<compile_context>
chip_gen: v5e
topology: v5e:2x2
jax: 0.10.0
libtpu: 0.0.40
codegen_flags: <defaults>
</compile_context>

<pallas_src>
import functools

import jax
import jax.numpy as jnp
from jax.experimental import pallas as pl
from jax.experimental.pallas import tpu as pltpu

LANES = 128      # channel / lane padding width
ROW_ALIGN = 32   # M-row alignment (multiple of bf16 sublane packing of 16)
MAX_TM = 256     # max row tile


def _round_up(x, m):
    return (x + m - 1) // m * m


def _tile_rows(m):
    """Pick (padded_M, row_tile): big tiles, and >=2 grid steps when there is
    enough work so both v7x TensorCores get a share of the 'parallel' axis."""
    mp = _round_up(max(m, ROW_ALIGN), ROW_ALIGN)
    if mp >= 2 * MAX_TM:
        tm = MAX_TM
    elif mp >= 2 * ROW_ALIGN:
        tm = mp // 2              # multiple of 16, divides mp exactly
    else:
        tm = mp
    mp = _round_up(mp, tm)
    return mp, tm


# --------------------------------------------------------------------------- #
# Pallas kernels
# --------------------------------------------------------------------------- #
def _matmul_bias_act_kernel(a_ref, w_ref, b_ref, o_ref, *, relu):
    # [TM, Kp](bf16) @ [Kp, 128](bf16) on the MXU, f32 accumulation.
    # BN scale is pre-folded into w; epilogue is bias (+ optional ReLU) in f32.
    acc = jnp.dot(a_ref[...], w_ref[...], preferred_element_type=jnp.float32)
    y = acc + b_ref[...]
    if relu:
        y = jnp.maximum(y, 0.0)
    o_ref[...] = y.astype(o_ref.dtype)


def _matmul_bias_res_relu_kernel(a_ref, w_ref, b_ref, r_ref, o_ref):
    # Second conv of a BasicBlock: matmul + bias + residual add + ReLU, fused.
    acc = jnp.dot(a_ref[...], w_ref[...], preferred_element_type=jnp.float32)
    y = acc + b_ref[...] + r_ref[...].astype(jnp.float32)
    o_ref[...] = jnp.maximum(y, 0.0).astype(o_ref.dtype)


def _maxpool_kernel(p_ref, o_ref, *, kk):
    # p_ref: [TM, kk, 128] extracted patches -> per-channel max over the window
    # (unrolled VPU max; lane-dense 128-wide output).
    m = p_ref[:, 0, :]
    for t in range(1, kk):
        m = jnp.maximum(m, p_ref[:, t, :])
    o_ref[...] = m


def _avgpool_kernel(x_ref, o_ref, *, inv_hw):
    # x_ref: [B, H*W, 128] -> mean over spatial axis, f32 output.
    o_ref[...] = jnp.sum(x_ref[...].astype(jnp.float32), axis=1) * inv_hw


# --------------------------------------------------------------------------- #
# Pallas wrappers
# --------------------------------------------------------------------------- #
def _matmul_bias(a, w, bias, residual=None, relu=True):
    m, k = a.shape
    kp, n = w.shape                      # kp: lane-aligned K, n == 128
    mp, tm = _tile_rows(m)

    a_p = a
    if kp != k or mp != m:
        a_p = jnp.pad(a, ((0, mp - m), (0, kp - k)))
    b2 = bias.reshape(1, n)

    grid = (mp // tm,)
    a_spec = pl.BlockSpec((tm, kp), lambda i: (i, 0))
    w_spec = pl.BlockSpec((kp, n), lambda i: (0, 0))
    v_spec = pl.BlockSpec((1, n), lambda i: (0, 0))
    o_spec = pl.BlockSpec((tm, n), lambda i: (i, 0))
    out_shape = jax.ShapeDtypeStruct((mp, n), jnp.bfloat16)
    cparams = pltpu.CompilerParams(dimension_semantics=("parallel",))

    if residual is None:
        out = pl.pallas_call(
            functools.partial(_matmul_bias_act_kernel, relu=relu),
            grid=grid,
            in_specs=[a_spec, w_spec, v_spec],
            out_specs=o_spec,
            out_shape=out_shape,
            compiler_params=cparams,
        )(a_p, w, b2)
    else:
        r_p = residual
        if mp != m:
            r_p = jnp.pad(residual, ((0, mp - m), (0, 0)))
        out = pl.pallas_call(
            _matmul_bias_res_relu_kernel,
            grid=grid,
            in_specs=[a_spec, w_spec, v_spec, o_spec],
            out_specs=o_spec,
            out_shape=out_shape,
            compiler_params=cparams,
        )(a_p, w, b2, r_p)
    return out if mp == m else out[:m]


def _extract_patches(x_nhwc, kh, kw, stride, pad, pad_value=0.0):
    # Glue: im2col-style patch extraction with *static* strides (slices only).
    B, H, W, C = x_nhwc.shape
    xp = x_nhwc
    if pad > 0:
        xp = jnp.pad(x_nhwc, ((0, 0), (pad, pad), (pad, pad), (0, 0)),
                     constant_values=pad_value)
    Ho = (H + 2 * pad - kh) // stride + 1
    Wo = (W + 2 * pad - kw) // stride + 1
    cols = []
    for i in range(kh):
        for j in range(kw):
            cols.append(xp[:, i:i + stride * Ho:stride,
                           j:j + stride * Wo:stride, :])
    p = jnp.stack(cols, axis=3)          # [B, Ho, Wo, kh*kw, C]
    return p, Ho, Wo


def conv_bn(x_nhwc, w_mat, kh, kw, bias, stride, pad,
            relu=True, residual=None):
    B = x_nhwc.shape[0]
    C = x_nhwc.shape[-1]
    p, Ho, Wo = _extract_patches(x_nhwc, kh, kw, stride, pad)
    a = p.reshape(B * Ho * Wo, kh * kw * C)
    n = w_mat.shape[1]
    res_mat = None if residual is None else residual.reshape(-1, n)
    out = _matmul_bias(a, w_mat, bias, residual=res_mat, relu=relu)
    return out.reshape(B, Ho, Wo, n)


def maxpool2d(x_nhwc, k=3, stride=2, pad=1):
    B, H, W, C = x_nhwc.shape
    p, Ho, Wo = _extract_patches(x_nhwc, k, k, stride, pad,
                                 pad_value=-jnp.inf)
    M = B * Ho * Wo
    p = p.reshape(M, k * k, C)
    mp, tm = _tile_rows(M)
    if mp != M:
        p = jnp.pad(p, ((0, mp - M), (0, 0), (0, 0)),
                    constant_values=-jnp.inf)
    out = pl.pallas_call(
        functools.partial(_maxpool_kernel, kk=k * k),
        grid=(mp // tm,),
        in_specs=[pl.BlockSpec((tm, k * k, C), lambda i: (i, 0, 0))],
        out_specs=pl.BlockSpec((tm, C), lambda i: (i, 0)),
        out_shape=jax.ShapeDtypeStruct((mp, C), x_nhwc.dtype),
        compiler_params=pltpu.CompilerParams(dimension_semantics=("parallel",)),
    )(p)
    out = out if mp == M else out[:M]
    return out.reshape(B, Ho, Wo, C)


def avgpool_flatten(x_nhwc, c_real):
    # AdaptiveAvgPool2d((1,1)) + flatten(1)  ->  [B, c_real] (f32)
    B, H, W, C = x_nhwc.shape
    x = x_nhwc.reshape(B, H * W, C)
    out = pl.pallas_call(
        functools.partial(_avgpool_kernel, inv_hw=1.0 / (H * W)),
        grid=(1,),
        in_specs=[pl.BlockSpec((B, H * W, C), lambda i: (0, 0, 0))],
        out_specs=pl.BlockSpec((B, C), lambda i: (0, 0)),
        out_shape=jax.ShapeDtypeStruct((B, C), jnp.float32),
    )(x)
    return out[:, :c_real]


# --------------------------------------------------------------------------- #
# Synthetic (deterministic) parameters — ResNet-18 topology, base width C0=8
# --------------------------------------------------------------------------- #
def _init_conv(key, kh, kw, cin, cout):
    fan = kh * kw * cin
    return (jax.random.normal(key, (kh, kw, cin, cout))
            * (2.0 / fan) ** 0.5).astype(jnp.float32)


def _init_bn(key, c):
    k1, k2, k3, k4 = jax.random.split(key, 4)
    gamma = 1.0 + 0.1 * jax.random.normal(k1, (c,))
    beta = 0.1 * jax.random.normal(k2, (c,))
    mean = 0.1 * jax.random.normal(k3, (c,))
    var = jnp.abs(jax.random.normal(k4, (c,))) + 0.5
    scale = gamma / jnp.sqrt(var + 1e-5)
    bias = beta - mean * scale
    return scale.astype(jnp.float32), bias.astype(jnp.float32)


def make_params(key, c_in=3, c0=8):
    keys = iter(jax.random.split(key, 128))
    params = {}
    params["conv1_w"] = _init_conv(next(keys), 7, 7, c_in, c0)
    params["bn1_s"], params["bn1_b"] = _init_bn(next(keys), c0)

    def basic_block_params(cin, cout, stride):
        blk = {}
        blk["w1"] = _init_conv(next(keys), 3, 3, cin, cout)
        blk["s1"], blk["b1"] = _init_bn(next(keys), cout)
        blk["w2"] = _init_conv(next(keys), 3, 3, cout, cout)
        blk["s2"], blk["b2"] = _init_bn(next(keys), cout)
        if stride != 1 or cin != cout:
            blk["wd"] = _init_conv(next(keys), 1, 1, cin, cout)
            blk["sd"], blk["bd"] = _init_bn(next(keys), cout)
        return blk

    widths = [c0, 2 * c0, 4 * c0, 8 * c0]
    cin = c0
    for li, cout in enumerate(widths, start=1):
        stride = 1 if li == 1 else 2
        params[f"layer{li}"] = [basic_block_params(cin, cout, stride),
                                basic_block_params(cout, cout, 1)]
        cin = cout
    return params


# --------------------------------------------------------------------------- #
# One-time parameter prep: fold BN scale into weights, pad channels to 128
# lanes, align K to 128, cast matmul operands to bf16.
# --------------------------------------------------------------------------- #
def _pad_to(x, axis, size):
    amt = size - x.shape[axis]
    if amt <= 0:
        return x
    widths = [(0, 0)] * x.ndim
    widths[axis] = (0, amt)
    return jnp.pad(x, widths)


def _prep_conv(w, scale, cin_pad):
    # Fold BN scale into output-channel columns in f32, then pad + reshape to a
    # [kh*kw*Cin_pad, 128] matmul operand and cast to bf16.
    kh, kw, _, _ = w.shape
    w = w * scale.reshape(1, 1, 1, -1)
    w = _pad_to(w, 2, cin_pad)
    w = _pad_to(w, 3, LANES)
    wm = w.reshape(kh * kw * cin_pad, LANES)
    wm = _pad_to(wm, 0, _round_up(wm.shape[0], LANES))
    return wm.astype(jnp.bfloat16)


def _prep_bias(b):
    return _pad_to(b, 0, LANES).astype(jnp.float32)


def prepare_params(params):
    prepared = {}
    # conv1 keeps its real cin (3) so im2col is not blown up 42x; K -> 256.
    prepared["conv1_w"] = _prep_conv(params["conv1_w"], params["bn1_s"],
                                     params["conv1_w"].shape[2])
    prepared["bn1_b"] = _prep_bias(params["bn1_b"])
    for li in range(1, 5):
        blocks = []
        for blk in params[f"layer{li}"]:
            pb = {}
            pb["w1"] = _prep_conv(blk["w1"], blk["s1"], LANES)
            pb["b1"] = _prep_bias(blk["b1"])
            pb["w2"] = _prep_conv(blk["w2"], blk["s2"], LANES)
            pb["b2"] = _prep_bias(blk["b2"])
            if "wd" in blk:
                pb["wd"] = _prep_conv(blk["wd"], blk["sd"], LANES)
                pb["bd"] = _prep_bias(blk["bd"])
            blocks.append(pb)
        prepared[f"layer{li}"] = blocks
    return prepared


# --------------------------------------------------------------------------- #
# Forward pass (mirrors myResNet.forward, eval-mode BN)
# --------------------------------------------------------------------------- #
def basic_block(x, blk, stride):
    identity = x
    out = conv_bn(x, blk["w1"], 3, 3, blk["b1"],
                  stride=stride, pad=1, relu=True)
    if "wd" in blk:  # downsample branch (1x1 conv + BN, no ReLU)
        identity = conv_bn(x, blk["wd"], 1, 1, blk["bd"],
                           stride=stride, pad=0, relu=False)
    # conv2 + BN + residual add + ReLU fused into one Pallas kernel call
    out = conv_bn(out, blk["w2"], 3, 3, blk["b2"],
                  stride=1, pad=1, relu=True, residual=identity)
    return out


@functools.partial(jax.jit, static_argnums=(2,))
def my_resnet_forward(x_nchw, params, c_out_real):
    x = jnp.transpose(x_nchw, (0, 2, 3, 1)).astype(jnp.bfloat16)  # NCHW->NHWC
    x = conv_bn(x, params["conv1_w"], 7, 7, params["bn1_b"],
                stride=2, pad=3, relu=True)
    x = maxpool2d(x, k=3, stride=2, pad=1)
    for li in range(1, 5):
        for bi, blk in enumerate(params[f"layer{li}"]):
            stride = 2 if (li > 1 and bi == 0) else 1   # static, not traced
            x = basic_block(x, blk, stride)
    return avgpool_flatten(x, c_out_real)   # == avgpool((1,1)) + flatten(1)


if __name__ == "__main__":
    key = jax.random.PRNGKey(0)
    kx, kp = jax.random.split(key)
    c0 = 8
    x = jax.random.normal(kx, (2, 3, 32, 32), dtype=jnp.float32)  # NCHW input
    params = make_params(kp, c_in=3, c0=c0)
    kparams = prepare_params(params)     # fold BN scale + pad/reshape/cast once
    out = my_resnet_forward(x, kparams, 8 * c0)
    out = jax.block_until_ready(out)
    assert out.shape == (2, 8 * c0), out.shape
    print("KERNEL_OK")
</pallas_src>

<mosaic_0001>
module attributes {stable_mosaic.version = 11 : i64} {
  func.func @_matmul_bias_act_kernel(%arg0: i32, %arg1: memref<256x256xbf16, #tpu.memory_space<vmem>>, %arg2: memref<256x128xbf16, #tpu.memory_space<vmem>>, %arg3: memref<1x128xf32, #tpu.memory_space<vmem>>, %arg4: memref<256x128xbf16, #tpu.memory_space<vmem>>) attributes {dimension_semantics = [#tpu.dimension_semantics<parallel>], iteration_bounds = array<i64: 2>, scalar_prefetch = 0 : i64, scratch_operands = 0 : i64, tpu.core_type = #tpu.core_type<tc>, window_params = [{transform_indices = @transform_0, window_bounds = array<i64: 256, 256>}, {pipeline_mode = #tpu.pipeline_mode<synchronous>, transform_indices = @transform_1, window_bounds = array<i64: 256, 128>}, {pipeline_mode = #tpu.pipeline_mode<synchronous>, transform_indices = @transform_2, window_bounds = array<i64: 1, 128>}, {transform_indices = @transform_3, window_bounds = array<i64: 256, 128>}]} {
    %c0 = arith.constant 0 : index
    %c0_0 = arith.constant 0 : index
    %0 = vector.load %arg1[%c0, %c0_0] : memref<256x256xbf16, #tpu.memory_space<vmem>>, vector<256x256xbf16>
    %c0_1 = arith.constant 0 : index
    %c0_2 = arith.constant 0 : index
    %1 = vector.load %arg2[%c0_1, %c0_2] : memref<256x128xbf16, #tpu.memory_space<vmem>>, vector<256x128xbf16>
    %cst = arith.constant dense<0.000000e+00> : vector<256x128xf32>
    %2 = tpu.matmul %0, %1, %cst {dimension_numbers = #tpu.dot_dimension_numbers<[1], [0], [0], [1], [0, 0, 1, 1], [], []>} : vector<256x256xbf16>, vector<256x128xbf16>, vector<256x128xf32> -> vector<256x128xf32>
    %c0_3 = arith.constant 0 : index
    %c0_4 = arith.constant 0 : index
    %3 = vector.load %arg3[%c0_3, %c0_4] : memref<1x128xf32, #tpu.memory_space<vmem>>, vector<1x128xf32>
    %4 = vector.broadcast %3 : vector<1x128xf32> to vector<256x128xf32>
    %5 = arith.addf %2, %4 : vector<256x128xf32>
    %cst_5 = arith.constant 0.000000e+00 : f32
    %6 = vector.broadcast %cst_5 : f32 to vector<256x128xf32>
    %7 = arith.maximumf %5, %6 : vector<256x128xf32>
    %8 = arith.truncf %7 : vector<256x128xf32> to vector<256x128xbf16>
    %c0_6 = arith.constant 0 : index
    %c0_7 = arith.constant 0 : index
    %9 = vector.load %arg4[%c0_6, %c0_7] : memref<256x128xbf16, #tpu.memory_space<vmem>>, vector<256x128xbf16>
    tpu.vector_store %arg4[%c0_6, %c0_7], %8 {strides = array<i32>} : memref<256x128xbf16, #tpu.memory_space<vmem>>, vector<256x128xbf16>,
    return
  }
  func.func @transform_0(%arg0: i32) -> (i32, i32) {
    %c0_i32 = arith.constant 0 : i32
    %c0_i32_0 = arith.constant 0 : i32
    return %arg0, %c0_i32 : i32, i32
  }
  func.func @transform_1(%arg0: i32) -> (i32, i32) {
    %c0_i32 = arith.constant 0 : i32
    %c0_i32_0 = arith.constant 0 : i32
    %c0_i32_1 = arith.constant 0 : i32
    return %c0_i32, %c0_i32_0 : i32, i32
  }
  func.func @transform_2(%arg0: i32) -> (i32, i32) {
    %c0_i32 = arith.constant 0 : i32
    %c0_i32_0 = arith.constant 0 : i32
    %c0_i32_1 = arith.constant 0 : i32
    return %c0_i32, %c0_i32_0 : i32, i32
  }
  func.func @transform_3(%arg0: i32) -> (i32, i32) {
    %c0_i32 = arith.constant 0 : i32
    %c0_i32_0 = arith.constant 0 : i32
    return %arg0, %c0_i32 : i32, i32
  }
}

module attributes {stable_mosaic.version = 11 : i64} {
  func.func @_maxpool_kernel(%arg0: i32, %arg1: memref<64x9x128xbf16, #tpu.memory_space<vmem>>, %arg2: memref<64x128xbf16, #tpu.memory_space<vmem>>) attributes {dimension_semantics = [#tpu.dimension_semantics<parallel>], iteration_bounds = array<i64: 2>, scalar_prefetch = 0 : i64, scratch_operands = 0 : i64, tpu.core_type = #tpu.core_type<tc>, window_params = [{transform_indices = @transform_0, window_bounds = array<i64: 64, 9, 128>}, {transform_indices = @transform_1, window_bounds = array<i64: 64, 128>}]} {
    %c0 = arith.constant 0 : index
    %c0_0 = arith.constant 0 : index
    %c0_1 = arith.constant 0 : index
    %0 = vector.load %arg1[%c0, %c0_0, %c0_1] : memref<64x9x128xbf16, #tpu.memory_space<vmem>>, vector<64x1x128xbf16>
    %1 = vector.shape_cast %0 : vector<64x1x128xbf16> to vector<64x128xbf16>
    %c0_2 = arith.constant 0 : index
    %c1 = arith.constant 1 : index
    %c0_3 = arith.constant 0 : index
    %2 = vector.load %arg1[%c0_2, %c1, %c0_3] : memref<64x9x128xbf16, #tpu.memory_space<vmem>>, vector<64x1x128xbf16>
    %3 = vector.shape_cast %2 : vector<64x1x128xbf16> to vector<64x128xbf16>
    %4 = arith.maximumf %1, %3 : vector<64x128xbf16>
    %c0_4 = arith.constant 0 : index
    %c2 = arith.constant 2 : index
    %c0_5 = arith.constant 0 : index
    %5 = vector.load %arg1[%c0_4, %c2, %c0_5] : memref<64x9x128xbf16, #tpu.memory_space<vmem>>, vector<64x1x128xbf16>
    %6 = vector.shape_cast %5 : vector<64x1x128xbf16> to vector<64x128xbf16>
    %7 = arith.maximumf %4, %6 : vector<64x128xbf16>
    %c0_6 = arith.constant 0 : index
    %c3 = arith.constant 3 : index
    %c0_7 = arith.constant 0 : index
    %8 = vector.load %arg1[%c0_6, %c3, %c0_7] : memref<64x9x128xbf16, #tpu.memory_space<vmem>>, vector<64x1x128xbf16>
    %9 = vector.shape_cast %8 : vector<64x1x128xbf16> to vector<64x128xbf16>
    %10 = arith.maximumf %7, %9 : vector<64x128xbf16>
    %c0_8 = arith.constant 0 : index
    %c4 = arith.constant 4 : index
    %c0_9 = arith.constant 0 : index
    %11 = vector.load %arg1[%c0_8, %c4, %c0_9] : memref<64x9x128xbf16, #tpu.memory_space<vmem>>, vector<64x1x128xbf16>
    %12 = vector.shape_cast %11 : vector<64x1x128xbf16> to vector<64x128xbf16>
    %13 = arith.maximumf %10, %12 : vector<64x128xbf16>
    %c0_10 = arith.constant 0 : index
    %c5 = arith.constant 5 : index
    %c0_11 = arith.constant 0 : index
    %14 = vector.load %arg1[%c0_10, %c5, %c0_11] : memref<64x9x128xbf16, #tpu.memory_space<vmem>>, vector<64x1x128xbf16>
    %15 = vector.shape_cast %14 : vector<64x1x128xbf16> to vector<64x128xbf16>
    %16 = arith.maximumf %13, %15 : vector<64x128xbf16>
    %c0_12 = arith.constant 0 : index
    %c6 = arith.constant 6 : index
    %c0_13 = arith.constant 0 : index
    %17 = vector.load %arg1[%c0_12, %c6, %c0_13] : memref<64x9x128xbf16, #tpu.memory_space<vmem>>, vector<64x1x128xbf16>
    %18 = vector.shape_cast %17 : vector<64x1x128xbf16> to vector<64x128xbf16>
    %19 = arith.maximumf %16, %18 : vector<64x128xbf16>
    %c0_14 = arith.constant 0 : index
    %c7 = arith.constant 7 : index
    %c0_15 = arith.constant 0 : index
    %20 = vector.load %arg1[%c0_14, %c7, %c0_15] : memref<64x9x128xbf16, #tpu.memory_space<vmem>>, vector<64x1x128xbf16>
    %21 = vector.shape_cast %20 : vector<64x1x128xbf16> to vector<64x128xbf16>
    %22 = arith.maximumf %19, %21 : vector<64x128xbf16>
    %c0_16 = arith.constant 0 : index
    %c8 = arith.constant 8 : index
    %c0_17 = arith.constant 0 : index
    %23 = vector.load %arg1[%c0_16, %c8, %c0_17] : memref<64x9x128xbf16, #tpu.memory_space<vmem>>, vector<64x1x128xbf16>
    %24 = vector.shape_cast %23 : vector<64x1x128xbf16> to vector<64x128xbf16>
    %25 = arith.maximumf %22, %24 : vector<64x128xbf16>
    %c0_18 = arith.constant 0 : index
    %c0_19 = arith.constant 0 : index
    %26 = vector.load %arg2[%c0_18, %c0_19] : memref<64x128xbf16, #tpu.memory_space<vmem>>, vector<64x128xbf16>
    tpu.vector_store %arg2[%c0_18, %c0_19], %25 {strides = array<i32>} : memref<64x128xbf16, #tpu.memory_space<vmem>>, vector<64x128xbf16>,
    return
  }
  func.func @transform_0(%arg0: i32) -> (i32, i32, i32) {
    %c0_i32 = arith.constant 0 : i32
    %c0_i32_0 = arith.constant 0 : i32
    %c0_i32_1 = arith.constant 0 : i32
    return %arg0, %c0_i32, %c0_i32_0 : i32, i32, i32
  }
  func.func @transform_1(%arg0: i32) -> (i32, i32) {
    %c0_i32 = arith.constant 0 : i32
    %c0_i32_0 = arith.constant 0 : i32
    return %arg0, %c0_i32 : i32, i32
  }
}

module attributes {stable_mosaic.version = 11 : i64} {
  func.func @_matmul_bias_act_kernel(%arg0: i32, %arg1: memref<64x1152xbf16, #tpu.memory_space<vmem>>, %arg2: memref<1152x128xbf16, #tpu.memory_space<vmem>>, %arg3: memref<1x128xf32, #tpu.memory_space<vmem>>, %arg4: memref<64x128xbf16, #tpu.memory_space<vmem>>) attributes {dimension_semantics = [#tpu.dimension_semantics<parallel>], iteration_bounds = array<i64: 2>, scalar_prefetch = 0 : i64, scratch_operands = 0 : i64, tpu.core_type = #tpu.core_type<tc>, window_params = [{transform_indices = @transform_0, window_bounds = array<i64: 64, 1152>}, {pipeline_mode = #tpu.pipeline_mode<synchronous>, transform_indices = @transform_1, window_bounds = array<i64: 1152, 128>}, {pipeline_mode = #tpu.pipeline_mode<synchronous>, transform_indices = @transform_2, window_bounds = array<i64: 1, 128>}, {transform_indices = @transform_3, window_bounds = array<i64: 64, 128>}]} {
    %c0 = arith.constant 0 : index
    %c0_0 = arith.constant 0 : index
    %0 = vector.load %arg1[%c0, %c0_0] : memref<64x1152xbf16, #tpu.memory_space<vmem>>, vector<64x1152xbf16>
    %c0_1 = arith.constant 0 : index
    %c0_2 = arith.constant 0 : index
    %1 = vector.load %arg2[%c0_1, %c0_2] : memref<1152x128xbf16, #tpu.memory_space<vmem>>, vector<1152x128xbf16>
    %cst = arith.constant dense<0.000000e+00> : vector<64x128xf32>
    %2 = tpu.matmul %0, %1, %cst {dimension_numbers = #tpu.dot_dimension_numbers<[1], [0], [0], [1], [0, 0, 1, 1], [], []>} : vector<64x1152xbf16>, vector<1152x128xbf16>, vector<64x128xf32> -> vector<64x128xf32>
    %c0_3 = arith.constant 0 : index
    %c0_4 = arith.constant 0 : index
    %3 = vector.load %arg3[%c0_3, %c0_4] : memref<1x128xf32, #tpu.memory_space<vmem>>, vector<1x128xf32>
    %4 = vector.broadcast %3 : vector<1x128xf32> to vector<64x128xf32>
    %5 = arith.addf %2, %4 : vector<64x128xf32>
    %cst_5 = arith.constant 0.000000e+00 : f32
    %6 = vector.broadcast %cst_5 : f32 to vector<64x128xf32>
    %7 = arith.maximumf %5, %6 : vector<64x128xf32>
    %8 = arith.truncf %7 : vector<64x128xf32> to vector<64x128xbf16>
    %c0_6 = arith.constant 0 : index
    %c0_7 = arith.constant 0 : index
    %9 = vector.load %arg4[%c0_6, %c0_7] : memref<64x128xbf16, #tpu.memory_space<vmem>>, vector<64x128xbf16>
    tpu.vector_store %arg4[%c0_6, %c0_7], %8 {strides = array<i32>} : memref<64x128xbf16, #tpu.memory_space<vmem>>, vector<64x128xbf16>,
    return
  }
  func.func @transform_0(%arg0: i32) -> (i32, i32) {
    %c0_i32 = arith.constant 0 : i32
    %c0_i32_0 = arith.constant 0 : i32
    return %arg0, %c0_i32 : i32, i32
  }
  func.func @transform_1(%arg0: i32) -> (i32, i32) {
    %c0_i32 = arith.constant 0 : i32
    %c0_i32_0 = arith.constant 0 : i32
    %c0_i32_1 = arith.constant 0 : i32
    return %c0_i32, %c0_i32_0 : i32, i32
  }
  func.func @transform_2(%arg0: i32) -> (i32, i32) {
    %c0_i32 = arith.constant 0 : i32
    %c0_i32_0 = arith.constant 0 : i32
    %c0_i32_1 = arith.constant 0 : i32
    return %c0_i32, %c0_i32_0 : i32, i32
  }
  func.func @transform_3(%arg0: i32) -> (i32, i32) {
    %c0_i32 = arith.constant 0 : i32
    %c0_i32_0 = arith.constant 0 : i32
    return %arg0, %c0_i32 : i32, i32
  }
}

module attributes {stable_mosaic.version = 11 : i64} {
  func.func @_matmul_bias_res_relu_kernel(%arg0: i32, %arg1: memref<64x1152xbf16, #tpu.memory_space<vmem>>, %arg2: memref<1152x128xbf16, #tpu.memory_space<vmem>>, %arg3: memref<1x128xf32, #tpu.memory_space<vmem>>, %arg4: memref<64x128xbf16, #tpu.memory_space<vmem>>, %arg5: memref<64x128xbf16, #tpu.memory_space<vmem>>) attributes {dimension_semantics = [#tpu.dimension_semantics<parallel>], iteration_bounds = array<i64: 2>, scalar_prefetch = 0 : i64, scratch_operands = 0 : i64, tpu.core_type = #tpu.core_type<tc>, window_params = [{transform_indices = @transform_0, window_bounds = array<i64: 64, 1152>}, {pipeline_mode = #tpu.pipeline_mode<synchronous>, transform_indices = @transform_1, window_bounds = array<i64: 1152, 128>}, {pipeline_mode = #tpu.pipeline_mode<synchronous>, transform_indices = @transform_2, window_bounds = array<i64: 1, 128>}, {transform_indices = @transform_3, window_bounds = array<i64: 64, 128>}, {transform_indices = @transform_4, window_bounds = array<i64: 64, 128>}]} {
    %c0 = arith.constant 0 : index
    %c0_0 = arith.constant 0 : index
    %0 = vector.load %arg1[%c0, %c0_0] : memref<64x1152xbf16, #tpu.memory_space<vmem>>, vector<64x1152xbf16>
    %c0_1 = arith.constant 0 : index
    %c0_2 = arith.constant 0 : index
    %1 = vector.load %arg2[%c0_1, %c0_2] : memref<1152x128xbf16, #tpu.memory_space<vmem>>, vector<1152x128xbf16>
    %cst = arith.constant dense<0.000000e+00> : vector<64x128xf32>
    %2 = tpu.matmul %0, %1, %cst {dimension_numbers = #tpu.dot_dimension_numbers<[1], [0], [0], [1], [0, 0, 1, 1], [], []>} : vector<64x1152xbf16>, vector<1152x128xbf16>, vector<64x128xf32> -> vector<64x128xf32>
    %c0_3 = arith.constant 0 : index
    %c0_4 = arith.constant 0 : index
    %3 = vector.load %arg3[%c0_3, %c0_4] : memref<1x128xf32, #tpu.memory_space<vmem>>, vector<1x128xf32>
    %4 = vector.broadcast %3 : vector<1x128xf32> to vector<64x128xf32>
    %5 = arith.addf %2, %4 : vector<64x128xf32>
    %c0_5 = arith.constant 0 : index
    %c0_6 = arith.constant 0 : index
    %6 = vector.load %arg4[%c0_5, %c0_6] : memref<64x128xbf16, #tpu.memory_space<vmem>>, vector<64x128xbf16>
    %7 = arith.extf %6 : vector<64x128xbf16> to vector<64x128xf32>
    %8 = arith.addf %5, %7 : vector<64x128xf32>
    %cst_7 = arith.constant 0.000000e+00 : f32
    %9 = vector.broadcast %cst_7 : f32 to vector<64x128xf32>
    %10 = arith.maximumf %8, %9 : vector<64x128xf32>
    %11 = arith.truncf %10 : vector<64x128xf32> to vector<64x128xbf16>
    %c0_8 = arith.constant 0 : index
    %c0_9 = arith.constant 0 : index
    %12 = vector.load %arg5[%c0_8, %c0_9] : memref<64x128xbf16, #tpu.memory_space<vmem>>, vector<64x128xbf16>
    tpu.vector_store %arg5[%c0_8, %c0_9], %11 {strides = array<i32>} : memref<64x128xbf16, #tpu.memory_space<vmem>>, vector<64x128xbf16>,
    return
  }
  func.func @transform_0(%arg0: i32) -> (i32, i32) {
    %c0_i32 = arith.constant 0 : i32
    %c0_i32_0 = arith.constant 0 : i32
    return %arg0, %c0_i32 : i32, i32
  }
  func.func @transform_1(%arg0: i32) -> (i32, i32) {
    %c0_i32 = arith.constant 0 : i32
    %c0_i32_0 = arith.constant 0 : i32
    %c0_i32_1 = arith.constant 0 : i32
    return %c0_i32, %c0_i32_0 : i32, i32
  }
  func.func @transform_2(%arg0: i32) -> (i32, i32) {
    %c0_i32 = arith.constant 0 : i32
    %c0_i32_0 = arith.constant 0 : i32
    %c0_i32_1 = arith.constant 0 : i32
    return %c0_i32, %c0_i32_0 : i32, i32
  }
  func.func @transform_3(%arg0: i32) -> (i32, i32) {
    %c0_i32 = arith.constant 0 : i32
    %c0_i32_0 = arith.constant 0 : i32
    return %arg0, %c0_i32 : i32, i32
  }
  func.func @transform_4(%arg0: i32) -> (i32, i32) {
    %c0_i32 = arith.constant 0 : i32
    %c0_i32_0 = arith.constant 0 : i32
    return %arg0, %c0_i32 : i32, i32
  }
}

module attributes {stable_mosaic.version = 11 : i64} {
  func.func @_matmul_bias_act_kernel(%arg0: i32, %arg1: memref<32x1152xbf16, #tpu.memory_space<vmem>>, %arg2: memref<1152x128xbf16, #tpu.memory_space<vmem>>, %arg3: memref<1x128xf32, #tpu.memory_space<vmem>>, %arg4: memref<32x128xbf16, #tpu.memory_space<vmem>>) attributes {dimension_semantics = [#tpu.dimension_semantics<parallel>], iteration_bounds = array<i64: 1>, scalar_prefetch = 0 : i64, scratch_operands = 0 : i64, tpu.core_type = #tpu.core_type<tc>, window_params = [{transform_indices = @transform_0, window_bounds = array<i64: 32, 1152>}, {pipeline_mode = #tpu.pipeline_mode<synchronous>, transform_indices = @transform_1, window_bounds = array<i64: 1152, 128>}, {pipeline_mode = #tpu.pipeline_mode<synchronous>, transform_indices = @transform_2, window_bounds = array<i64: 1, 128>}, {transform_indices = @transform_3, window_bounds = array<i64: 32, 128>}]} {
    %c0 = arith.constant 0 : index
    %c0_0 = arith.constant 0 : index
    %0 = vector.load %arg1[%c0, %c0_0] : memref<32x1152xbf16, #tpu.memory_space<vmem>>, vector<32x1152xbf16>
    %c0_1 = arith.constant 0 : index
    %c0_2 = arith.constant 0 : index
    %1 = vector.load %arg2[%c0_1, %c0_2] : memref<1152x128xbf16, #tpu.memory_space<vmem>>, vector<1152x128xbf16>
    %cst = arith.constant dense<0.000000e+00> : vector<32x128xf32>
    %2 = tpu.matmul %0, %1, %cst {dimension_numbers = #tpu.dot_dimension_numbers<[1], [0], [0], [1], [0, 0, 1, 1], [], []>} : vector<32x1152xbf16>, vector<1152x128xbf16>, vector<32x128xf32> -> vector<32x128xf32>
    %c0_3 = arith.constant 0 : index
    %c0_4 = arith.constant 0 : index
    %3 = vector.load %arg3[%c0_3, %c0_4] : memref<1x128xf32, #tpu.memory_space<vmem>>, vector<1x128xf32>
    %4 = vector.broadcast %3 : vector<1x128xf32> to vector<32x128xf32>
    %5 = arith.addf %2, %4 : vector<32x128xf32>
    %cst_5 = arith.constant 0.000000e+00 : f32
    %6 = vector.broadcast %cst_5 : f32 to vector<32x128xf32>
    %7 = arith.maximumf %5, %6 : vector<32x128xf32>
    %8 = arith.truncf %7 : vector<32x128xf32> to vector<32x128xbf16>
    %c0_6 = arith.constant 0 : index
    %c0_7 = arith.constant 0 : index
    %9 = vector.load %arg4[%c0_6, %c0_7] : memref<32x128xbf16, #tpu.memory_space<vmem>>, vector<32x128xbf16>
    tpu.vector_store %arg4[%c0_6, %c0_7], %8 {strides = array<i32>} : memref<32x128xbf16, #tpu.memory_space<vmem>>, vector<32x128xbf16>,
    return
  }
  func.func @transform_0(%arg0: i32) -> (i32, i32) {
    %c0_i32 = arith.constant 0 : i32
    %c0_i32_0 = arith.constant 0 : i32
    return %arg0, %c0_i32 : i32, i32
  }
  func.func @transform_1(%arg0: i32) -> (i32, i32) {
    %c0_i32 = arith.constant 0 : i32
    %c0_i32_0 = arith.constant 0 : i32
    %c0_i32_1 = arith.constant 0 : i32
    return %c0_i32, %c0_i32_0 : i32, i32
  }
  func.func @transform_2(%arg0: i32) -> (i32, i32) {
    %c0_i32 = arith.constant 0 : i32
    %c0_i32_0 = arith.constant 0 : i32
    %c0_i32_1 = arith.constant 0 : i32
    return %c0_i32, %c0_i32_0 : i32, i32
  }
  func.func @transform_3(%arg0: i32) -> (i32, i32) {
    %c0_i32 = arith.constant 0 : i32
    %c0_i32_0 = arith.constant 0 : i32
    return %arg0, %c0_i32 : i32, i32
  }
}

module attributes {stable_mosaic.version = 11 : i64} {
  func.func @_matmul_bias_act_kernel(%arg0: i32, %arg1: memref<32x128xbf16, #tpu.memory_space<vmem>>, %arg2: memref<128x128xbf16, #tpu.memory_space<vmem>>, %arg3: memref<1x128xf32, #tpu.memory_space<vmem>>, %arg4: memref<32x128xbf16, #tpu.memory_space<vmem>>) attributes {dimension_semantics = [#tpu.dimension_semantics<parallel>], iteration_bounds = array<i64: 1>, scalar_prefetch = 0 : i64, scratch_operands = 0 : i64, tpu.core_type = #tpu.core_type<tc>, window_params = [{transform_indices = @transform_0, window_bounds = array<i64: 32, 128>}, {pipeline_mode = #tpu.pipeline_mode<synchronous>, transform_indices = @transform_1, window_bounds = array<i64: 128, 128>}, {pipeline_mode = #tpu.pipeline_mode<synchronous>, transform_indices = @transform_2, window_bounds = array<i64: 1, 128>}, {transform_indices = @transform_3, window_bounds = array<i64: 32, 128>}]} {
    %c0 = arith.constant 0 : index
    %c0_0 = arith.constant 0 : index
    %0 = vector.load %arg1[%c0, %c0_0] : memref<32x128xbf16, #tpu.memory_space<vmem>>, vector<32x128xbf16>
    %c0_1 = arith.constant 0 : index
    %c0_2 = arith.constant 0 : index
    %1 = vector.load %arg2[%c0_1, %c0_2] : memref<128x128xbf16, #tpu.memory_space<vmem>>, vector<128x128xbf16>
    %cst = arith.constant dense<0.000000e+00> : vector<32x128xf32>
    %2 = tpu.matmul %0, %1, %cst {dimension_numbers = #tpu.dot_dimension_numbers<[1], [0], [0], [1], [0, 0, 1, 1], [], []>} : vector<32x128xbf16>, vector<128x128xbf16>, vector<32x128xf32> -> vector<32x128xf32>
    %c0_3 = arith.constant 0 : index
    %c0_4 = arith.constant 0 : index
    %3 = vector.load %arg3[%c0_3, %c0_4] : memref<1x128xf32, #tpu.memory_space<vmem>>, vector<1x128xf32>
    %4 = vector.broadcast %3 : vector<1x128xf32> to vector<32x128xf32>
    %5 = arith.addf %2, %4 : vector<32x128xf32>
    %6 = arith.truncf %5 : vector<32x128xf32> to vector<32x128xbf16>
    %c0_5 = arith.constant 0 : index
    %c0_6 = arith.constant 0 : index
    %7 = vector.load %arg4[%c0_5, %c0_6] : memref<32x128xbf16, #tpu.memory_space<vmem>>, vector<32x128xbf16>
    tpu.vector_store %arg4[%c0_5, %c0_6], %6 {strides = array<i32>} : memref<32x128xbf16, #tpu.memory_space<vmem>>, vector<32x128xbf16>,
    return
  }
  func.func @transform_0(%arg0: i32) -> (i32, i32) {
    %c0_i32 = arith.constant 0 : i32
    %c0_i32_0 = arith.constant 0 : i32
    return %arg0, %c0_i32 : i32, i32
  }
  func.func @transform_1(%arg0: i32) -> (i32, i32) {
    %c0_i32 = arith.constant 0 : i32
    %c0_i32_0 = arith.constant 0 : i32
    %c0_i32_1 = arith.constant 0 : i32
    return %c0_i32, %c0_i32_0 : i32, i32
  }
  func.func @transform_2(%arg0: i32) -> (i32, i32) {
    %c0_i32 = arith.constant 0 : i32
    %c0_i32_0 = arith.constant 0 : i32
    %c0_i32_1 = arith.constant 0 : i32
    return %c0_i32, %c0_i32_0 : i32, i32
  }
  func.func @transform_3(%arg0: i32) -> (i32, i32) {
    %c0_i32 = arith.constant 0 : i32
    %c0_i32_0 = arith.constant 0 : i32
    return %arg0, %c0_i32 : i32, i32
  }
}

module attributes {stable_mosaic.version = 11 : i64} {
  func.func @_matmul_bias_res_relu_kernel(%arg0: i32, %arg1: memref<32x1152xbf16, #tpu.memory_space<vmem>>, %arg2: memref<1152x128xbf16, #tpu.memory_space<vmem>>, %arg3: memref<1x128xf32, #tpu.memory_space<vmem>>, %arg4: memref<32x128xbf16, #tpu.memory_space<vmem>>, %arg5: memref<32x128xbf16, #tpu.memory_space<vmem>>) attributes {dimension_semantics = [#tpu.dimension_semantics<parallel>], iteration_bounds = array<i64: 1>, scalar_prefetch = 0 : i64, scratch_operands = 0 : i64, tpu.core_type = #tpu.core_type<tc>, window_params = [{transform_indices = @transform_0, window_bounds = array<i64: 32, 1152>}, {pipeline_mode = #tpu.pipeline_mode<synchronous>, transform_indices = @transform_1, window_bounds = array<i64: 1152, 128>}, {pipeline_mode = #tpu.pipeline_mode<synchronous>, transform_indices = @transform_2, window_bounds = array<i64: 1, 128>}, {transform_indices = @transform_3, window_bounds = array<i64: 32, 128>}, {transform_indices = @transform_4, window_bounds = array<i64: 32, 128>}]} {
    %c0 = arith.constant 0 : index
    %c0_0 = arith.constant 0 : index
    %0 = vector.load %arg1[%c0, %c0_0] : memref<32x1152xbf16, #tpu.memory_space<vmem>>, vector<32x1152xbf16>
    %c0_1 = arith.constant 0 : index
    %c0_2 = arith.constant 0 : index
    %1 = vector.load %arg2[%c0_1, %c0_2] : memref<1152x128xbf16, #tpu.memory_space<vmem>>, vector<1152x128xbf16>
    %cst = arith.constant dense<0.000000e+00> : vector<32x128xf32>
    %2 = tpu.matmul %0, %1, %cst {dimension_numbers = #tpu.dot_dimension_numbers<[1], [0], [0], [1], [0, 0, 1, 1], [], []>} : vector<32x1152xbf16>, vector<1152x128xbf16>, vector<32x128xf32> -> vector<32x128xf32>
    %c0_3 = arith.constant 0 : index
    %c0_4 = arith.constant 0 : index
    %3 = vector.load %arg3[%c0_3, %c0_4] : memref<1x128xf32, #tpu.memory_space<vmem>>, vector<1x128xf32>
    %4 = vector.broadcast %3 : vector<1x128xf32> to vector<32x128xf32>
    %5 = arith.addf %2, %4 : vector<32x128xf32>
    %c0_5 = arith.constant 0 : index
    %c0_6 = arith.constant 0 : index
    %6 = vector.load %arg4[%c0_5, %c0_6] : memref<32x128xbf16, #tpu.memory_space<vmem>>, vector<32x128xbf16>
    %7 = arith.extf %6 : vector<32x128xbf16> to vector<32x128xf32>
    %8 = arith.addf %5, %7 : vector<32x128xf32>
    %cst_7 = arith.constant 0.000000e+00 : f32
    %9 = vector.broadcast %cst_7 : f32 to vector<32x128xf32>
    %10 = arith.maximumf %8, %9 : vector<32x128xf32>
    %11 = arith.truncf %10 : vector<32x128xf32> to vector<32x128xbf16>
    %c0_8 = arith.constant 0 : index
    %c0_9 = arith.constant 0 : index
    %12 = vector.load %arg5[%c0_8, %c0_9] : memref<32x128xbf16, #tpu.memory_space<vmem>>, vector<32x128xbf16>
    tpu.vector_store %arg5[%c0_8, %c0_9], %11 {strides = array<i32>} : memref<32x128xbf16, #tpu.memory_space<vmem>>, vector<32x128xbf16>,
    return
  }
  func.func @transform_0(%arg0: i32) -> (i32, i32) {
    %c0_i32 = arith.constant 0 : i32
    %c0_i32_0 = arith.constant 0 : i32
    return %arg0, %c0_i32 : i32, i32
  }
  func.func @transform_1(%arg0: i32) -> (i32, i32) {
    %c0_i32 = arith.constant 0 : i32
    %c0_i32_0 = arith.constant 0 : i32
    %c0_i32_1 = arith.constant 0 : i32
    return %c0_i32, %c0_i32_0 : i32, i32
  }
  func.func @transform_2(%arg0: i32) -> (i32, i32) {
    %c0_i32 = arith.constant 0 : i32
    %c0_i32_0 = arith.constant 0 : i32
    %c0_i32_1 = arith.constant 0 : i32
    return %c0_i32, %c0_i32_0 : i32, i32
  }
  func.func @transform_3(%arg0: i32) -> (i32, i32) {
    %c0_i32 = arith.constant 0 : i32
    %c0_i32_0 = arith.constant 0 : i32
    return %arg0, %c0_i32 : i32, i32
  }
  func.func @transform_4(%arg0: i32) -> (i32, i32) {
    %c0_i32 = arith.constant 0 : i32
    %c0_i32_0 = arith.constant 0 : i32
    return %arg0, %c0_i32 : i32, i32
  }
}

module attributes {stable_mosaic.version = 11 : i64} {
  func.func @_avgpool_kernel(%arg0: i32, %arg1: memref<2x1x128xbf16, #tpu.memory_space<vmem>>, %arg2: memref<2x128xf32, #tpu.memory_space<vmem>>) attributes {dimension_semantics = [#tpu.dimension_semantics<arbitrary>], iteration_bounds = array<i64: 1>, scalar_prefetch = 0 : i64, scratch_operands = 0 : i64, tpu.core_type = #tpu.core_type<tc>, window_params = [{pipeline_mode = #tpu.pipeline_mode<synchronous>, transform_indices = @transform_0, window_bounds = array<i64: 2, 1, 128>}, {pipeline_mode = #tpu.pipeline_mode<synchronous>, transform_indices = @transform_1, window_bounds = array<i64: 2, 128>}]} {
    %c0 = arith.constant 0 : index
    %c0_0 = arith.constant 0 : index
    %c0_1 = arith.constant 0 : index
    %0 = vector.load %arg1[%c0, %c0_0, %c0_1] : memref<2x1x128xbf16, #tpu.memory_space<vmem>>, vector<2x1x128xbf16>
    %1 = arith.extf %0 : vector<2x1x128xbf16> to vector<2x1x128xf32>
    %cst = arith.constant dense<0.000000e+00> : vector<2x128xf32>
    %2 = vector.multi_reduction <add>, %1, %cst [1] : vector<2x1x128xf32> to vector<2x128xf32>
    %cst_2 = arith.constant 1.000000e+00 : f32
    %3 = vector.broadcast %cst_2 : f32 to vector<2x128xf32>
    %4 = arith.mulf %2, %3 : vector<2x128xf32>
    %c0_3 = arith.constant 0 : index
    %c0_4 = arith.constant 0 : index
    %5 = vector.load %arg2[%c0_3, %c0_4] : memref<2x128xf32, #tpu.memory_space<vmem>>, vector<2x128xf32>
    tpu.vector_store %arg2[%c0_3, %c0_4], %4 {strides = array<i32>} : memref<2x128xf32, #tpu.memory_space<vmem>>, vector<2x128xf32>,
    return
  }
  func.func @transform_0(%arg0: i32) -> (i32, i32, i32) {
    %c0_i32 = arith.constant 0 : i32
    %c0_i32_0 = arith.constant 0 : i32
    %c0_i32_1 = arith.constant 0 : i32
    %c0_i32_2 = arith.constant 0 : i32
    return %c0_i32, %c0_i32_0, %c0_i32_1 : i32, i32, i32
  }
  func.func @transform_1(%arg0: i32) -> (i32, i32) {
    %c0_i32 = arith.constant 0 : i32
    %c0_i32_0 = arith.constant 0 : i32
    %c0_i32_1 = arith.constant 0 : i32
    return %c0_i32, %c0_i32_0 : i32, i32
  }
}

</mosaic_0001>

<llo_original>
// kernel: my_resnet_forward.22
$region0: #{my_resnet_forward.22}
  #allocation0 [shape = 'u32[]', space=smem, size = 0x4, offset = 0x4, fixed_abs, tag = 'smem constant byte address 0x4 - core index']
  #allocation1 [shape = 'u32[72,128]{1,0:T(1,128)}', space=vmem, size = 0x9000, scoped, tag = 'internal scratch']
  %s0 = inlined_call_operand.vmem [shape: bf16[512,256], index: 0, kind: input, shape index: {}]
  %s1 = inlined_call_operand.vmem [shape: bf16[256,128], index: 1, kind: input, shape index: {}]
  %s2 = inlined_call_operand.vmem [shape: f32[1,128], index: 2, kind: input, shape index: {}]
  %s3 = inlined_call_operand.vmem [shape: bf16[512,128], index: 3, kind: output, shape index: {}]
  %s4 = sld [smem:[#allocation0]]
  $region45: #{my_resnet_forward.22} parent=0
    _
  %s6 = ssub.s32 1, %s4
  %s7 = scalar_select 0, %s6, %s4
  loop: start=0, step=1, limit=4
  $region2: #{my_resnet_forward.22} parent=0 // loop_pre_header
    _
  $region3: #{my_resnet_forward.22} parent=0 // loop_header
    %s9 = sphi 0, %s13
    %p10 = scmp.ge.s32.totalorder %s9, 4
    %s19 = sphi 0, %s21
    %s22 = sphi 0, %s19
    %s23 = sphi 0, %s22
    %s39 = sphi 0, %s23
    %s43 = sphi 0, %s43
    %s45 = sphi 0, %s43
    %s46 = sphi 0, %s45
    %s60 = sphi 0, %s46
    %s64 = sphi 0, %s64
    %s66 = sphi 0, %s64
    %s67 = sphi 0, %s66
    %s81 = sphi 0, %s67
    %s87 = sphi 0, %s89
    %s90 = sphi 0, %s87
    %s91 = sphi 0, %s90
    %s107 = sphi 0, %s91
  $region4: #{my_resnet_forward.22} parent=0 // loop_header_branch
    %12 = sbr.rel (%p10) target = $region8
  $region5: #{my_resnet_forward.22} parent=0 // loop_body
    %s14 = ssub.s32 %s9, 1
    %s15 = ssub.s32 %s9, 2
    %s16 = sadd.s32 %s9, 1
    %s17 = ssub.s32 %s9, %s16
    %p18 = scmp.eq.s32.totalorder %s17, 0
    %s20 = sadd.s32 %s19, 1
    %s21 = scalar_select %p18, %s19, %s20
    %p24 = pneg %p18
    %p25 = scmp.eq.s32.totalorder %s9, 1
    %p26 = por %p24, %p25
    %p27 = scmp.ne.s32.totalorder %s19, %s22
    %p28 = scmp.eq.s32.totalorder %s9, 0
    %p29 = por %p27, %p28
    %p30 = scmp.ne.s32.totalorder %s19, %s22
    %p31 = scmp.eq.s32.totalorder %s14, 1
    %p32 = por %p30, %p31
    %p33 = scmp.ne.s32.totalorder %s22, %s23
    %p34 = scmp.eq.s32.totalorder %s14, 0
    %p35 = por %p33, %p34
    %p36 = scmp.ne.s32.totalorder %s22, %s23
    %p37 = scmp.eq.s32.totalorder %s15, 1
    %p38 = por %p36, %p37
    %p40 = scmp.ne.s32.totalorder %s23, %s39
    %p41 = scmp.eq.s32.totalorder %s15, 0
    %p42 = por %p40, %p41
    %s44 = sadd.s32 %s43, 1
    %p47 = scmp.eq.s32.totalorder %s9, 1
    %p48 = scmp.ne.s32.totalorder %s43, %s45
    %p49 = scmp.eq.s32.totalorder %s9, 0
    %p50 = por %p48, %p49
    %p51 = scmp.ne.s32.totalorder %s43, %s45
    %p52 = scmp.eq.s32.totalorder %s14, 1
    %p53 = por %p51, %p52
    %p54 = scmp.ne.s32.totalorder %s45, %s46
    %p55 = scmp.eq.s32.totalorder %s14, 0
    %p56 = por %p54, %p55
    %p57 = scmp.ne.s32.totalorder %s45, %s46
    %p58 = scmp.eq.s32.totalorder %s15, 1
    %p59 = por %p57, %p58
    %p61 = scmp.ne.s32.totalorder %s46, %s60
    %p62 = scmp.eq.s32.totalorder %s15, 0
    %p63 = por %p61, %p62
    %s65 = sadd.s32 %s64, 1
    %p68 = scmp.eq.s32.totalorder %s9, 1
    %p69 = scmp.ne.s32.totalorder %s64, %s66
    %p70 = scmp.eq.s32.totalorder %s9, 0
    %p71 = por %p69, %p70
    %p72 = scmp.ne.s32.totalorder %s64, %s66
    %p73 = scmp.eq.s32.totalorder %s14, 1
    %p74 = por %p72, %p73
    %p75 = scmp.ne.s32.totalorder %s66, %s67
    %p76 = scmp.eq.s32.totalorder %s14, 0
    %p77 = por %p75, %p76
    %p78 = scmp.ne.s32.totalorder %s66, %s67
    %p79 = scmp.eq.s32.totalorder %s15, 1
    %p80 = por %p78, %p79
    %p82 = scmp.ne.s32.totalorder %s67, %s81
    %p83 = scmp.eq.s32.totalorder %s15, 0
    %p84 = por %p82, %p83
    %s85 = ssub.s32 %s9, %s16
    %p86 = scmp.eq.s32.totalorder %s85, 0
    %s88 = sadd.s32 %s87, 1
    %s89 = scalar_select %p86, %s87, %s88
    %p92 = pneg %p86
    %p93 = scmp.eq.s32.totalorder %s9, 1
    %p94 = por %p92, %p93
    %p95 = scmp.ne.s32.totalorder %s87, %s90
    %p96 = scmp.eq.s32.totalorder %s9, 0
    %p97 = por %p95, %p96
    %p98 = scmp.ne.s32.totalorder %s87, %s90
    %p99 = scmp.eq.s32.totalorder %s14, 1
    %p100 = por %p98, %p99
    %p101 = scmp.ne.s32.totalorder %s90, %s91
    %p102 = scmp.eq.s32.totalorder %s14, 0
    %p103 = por %p101, %p102
    %p104 = scmp.ne.s32.totalorder %s90, %s91
    %p105 = scmp.eq.s32.totalorder %s15, 1
    %p106 = por %p104, %p105
    %p108 = scmp.ne.s32.totalorder %s91, %s107
    %p109 = scmp.eq.s32.totalorder %s15, 0
    %p110 = por %p108, %p109
    %p111 = scmp.le.s32.totalorder 1, %s9
    %p112 = scmp.lt.s32.totalorder %s9, 3
    %p113 = pnand %p111, %p112
    %p114 = pneg %p113
    // Predicated region
    $region9: #{my_resnet_forward.22} parent=5 // pred_check
      _
    $region10: #{my_resnet_forward.22} parent=5 // pred_check_branch
      %116 = sbr.rel (%p113) target = $region12
    $region11: #{my_resnet_forward.22} parent=5 // pred_region
      %s117 = ssub.s32 %s9, 1
      // Predicated region
      $region13: #{my_resnet_forward.22} parent=11 // pred_check
        %p118 = pneg %p56
      $region14: #{my_resnet_forward.22} parent=11 // pred_check_branch
        %120 = sbr.rel (%p118) target = $region16
      $region15: #{my_resnet_forward.22} parent=11 // pred_region
        _
      $region16: #{my_resnet_forward.22} parent=11 // pred_fallthru
        _
      // Predicated region
      $region17: #{my_resnet_forward.22} parent=11 // pred_check
        %p121 = pneg %p77
      $region18: #{my_resnet_forward.22} parent=11 // pred_check_branch
        %123 = sbr.rel (%p121) target = $region20
      $region19: #{my_resnet_forward.22} parent=11 // pred_region
        _
      $region20: #{my_resnet_forward.22} parent=11 // pred_fallthru
        _
    $region12: #{my_resnet_forward.22} parent=5 // pred_fallthru
      _
    %p124 = scmp.lt.s32.totalorder %s9, 2
    // Predicated region
    $region21: #{my_resnet_forward.22} parent=5 // pred_check
      %p125 = pneg %p124
    $region22: #{my_resnet_forward.22} parent=5 // pred_check_branch
      %127 = sbr.rel (%p125) target = $region24
    $region23: #{my_resnet_forward.22} parent=5 // pred_region
      // Predicated region
      $region25: #{my_resnet_forward.22} parent=23 // pred_check
        %p128 = pneg %p29
      $region26: #{my_resnet_forward.22} parent=23 // pred_check_branch
        %130 = sbr.rel (%p128) target = $region28
      $region27: #{my_resnet_forward.22} parent=23 // pred_region
        %s131 = smul.u32 32, %s9
        %p132 = scmp.lt.s32.totalorder %s131, 63
        %s133 = scalar_select %p132, %s131, 63
        %s134 = smul.addr %s133, 2
        %s135 = smul.addr %s134, 4
        %s136 = scalar_lea.vmem %s0, %s135
        %s137 = smul.u32 32, %s9
      $region28: #{my_resnet_forward.22} parent=23 // pred_fallthru
        _
    $region24: #{my_resnet_forward.22} parent=5 // pred_fallthru
      _
    %p138 = scmp.le.s32.totalorder 1, %s9
    %p139 = scmp.lt.s32.totalorder %s9, 3
    %p140 = pnand %p138, %p139
    %p141 = pneg %p140
    // Predicated region
    $region29: #{my_resnet_forward.22} parent=5 // pred_check
      _
    $region30: #{my_resnet_forward.22} parent=5 // pred_check_branch
      %143 = sbr.rel (%p140) target = $region32
    $region31: #{my_resnet_forward.22} parent=5 // pred_region
      %s144 = ssub.s32 %s9, 1
      %s145 = smul.u32 32, %s14
      %p146 = scmp.lt.s32.totalorder %s145, 63
      %s147 = scalar_select %p146, %s145, 63
      %s148 = smul.addr %s147, 2
      %s149 = smul.addr %s148, 4
      %s150 = scalar_lea.vmem %s0, %s149
      %p151 = pneg %p35
      %p152 = pneg %p32
      %p153 = pneg %p56
      %p154 = pneg %p53
      %p155 = pneg %p77
      %p156 = pneg %p74
      %p157 = pneg %p103
      %p158 = pneg %p100
      %s159 = smul.u32 32, %s14
      %p160 = scmp.lt.s32.totalorder %s159, 63
      %s161 = scalar_select %p160, %s159, 63
      %s162 = smul.addr %s161, 4
      %s163 = scalar_lea.vmem %s3, %s162
      %s164 = smul.u32 32, %s14
      %p165 = scmp.lt.s32.totalorder %s164, 63
      %s166 = scalar_select %p165, %s164, 63
      %s167 = smul.addr %s166, 2
      %s168 = smul.addr %s167, 4
      %s169 = scalar_lea.vmem %s0, %s168
      %s170 = smul.u32 32, %s14
      %s171 = smul.u32 32, %s14
      %p172 = scmp.lt.s32.totalorder %s171, 63
      %s173 = scalar_select %p172, %s171, 63
      %s174 = smul.addr %s173, 4
      %s175 = scalar_lea.vmem %s3, %s174
      %s176 = smul.u32 32, %s14
      %v177 = vld [vmem:[%s169] sm:$0xff]
      %v178 = vld [vmem:[%s169 + $0x8] sm:$0xff]
      %v179 = vld [vmem:[%s169 + $0x10] sm:$0xff]
      %v180 = vld [vmem:[%s169 + $0x18] sm:$0xff]
      %v181 = vld [vmem:[%s169 + $0x20] sm:$0xff]
      %v182 = vld [vmem:[%s169 + $0x28] sm:$0xff]
      %v183 = vld [vmem:[%s169 + $0x30] sm:$0xff]
      %v184 = vld [vmem:[%s169 + $0x38] sm:$0xff]
      %v185 = vld [vmem:[%s169 + $0x40] sm:$0xff]
      %v186 = vld [vmem:[%s169 + $0x48] sm:$0xff]
      %v187 = vld [vmem:[%s169 + $0x50] sm:$0xff]
      %v188 = vld [vmem:[%s169 + $0x58] sm:$0xff]
      %v189 = vld [vmem:[%s169 + $0x60] sm:$0xff]
      %v190 = vld [vmem:[%s169 + $0x68] sm:$0xff]
      %v191 = vld [vmem:[%s169 + $0x70] sm:$0xff]
      %v192 = vld [vmem:[%s169 + $0x78] sm:$0xff]
      %v193 = vld [vmem:[%s169 + $0x80] sm:$0xff]
      %v194 = vld [vmem:[%s169 + $0x88] sm:$0xff]
      %v195 = vld [vmem:[%s169 + $0x90] sm:$0xff]
      %v196 = vld [vmem:[%s169 + $0x98] sm:$0xff]
      %v197 = vld [vmem:[%s169 + $0xa0] sm:$0xff]
      %v198 = vld [vmem:[%s169 + $0xa8] sm:$0xff]
      %v199 = vld [vmem:[%s169 + $0xb0] sm:$0xff]
      %v200 = vld [vmem:[%s169 + $0xb8] sm:$0xff]
      %v201 = vld [vmem:[%s169 + $0xc0] sm:$0xff]
      %v202 = vld [vmem:[%s169 + $0xc8] sm:$0xff]
      %v203 = vld [vmem:[%s169 + $0xd0] sm:$0xff]
      %v204 = vld [vmem:[%s169 + $0xd8] sm:$0xff]
      %v205 = vld [vmem:[%s169 + $0xe0] sm:$0xff]
      %v206 = vld [vmem:[%s169 + $0xe8] sm:$0xff]
      %v207 = vld [vmem:[%s169 + $0xf0] sm:$0xff]
      %v208 = vld [vmem:[%s169 + $0xf8] sm:$0xff]
      %v209 = vld [vmem:[%s1] sm:$0xf]
      %v210 = vld [vmem:[%s1 + $0x4] sm:$0xf]
      %v211 = vld [vmem:[%s1 + $0x8] sm:$0xf]
      %v212 = vld [vmem:[%s1 + $0xc] sm:$0xf]
      %v213 = vld [vmem:[%s1 + $0x10] sm:$0xf]
      %v214 = vld [vmem:[%s1 + $0x14] sm:$0xf]
      %v215 = vld [vmem:[%s1 + $0x18] sm:$0xf]
      %v216 = vld [vmem:[%s1 + $0x1c] sm:$0xf]
      %v217 = vld [vmem:[%s1 + $0x20] sm:$0xf]
      %v218 = vld [vmem:[%s1 + $0x24] sm:$0xf]
      %v219 = vld [vmem:[%s1 + $0x28] sm:$0xf]
      %v220 = vld [vmem:[%s1 + $0x2c] sm:$0xf]
      %v221 = vld [vmem:[%s1 + $0x30] sm:$0xf]
      %v222 = vld [vmem:[%s1 + $0x34] sm:$0xf]
      %v223 = vld [vmem:[%s1 + $0x38] sm:$0xf]
      %v224 = vld [vmem:[%s1 + $0x3c] sm:$0xf]
      %v225 = vld [vmem:[%s1 + $0x40] sm:$0xf]
      %v226 = vld [vmem:[%s1 + $0x44] sm:$0xf]
      %v227 = vld [vmem:[%s1 + $0x48] sm:$0xf]
      %v228 = vld [vmem:[%s1 + $0x4c] sm:$0xf]
      %v229 = vld [vmem:[%s1 + $0x50] sm:$0xf]
      %v230 = vld [vmem:[%s1 + $0x54] sm:$0xf]
      %v231 = vld [vmem:[%s1 + $0x58] sm:$0xf]
      %v232 = vld [vmem:[%s1 + $0x5c] sm:$0xf]
      %v233 = vld [vmem:[%s1 + $0x60] sm:$0xf]
      %v234 = vld [vmem:[%s1 + $0x64] sm:$0xf]
      %v235 = vld [vmem:[%s1 + $0x68] sm:$0xf]
      %v236 = vld [vmem:[%s1 + $0x6c] sm:$0xf]
      %v237 = vld [vmem:[%s1 + $0x70] sm:$0xf]
      %v238 = vld [vmem:[%s1 + $0x74] sm:$0xf]
      %v239 = vld [vmem:[%s1 + $0x78] sm:$0xf]
      %v240 = vld [vmem:[%s1 + $0x7c] sm:$0xf]
      %v241 = vld [vmem:[%s2] sm:$0x1]
      %v243 = vperm.slane %v241, 0
      %v277 = vunpack.c.l.b16 %v177
      %v278 = vunpack.c.h.b16 %v177
      %v279 = vunpack.c.l.b16 %v178
      %v280 = vunpack.c.h.b16 %v178
      %v281 = vunpack.c.l.b16 %v179
      %v282 = vunpack.c.h.b16 %v179
      %v283 = vunpack.c.l.b16 %v180
      %v284 = vunpack.c.h.b16 %v180
      %v285 = vunpack.c.l.b16 %v181
      %v286 = vunpack.c.h.b16 %v181
      %v287 = vunpack.c.l.b16 %v182
      %v288 = vunpack.c.h.b16 %v182
      %v289 = vunpack.c.l.b16 %v183
      %v290 = vunpack.c.h.b16 %v183
      %v291 = vunpack.c.l.b16 %v184
      %v292 = vunpack.c.h.b16 %v184
      %v293 = vunpack.c.l.b16 %v185
      %v294 = vunpack.c.h.b16 %v185
      %v295 = vunpack.c.l.b16 %v186
      %v296 = vunpack.c.h.b16 %v186
      %v297 = vunpack.c.l.b16 %v187
      %v298 = vunpack.c.h.b16 %v187
      %v299 = vunpack.c.l.b16 %v188
      %v300 = vunpack.c.h.b16 %v188
      %v301 = vunpack.c.l.b16 %v189
      %v302 = vunpack.c.h.b16 %v189
      %v303 = vunpack.c.l.b16 %v190
      %v304 = vunpack.c.h.b16 %v190
      %v305 = vunpack.c.l.b16 %v191
      %v306 = vunpack.c.h.b16 %v191
      %v307 = vunpack.c.l.b16 %v192
      %v308 = vunpack.c.h.b16 %v192
      %v309 = vunpack.c.l.b16 %v193
      %v310 = vunpack.c.h.b16 %v193
      %v311 = vunpack.c.l.b16 %v194
      %v312 = vunpack.c.h.b16 %v194
      %v313 = vunpack.c.l.b16 %v195
      %v314 = vunpack.c.h.b16 %v195
      %v315 = vunpack.c.l.b16 %v196
      %v316 = vunpack.c.h.b16 %v196
      %v317 = vunpack.c.l.b16 %v197
      %v318 = vunpack.c.h.b16 %v197
      %v319 = vunpack.c.l.b16 %v198
      %v320 = vunpack.c.h.b16 %v198
      %v321 = vunpack.c.l.b16 %v199
      %v322 = vunpack.c.h.b16 %v199
      %v323 = vunpack.c.l.b16 %v200
      %v324 = vunpack.c.h.b16 %v200
      %v325 = vunpack.c.l.b16 %v201
      %v326 = vunpack.c.h.b16 %v201
      %v327 = vunpack.c.l.b16 %v202
      %v328 = vunpack.c.h.b16 %v202
      %v329 = vunpack.c.l.b16 %v203
      %v330 = vunpack.c.h.b16 %v203
      %v331 = vunpack.c.l.b16 %v204
      %v332 = vunpack.c.h.b16 %v204
      %v333 = vunpack.c.l.b16 %v205
      %v334 = vunpack.c.h.b16 %v205
      %v335 = vunpack.c.l.b16 %v206
      %v336 = vunpack.c.h.b16 %v206
      %v337 = vunpack.c.l.b16 %v207
      %v338 = vunpack.c.h.b16 %v207
      %v339 = vunpack.c.l.b16 %v208
      %v340 = vunpack.c.h.b16 %v208
      %v341 = vpack.c.b16 %v279, %v277
      %v342 = vpack.c.b16 %v280, %v278
      %v343 = vpack.c.b16 %v283, %v281
      %v344 = vpack.c.b16 %v284, %v282
      %v345 = vpack.c.b16 %v287, %v285
      %v346 = vpack.c.b16 %v288, %v286
      %v347 = vpack.c.b16 %v291, %v289
      %v348 = vpack.c.b16 %v292, %v290
      %v349 = vpack.c.b16 %v295, %v293
      %v350 = vpack.c.b16 %v296, %v294
      %v351 = vpack.c.b16 %v299, %v297
      %v352 = vpack.c.b16 %v300, %v298
      %v353 = vpack.c.b16 %v303, %v301
      %v354 = vpack.c.b16 %v304, %v302
      %v355 = vpack.c.b16 %v307, %v305
      %v356 = vpack.c.b16 %v308, %v306
      %v357 = vpack.c.b16 %v311, %v309
      %v358 = vpack.c.b16 %v312, %v310
      %v359 = vpack.c.b16 %v315, %v313
      %v360 = vpack.c.b16 %v316, %v314
      %v361 = vpack.c.b16 %v319, %v317
      %v362 = vpack.c.b16 %v320, %v318
      %v363 = vpack.c.b16 %v323, %v321
      %v364 = vpack.c.b16 %v324, %v322
      %v365 = vpack.c.b16 %v327, %v325
      %v366 = vpack.c.b16 %v328, %v326
      %v367 = vpack.c.b16 %v331, %v329
      %v368 = vpack.c.b16 %v332, %v330
      %v369 = vpack.c.b16 %v335, %v333
      %v370 = vpack.c.b16 %v336, %v334
      %v371 = vpack.c.b16 %v339, %v337
      %v372 = vpack.c.b16 %v340, %v338
      %v437 = vunpack.c.l.b16 %v209
      %v438 = vunpack.c.l.b16 %v210
      %v439 = vunpack.c.l.b16 %v211
      %v440 = vunpack.c.l.b16 %v212
      %v441 = vunpack.c.l.b16 %v213
      %v442 = vunpack.c.l.b16 %v214
      %v443 = vunpack.c.l.b16 %v215
      %v444 = vunpack.c.l.b16 %v216
      %v445 = vunpack.c.l.b16 %v217
      %v446 = vunpack.c.l.b16 %v218
      %v447 = vunpack.c.l.b16 %v219
      %v448 = vunpack.c.l.b16 %v220
      %v449 = vunpack.c.l.b16 %v221
      %v450 = vunpack.c.l.b16 %v222
      %v451 = vunpack.c.l.b16 %v223
      %v452 = vunpack.c.l.b16 %v224
      %v453 = vunpack.c.l.b16 %v225
      %v454 = vunpack.c.l.b16 %v226
      %v455 = vunpack.c.l.b16 %v227
      %v456 = vunpack.c.l.b16 %v228
      %v457 = vunpack.c.l.b16 %v229
      %v458 = vunpack.c.l.b16 %v230
      %v459 = vunpack.c.l.b16 %v231
      %v460 = vunpack.c.l.b16 %v232
      %v461 = vunpack.c.l.b16 %v233
      %v462 = vunpack.c.l.b16 %v234
      %v463 = vunpack.c.l.b16 %v235
      %v464 = vunpack.c.l.b16 %v236
      %v465 = vunpack.c.l.b16 %v237
      %v466 = vunpack.c.l.b16 %v238
      %v467 = vunpack.c.l.b16 %v239
      %v468 = vunpack.c.l.b16 %v240
      %v469 = vpack.c.b16 %v438, %v437
      %v470 = vpack.c.b16 %v440, %v439
      %v471 = vpack.c.b16 %v442, %v441
      %v472 = vpack.c.b16 %v444, %v443
      %v473 = vpack.c.b16 %v446, %v445
      %v474 = vpack.c.b16 %v448, %v447
      %v475 = vpack.c.b16 %v450, %v449
      %v476 = vpack.c.b16 %v452, %v451
      %v477 = vpack.c.b16 %v454, %v453
      %v478 = vpack.c.b16 %v456, %v455
      %v479 = vpack.c.b16 %v458, %v457
      %v480 = vpack.c.b16 %v460, %v459
      %v481 = vpack.c.b16 %v462, %v461
      %v482 = vpack.c.b16 %v464, %v463
      %v483 = vpack.c.b16 %v466, %v465
      %v484 = vpack.c.b16 %v468, %v467
      %501 = vmatpush.bf16.msra.mxu0 %v476
      %502 = vmatpush.bf16.msra.mxu0 %v475
      %503 = vmatpush.bf16.msra.mxu0 %v474
      %504 = vmatpush.bf16.msra.mxu0 %v473
      %505 = vmatpush.bf16.msra.mxu0 %v472
      %506 = vmatpush.bf16.msra.mxu0 %v471
      %507 = vmatpush.bf16.msra.mxu0 %v470
      %508 = vmatpush.bf16.msra.mxu0 %v469
      %509 = vmatmul.bf16.gmra.mxu0 %v341
      %v510 = vpop.f32.mrf.mxu0
      %v511 = vadd.f32 %v243, %v510
      %v512 = vpop.f32.mrf.mxu0
      %v513 = vadd.f32 %v243, %v512
      %514 = vmatmul.bf16.gmra.mxu0 %v343
      %v515 = vpop.f32.mrf.mxu0
      %v516 = vadd.f32 %v243, %v515
      %v517 = vpop.f32.mrf.mxu0
      %v518 = vadd.f32 %v243, %v517
      %519 = vmatmul.bf16.gmra.mxu0 %v345
      %v520 = vpop.f32.mrf.mxu0
      %v521 = vadd.f32 %v243, %v520
      %v522 = vpop.f32.mrf.mxu0
      %v523 = vadd.f32 %v243, %v522
      %524 = vmatmul.bf16.gmra.mxu0 %v347
      %v525 = vpop.f32.mrf.mxu0
      %v526 = vadd.f32 %v243, %v525
      %v527 = vpop.f32.mrf.mxu0
      %v528 = vadd.f32 %v243, %v527
      %529 = vmatmul.bf16.gmra.mxu0 %v349
      %v530 = vpop.f32.mrf.mxu0
      %v531 = vadd.f32 %v243, %v530
      %v532 = vpop.f32.mrf.mxu0
      %v533 = vadd.f32 %v243, %v532
      %534 = vmatmul.bf16.gmra.mxu0 %v351
      %v535 = vpop.f32.mrf.mxu0
      %v536 = vadd.f32 %v243, %v535
      %v537 = vpop.f32.mrf.mxu0
      %v538 = vadd.f32 %v243, %v537
      %539 = vmatmul.bf16.gmra.mxu0 %v353
      %v540 = vpop.f32.mrf.mxu0
      %v541 = vadd.f32 %v243, %v540
      %v542 = vpop.f32.mrf.mxu0
      %v543 = vadd.f32 %v243, %v542
      %544 = vmatmul.bf16.gmra.mxu0 %v355
      %v545 = vpop.f32.mrf.mxu0
      %v546 = vadd.f32 %v243, %v545
      %v547 = vpop.f32.mrf.mxu0
      %v548 = vadd.f32 %v243, %v547
      %549 = vmatmul.bf16.gmra.mxu0 %v357
      %v550 = vpop.f32.mrf.mxu0
      %v551 = vadd.f32 %v243, %v550
      %v552 = vpop.f32.mrf.mxu0
      %v553 = vadd.f32 %v243, %v552
      %554 = vmatmul.bf16.gmra.mxu0 %v359
      %v555 = vpop.f32.mrf.mxu0
      %v556 = vadd.f32 %v243, %v555
      %v557 = vpop.f32.mrf.mxu0
      %v558 = vadd.f32 %v243, %v557
      %559 = vmatmul.bf16.gmra.mxu0 %v361
      %v560 = vpop.f32.mrf.mxu0
      %v561 = vadd.f32 %v243, %v560
      %v562 = vpop.f32.mrf.mxu0
      %v563 = vadd.f32 %v243, %v562
      %564 = vmatmul.bf16.gmra.mxu0 %v363
      %v565 = vpop.f32.mrf.mxu0
      %v566 = vadd.f32 %v243, %v565
      %v567 = vpop.f32.mrf.mxu0
      %v568 = vadd.f32 %v243, %v567
      %569 = vmatmul.bf16.gmra.mxu0 %v365
      %v570 = vpop.f32.mrf.mxu0
      %v571 = vadd.f32 %v243, %v570
      %v572 = vpop.f32.mrf.mxu0
      %v573 = vadd.f32 %v243, %v572
      %574 = vmatmul.bf16.gmra.mxu0 %v367
      %v575 = vpop.f32.mrf.mxu0
      %v576 = vadd.f32 %v243, %v575
      %v577 = vpop.f32.mrf.mxu0
      %v578 = vadd.f32 %v243, %v577
      %579 = vmatmul.bf16.gmra.mxu0 %v369
      %v580 = vpop.f32.mrf.mxu0
      %v581 = vadd.f32 %v243, %v580
      %v582 = vpop.f32.mrf.mxu0
      %v583 = vadd.f32 %v243, %v582
      %584 = vmatmul.bf16.gmra.mxu0 %v371
      %v585 = vpop.f32.mrf.mxu0
      %v586 = vadd.f32 %v243, %v585
      %v587 = vpop.f32.mrf.mxu0
      %v588 = vadd.f32 %v243, %v587
      %589 = vdwg.mxu0
      %590 = vmatpush.bf16.msra.mxu0 %v484
      %591 = vmatpush.bf16.msra.mxu0 %v483
      %592 = vmatpush.bf16.msra.mxu0 %v482
      %593 = vmatpush.bf16.msra.mxu0 %v481
      %594 = vmatpush.bf16.msra.mxu0 %v480
      %595 = vmatpush.bf16.msra.mxu0 %v479
      %596 = vmatpush.bf16.msra.mxu0 %v478
      %597 = vmatpush.bf16.msra.mxu0 %v477
      %598 = vmatmul.bf16.gmra.mxu0 %v342
      %v599 = vpop.f32.mrf.mxu0
      %v600 = vadd.f32 %v511, %v599
      %v601 = vpop.f32.mrf.mxu0
      %v602 = vadd.f32 %v513, %v601
      %603 = vmatmul.bf16.gmra.mxu0 %v344
      %v604 = vpop.f32.mrf.mxu0
      %v605 = vadd.f32 %v516, %v604
      %v606 = vpop.f32.mrf.mxu0
      %v607 = vadd.f32 %v518, %v606
      %608 = vmatmul.bf16.gmra.mxu0 %v346
      %v609 = vpop.f32.mrf.mxu0
      %v610 = vadd.f32 %v521, %v609
      %v611 = vpop.f32.mrf.mxu0
      %v612 = vadd.f32 %v523, %v611
      %613 = vmatmul.bf16.gmra.mxu0 %v348
      %v614 = vpop.f32.mrf.mxu0
      %v615 = vadd.f32 %v526, %v614
      %v616 = vpop.f32.mrf.mxu0
      %v617 = vadd.f32 %v528, %v616
      %618 = vmatmul.bf16.gmra.mxu0 %v350
      %v619 = vpop.f32.mrf.mxu0
      %v620 = vadd.f32 %v531, %v619
      %v621 = vpop.f32.mrf.mxu0
      %v622 = vadd.f32 %v533, %v621
      %623 = vmatmul.bf16.gmra.mxu0 %v352
      %v624 = vpop.f32.mrf.mxu0
      %v625 = vadd.f32 %v536, %v624
      %v626 = vpop.f32.mrf.mxu0
      %v627 = vadd.f32 %v538, %v626
      %628 = vmatmul.bf16.gmra.mxu0 %v354
      %v629 = vpop.f32.mrf.mxu0
      %v630 = vadd.f32 %v541, %v629
      %v631 = vpop.f32.mrf.mxu0
      %v632 = vadd.f32 %v543, %v631
      %633 = vmatmul.bf16.gmra.mxu0 %v356
      %v634 = vpop.f32.mrf.mxu0
      %v635 = vadd.f32 %v546, %v634
      %v636 = vpop.f32.mrf.mxu0
      %v637 = vadd.f32 %v548, %v636
      %638 = vmatmul.bf16.gmra.mxu0 %v358
      %v639 = vpop.f32.mrf.mxu0
      %v640 = vadd.f32 %v551, %v639
      %v641 = vpop.f32.mrf.mxu0
      %v642 = vadd.f32 %v553, %v641
      %643 = vmatmul.bf16.gmra.mxu0 %v360
      %v644 = vpop.f32.mrf.mxu0
      %v645 = vadd.f32 %v556, %v644
      %v646 = vpop.f32.mrf.mxu0
      %v647 = vadd.f32 %v558, %v646
      %648 = vmatmul.bf16.gmra.mxu0 %v362
      %v649 = vpop.f32.mrf.mxu0
      %v650 = vadd.f32 %v561, %v649
      %v651 = vpop.f32.mrf.mxu0
      %v652 = vadd.f32 %v563, %v651
      %653 = vmatmul.bf16.gmra.mxu0 %v364
      %v654 = vpop.f32.mrf.mxu0
      %v655 = vadd.f32 %v566, %v654
      %v656 = vpop.f32.mrf.mxu0
      %v657 = vadd.f32 %v568, %v656
      %658 = vmatmul.bf16.gmra.mxu0 %v366
      %v659 = vpop.f32.mrf.mxu0
      %v660 = vadd.f32 %v571, %v659
      %v661 = vpop.f32.mrf.mxu0
      %v662 = vadd.f32 %v573, %v661
      %663 = vmatmul.bf16.gmra.mxu0 %v368
      %v664 = vpop.f32.mrf.mxu0
      %v665 = vadd.f32 %v576, %v664
      %v666 = vpop.f32.mrf.mxu0
      %v667 = vadd.f32 %v578, %v666
      %668 = vmatmul.bf16.gmra.mxu0 %v370
      %v669 = vpop.f32.mrf.mxu0
      %v670 = vadd.f32 %v581, %v669
      %v671 = vpop.f32.mrf.mxu0
      %v672 = vadd.f32 %v583, %v671
      %673 = vmatmul.bf16.gmra.mxu0 %v372
      %v674 = vpop.f32.mrf.mxu0
      %v675 = vadd.f32 %v586, %v674
      %v676 = vpop.f32.mrf.mxu0
      %v677 = vadd.f32 %v588, %v676
      %678 = vdwg.mxu0
      %v679 = vmax.f32 %v600, 0.0
      %v680 = vmax.f32 %v602, 0.0
      %v681 = vmax.f32 %v605, 0.0
      %v682 = vmax.f32 %v607, 0.0
      %v683 = vmax.f32 %v610, 0.0
      %v684 = vmax.f32 %v612, 0.0
      %v685 = vmax.f32 %v615, 0.0
      %v686 = vmax.f32 %v617, 0.0
      %v687 = vmax.f32 %v620, 0.0
      %v688 = vmax.f32 %v622, 0.0
      %v689 = vmax.f32 %v625, 0.0
      %v690 = vmax.f32 %v627, 0.0
      %v691 = vmax.f32 %v630, 0.0
      %v692 = vmax.f32 %v632, 0.0
      %v693 = vmax.f32 %v635, 0.0
      %v694 = vmax.f32 %v637, 0.0
      %v695 = vmax.f32 %v640, 0.0
      %v696 = vmax.f32 %v642, 0.0
      %v697 = vmax.f32 %v645, 0.0
      %v698 = vmax.f32 %v647, 0.0
      %v699 = vmax.f32 %v650, 0.0
      %v700 = vmax.f32 %v652, 0.0
      %v701 = vmax.f32 %v655, 0.0
      %v702 = vmax.f32 %v657, 0.0
      %v703 = vmax.f32 %v660, 0.0
      %v704 = vmax.f32 %v662, 0.0
      %v705 = vmax.f32 %v665, 0.0
      %v706 = vmax.f32 %v667, 0.0
      %v707 = vmax.f32 %v670, 0.0
      %v708 = vmax.f32 %v672, 0.0
      %v709 = vmax.f32 %v675, 0.0
      %v710 = vmax.f32 %v677, 0.0
      %v711 = vpack.c.bf16 %v679, %v679
      %v712 = vpack.c.bf16 %v680, %v680
      %v713 = vpack.c.bf16 %v681, %v681
      %v714 = vpack.c.bf16 %v682, %v682
      %v715 = vpack.c.bf16 %v683, %v683
      %v716 = vpack.c.bf16 %v684, %v684
      %v717 = vpack.c.bf16 %v685, %v685
      %v718 = vpack.c.bf16 %v686, %v686
      %v719 = vpack.c.bf16 %v687, %v687
      %v720 = vpack.c.bf16 %v688, %v688
      %v721 = vpack.c.bf16 %v689, %v689
      %v722 = vpack.c.bf16 %v690, %v690
      %v723 = vpack.c.bf16 %v691, %v691
      %v724 = vpack.c.bf16 %v692, %v692
      %v725 = vpack.c.bf16 %v693, %v693
      %v726 = vpack.c.bf16 %v694, %v694
      %v727 = vpack.c.bf16 %v695, %v695
      %v728 = vpack.c.bf16 %v696, %v696
      %v729 = vpack.c.bf16 %v697, %v697
      %v730 = vpack.c.bf16 %v698, %v698
      %v731 = vpack.c.bf16 %v699, %v699
      %v732 = vpack.c.bf16 %v700, %v700
      %v733 = vpack.c.bf16 %v701, %v701
      %v734 = vpack.c.bf16 %v702, %v702
      %v735 = vpack.c.bf16 %v703, %v703
      %v736 = vpack.c.bf16 %v704, %v704
      %v737 = vpack.c.bf16 %v705, %v705
      %v738 = vpack.c.bf16 %v706, %v706
      %v739 = vpack.c.bf16 %v707, %v707
      %v740 = vpack.c.bf16 %v708, %v708
      %v741 = vpack.c.bf16 %v709, %v709
      %v742 = vpack.c.bf16 %v710, %v710
      %743 = vst [vmem:[%s175] sm:$0xf] %v711
      %744 = vst [vmem:[%s175 + $0x4] sm:$0xf] %v712
      %745 = vst [vmem:[%s175 + $0x8] sm:$0xf] %v713
      %746 = vst [vmem:[%s175 + $0xc] sm:$0xf] %v714
      %747 = vst [vmem:[%s175 + $0x10] sm:$0xf] %v715
      %748 = vst [vmem:[%s175 + $0x14] sm:$0xf] %v716
      %749 = vst [vmem:[%s175 + $0x18] sm:$0xf] %v717
      %750 = vst [vmem:[%s175 + $0x1c] sm:$0xf] %v718
      %751 = vst [vmem:[%s175 + $0x20] sm:$0xf] %v719
      %752 = vst [vmem:[%s175 + $0x24] sm:$0xf] %v720
      %753 = vst [vmem:[%s175 + $0x28] sm:$0xf] %v721
      %754 = vst [vmem:[%s175 + $0x2c] sm:$0xf] %v722
      %755 = vst [vmem:[%s175 + $0x30] sm:$0xf] %v723
      %756 = vst [vmem:[%s175 + $0x34] sm:$0xf] %v724
      %757 = vst [vmem:[%s175 + $0x38] sm:$0xf] %v725
      %758 = vst [vmem:[%s175 + $0x3c] sm:$0xf] %v726
      %759 = vst [vmem:[%s175 + $0x40] sm:$0xf] %v727
      %760 = vst [vmem:[%s175 + $0x44] sm:$0xf] %v728
      %761 = vst [vmem:[%s175 + $0x48] sm:$0xf] %v729
      %762 = vst [vmem:[%s175 + $0x4c] sm:$0xf] %v730
      %763 = vst [vmem:[%s175 + $0x50] sm:$0xf] %v731
      %764 = vst [vmem:[%s175 + $0x54] sm:$0xf] %v732
      %765 = vst [vmem:[%s175 + $0x58] sm:$0xf] %v733
      %766 = vst [vmem:[%s175 + $0x5c] sm:$0xf] %v734
      %767 = vst [vmem:[%s175 + $0x60] sm:$0xf] %v735
      %768 = vst [vmem:[%s175 + $0x64] sm:$0xf] %v736
      %769 = vst [vmem:[%s175 + $0x68] sm:$0xf] %v737
      %770 = vst [vmem:[%s175 + $0x6c] sm:$0xf] %v738
      %771 = vst [vmem:[%s175 + $0x70] sm:$0xf] %v739
      %772 = vst [vmem:[%s175 + $0x74] sm:$0xf] %v740
      %773 = vst [vmem:[%s175 + $0x78] sm:$0xf] %v741
      %774 = vst [vmem:[%s175 + $0x7c] sm:$0xf] %v742
      %s775 = smul.u32 32, %s14
      %p776 = scmp.lt.s32.totalorder %s775, 63
      %s777 = scalar_select %p776, %s775, 63
      %s778 = smul.addr %s777, 4
      %s779 = scalar_lea.vmem %s3, %s778
      // Predicated region
      $region33: #{my_resnet_forward.22} parent=31 // pred_check
        %p780 = pneg %p100
      $region34: #{my_resnet_forward.22} parent=31 // pred_check_branch
        %782 = sbr.rel (%p780) target = $region36
      $region35: #{my_resnet_forward.22} parent=31 // pred_region
        %s783 = smul.u32 32, %s14
      $region36: #{my_resnet_forward.22} parent=31 // pred_fallthru
        _
    $region32: #{my_resnet_forward.22} parent=5 // pred_fallthru
      _
    %p784 = scmp.le.s32.totalorder 2, %s9
    // Predicated region
    $region37: #{my_resnet_forward.22} parent=5 // pred_check
      %p785 = pneg %p784
    $region38: #{my_resnet_forward.22} parent=5 // pred_check_branch
      %787 = sbr.rel (%p785) target = $region40
    $region39: #{my_resnet_forward.22} parent=5 // pred_region
      %s788 = ssub.s32 %s9, 2
      // Predicated region
      $region41: #{my_resnet_forward.22} parent=39 // pred_check
        %p789 = pneg %p106
      $region42: #{my_resnet_forward.22} parent=39 // pred_check_branch
        %791 = sbr.rel (%p789) target = $region44
      $region43: #{my_resnet_forward.22} parent=39 // pred_region
        %s792 = smul.u32 32, %s15
        %p793 = scmp.lt.s32.totalorder %s792, 63
        %s794 = scalar_select %p793, %s792, 63
        %s795 = smul.addr %s794, 4
        %s796 = scalar_lea.vmem %s3, %s795
      $region44: #{my_resnet_forward.22} parent=39 // pred_fallthru
        _
    $region40: #{my_resnet_forward.22} parent=5 // pred_fallthru
      _
  $region6: #{my_resnet_forward.22} parent=0 // loop_footer
    %s13 = sadd.s32 1, %s9
  $region7: #{my_resnet_forward.22} parent=0 // loop_footer_branch
    %8 = sbr.rel target = $region3
  $region8: #{my_resnet_forward.22} parent=0 // loop_exit
    _

// kernel: my_resnet_forward.24
$region0: #{my_resnet_forward.24}
  #allocation0 [shape = 'u32[]', space=smem, size = 0x4, offset = 0x4, fixed_abs, tag = 'smem constant byte address 0x4 - core index']
  #allocation1 [shape = 'u32[72,128]{1,0:T(1,128)}', space=vmem, size = 0x9000, scoped, tag = 'internal scratch']
  %s0 = inlined_call_operand.vmem [shape: bf16[128,1152], index: 0, kind: input, shape index: {}]
  %s1 = inlined_call_operand.vmem [shape: bf16[1152,128], index: 1, kind: input, shape index: {}]
  %s2 = inlined_call_operand.vmem [shape: f32[1,128], index: 2, kind: input, shape index: {}]
  %s3 = inlined_call_operand.vmem [shape: bf16[128,128], index: 3, kind: output, shape index: {}]
  %s4 = sld [smem:[#allocation0]]
  $region45: #{my_resnet_forward.24} parent=0
    _
  %s6 = ssub.s32 1, %s4
  %s7 = scalar_select 0, %s6, %s4
  loop: start=0, step=1, limit=4
  $region2: #{my_resnet_forward.24} parent=0 // loop_pre_header
    _
  $region3: #{my_resnet_forward.24} parent=0 // loop_header
    %s9 = sphi 0, %s13
    %p10 = scmp.ge.s32.totalorder %s9, 4
    %s19 = sphi 0, %s21
    %s22 = sphi 0, %s19
    %s23 = sphi 0, %s22
    %s39 = sphi 0, %s23
    %s43 = sphi 0, %s43
    %s45 = sphi 0, %s43
    %s46 = sphi 0, %s45
    %s60 = sphi 0, %s46
    %s64 = sphi 0, %s64
    %s66 = sphi 0, %s64
    %s67 = sphi 0, %s66
    %s81 = sphi 0, %s67
    %s87 = sphi 0, %s89
    %s90 = sphi 0, %s87
    %s91 = sphi 0, %s90
    %s107 = sphi 0, %s91
  $region4: #{my_resnet_forward.24} parent=0 // loop_header_branch
    %12 = sbr.rel (%p10) target = $region8
  $region5: #{my_resnet_forward.24} parent=0 // loop_body
    %s14 = ssub.s32 %s9, 1
    %s15 = ssub.s32 %s9, 2
    %s16 = sadd.s32 %s9, 1
    %s17 = ssub.s32 %s9, %s16
    %p18 = scmp.eq.s32.totalorder %s17, 0
    %s20 = sadd.s32 %s19, 1
    %s21 = scalar_select %p18, %s19, %s20
    %p24 = pneg %p18
    %p25 = scmp.eq.s32.totalorder %s9, 1
    %p26 = por %p24, %p25
    %p27 = scmp.ne.s32.totalorder %s19, %s22
    %p28 = scmp.eq.s32.totalorder %s9, 0
    %p29 = por %p27, %p28
    %p30 = scmp.ne.s32.totalorder %s19, %s22
    %p31 = scmp.eq.s32.totalorder %s14, 1
    %p32 = por %p30, %p31
    %p33 = scmp.ne.s32.totalorder %s22, %s23
    %p34 = scmp.eq.s32.totalorder %s14, 0
    %p35 = por %p33, %p34
    %p36 = scmp.ne.s32.totalorder %s22, %s23
    %p37 = scmp.eq.s32.totalorder %s15, 1
    %p38 = por %p36, %p37
    %p40 = scmp.ne.s32.totalorder %s23, %s39
    %p41 = scmp.eq.s32.totalorder %s15, 0
    %p42 = por %p40, %p41
    %s44 = sadd.s32 %s43, 1
    %p47 = scmp.eq.s32.totalorder %s9, 1
    %p48 = scmp.ne.s32.totalorder %s43, %s45
    %p49 = scmp.eq.s32.totalorder %s9, 0
    %p50 = por %p48, %p49
    %p51 = scmp.ne.s32.totalorder %s43, %s45
    %p52 = scmp.eq.s32.totalorder %s14, 1
    %p53 = por %p51, %p52
    %p54 = scmp.ne.s32.totalorder %s45, %s46
    %p55 = scmp.eq.s32.totalorder %s14, 0
    %p56 = por %p54, %p55
    %p57 = scmp.ne.s32.totalorder %s45, %s46
    %p58 = scmp.eq.s32.totalorder %s15, 1
    %p59 = por %p57, %p58
    %p61 = scmp.ne.s32.totalorder %s46, %s60
    %p62 = scmp.eq.s32.totalorder %s15, 0
    %p63 = por %p61, %p62
    %s65 = sadd.s32 %s64, 1
    %p68 = scmp.eq.s32.totalorder %s9, 1
    %p69 = scmp.ne.s32.totalorder %s64, %s66
    %p70 = scmp.eq.s32.totalorder %s9, 0
    %p71 = por %p69, %p70
    %p72 = scmp.ne.s32.totalorder %s64, %s66
    %p73 = scmp.eq.s32.totalorder %s14, 1
    %p74 = por %p72, %p73
    %p75 = scmp.ne.s32.totalorder %s66, %s67
    %p76 = scmp.eq.s32.totalorder %s14, 0
    %p77 = por %p75, %p76
    %p78 = scmp.ne.s32.totalorder %s66, %s67
    %p79 = scmp.eq.s32.totalorder %s15, 1
    %p80 = por %p78, %p79
    %p82 = scmp.ne.s32.totalorder %s67, %s81
    %p83 = scmp.eq.s32.totalorder %s15, 0
    %p84 = por %p82, %p83
    %s85 = ssub.s32 %s9, %s16
    %p86 = scmp.eq.s32.totalorder %s85, 0
    %s88 = sadd.s32 %s87, 1
    %s89 = scalar_select %p86, %s87, %s88
    %p92 = pneg %p86
    %p93 = scmp.eq.s32.totalorder %s9, 1
    %p94 = por %p92, %p93
    %p95 = scmp.ne.s32.totalorder %s87, %s90
    %p96 = scmp.eq.s32.totalorder %s9, 0
    %p97 = por %p95, %p96
    %p98 = scmp.ne.s32.totalorder %s87, %s90
    %p99 = scmp.eq.s32.totalorder %s14, 1
    %p100 = por %p98, %p99
    %p101 = scmp.ne.s32.totalorder %s90, %s91
    %p102 = scmp.eq.s32.totalorder %s14, 0
    %p103 = por %p101, %p102
    %p104 = scmp.ne.s32.totalorder %s90, %s91
    %p105 = scmp.eq.s32.totalorder %s15, 1
    %p106 = por %p104, %p105
    %p108 = scmp.ne.s32.totalorder %s91, %s107
    %p109 = scmp.eq.s32.totalorder %s15, 0
    %p110 = por %p108, %p109
    %p111 = scmp.le.s32.totalorder 1, %s9
    %p112 = scmp.lt.s32.totalorder %s9, 3
    %p113 = pnand %p111, %p112
    %p114 = pneg %p113
    // Predicated region
    $region9: #{my_resnet_forward.24} parent=5 // pred_check
      _
    $region10: #{my_resnet_forward.24} parent=5 // pred_check_branch
      %116 = sbr.rel (%p113) target = $region12
    $region11: #{my_resnet_forward.24} parent=5 // pred_region
      %s117 = ssub.s32 %s9, 1
      // Predicated region
      $region13: #{my_resnet_forward.24} parent=11 // pred_check
        %p118 = pneg %p56
      $region14: #{my_resnet_forward.24} parent=11 // pred_check_branch
        %120 = sbr.rel (%p118) target = $region16
      $region15: #{my_resnet_forward.24} parent=11 // pred_region
        _
      $region16: #{my_resnet_forward.24} parent=11 // pred_fallthru
        _
      // Predicated region
      $region17: #{my_resnet_forward.24} parent=11 // pred_check
        %p121 = pneg %p77
      $region18: #{my_resnet_forward.24} parent=11 // pred_check_branch
        %123 = sbr.rel (%p121) target = $region20
      $region19: #{my_resnet_forward.24} parent=11 // pred_region
        _
      $region20: #{my_resnet_forward.24} parent=11 // pred_fallthru
        _
    $region12: #{my_resnet_forward.24} parent=5 // pred_fallthru
      _
    %p124 = scmp.lt.s32.totalorder %s9, 2
    // Predicated region
    $region21: #{my_resnet_forward.24} parent=5 // pred_check
      %p125 = pneg %p124
    $region22: #{my_resnet_forward.24} parent=5 // pred_check_branch
      %127 = sbr.rel (%p125) target = $region24
    $region23: #{my_resnet_forward.24} parent=5 // pred_region
      // Predicated region
      $region25: #{my_resnet_forward.24} parent=23 // pred_check
        %p128 = pneg %p29
      $region26: #{my_resnet_forward.24} parent=23 // pred_check_branch
        %130 = sbr.rel (%p128) target = $region28
      $region27: #{my_resnet_forward.24} parent=23 // pred_region
        %s131 = smul.u32 8, %s9
        %p132 = scmp.lt.s32.totalorder %s131, 15
        %s133 = scalar_select %p132, %s131, 15
        %s134 = smul.addr %s133, 9
        %s135 = smul.addr %s134, 4
        %s136 = scalar_lea.vmem %s0, %s135
        %s137 = smul.u32 8, %s9
      $region28: #{my_resnet_forward.24} parent=23 // pred_fallthru
        _
    $region24: #{my_resnet_forward.24} parent=5 // pred_fallthru
      _
    %p138 = scmp.le.s32.totalorder 1, %s9
    %p139 = scmp.lt.s32.totalorder %s9, 3
    %p140 = pnand %p138, %p139
    %p141 = pneg %p140
    // Predicated region
    $region29: #{my_resnet_forward.24} parent=5 // pred_check
      _
    $region30: #{my_resnet_forward.24} parent=5 // pred_check_branch
      %143 = sbr.rel (%p140) target = $region32
    $region31: #{my_resnet_forward.24} parent=5 // pred_region
      %s144 = ssub.s32 %s9, 1
      %s145 = smul.u32 8, %s14
      %p146 = scmp.lt.s32.totalorder %s145, 15
      %s147 = scalar_select %p146, %s145, 15
      %s148 = smul.addr %s147, 9
      %s149 = smul.addr %s148, 4
      %s150 = scalar_lea.vmem %s0, %s149
      %p151 = pneg %p35
      %p152 = pneg %p32
      %p153 = pneg %p56
      %p154 = pneg %p53
      %p155 = pneg %p77
      %p156 = pneg %p74
      %p157 = pneg %p103
      %p158 = pneg %p100
      %s159 = smul.u32 8, %s14
      %p160 = scmp.lt.s32.totalorder %s159, 15
      %s161 = scalar_select %p160, %s159, 15
      %s162 = smul.addr %s161, 4
      %s163 = scalar_lea.vmem %s3, %s162
      %s164 = smul.u32 8, %s14
      %p165 = scmp.lt.s32.totalorder %s164, 15
      %s166 = scalar_select %p165, %s164, 15
      %s167 = smul.addr %s166, 9
      %s168 = smul.addr %s167, 4
      %s169 = scalar_lea.vmem %s0, %s168
      %s170 = smul.u32 8, %s14
      %s171 = smul.u32 8, %s14
      %p172 = scmp.lt.s32.totalorder %s171, 15
      %s173 = scalar_select %p172, %s171, 15
      %s174 = smul.addr %s173, 4
      %s175 = scalar_lea.vmem %s3, %s174
      %s176 = smul.u32 8, %s14
      %v177 = vld [vmem:[%s169] sm:$0xff]
      %v178 = vld [vmem:[%s169 + $0x8] sm:$0xff]
      %v179 = vld [vmem:[%s169 + $0x10] sm:$0xff]
      %v180 = vld [vmem:[%s169 + $0x18] sm:$0xff]
      %v181 = vld [vmem:[%s169 + $0x20] sm:$0xf]
      %v182 = vld [vmem:[%s169 + $0x24] sm:$0xff]
      %v183 = vld [vmem:[%s169 + $0x2c] sm:$0xff]
      %v184 = vld [vmem:[%s169 + $0x34] sm:$0xff]
      %v185 = vld [vmem:[%s169 + $0x3c] sm:$0xff]
      %v186 = vld [vmem:[%s169 + $0x44] sm:$0xf]
      %v187 = vld [vmem:[%s169 + $0x48] sm:$0xff]
      %v188 = vld [vmem:[%s169 + $0x50] sm:$0xff]
      %v189 = vld [vmem:[%s169 + $0x58] sm:$0xff]
      %v190 = vld [vmem:[%s169 + $0x60] sm:$0xff]
      %v191 = vld [vmem:[%s169 + $0x68] sm:$0xf]
      %v192 = vld [vmem:[%s169 + $0x6c] sm:$0xff]
      %v193 = vld [vmem:[%s169 + $0x74] sm:$0xff]
      %v194 = vld [vmem:[%s169 + $0x7c] sm:$0xff]
      %v195 = vld [vmem:[%s169 + $0x84] sm:$0xff]
      %v196 = vld [vmem:[%s169 + $0x8c] sm:$0xf]
      %v197 = vld [vmem:[%s169 + $0x90] sm:$0xff]
      %v198 = vld [vmem:[%s169 + $0x98] sm:$0xff]
      %v199 = vld [vmem:[%s169 + $0xa0] sm:$0xff]
      %v200 = vld [vmem:[%s169 + $0xa8] sm:$0xff]
      %v201 = vld [vmem:[%s169 + $0xb0] sm:$0xf]
      %v202 = vld [vmem:[%s169 + $0xb4] sm:$0xff]
      %v203 = vld [vmem:[%s169 + $0xbc] sm:$0xff]
      %v204 = vld [vmem:[%s169 + $0xc4] sm:$0xff]
      %v205 = vld [vmem:[%s169 + $0xcc] sm:$0xff]
      %v206 = vld [vmem:[%s169 + $0xd4] sm:$0xf]
      %v207 = vld [vmem:[%s169 + $0xd8] sm:$0xff]
      %v208 = vld [vmem:[%s169 + $0xe0] sm:$0xff]
      %v209 = vld [vmem:[%s169 + $0xe8] sm:$0xff]
      %v210 = vld [vmem:[%s169 + $0xf0] sm:$0xff]
      %v211 = vld [vmem:[%s169 + $0xf8] sm:$0xf]
      %v212 = vld [vmem:[%s169 + $0xfc] sm:$0xff]
      %v213 = vld [vmem:[%s169 + $0x104] sm:$0xff]
      %v214 = vld [vmem:[%s169 + $0x10c] sm:$0xff]
      %v215 = vld [vmem:[%s169 + $0x114] sm:$0xff]
      %v216 = vld [vmem:[%s169 + $0x11c] sm:$0xf]
      %v217 = vld [vmem:[%s1] sm:$0xf]
      %v218 = vld [vmem:[%s1 + $0x4] sm:$0xf]
      %v219 = vld [vmem:[%s1 + $0x8] sm:$0xf]
      %v220 = vld [vmem:[%s1 + $0xc] sm:$0xf]
      %v221 = vld [vmem:[%s1 + $0x10] sm:$0xf]
      %v222 = vld [vmem:[%s1 + $0x14] sm:$0xf]
      %v223 = vld [vmem:[%s1 + $0x18] sm:$0xf]
      %v224 = vld [vmem:[%s1 + $0x1c] sm:$0xf]
      %v225 = vld [vmem:[%s1 + $0x20] sm:$0xf]
      %v226 = vld [vmem:[%s1 + $0x24] sm:$0xf]
      %v227 = vld [vmem:[%s1 + $0x28] sm:$0xf]
      %v228 = vld [vmem:[%s1 + $0x2c] sm:$0xf]
      %v229 = vld [vmem:[%s1 + $0x30] sm:$0xf]
      %v230 = vld [vmem:[%s1 + $0x34] sm:$0xf]
      %v231 = vld [vmem:[%s1 + $0x38] sm:$0xf]
      %v232 = vld [vmem:[%s1 + $0x3c] sm:$0xf]
      %v233 = vld [vmem:[%s1 + $0x40] sm:$0xf]
      %v234 = vld [vmem:[%s1 + $0x44] sm:$0xf]
      %v235 = vld [vmem:[%s1 + $0x48] sm:$0xf]
      %v236 = vld [vmem:[%s1 + $0x4c] sm:$0xf]
      %v237 = vld [vmem:[%s1 + $0x50] sm:$0xf]
      %v238 = vld [vmem:[%s1 + $0x54] sm:$0xf]
      %v239 = vld [vmem:[%s1 + $0x58] sm:$0xf]
      %v240 = vld [vmem:[%s1 + $0x5c] sm:$0xf]
      %v241 = vld [vmem:[%s1 + $0x60] sm:$0xf]
      %v242 = vld [vmem:[%s1 + $0x64] sm:$0xf]
      %v243 = vld [vmem:[%s1 + $0x68] sm:$0xf]
      %v244 = vld [vmem:[%s1 + $0x6c] sm:$0xf]
      %v245 = vld [vmem:[%s1 + $0x70] sm:$0xf]
      %v246 = vld [vmem:[%s1 + $0x74] sm:$0xf]
      %v247 = vld [vmem:[%s1 + $0x78] sm:$0xf]
      %v248 = vld [vmem:[%s1 + $0x7c] sm:$0xf]
      %v249 = vld [vmem:[%s1 + $0x80] sm:$0xf]
      %v250 = vld [vmem:[%s1 + $0x84] sm:$0xf]
      %v251 = vld [vmem:[%s1 + $0x88] sm:$0xf]
      %v252 = vld [vmem:[%s1 + $0x8c] sm:$0xf]
      %v253 = vld [vmem:[%s1 + $0x90] sm:$0xf]
      %v254 = vld [vmem:[%s1 + $0x94] sm:$0xf]
      %v255 = vld [vmem:[%s1 + $0x98] sm:$0xf]
      %v256 = vld [vmem:[%s1 + $0x9c] sm:$0xf]
      %v257 = vld [vmem:[%s1 + $0xa0] sm:$0xf]
      %v258 = vld [vmem:[%s1 + $0xa4] sm:$0xf]
      %v259 = vld [vmem:[%s1 + $0xa8] sm:$0xf]
      %v260 = vld [vmem:[%s1 + $0xac] sm:$0xf]
      %v261 = vld [vmem:[%s1 + $0xb0] sm:$0xf]
      %v262 = vld [vmem:[%s1 + $0xb4] sm:$0xf]
      %v263 = vld [vmem:[%s1 + $0xb8] sm:$0xf]
      %v264 = vld [vmem:[%s1 + $0xbc] sm:$0xf]
      %v265 = vld [vmem:[%s1 + $0xc0] sm:$0xf]
      %v266 = vld [vmem:[%s1 + $0xc4] sm:$0xf]
      %v267 = vld [vmem:[%s1 + $0xc8] sm:$0xf]
      %v268 = vld [vmem:[%s1 + $0xcc] sm:$0xf]
      %v269 = vld [vmem:[%s1 + $0xd0] sm:$0xf]
      %v270 = vld [vmem:[%s1 + $0xd4] sm:$0xf]
      %v271 = vld [vmem:[%s1 + $0xd8] sm:$0xf]
      %v272 = vld [vmem:[%s1 + $0xdc] sm:$0xf]
      %v273 = vld [vmem:[%s1 + $0xe0] sm:$0xf]
      %v274 = vld [vmem:[%s1 + $0xe4] sm:$0xf]
      %v275 = vld [vmem:[%s1 + $0xe8] sm:$0xf]
      %v276 = vld [vmem:[%s1 + $0xec] sm:$0xf]
      %v277 = vld [vmem:[%s1 + $0xf0] sm:$0xf]
      %v278 = vld [vmem:[%s1 + $0xf4] sm:$0xf]
      %v279 = vld [vmem:[%s1 + $0xf8] sm:$0xf]
      %v280 = vld [vmem:[%s1 + $0xfc] sm:$0xf]
      %v281 = vld [vmem:[%s1 + $0x100] sm:$0xf]
      %v282 = vld [vmem:[%s1 + $0x104] sm:$0xf]
      %v283 = vld [vmem:[%s1 + $0x108] sm:$0xf]
      %v284 = vld [vmem:[%s1 + $0x10c] sm:$0xf]
      %v285 = vld [vmem:[%s1 + $0x110] sm:$0xf]
      %v286 = vld [vmem:[%s1 + $0x114] sm:$0xf]
      %v287 = vld [vmem:[%s1 + $0x118] sm:$0xf]
      %v288 = vld [vmem:[%s1 + $0x11c] sm:$0xf]
      %v289 = vld [vmem:[%s1 + $0x120] sm:$0xf]
      %v290 = vld [vmem:[%s1 + $0x124] sm:$0xf]
      %v291 = vld [vmem:[%s1 + $0x128] sm:$0xf]
      %v292 = vld [vmem:[%s1 + $0x12c] sm:$0xf]
      %v293 = vld [vmem:[%s1 + $0x130] sm:$0xf]
      %v294 = vld [vmem:[%s1 + $0x134] sm:$0xf]
      %v295 = vld [vmem:[%s1 + $0x138] sm:$0xf]
      %v296 = vld [vmem:[%s1 + $0x13c] sm:$0xf]
      %v297 = vld [vmem:[%s1 + $0x140] sm:$0xf]
      %v298 = vld [vmem:[%s1 + $0x144] sm:$0xf]
      %v299 = vld [vmem:[%s1 + $0x148] sm:$0xf]
      %v300 = vld [vmem:[%s1 + $0x14c] sm:$0xf]
      %v301 = vld [vmem:[%s1 + $0x150] sm:$0xf]
      %v302 = vld [vmem:[%s1 + $0x154] sm:$0xf]
      %v303 = vld [vmem:[%s1 + $0x158] sm:$0xf]
      %v304 = vld [vmem:[%s1 + $0x15c] sm:$0xf]
      %v305 = vld [vmem:[%s1 + $0x160] sm:$0xf]
      %v306 = vld [vmem:[%s1 + $0x164] sm:$0xf]
      %v307 = vld [vmem:[%s1 + $0x168] sm:$0xf]
      %v308 = vld [vmem:[%s1 + $0x16c] sm:$0xf]
      %v309 = vld [vmem:[%s1 + $0x170] sm:$0xf]
      %v310 = vld [vmem:[%s1 + $0x174] sm:$0xf]
      %v311 = vld [vmem:[%s1 + $0x178] sm:$0xf]
      %v312 = vld [vmem:[%s1 + $0x17c] sm:$0xf]
      %v313 = vld [vmem:[%s1 + $0x180] sm:$0xf]
      %v314 = vld [vmem:[%s1 + $0x184] sm:$0xf]
      %v315 = vld [vmem:[%s1 + $0x188] sm:$0xf]
      %v316 = vld [vmem:[%s1 + $0x18c] sm:$0xf]
      %v317 = vld [vmem:[%s1 + $0x190] sm:$0xf]
      %v318 = vld [vmem:[%s1 + $0x194] sm:$0xf]
      %v319 = vld [vmem:[%s1 + $0x198] sm:$0xf]
      %v320 = vld [vmem:[%s1 + $0x19c] sm:$0xf]
      %v321 = vld [vmem:[%s1 + $0x1a0] sm:$0xf]
      %v322 = vld [vmem:[%s1 + $0x1a4] sm:$0xf]
      %v323 = vld [vmem:[%s1 + $0x1a8] sm:$0xf]
      %v324 = vld [vmem:[%s1 + $0x1ac] sm:$0xf]
      %v325 = vld [vmem:[%s1 + $0x1b0] sm:$0xf]
      %v326 = vld [vmem:[%s1 + $0x1b4] sm:$0xf]
      %v327 = vld [vmem:[%s1 + $0x1b8] sm:$0xf]
      %v328 = vld [vmem:[%s1 + $0x1bc] sm:$0xf]
      %v329 = vld [vmem:[%s1 + $0x1c0] sm:$0xf]
      %v330 = vld [vmem:[%s1 + $0x1c4] sm:$0xf]
      %v331 = vld [vmem:[%s1 + $0x1c8] sm:$0xf]
      %v332 = vld [vmem:[%s1 + $0x1cc] sm:$0xf]
      %v333 = vld [vmem:[%s1 + $0x1d0] sm:$0xf]
      %v334 = vld [vmem:[%s1 + $0x1d4] sm:$0xf]
      %v335 = vld [vmem:[%s1 + $0x1d8] sm:$0xf]
      %v336 = vld [vmem:[%s1 + $0x1dc] sm:$0xf]
      %v337 = vld [vmem:[%s1 + $0x1e0] sm:$0xf]
      %v338 = vld [vmem:[%s1 + $0x1e4] sm:$0xf]
      %v339 = vld [vmem:[%s1 + $0x1e8] sm:$0xf]
      %v340 = vld [vmem:[%s1 + $0x1ec] sm:$0xf]
      %v341 = vld [vmem:[%s1 + $0x1f0] sm:$0xf]
      %v342 = vld [vmem:[%s1 + $0x1f4] sm:$0xf]
      %v343 = vld [vmem:[%s1 + $0x1f8] sm:$0xf]
      %v344 = vld [vmem:[%s1 + $0x1fc] sm:$0xf]
      %v345 = vld [vmem:[%s1 + $0x200] sm:$0xf]
      %v346 = vld [vmem:[%s1 + $0x204] sm:$0xf]
      %v347 = vld [vmem:[%s1 + $0x208] sm:$0xf]
      %v348 = vld [vmem:[%s1 + $0x20c] sm:$0xf]
      %v349 = vld [vmem:[%s1 + $0x210] sm:$0xf]
      %v350 = vld [vmem:[%s1 + $0x214] sm:$0xf]
      %v351 = vld [vmem:[%s1 + $0x218] sm:$0xf]
      %v352 = vld [vmem:[%s1 + $0x21c] sm:$0xf]
      %v353 = vld [vmem:[%s1 + $0x220] sm:$0xf]
      %v354 = vld [vmem:[%s1 + $0x224] sm:$0xf]
      %v355 = vld [vmem:[%s1 + $0x228] sm:$0xf]
      %v356 = vld [vmem:[%s1 + $0x22c] sm:$0xf]
      %v357 = vld [vmem:[%s1 + $0x230] sm:$0xf]
      %v358 = vld [vmem:[%s1 + $0x234] sm:$0xf]
      %v359 = vld [vmem:[%s1 + $0x238] sm:$0xf]
      %v360 = vld [vmem:[%s1 + $0x23c] sm:$0xf]
      %v361 = vld [vmem:[%s2] sm:$0x1]
      %v363 = vperm.slane %v361, 0
      %v405 = vunpack.c.l.b16 %v177
      %v406 = vunpack.c.h.b16 %v177
      %v407 = vunpack.c.l.b16 %v178
      %v408 = vunpack.c.h.b16 %v178
      %v409 = vunpack.c.l.b16 %v179
      %v410 = vunpack.c.h.b16 %v179
      %v411 = vunpack.c.l.b16 %v180
      %v412 = vunpack.c.h.b16 %v180
      %v413 = vunpack.c.l.b16 %v181
      %v414 = vunpack.c.l.b16 %v182
      %v415 = vunpack.c.h.b16 %v182
      %v416 = vunpack.c.l.b16 %v183
      %v417 = vunpack.c.h.b16 %v183
      %v418 = vunpack.c.l.b16 %v184
      %v419 = vunpack.c.h.b16 %v184
      %v420 = vunpack.c.l.b16 %v185
      %v421 = vunpack.c.h.b16 %v185
      %v422 = vunpack.c.l.b16 %v186
      %v423 = vunpack.c.l.b16 %v187
      %v424 = vunpack.c.h.b16 %v187
      %v425 = vunpack.c.l.b16 %v188
      %v426 = vunpack.c.h.b16 %v188
      %v427 = vunpack.c.l.b16 %v189
      %v428 = vunpack.c.h.b16 %v189
      %v429 = vunpack.c.l.b16 %v190
      %v430 = vunpack.c.h.b16 %v190
      %v431 = vunpack.c.l.b16 %v191
      %v432 = vunpack.c.l.b16 %v192
      %v433 = vunpack.c.h.b16 %v192
      %v434 = vunpack.c.l.b16 %v193
      %v435 = vunpack.c.h.b16 %v193
      %v436 = vunpack.c.l.b16 %v194
      %v437 = vunpack.c.h.b16 %v194
      %v438 = vunpack.c.l.b16 %v195
      %v439 = vunpack.c.h.b16 %v195
      %v440 = vunpack.c.l.b16 %v196
      %v441 = vunpack.c.l.b16 %v197
      %v442 = vunpack.c.h.b16 %v197
      %v443 = vunpack.c.l.b16 %v198
      %v444 = vunpack.c.h.b16 %v198
      %v445 = vunpack.c.l.b16 %v199
      %v446 = vunpack.c.h.b16 %v199
      %v447 = vunpack.c.l.b16 %v200
      %v448 = vunpack.c.h.b16 %v200
      %v449 = vunpack.c.l.b16 %v201
      %v450 = vunpack.c.l.b16 %v202
      %v451 = vunpack.c.h.b16 %v202
      %v452 = vunpack.c.l.b16 %v203
      %v453 = vunpack.c.h.b16 %v203
      %v454 = vunpack.c.l.b16 %v204
      %v455 = vunpack.c.h.b16 %v204
      %v456 = vunpack.c.l.b16 %v205
      %v457 = vunpack.c.h.b16 %v205
      %v458 = vunpack.c.l.b16 %v206
      %v459 = vunpack.c.l.b16 %v207
      %v460 = vunpack.c.h.b16 %v207
      %v461 = vunpack.c.l.b16 %v208
      %v462 = vunpack.c.h.b16 %v208
      %v463 = vunpack.c.l.b16 %v209
      %v464 = vunpack.c.h.b16 %v209
      %v465 = vunpack.c.l.b16 %v210
      %v466 = vunpack.c.h.b16 %v210
      %v467 = vunpack.c.l.b16 %v211
      %v468 = vunpack.c.l.b16 %v212
      %v469 = vunpack.c.h.b16 %v212
      %v470 = vunpack.c.l.b16 %v213
      %v471 = vunpack.c.h.b16 %v213
      %v472 = vunpack.c.l.b16 %v214
      %v473 = vunpack.c.h.b16 %v214
      %v474 = vunpack.c.l.b16 %v215
      %v475 = vunpack.c.h.b16 %v215
      %v476 = vunpack.c.l.b16 %v216
      %v477 = vpack.c.b16 %v414, %v405
      %v478 = vpack.c.b16 %v415, %v406
      %v479 = vpack.c.b16 %v416, %v407
      %v480 = vpack.c.b16 %v417, %v408
      %v481 = vpack.c.b16 %v418, %v409
      %v482 = vpack.c.b16 %v419, %v410
      %v483 = vpack.c.b16 %v420, %v411
      %v484 = vpack.c.b16 %v421, %v412
      %v485 = vpack.c.b16 %v422, %v413
      %v486 = vpack.c.b16 %v432, %v423
      %v487 = vpack.c.b16 %v433, %v424
      %v488 = vpack.c.b16 %v434, %v425
      %v489 = vpack.c.b16 %v435, %v426
      %v490 = vpack.c.b16 %v436, %v427
      %v491 = vpack.c.b16 %v437, %v428
      %v492 = vpack.c.b16 %v438, %v429
      %v493 = vpack.c.b16 %v439, %v430
      %v494 = vpack.c.b16 %v440, %v431
      %v495 = vpack.c.b16 %v450, %v441
      %v496 = vpack.c.b16 %v451, %v442
      %v497 = vpack.c.b16 %v452, %v443
      %v498 = vpack.c.b16 %v453, %v444
      %v499 = vpack.c.b16 %v454, %v445
      %v500 = vpack.c.b16 %v455, %v446
      %v501 = vpack.c.b16 %v456, %v447
      %v502 = vpack.c.b16 %v457, %v448
      %v503 = vpack.c.b16 %v458, %v449
      %v504 = vpack.c.b16 %v468, %v459
      %v505 = vpack.c.b16 %v469, %v460
      %v506 = vpack.c.b16 %v470, %v461
      %v507 = vpack.c.b16 %v471, %v462
      %v508 = vpack.c.b16 %v472, %v463
      %v509 = vpack.c.b16 %v473, %v464
      %v510 = vpack.c.b16 %v474, %v465
      %v511 = vpack.c.b16 %v475, %v466
      %v512 = vpack.c.b16 %v476, %v467
      %v693 = vunpack.c.l.b16 %v217
      %v694 = vunpack.c.l.b16 %v218
      %v695 = vunpack.c.l.b16 %v219
      %v696 = vunpack.c.l.b16 %v220
      %v697 = vunpack.c.l.b16 %v221
      %v698 = vunpack.c.l.b16 %v222
      %v699 = vunpack.c.l.b16 %v223
      %v700 = vunpack.c.l.b16 %v224
      %v701 = vunpack.c.l.b16 %v225
      %v702 = vunpack.c.l.b16 %v226
      %v703 = vunpack.c.l.b16 %v227
      %v704 = vunpack.c.l.b16 %v228
      %v705 = vunpack.c.l.b16 %v229
      %v706 = vunpack.c.l.b16 %v230
      %v707 = vunpack.c.l.b16 %v231
      %v708 = vunpack.c.l.b16 %v232
      %v709 = vunpack.c.l.b16 %v233
      %v710 = vunpack.c.l.b16 %v234
      %v711 = vunpack.c.l.b16 %v235
      %v712 = vunpack.c.l.b16 %v236
      %v713 = vunpack.c.l.b16 %v237
      %v714 = vunpack.c.l.b16 %v238
      %v715 = vunpack.c.l.b16 %v239
      %v716 = vunpack.c.l.b16 %v240
      %v717 = vunpack.c.l.b16 %v241
      %v718 = vunpack.c.l.b16 %v242
      %v719 = vunpack.c.l.b16 %v243
      %v720 = vunpack.c.l.b16 %v244
      %v721 = vunpack.c.l.b16 %v245
      %v722 = vunpack.c.l.b16 %v246
      %v723 = vunpack.c.l.b16 %v247
      %v724 = vunpack.c.l.b16 %v248
      %v725 = vunpack.c.l.b16 %v249
      %v726 = vunpack.c.l.b16 %v250
      %v727 = vunpack.c.l.b16 %v251
      %v728 = vunpack.c.l.b16 %v252
      %v729 = vunpack.c.l.b16 %v253
      %v730 = vunpack.c.l.b16 %v254
      %v731 = vunpack.c.l.b16 %v255
      %v732 = vunpack.c.l.b16 %v256
      %v733 = vunpack.c.l.b16 %v257
      %v734 = vunpack.c.l.b16 %v258
      %v735 = vunpack.c.l.b16 %v259
      %v736 = vunpack.c.l.b16 %v260
      %v737 = vunpack.c.l.b16 %v261
      %v738 = vunpack.c.l.b16 %v262
      %v739 = vunpack.c.l.b16 %v263
      %v740 = vunpack.c.l.b16 %v264
      %v741 = vunpack.c.l.b16 %v265
      %v742 = vunpack.c.l.b16 %v266
      %v743 = vunpack.c.l.b16 %v267
      %v744 = vunpack.c.l.b16 %v268
      %v745 = vunpack.c.l.b16 %v269
      %v746 = vunpack.c.l.b16 %v270
      %v747 = vunpack.c.l.b16 %v271
      %v748 = vunpack.c.l.b16 %v272
      %v749 = vunpack.c.l.b16 %v273
      %v750 = vunpack.c.l.b16 %v274
      %v751 = vunpack.c.l.b16 %v275
      %v752 = vunpack.c.l.b16 %v276
      %v753 = vunpack.c.l.b16 %v277
      %v754 = vunpack.c.l.b16 %v278
      %v755 = vunpack.c.l.b16 %v279
      %v756 = vunpack.c.l.b16 %v280
      %v757 = vunpack.c.l.b16 %v281
      %v758 = vunpack.c.l.b16 %v282
      %v759 = vunpack.c.l.b16 %v283
      %v760 = vunpack.c.l.b16 %v284
      %v761 = vunpack.c.l.b16 %v285
      %v762 = vunpack.c.l.b16 %v286
      %v763 = vunpack.c.l.b16 %v287
      %v764 = vunpack.c.l.b16 %v288
      %v765 = vunpack.c.l.b16 %v289
      %v766 = vunpack.c.l.b16 %v290
      %v767 = vunpack.c.l.b16 %v291
      %v768 = vunpack.c.l.b16 %v292
      %v769 = vunpack.c.l.b16 %v293
      %v770 = vunpack.c.l.b16 %v294
      %v771 = vunpack.c.l.b16 %v295
      %v772 = vunpack.c.l.b16 %v296
      %v773 = vunpack.c.l.b16 %v297
      %v774 = vunpack.c.l.b16 %v298
      %v775 = vunpack.c.l.b16 %v299
      %v776 = vunpack.c.l.b16 %v300
      %v777 = vunpack.c.l.b16 %v301
      %v778 = vunpack.c.l.b16 %v302
      %v779 = vunpack.c.l.b16 %v303
      %v780 = vunpack.c.l.b16 %v304
      %v781 = vunpack.c.l.b16 %v305
      %v782 = vunpack.c.l.b16 %v306
      %v783 = vunpack.c.l.b16 %v307
      %v784 = vunpack.c.l.b16 %v308
      %v785 = vunpack.c.l.b16 %v309
      %v786 = vunpack.c.l.b16 %v310
      %v787 = vunpack.c.l.b16 %v311
      %v788 = vunpack.c.l.b16 %v312
      %v789 = vunpack.c.l.b16 %v313
      %v790 = vunpack.c.l.b16 %v314
      %v791 = vunpack.c.l.b16 %v315
      %v792 = vunpack.c.l.b16 %v316
      %v793 = vunpack.c.l.b16 %v317
      %v794 = vunpack.c.l.b16 %v318
      %v795 = vunpack.c.l.b16 %v319
      %v796 = vunpack.c.l.b16 %v320
      %v797 = vunpack.c.l.b16 %v321
      %v798 = vunpack.c.l.b16 %v322
      %v799 = vunpack.c.l.b16 %v323
      %v800 = vunpack.c.l.b16 %v324
      %v801 = vunpack.c.l.b16 %v325
      %v802 = vunpack.c.l.b16 %v326
      %v803 = vunpack.c.l.b16 %v327
      %v804 = vunpack.c.l.b16 %v328
      %v805 = vunpack.c.l.b16 %v329
      %v806 = vunpack.c.l.b16 %v330
      %v807 = vunpack.c.l.b16 %v331
      %v808 = vunpack.c.l.b16 %v332
      %v809 = vunpack.c.l.b16 %v333
      %v810 = vunpack.c.l.b16 %v334
      %v811 = vunpack.c.l.b16 %v335
      %v812 = vunpack.c.l.b16 %v336
      %v813 = vunpack.c.l.b16 %v337
      %v814 = vunpack.c.l.b16 %v338
      %v815 = vunpack.c.l.b16 %v339
      %v816 = vunpack.c.l.b16 %v340
      %v817 = vunpack.c.l.b16 %v341
      %v818 = vunpack.c.l.b16 %v342
      %v819 = vunpack.c.l.b16 %v343
      %v820 = vunpack.c.l.b16 %v344
      %v821 = vunpack.c.l.b16 %v345
      %v822 = vunpack.c.l.b16 %v346
      %v823 = vunpack.c.l.b16 %v347
      %v824 = vunpack.c.l.b16 %v348
      %v825 = vunpack.c.l.b16 %v349
      %v826 = vunpack.c.l.b16 %v350
      %v827 = vunpack.c.l.b16 %v351
      %v828 = vunpack.c.l.b16 %v352
      %v829 = vunpack.c.l.b16 %v353
      %v830 = vunpack.c.l.b16 %v354
      %v831 = vunpack.c.l.b16 %v355
      %v832 = vunpack.c.l.b16 %v356
      %v833 = vunpack.c.l.b16 %v357
      %v834 = vunpack.c.l.b16 %v358
      %v835 = vunpack.c.l.b16 %v359
      %v836 = vunpack.c.l.b16 %v360
      %v837 = vpack.c.b16 %v694, %v693
      %v838 = vpack.c.b16 %v696, %v695
      %v839 = vpack.c.b16 %v698, %v697
      %v840 = vpack.c.b16 %v700, %v699
      %v841 = vpack.c.b16 %v702, %v701
      %v842 = vpack.c.b16 %v704, %v703
      %v843 = vpack.c.b16 %v706, %v705
      %v844 = vpack.c.b16 %v708, %v707
      %v845 = vpack.c.b16 %v710, %v709
      %v846 = vpack.c.b16 %v712, %v711
      %v847 = vpack.c.b16 %v714, %v713
      %v848 = vpack.c.b16 %v716, %v715
      %v849 = vpack.c.b16 %v718, %v717
      %v850 = vpack.c.b16 %v720, %v719
      %v851 = vpack.c.b16 %v722, %v721
      %v852 = vpack.c.b16 %v724, %v723
      %v853 = vpack.c.b16 %v726, %v725
      %v854 = vpack.c.b16 %v728, %v727
      %v855 = vpack.c.b16 %v730, %v729
      %v856 = vpack.c.b16 %v732, %v731
      %v857 = vpack.c.b16 %v734, %v733
      %v858 = vpack.c.b16 %v736, %v735
      %v859 = vpack.c.b16 %v738, %v737
      %v860 = vpack.c.b16 %v740, %v739
      %v861 = vpack.c.b16 %v742, %v741
      %v862 = vpack.c.b16 %v744, %v743
      %v863 = vpack.c.b16 %v746, %v745
      %v864 = vpack.c.b16 %v748, %v747
      %v865 = vpack.c.b16 %v750, %v749
      %v866 = vpack.c.b16 %v752, %v751
      %v867 = vpack.c.b16 %v754, %v753
      %v868 = vpack.c.b16 %v756, %v755
      %v869 = vpack.c.b16 %v758, %v757
      %v870 = vpack.c.b16 %v760, %v759
      %v871 = vpack.c.b16 %v762, %v761
      %v872 = vpack.c.b16 %v764, %v763
      %v873 = vpack.c.b16 %v766, %v765
      %v874 = vpack.c.b16 %v768, %v767
      %v875 = vpack.c.b16 %v770, %v769
      %v876 = vpack.c.b16 %v772, %v771
      %v877 = vpack.c.b16 %v774, %v773
      %v878 = vpack.c.b16 %v776, %v775
      %v879 = vpack.c.b16 %v778, %v777
      %v880 = vpack.c.b16 %v780, %v779
      %v881 = vpack.c.b16 %v782, %v781
      %v882 = vpack.c.b16 %v784, %v783
      %v883 = vpack.c.b16 %v786, %v785
      %v884 = vpack.c.b16 %v788, %v787
      %v885 = vpack.c.b16 %v790, %v789
      %v886 = vpack.c.b16 %v792, %v791
      %v887 = vpack.c.b16 %v794, %v793
      %v888 = vpack.c.b16 %v796, %v795
      %v889 = vpack.c.b16 %v798, %v797
      %v890 = vpack.c.b16 %v800, %v799
      %v891 = vpack.c.b16 %v802, %v801
      %v892 = vpack.c.b16 %v804, %v803
      %v893 = vpack.c.b16 %v806, %v805
      %v894 = vpack.c.b16 %v808, %v807
      %v895 = vpack.c.b16 %v810, %v809
      %v896 = vpack.c.b16 %v812, %v811
      %v897 = vpack.c.b16 %v814, %v813
      %v898 = vpack.c.b16 %v816, %v815
      %v899 = vpack.c.b16 %v818, %v817
      %v900 = vpack.c.b16 %v820, %v819
      %v901 = vpack.c.b16 %v822, %v821
      %v902 = vpack.c.b16 %v824, %v823
      %v903 = vpack.c.b16 %v826, %v825
      %v904 = vpack.c.b16 %v828, %v827
      %v905 = vpack.c.b16 %v830, %v829
      %v906 = vpack.c.b16 %v832, %v831
      %v907 = vpack.c.b16 %v834, %v833
      %v908 = vpack.c.b16 %v836, %v835
      %981 = vmatpush.bf16.msra.mxu0 %v844
      %982 = vmatpush.bf16.msra.mxu0 %v843
      %983 = vmatpush.bf16.msra.mxu0 %v842
      %984 = vmatpush.bf16.msra.mxu0 %v841
      %985 = vmatpush.bf16.msra.mxu0 %v840
      %986 = vmatpush.bf16.msra.mxu0 %v839
      %987 = vmatpush.bf16.msra.mxu0 %v838
      %988 = vmatpush.bf16.msra.mxu0 %v837
      %989 = vmatmul.bf16.gmra.mxu0 %v477
      %v990 = vpop.f32.mrf.mxu0
      %v991 = vadd.f32 %v363, %v990
      %v992 = vpop.f32.mrf.mxu0
      %v993 = vadd.f32 %v363, %v992
      %994 = vmatmul.bf16.gmra.mxu0 %v486
      %v995 = vpop.f32.mrf.mxu0
      %v996 = vadd.f32 %v363, %v995
      %v997 = vpop.f32.mrf.mxu0
      %v998 = vadd.f32 %v363, %v997
      %999 = vmatmul.bf16.gmra.mxu0 %v495
      %v1000 = vpop.f32.mrf.mxu0
      %v1001 = vadd.f32 %v363, %v1000
      %v1002 = vpop.f32.mrf.mxu0
      %v1003 = vadd.f32 %v363, %v1002
      %1004 = vmatmul.bf16.gmra.mxu0 %v504
      %v1005 = vpop.f32.mrf.mxu0
      %v1006 = vadd.f32 %v363, %v1005
      %v1007 = vpop.f32.mrf.mxu0
      %v1008 = vadd.f32 %v363, %v1007
      %1009 = vdwg.mxu0
      %1010 = vmatpush.bf16.msra.mxu0 %v852
      %1011 = vmatpush.bf16.msra.mxu0 %v851
      %1012 = vmatpush.bf16.msra.mxu0 %v850
      %1013 = vmatpush.bf16.msra.mxu0 %v849
      %1014 = vmatpush.bf16.msra.mxu0 %v848
      %1015 = vmatpush.bf16.msra.mxu0 %v847
      %1016 = vmatpush.bf16.msra.mxu0 %v846
      %1017 = vmatpush.bf16.msra.mxu0 %v845
      %1018 = vmatmul.bf16.gmra.mxu0 %v478
      %v1019 = vpop.f32.mrf.mxu0
      %v1020 = vadd.f32 %v991, %v1019
      %v1021 = vpop.f32.mrf.mxu0
      %v1022 = vadd.f32 %v993, %v1021
      %1023 = vmatmul.bf16.gmra.mxu0 %v487
      %v1024 = vpop.f32.mrf.mxu0
      %v1025 = vadd.f32 %v996, %v1024
      %v1026 = vpop.f32.mrf.mxu0
      %v1027 = vadd.f32 %v998, %v1026
      %1028 = vmatmul.bf16.gmra.mxu0 %v496
      %v1029 = vpop.f32.mrf.mxu0
      %v1030 = vadd.f32 %v1001, %v1029
      %v1031 = vpop.f32.mrf.mxu0
      %v1032 = vadd.f32 %v1003, %v1031
      %1033 = vmatmul.bf16.gmra.mxu0 %v505
      %v1034 = vpop.f32.mrf.mxu0
      %v1035 = vadd.f32 %v1006, %v1034
      %v1036 = vpop.f32.mrf.mxu0
      %v1037 = vadd.f32 %v1008, %v1036
      %1038 = vdwg.mxu0
      %1039 = vmatpush.bf16.msra.mxu0 %v860
      %1040 = vmatpush.bf16.msra.mxu0 %v859
      %1041 = vmatpush.bf16.msra.mxu0 %v858
      %1042 = vmatpush.bf16.msra.mxu0 %v857
      %1043 = vmatpush.bf16.msra.mxu0 %v856
      %1044 = vmatpush.bf16.msra.mxu0 %v855
      %1045 = vmatpush.bf16.msra.mxu0 %v854
      %1046 = vmatpush.bf16.msra.mxu0 %v853
      %1047 = vmatmul.bf16.gmra.mxu0 %v479
      %v1048 = vpop.f32.mrf.mxu0
      %v1049 = vadd.f32 %v1020, %v1048
      %v1050 = vpop.f32.mrf.mxu0
      %v1051 = vadd.f32 %v1022, %v1050
      %1052 = vmatmul.bf16.gmra.mxu0 %v488
      %v1053 = vpop.f32.mrf.mxu0
      %v1054 = vadd.f32 %v1025, %v1053
      %v1055 = vpop.f32.mrf.mxu0
      %v1056 = vadd.f32 %v1027, %v1055
      %1057 = vmatmul.bf16.gmra.mxu0 %v497
      %v1058 = vpop.f32.mrf.mxu0
      %v1059 = vadd.f32 %v1030, %v1058
      %v1060 = vpop.f32.mrf.mxu0
      %v1061 = vadd.f32 %v1032, %v1060
      %1062 = vmatmul.bf16.gmra.mxu0 %v506
      %v1063 = vpop.f32.mrf.mxu0
      %v1064 = vadd.f32 %v1035, %v1063
      %v1065 = vpop.f32.mrf.mxu0
      %v1066 = vadd.f32 %v1037, %v1065
      %1067 = vdwg.mxu0
      %1068 = vmatpush.bf16.msra.mxu0 %v868
      %1069 = vmatpush.bf16.msra.mxu0 %v867
      %1070 = vmatpush.bf16.msra.mxu0 %v866
      %1071 = vmatpush.bf16.msra.mxu0 %v865
      %1072 = vmatpush.bf16.msra.mxu0 %v864
      %1073 = vmatpush.bf16.msra.mxu0 %v863
      %1074 = vmatpush.bf16.msra.mxu0 %v862
      %1075 = vmatpush.bf16.msra.mxu0 %v861
      %1076 = vmatmul.bf16.gmra.mxu0 %v480
      %v1077 = vpop.f32.mrf.mxu0
      %v1078 = vadd.f32 %v1049, %v1077
      %v1079 = vpop.f32.mrf.mxu0
      %v1080 = vadd.f32 %v1051, %v1079
      %1081 = vmatmul.bf16.gmra.mxu0 %v489
      %v1082 = vpop.f32.mrf.mxu0
      %v1083 = vadd.f32 %v1054, %v1082
      %v1084 = vpop.f32.mrf.mxu0
      %v1085 = vadd.f32 %v1056, %v1084
      %1086 = vmatmul.bf16.gmra.mxu0 %v498
      %v1087 = vpop.f32.mrf.mxu0
      %v1088 = vadd.f32 %v1059, %v1087
      %v1089 = vpop.f32.mrf.mxu0
      %v1090 = vadd.f32 %v1061, %v1089
      %1091 = vmatmul.bf16.gmra.mxu0 %v507
      %v1092 = vpop.f32.mrf.mxu0
      %v1093 = vadd.f32 %v1064, %v1092
      %v1094 = vpop.f32.mrf.mxu0
      %v1095 = vadd.f32 %v1066, %v1094
      %1096 = vdwg.mxu0
      %1097 = vmatpush.bf16.msra.mxu0 %v876
      %1098 = vmatpush.bf16.msra.mxu0 %v875
      %1099 = vmatpush.bf16.msra.mxu0 %v874
      %1100 = vmatpush.bf16.msra.mxu0 %v873
      %1101 = vmatpush.bf16.msra.mxu0 %v872
      %1102 = vmatpush.bf16.msra.mxu0 %v871
      %1103 = vmatpush.bf16.msra.mxu0 %v870
      %1104 = vmatpush.bf16.msra.mxu0 %v869
      %1105 = vmatmul.bf16.gmra.mxu0 %v481
      %v1106 = vpop.f32.mrf.mxu0
      %v1107 = vadd.f32 %v1078, %v1106
      %v1108 = vpop.f32.mrf.mxu0
      %v1109 = vadd.f32 %v1080, %v1108
      %1110 = vmatmul.bf16.gmra.mxu0 %v490
      %v1111 = vpop.f32.mrf.mxu0
      %v1112 = vadd.f32 %v1083, %v1111
      %v1113 = vpop.f32.mrf.mxu0
      %v1114 = vadd.f32 %v1085, %v1113
      %1115 = vmatmul.bf16.gmra.mxu0 %v499
      %v1116 = vpop.f32.mrf.mxu0
      %v1117 = vadd.f32 %v1088, %v1116
      %v1118 = vpop.f32.mrf.mxu0
      %v1119 = vadd.f32 %v1090, %v1118
      %1120 = vmatmul.bf16.gmra.mxu0 %v508
      %v1121 = vpop.f32.mrf.mxu0
      %v1122 = vadd.f32 %v1093, %v1121
      %v1123 = vpop.f32.mrf.mxu0
      %v1124 = vadd.f32 %v1095, %v1123
      %1125 = vdwg.mxu0
      %1126 = vmatpush.bf16.msra.mxu0 %v884
      %1127 = vmatpush.bf16.msra.mxu0 %v883
      %1128 = vmatpush.bf16.msra.mxu0 %v882
      %1129 = vmatpush.bf16.msra.mxu0 %v881
      %1130 = vmatpush.bf16.msra.mxu0 %v880
      %1131 = vmatpush.bf16.msra.mxu0 %v879
      %1132 = vmatpush.bf16.msra.mxu0 %v878
      %1133 = vmatpush.bf16.msra.mxu0 %v877
      %1134 = vmatmul.bf16.gmra.mxu0 %v482
      %v1135 = vpop.f32.mrf.mxu0
      %v1136 = vadd.f32 %v1107, %v1135
      %v1137 = vpop.f32.mrf.mxu0
      %v1138 = vadd.f32 %v1109, %v1137
      %1139 = vmatmul.bf16.gmra.mxu0 %v491
      %v1140 = vpop.f32.mrf.mxu0
      %v1141 = vadd.f32 %v1112, %v1140
      %v1142 = vpop.f32.mrf.mxu0
      %v1143 = vadd.f32 %v1114, %v1142
      %1144 = vmatmul.bf16.gmra.mxu0 %v500
      %v1145 = vpop.f32.mrf.mxu0
      %v1146 = vadd.f32 %v1117, %v1145
      %v1147 = vpop.f32.mrf.mxu0
      %v1148 = vadd.f32 %v1119, %v1147
      %1149 = vmatmul.bf16.gmra.mxu0 %v509
      %v1150 = vpop.f32.mrf.mxu0
      %v1151 = vadd.f32 %v1122, %v1150
      %v1152 = vpop.f32.mrf.mxu0
      %v1153 = vadd.f32 %v1124, %v1152
      %1154 = vdwg.mxu0
      %1155 = vmatpush.bf16.msra.mxu0 %v892
      %1156 = vmatpush.bf16.msra.mxu0 %v891
      %1157 = vmatpush.bf16.msra.mxu0 %v890
      %1158 = vmatpush.bf16.msra.mxu0 %v889
      %1159 = vmatpush.bf16.msra.mxu0 %v888
      %1160 = vmatpush.bf16.msra.mxu0 %v887
      %1161 = vmatpush.bf16.msra.mxu0 %v886
      %1162 = vmatpush.bf16.msra.mxu0 %v885
      %1163 = vmatmul.bf16.gmra.mxu0 %v483
      %v1164 = vpop.f32.mrf.mxu0
      %v1165 = vadd.f32 %v1136, %v1164
      %v1166 = vpop.f32.mrf.mxu0
      %v1167 = vadd.f32 %v1138, %v1166
      %1168 = vmatmul.bf16.gmra.mxu0 %v492
      %v1169 = vpop.f32.mrf.mxu0
      %v1170 = vadd.f32 %v1141, %v1169
      %v1171 = vpop.f32.mrf.mxu0
      %v1172 = vadd.f32 %v1143, %v1171
      %1173 = vmatmul.bf16.gmra.mxu0 %v501
      %v1174 = vpop.f32.mrf.mxu0
      %v1175 = vadd.f32 %v1146, %v1174
      %v1176 = vpop.f32.mrf.mxu0
      %v1177 = vadd.f32 %v1148, %v1176
      %1178 = vmatmul.bf16.gmra.mxu0 %v510
      %v1179 = vpop.f32.mrf.mxu0
      %v1180 = vadd.f32 %v1151, %v1179
      %v1181 = vpop.f32.mrf.mxu0
      %v1182 = vadd.f32 %v1153, %v1181
      %1183 = vdwg.mxu0
      %1184 = vmatpush.bf16.msra.mxu0 %v900
      %1185 = vmatpush.bf16.msra.mxu0 %v899
      %1186 = vmatpush.bf16.msra.mxu0 %v898
      %1187 = vmatpush.bf16.msra.mxu0 %v897
      %1188 = vmatpush.bf16.msra.mxu0 %v896
      %1189 = vmatpush.bf16.msra.mxu0 %v895
      %1190 = vmatpush.bf16.msra.mxu0 %v894
      %1191 = vmatpush.bf16.msra.mxu0 %v893
      %1192 = vmatmul.bf16.gmra.mxu0 %v484
      %v1193 = vpop.f32.mrf.mxu0
      %v1194 = vadd.f32 %v1165, %v1193
      %v1195 = vpop.f32.mrf.mxu0
      %v1196 = vadd.f32 %v1167, %v1195
      %1197 = vmatmul.bf16.gmra.mxu0 %v493
      %v1198 = vpop.f32.mrf.mxu0
      %v1199 = vadd.f32 %v1170, %v1198
      %v1200 = vpop.f32.mrf.mxu0
      %v1201 = vadd.f32 %v1172, %v1200
      %1202 = vmatmul.bf16.gmra.mxu0 %v502
      %v1203 = vpop.f32.mrf.mxu0
      %v1204 = vadd.f32 %v1175, %v1203
      %v1205 = vpop.f32.mrf.mxu0
      %v1206 = vadd.f32 %v1177, %v1205
      %1207 = vmatmul.bf16.gmra.mxu0 %v511
      %v1208 = vpop.f32.mrf.mxu0
      %v1209 = vadd.f32 %v1180, %v1208
      %v1210 = vpop.f32.mrf.mxu0
      %v1211 = vadd.f32 %v1182, %v1210
      %1212 = vdwg.mxu0
      %1213 = vmatpush.bf16.msra.mxu0 %v908
      %1214 = vmatpush.bf16.msra.mxu0 %v907
      %1215 = vmatpush.bf16.msra.mxu0 %v906
      %1216 = vmatpush.bf16.msra.mxu0 %v905
      %1217 = vmatpush.bf16.msra.mxu0 %v904
      %1218 = vmatpush.bf16.msra.mxu0 %v903
      %1219 = vmatpush.bf16.msra.mxu0 %v902
      %1220 = vmatpush.bf16.msra.mxu0 %v901
      %1221 = vmatmul.bf16.gmra.mxu0 %v485
      %v1222 = vpop.f32.mrf.mxu0
      %v1223 = vadd.f32 %v1194, %v1222
      %v1224 = vpop.f32.mrf.mxu0
      %v1225 = vadd.f32 %v1196, %v1224
      %1226 = vmatmul.bf16.gmra.mxu0 %v494
      %v1227 = vpop.f32.mrf.mxu0
      %v1228 = vadd.f32 %v1199, %v1227
      %v1229 = vpop.f32.mrf.mxu0
      %v1230 = vadd.f32 %v1201, %v1229
      %1231 = vmatmul.bf16.gmra.mxu0 %v503
      %v1232 = vpop.f32.mrf.mxu0
      %v1233 = vadd.f32 %v1204, %v1232
      %v1234 = vpop.f32.mrf.mxu0
      %v1235 = vadd.f32 %v1206, %v1234
      %1236 = vmatmul.bf16.gmra.mxu0 %v512
      %v1237 = vpop.f32.mrf.mxu0
      %v1238 = vadd.f32 %v1209, %v1237
      %v1239 = vpop.f32.mrf.mxu0
      %v1240 = vadd.f32 %v1211, %v1239
      %1241 = vdwg.mxu0
      %v1242 = vmax.f32 %v1223, 0.0
      %v1243 = vmax.f32 %v1225, 0.0
      %v1244 = vmax.f32 %v1228, 0.0
      %v1245 = vmax.f32 %v1230, 0.0
      %v1246 = vmax.f32 %v1233, 0.0
      %v1247 = vmax.f32 %v1235, 0.0
      %v1248 = vmax.f32 %v1238, 0.0
      %v1249 = vmax.f32 %v1240, 0.0
      %v1250 = vpack.c.bf16 %v1242, %v1242
      %v1251 = vpack.c.bf16 %v1243, %v1243
      %v1252 = vpack.c.bf16 %v1244, %v1244
      %v1253 = vpack.c.bf16 %v1245, %v1245
      %v1254 = vpack.c.bf16 %v1246, %v1246
      %v1255 = vpack.c.bf16 %v1247, %v1247
      %v1256 = vpack.c.bf16 %v1248, %v1248
      %v1257 = vpack.c.bf16 %v1249, %v1249
      %1258 = vst [vmem:[%s175] sm:$0xf] %v1250
      %1259 = vst [vmem:[%s175 + $0x4] sm:$0xf] %v1251
      %1260 = vst [vmem:[%s175 + $0x8] sm:$0xf] %v1252
      %1261 = vst [vmem:[%s175 + $0xc] sm:$0xf] %v1253
      %1262 = vst [vmem:[%s175 + $0x10] sm:$0xf] %v1254
      %1263 = vst [vmem:[%s175 + $0x14] sm:$0xf] %v1255
      %1264 = vst [vmem:[%s175 + $0x18] sm:$0xf] %v1256
      %1265 = vst [vmem:[%s175 + $0x1c] sm:$0xf] %v1257
      %s1266 = smul.u32 8, %s14
      %p1267 = scmp.lt.s32.totalorder %s1266, 15
      %s1268 = scalar_select %p1267, %s1266, 15
      %s1269 = smul.addr %s1268, 4
      %s1270 = scalar_lea.vmem %s3, %s1269
      // Predicated region
      $region33: #{my_resnet_forward.24} parent=31 // pred_check
        %p1271 = pneg %p100
      $region34: #{my_resnet_forward.24} parent=31 // pred_check_branch
        %1273 = sbr.rel (%p1271) target = $region36
      $region35: #{my_resnet_forward.24} parent=31 // pred_region
        %s1274 = smul.u32 8, %s14
      $region36: #{my_resnet_forward.24} parent=31 // pred_fallthru
        _
    $region32: #{my_resnet_forward.24} parent=5 // pred_fallthru
      _
    %p1275 = scmp.le.s32.totalorder 2, %s9
    // Predicated region
    $region37: #{my_resnet_forward.24} parent=5 // pred_check
      %p1276 = pneg %p1275
    $region38: #{my_resnet_forward.24} parent=5 // pred_check_branch
      %1278 = sbr.rel (%p1276) target = $region40
    $region39: #{my_resnet_forward.24} parent=5 // pred_region
      %s1279 = ssub.s32 %s9, 2
      // Predicated region
      $region41: #{my_resnet_forward.24} parent=39 // pred_check
        %p1280 = pneg %p106
      $region42: #{my_resnet_forward.24} parent=39 // pred_check_branch
        %1282 = sbr.rel (%p1280) target = $region44
      $region43: #{my_resnet_forward.24} parent=39 // pred_region
        %s1283 = smul.u32 8, %s15
        %p1284 = scmp.lt.s32.totalorder %s1283, 15
        %s1285 = scalar_select %p1284, %s1283, 15
        %s1286 = smul.addr %s1285, 4
        %s1287 = scalar_lea.vmem %s3, %s1286
      $region44: #{my_resnet_forward.24} parent=39 // pred_fallthru
        _
    $region40: #{my_resnet_forward.24} parent=5 // pred_fallthru
      _
  $region6: #{my_resnet_forward.24} parent=0 // loop_footer
    %s13 = sadd.s32 1, %s9
  $region7: #{my_resnet_forward.24} parent=0 // loop_footer_branch
    %8 = sbr.rel target = $region3
  $region8: #{my_resnet_forward.24} parent=0 // loop_exit
    _

// kernel: my_resnet_forward.23
$region0: #{my_resnet_forward.23}
  #allocation0 [shape = 'u32[]', space=smem, size = 0x4, offset = 0x4, fixed_abs, tag = 'smem constant byte address 0x4 - core index']
  #allocation1 [shape = 'u32[72,128]{1,0:T(1,128)}', space=vmem, size = 0x9000, scoped, tag = 'internal scratch']
  %s0 = inlined_call_operand.vmem [shape: bf16[128,9,128], index: 0, kind: input, shape index: {}]
  %s1 = inlined_call_operand.vmem [shape: bf16[128,128], index: 1, kind: output, shape index: {}]
  %s2 = sld [smem:[#allocation0]]
  $region37: #{my_resnet_forward.23} parent=0
    _
  %s4 = ssub.s32 1, %s2
  %s5 = scalar_select 0, %s4, %s2
  loop: start=0, step=1, limit=4
  $region2: #{my_resnet_forward.23} parent=0 // loop_pre_header
    _
  $region3: #{my_resnet_forward.23} parent=0 // loop_header
    %s7 = sphi 0, %s11
    %p8 = scmp.ge.s32.totalorder %s7, 4
    %s17 = sphi 0, %s19
    %s20 = sphi 0, %s17
    %s21 = sphi 0, %s20
    %s37 = sphi 0, %s21
    %s43 = sphi 0, %s45
    %s46 = sphi 0, %s43
    %s47 = sphi 0, %s46
    %s63 = sphi 0, %s47
  $region4: #{my_resnet_forward.23} parent=0 // loop_header_branch
    %10 = sbr.rel (%p8) target = $region8
  $region5: #{my_resnet_forward.23} parent=0 // loop_body
    %s12 = ssub.s32 %s7, 1
    %s13 = ssub.s32 %s7, 2
    %s14 = sadd.s32 %s7, 1
    %s15 = ssub.s32 %s7, %s14
    %p16 = scmp.eq.s32.totalorder %s15, 0
    %s18 = sadd.s32 %s17, 1
    %s19 = scalar_select %p16, %s17, %s18
    %p22 = pneg %p16
    %p23 = scmp.eq.s32.totalorder %s7, 1
    %p24 = por %p22, %p23
    %p25 = scmp.ne.s32.totalorder %s17, %s20
    %p26 = scmp.eq.s32.totalorder %s7, 0
    %p27 = por %p25, %p26
    %p28 = scmp.ne.s32.totalorder %s17, %s20
    %p29 = scmp.eq.s32.totalorder %s12, 1
    %p30 = por %p28, %p29
    %p31 = scmp.ne.s32.totalorder %s20, %s21
    %p32 = scmp.eq.s32.totalorder %s12, 0
    %p33 = por %p31, %p32
    %p34 = scmp.ne.s32.totalorder %s20, %s21
    %p35 = scmp.eq.s32.totalorder %s13, 1
    %p36 = por %p34, %p35
    %p38 = scmp.ne.s32.totalorder %s21, %s37
    %p39 = scmp.eq.s32.totalorder %s13, 0
    %p40 = por %p38, %p39
    %s41 = ssub.s32 %s7, %s14
    %p42 = scmp.eq.s32.totalorder %s41, 0
    %s44 = sadd.s32 %s43, 1
    %s45 = scalar_select %p42, %s43, %s44
    %p48 = pneg %p42
    %p49 = scmp.eq.s32.totalorder %s7, 1
    %p50 = por %p48, %p49
    %p51 = scmp.ne.s32.totalorder %s43, %s46
    %p52 = scmp.eq.s32.totalorder %s7, 0
    %p53 = por %p51, %p52
    %p54 = scmp.ne.s32.totalorder %s43, %s46
    %p55 = scmp.eq.s32.totalorder %s12, 1
    %p56 = por %p54, %p55
    %p57 = scmp.ne.s32.totalorder %s46, %s47
    %p58 = scmp.eq.s32.totalorder %s12, 0
    %p59 = por %p57, %p58
    %p60 = scmp.ne.s32.totalorder %s46, %s47
    %p61 = scmp.eq.s32.totalorder %s13, 1
    %p62 = por %p60, %p61
    %p64 = scmp.ne.s32.totalorder %s47, %s63
    %p65 = scmp.eq.s32.totalorder %s13, 0
    %p66 = por %p64, %p65
    %p67 = scmp.le.s32.totalorder 1, %s7
    %p68 = scmp.lt.s32.totalorder %s7, 3
    %p69 = pnand %p67, %p68
    %p70 = pneg %p69
    // Predicated region
    $region9: #{my_resnet_forward.23} parent=5 // pred_check
      _
    $region10: #{my_resnet_forward.23} parent=5 // pred_check_branch
      %72 = sbr.rel (%p69) target = $region12
    $region11: #{my_resnet_forward.23} parent=5 // pred_region
      %s73 = ssub.s32 %s7, 1
    $region12: #{my_resnet_forward.23} parent=5 // pred_fallthru
      _
    %p74 = scmp.lt.s32.totalorder %s7, 2
    // Predicated region
    $region13: #{my_resnet_forward.23} parent=5 // pred_check
      %p75 = pneg %p74
    $region14: #{my_resnet_forward.23} parent=5 // pred_check_branch
      %77 = sbr.rel (%p75) target = $region16
    $region15: #{my_resnet_forward.23} parent=5 // pred_region
      // Predicated region
      $region17: #{my_resnet_forward.23} parent=15 // pred_check
        %p78 = pneg %p27
      $region18: #{my_resnet_forward.23} parent=15 // pred_check_branch
        %80 = sbr.rel (%p78) target = $region20
      $region19: #{my_resnet_forward.23} parent=15 // pred_region
        %s81 = smul.u32 64, %s7
        %p82 = scmp.lt.s32.totalorder %s81, 127
        %s83 = scalar_select %p82, %s81, 127
        %s84 = smul.addr %s83, 2
        %s85 = smul.addr %s84, 4
        %s86 = scalar_lea.vmem %s0, %s85
        %s87 = smul.u32 64, %s7
      $region20: #{my_resnet_forward.23} parent=15 // pred_fallthru
        _
    $region16: #{my_resnet_forward.23} parent=5 // pred_fallthru
      _
    %p88 = scmp.le.s32.totalorder 1, %s7
    %p89 = scmp.lt.s32.totalorder %s7, 3
    %p90 = pnand %p88, %p89
    %p91 = pneg %p90
    // Predicated region
    $region21: #{my_resnet_forward.23} parent=5 // pred_check
      _
    $region22: #{my_resnet_forward.23} parent=5 // pred_check_branch
      %93 = sbr.rel (%p90) target = $region24
    $region23: #{my_resnet_forward.23} parent=5 // pred_region
      %s94 = ssub.s32 %s7, 1
      %s95 = smul.u32 64, %s12
      %p96 = scmp.lt.s32.totalorder %s95, 127
      %s97 = scalar_select %p96, %s95, 127
      %s98 = smul.addr %s97, 2
      %s99 = smul.addr %s98, 4
      %s100 = scalar_lea.vmem %s0, %s99
      %p101 = pneg %p33
      %p102 = pneg %p30
      %p103 = pneg %p59
      %p104 = pneg %p56
      %s105 = smul.u32 8, %s12
      %p106 = scmp.lt.s32.totalorder %s105, 15
      %s107 = scalar_select %p106, %s105, 15
      %s108 = smul.addr %s107, 4
      %s109 = scalar_lea.vmem %s1, %s108
      %s110 = smul.u32 64, %s12
      %p111 = scmp.lt.s32.totalorder %s110, 127
      %s112 = scalar_select %p111, %s110, 127
      %s113 = smul.addr %s112, 2
      %s114 = smul.addr %s113, 4
      %s115 = scalar_lea.vmem %s0, %s114
      %s116 = smul.u32 64, %s12
      %s117 = smul.u32 8, %s12
      %p118 = scmp.lt.s32.totalorder %s117, 15
      %s119 = scalar_select %p118, %s117, 15
      %s120 = smul.addr %s119, 4
      %s121 = scalar_lea.vmem %s1, %s120
      %s122 = smul.u32 8, %s12
      %v123 = vld [vmem:[%s115] sm:$0x1]
      %v124 = vld [vmem:[%s115 + $0x8] sm:$0x1]
      %v125 = vld [vmem:[%s115 + $0x10] sm:$0x1]
      %v126 = vld [vmem:[%s115 + $0x18] sm:$0x1]
      %v127 = vld [vmem:[%s115 + $0x20] sm:$0x1]
      %v128 = vld [vmem:[%s115 + $0x28] sm:$0x1]
      %v129 = vld [vmem:[%s115 + $0x30] sm:$0x1]
      %v130 = vld [vmem:[%s115 + $0x38] sm:$0x1]
      %v131 = vld [vmem:[%s115 + $0x40] sm:$0x1]
      %v132 = vld [vmem:[%s115 + $0x48] sm:$0x1]
      %v133 = vld [vmem:[%s115 + $0x50] sm:$0x1]
      %v134 = vld [vmem:[%s115 + $0x58] sm:$0x1]
      %v135 = vld [vmem:[%s115 + $0x60] sm:$0x1]
      %v136 = vld [vmem:[%s115 + $0x68] sm:$0x1]
      %v137 = vld [vmem:[%s115 + $0x70] sm:$0x1]
      %v138 = vld [vmem:[%s115 + $0x78] sm:$0x1]
      %v139 = vld [vmem:[%s115 + $0x80] sm:$0x1]
      %v140 = vld [vmem:[%s115 + $0x88] sm:$0x1]
      %v141 = vld [vmem:[%s115 + $0x90] sm:$0x1]
      %v142 = vld [vmem:[%s115 + $0x98] sm:$0x1]
      %v143 = vld [vmem:[%s115 + $0xa0] sm:$0x1]
      %v144 = vld [vmem:[%s115 + $0xa8] sm:$0x1]
      %v145 = vld [vmem:[%s115 + $0xb0] sm:$0x1]
      %v146 = vld [vmem:[%s115 + $0xb8] sm:$0x1]
      %v147 = vld [vmem:[%s115 + $0xc0] sm:$0x1]
      %v148 = vld [vmem:[%s115 + $0xc8] sm:$0x1]
      %v149 = vld [vmem:[%s115 + $0xd0] sm:$0x1]
      %v150 = vld [vmem:[%s115 + $0xd8] sm:$0x1]
      %v151 = vld [vmem:[%s115 + $0xe0] sm:$0x1]
      %v152 = vld [vmem:[%s115 + $0xe8] sm:$0x1]
      %v153 = vld [vmem:[%s115 + $0xf0] sm:$0x1]
      %v154 = vld [vmem:[%s115 + $0xf8] sm:$0x1]
      %v155 = vld [vmem:[%s115 + $0x100] sm:$0x1]
      %v156 = vld [vmem:[%s115 + $0x108] sm:$0x1]
      %v157 = vld [vmem:[%s115 + $0x110] sm:$0x1]
      %v158 = vld [vmem:[%s115 + $0x118] sm:$0x1]
      %v159 = vld [vmem:[%s115 + $0x120] sm:$0x1]
      %v160 = vld [vmem:[%s115 + $0x128] sm:$0x1]
      %v161 = vld [vmem:[%s115 + $0x130] sm:$0x1]
      %v162 = vld [vmem:[%s115 + $0x138] sm:$0x1]
      %v163 = vld [vmem:[%s115 + $0x140] sm:$0x1]
      %v164 = vld [vmem:[%s115 + $0x148] sm:$0x1]
      %v165 = vld [vmem:[%s115 + $0x150] sm:$0x1]
      %v166 = vld [vmem:[%s115 + $0x158] sm:$0x1]
      %v167 = vld [vmem:[%s115 + $0x160] sm:$0x1]
      %v168 = vld [vmem:[%s115 + $0x168] sm:$0x1]
      %v169 = vld [vmem:[%s115 + $0x170] sm:$0x1]
      %v170 = vld [vmem:[%s115 + $0x178] sm:$0x1]
      %v171 = vld [vmem:[%s115 + $0x180] sm:$0x1]
      %v172 = vld [vmem:[%s115 + $0x188] sm:$0x1]
      %v173 = vld [vmem:[%s115 + $0x190] sm:$0x1]
      %v174 = vld [vmem:[%s115 + $0x198] sm:$0x1]
      %v175 = vld [vmem:[%s115 + $0x1a0] sm:$0x1]
      %v176 = vld [vmem:[%s115 + $0x1a8] sm:$0x1]
      %v177 = vld [vmem:[%s115 + $0x1b0] sm:$0x1]
      %v178 = vld [vmem:[%s115 + $0x1b8] sm:$0x1]
      %v179 = vld [vmem:[%s115 + $0x1c0] sm:$0x1]
      %v180 = vld [vmem:[%s115 + $0x1c8] sm:$0x1]
      %v181 = vld [vmem:[%s115 + $0x1d0] sm:$0x1]
      %v182 = vld [vmem:[%s115 + $0x1d8] sm:$0x1]
      %v183 = vld [vmem:[%s115 + $0x1e0] sm:$0x1]
      %v184 = vld [vmem:[%s115 + $0x1e8] sm:$0x1]
      %v185 = vld [vmem:[%s115 + $0x1f0] sm:$0x1]
      %v186 = vld [vmem:[%s115 + $0x1f8] sm:$0x1]
      %v187 = vunpack.c.l.bf16 %v123
      %v188 = vunpack.c.l.bf16 %v124
      %v189 = vunpack.c.l.bf16 %v125
      %v190 = vunpack.c.l.bf16 %v126
      %v191 = vunpack.c.l.bf16 %v127
      %v192 = vunpack.c.l.bf16 %v128
      %v193 = vunpack.c.l.bf16 %v129
      %v194 = vunpack.c.l.bf16 %v130
      %v195 = vunpack.c.l.bf16 %v131
      %v196 = vunpack.c.l.bf16 %v132
      %v197 = vunpack.c.l.bf16 %v133
      %v198 = vunpack.c.l.bf16 %v134
      %v199 = vunpack.c.l.bf16 %v135
      %v200 = vunpack.c.l.bf16 %v136
      %v201 = vunpack.c.l.bf16 %v137
      %v202 = vunpack.c.l.bf16 %v138
      %v203 = vunpack.c.l.bf16 %v139
      %v204 = vunpack.c.l.bf16 %v140
      %v205 = vunpack.c.l.bf16 %v141
      %v206 = vunpack.c.l.bf16 %v142
      %v207 = vunpack.c.l.bf16 %v143
      %v208 = vunpack.c.l.bf16 %v144
      %v209 = vunpack.c.l.bf16 %v145
      %v210 = vunpack.c.l.bf16 %v146
      %v211 = vunpack.c.l.bf16 %v147
      %v212 = vunpack.c.l.bf16 %v148
      %v213 = vunpack.c.l.bf16 %v149
      %v214 = vunpack.c.l.bf16 %v150
      %v215 = vunpack.c.l.bf16 %v151
      %v216 = vunpack.c.l.bf16 %v152
      %v217 = vunpack.c.l.bf16 %v153
      %v218 = vunpack.c.l.bf16 %v154
      %v219 = vunpack.c.l.bf16 %v155
      %v220 = vunpack.c.l.bf16 %v156
      %v221 = vunpack.c.l.bf16 %v157
      %v222 = vunpack.c.l.bf16 %v158
      %v223 = vunpack.c.l.bf16 %v159
      %v224 = vunpack.c.l.bf16 %v160
      %v225 = vunpack.c.l.bf16 %v161
      %v226 = vunpack.c.l.bf16 %v162
      %v227 = vunpack.c.l.bf16 %v163
      %v228 = vunpack.c.l.bf16 %v164
      %v229 = vunpack.c.l.bf16 %v165
      %v230 = vunpack.c.l.bf16 %v166
      %v231 = vunpack.c.l.bf16 %v167
      %v232 = vunpack.c.l.bf16 %v168
      %v233 = vunpack.c.l.bf16 %v169
      %v234 = vunpack.c.l.bf16 %v170
      %v235 = vunpack.c.l.bf16 %v171
      %v236 = vunpack.c.l.bf16 %v172
      %v237 = vunpack.c.l.bf16 %v173
      %v238 = vunpack.c.l.bf16 %v174
      %v239 = vunpack.c.l.bf16 %v175
      %v240 = vunpack.c.l.bf16 %v176
      %v241 = vunpack.c.l.bf16 %v177
      %v242 = vunpack.c.l.bf16 %v178
      %v243 = vunpack.c.l.bf16 %v179
      %v244 = vunpack.c.l.bf16 %v180
      %v245 = vunpack.c.l.bf16 %v181
      %v246 = vunpack.c.l.bf16 %v182
      %v247 = vunpack.c.l.bf16 %v183
      %v248 = vunpack.c.l.bf16 %v184
      %v249 = vunpack.c.l.bf16 %v185
      %v250 = vunpack.c.l.bf16 %v186
      %v315 = vrot.slane %v187, 1
      %v316 = vrot.slane %v188, 1
      %v317 = vrot.slane %v189, 1
      %v318 = vrot.slane %v190, 1
      %v319 = vrot.slane %v191, 1
      %v320 = vrot.slane %v192, 1
      %v321 = vrot.slane %v193, 1
      %v322 = vrot.slane %v194, 1
      %v323 = vrot.slane %v195, 1
      %v324 = vrot.slane %v196, 1
      %v325 = vrot.slane %v197, 1
      %v326 = vrot.slane %v198, 1
      %v327 = vrot.slane %v199, 1
      %v328 = vrot.slane %v200, 1
      %v329 = vrot.slane %v201, 1
      %v330 = vrot.slane %v202, 1
      %v331 = vrot.slane %v203, 1
      %v332 = vrot.slane %v204, 1
      %v333 = vrot.slane %v205, 1
      %v334 = vrot.slane %v206, 1
      %v335 = vrot.slane %v207, 1
      %v336 = vrot.slane %v208, 1
      %v337 = vrot.slane %v209, 1
      %v338 = vrot.slane %v210, 1
      %v339 = vrot.slane %v211, 1
      %v340 = vrot.slane %v212, 1
      %v341 = vrot.slane %v213, 1
      %v342 = vrot.slane %v214, 1
      %v343 = vrot.slane %v215, 1
      %v344 = vrot.slane %v216, 1
      %v345 = vrot.slane %v217, 1
      %v346 = vrot.slane %v218, 1
      %v347 = vrot.slane %v219, 1
      %v348 = vrot.slane %v220, 1
      %v349 = vrot.slane %v221, 1
      %v350 = vrot.slane %v222, 1
      %v351 = vrot.slane %v223, 1
      %v352 = vrot.slane %v224, 1
      %v353 = vrot.slane %v225, 1
      %v354 = vrot.slane %v226, 1
      %v355 = vrot.slane %v227, 1
      %v356 = vrot.slane %v228, 1
      %v357 = vrot.slane %v229, 1
      %v358 = vrot.slane %v230, 1
      %v359 = vrot.slane %v231, 1
      %v360 = vrot.slane %v232, 1
      %v361 = vrot.slane %v233, 1
      %v362 = vrot.slane %v234, 1
      %v363 = vrot.slane %v235, 1
      %v364 = vrot.slane %v236, 1
      %v365 = vrot.slane %v237, 1
      %v366 = vrot.slane %v238, 1
      %v367 = vrot.slane %v239, 1
      %v368 = vrot.slane %v240, 1
      %v369 = vrot.slane %v241, 1
      %v370 = vrot.slane %v242, 1
      %v371 = vrot.slane %v243, 1
      %v372 = vrot.slane %v244, 1
      %v373 = vrot.slane %v245, 1
      %v374 = vrot.slane %v246, 1
      %v375 = vrot.slane %v247, 1
      %v376 = vrot.slane %v248, 1
      %v377 = vrot.slane %v249, 1
      %v378 = vrot.slane %v250, 1
      %v443 = vmax.f32 %v187, %v315
      %v444 = vmax.f32 %v188, %v316
      %v445 = vmax.f32 %v189, %v317
      %v446 = vmax.f32 %v190, %v318
      %v447 = vmax.f32 %v191, %v319
      %v448 = vmax.f32 %v192, %v320
      %v449 = vmax.f32 %v193, %v321
      %v450 = vmax.f32 %v194, %v322
      %v451 = vmax.f32 %v195, %v323
      %v452 = vmax.f32 %v196, %v324
      %v453 = vmax.f32 %v197, %v325
      %v454 = vmax.f32 %v198, %v326
      %v455 = vmax.f32 %v199, %v327
      %v456 = vmax.f32 %v200, %v328
      %v457 = vmax.f32 %v201, %v329
      %v458 = vmax.f32 %v202, %v330
      %v459 = vmax.f32 %v203, %v331
      %v460 = vmax.f32 %v204, %v332
      %v461 = vmax.f32 %v205, %v333
      %v462 = vmax.f32 %v206, %v334
      %v463 = vmax.f32 %v207, %v335
      %v464 = vmax.f32 %v208, %v336
      %v465 = vmax.f32 %v209, %v337
      %v466 = vmax.f32 %v210, %v338
      %v467 = vmax.f32 %v211, %v339
      %v468 = vmax.f32 %v212, %v340
      %v469 = vmax.f32 %v213, %v341
      %v470 = vmax.f32 %v214, %v342
      %v471 = vmax.f32 %v215, %v343
      %v472 = vmax.f32 %v216, %v344
      %v473 = vmax.f32 %v217, %v345
      %v474 = vmax.f32 %v218, %v346
      %v475 = vmax.f32 %v219, %v347
      %v476 = vmax.f32 %v220, %v348
      %v477 = vmax.f32 %v221, %v349
      %v478 = vmax.f32 %v222, %v350
      %v479 = vmax.f32 %v223, %v351
      %v480 = vmax.f32 %v224, %v352
      %v481 = vmax.f32 %v225, %v353
      %v482 = vmax.f32 %v226, %v354
      %v483 = vmax.f32 %v227, %v355
      %v484 = vmax.f32 %v228, %v356
      %v485 = vmax.f32 %v229, %v357
      %v486 = vmax.f32 %v230, %v358
      %v487 = vmax.f32 %v231, %v359
      %v488 = vmax.f32 %v232, %v360
      %v489 = vmax.f32 %v233, %v361
      %v490 = vmax.f32 %v234, %v362
      %v491 = vmax.f32 %v235, %v363
      %v492 = vmax.f32 %v236, %v364
      %v493 = vmax.f32 %v237, %v365
      %v494 = vmax.f32 %v238, %v366
      %v495 = vmax.f32 %v239, %v367
      %v496 = vmax.f32 %v240, %v368
      %v497 = vmax.f32 %v241, %v369
      %v498 = vmax.f32 %v242, %v370
      %v499 = vmax.f32 %v243, %v371
      %v500 = vmax.f32 %v244, %v372
      %v501 = vmax.f32 %v245, %v373
      %v502 = vmax.f32 %v246, %v374
      %v503 = vmax.f32 %v247, %v375
      %v504 = vmax.f32 %v248, %v376
      %v505 = vmax.f32 %v249, %v377
      %v506 = vmax.f32 %v250, %v378
      %v507 = vpack.c.bf16 %v443, %v443
      %v508 = vpack.c.bf16 %v444, %v444
      %v509 = vpack.c.bf16 %v445, %v445
      %v510 = vpack.c.bf16 %v446, %v446
      %v511 = vpack.c.bf16 %v447, %v447
      %v512 = vpack.c.bf16 %v448, %v448
      %v513 = vpack.c.bf16 %v449, %v449
      %v514 = vpack.c.bf16 %v450, %v450
      %v515 = vpack.c.bf16 %v451, %v451
      %v516 = vpack.c.bf16 %v452, %v452
      %v517 = vpack.c.bf16 %v453, %v453
      %v518 = vpack.c.bf16 %v454, %v454
      %v519 = vpack.c.bf16 %v455, %v455
      %v520 = vpack.c.bf16 %v456, %v456
      %v521 = vpack.c.bf16 %v457, %v457
      %v522 = vpack.c.bf16 %v458, %v458
      %v523 = vpack.c.bf16 %v459, %v459
      %v524 = vpack.c.bf16 %v460, %v460
      %v525 = vpack.c.bf16 %v461, %v461
      %v526 = vpack.c.bf16 %v462, %v462
      %v527 = vpack.c.bf16 %v463, %v463
      %v528 = vpack.c.bf16 %v464, %v464
      %v529 = vpack.c.bf16 %v465, %v465
      %v530 = vpack.c.bf16 %v466, %v466
      %v531 = vpack.c.bf16 %v467, %v467
      %v532 = vpack.c.bf16 %v468, %v468
      %v533 = vpack.c.bf16 %v469, %v469
      %v534 = vpack.c.bf16 %v470, %v470
      %v535 = vpack.c.bf16 %v471, %v471
      %v536 = vpack.c.bf16 %v472, %v472
      %v537 = vpack.c.bf16 %v473, %v473
      %v538 = vpack.c.bf16 %v474, %v474
      %v539 = vpack.c.bf16 %v475, %v475
      %v540 = vpack.c.bf16 %v476, %v476
      %v541 = vpack.c.bf16 %v477, %v477
      %v542 = vpack.c.bf16 %v478, %v478
      %v543 = vpack.c.bf16 %v479, %v479
      %v544 = vpack.c.bf16 %v480, %v480
      %v545 = vpack.c.bf16 %v481, %v481
      %v546 = vpack.c.bf16 %v482, %v482
      %v547 = vpack.c.bf16 %v483, %v483
      %v548 = vpack.c.bf16 %v484, %v484
      %v549 = vpack.c.bf16 %v485, %v485
      %v550 = vpack.c.bf16 %v486, %v486
      %v551 = vpack.c.bf16 %v487, %v487
      %v552 = vpack.c.bf16 %v488, %v488
      %v553 = vpack.c.bf16 %v489, %v489
      %v554 = vpack.c.bf16 %v490, %v490
      %v555 = vpack.c.bf16 %v491, %v491
      %v556 = vpack.c.bf16 %v492, %v492
      %v557 = vpack.c.bf16 %v493, %v493
      %v558 = vpack.c.bf16 %v494, %v494
      %v559 = vpack.c.bf16 %v495, %v495
      %v560 = vpack.c.bf16 %v496, %v496
      %v561 = vpack.c.bf16 %v497, %v497
      %v562 = vpack.c.bf16 %v498, %v498
      %v563 = vpack.c.bf16 %v499, %v499
      %v564 = vpack.c.bf16 %v500, %v500
      %v565 = vpack.c.bf16 %v501, %v501
      %v566 = vpack.c.bf16 %v502, %v502
      %v567 = vpack.c.bf16 %v503, %v503
      %v568 = vpack.c.bf16 %v504, %v504
      %v569 = vpack.c.bf16 %v505, %v505
      %v570 = vpack.c.bf16 %v506, %v506
      %v571 = vld [vmem:[%s115] sm:$0x2]
      %v572 = vld [vmem:[%s115 + $0x8] sm:$0x2]
      %v573 = vld [vmem:[%s115 + $0x10] sm:$0x2]
      %v574 = vld [vmem:[%s115 + $0x18] sm:$0x2]
      %v575 = vld [vmem:[%s115 + $0x20] sm:$0x2]
      %v576 = vld [vmem:[%s115 + $0x28] sm:$0x2]
      %v577 = vld [vmem:[%s115 + $0x30] sm:$0x2]
      %v578 = vld [vmem:[%s115 + $0x38] sm:$0x2]
      %v579 = vld [vmem:[%s115 + $0x40] sm:$0x2]
      %v580 = vld [vmem:[%s115 + $0x48] sm:$0x2]
      %v581 = vld [vmem:[%s115 + $0x50] sm:$0x2]
      %v582 = vld [vmem:[%s115 + $0x58] sm:$0x2]
      %v583 = vld [vmem:[%s115 + $0x60] sm:$0x2]
      %v584 = vld [vmem:[%s115 + $0x68] sm:$0x2]
      %v585 = vld [vmem:[%s115 + $0x70] sm:$0x2]
      %v586 = vld [vmem:[%s115 + $0x78] sm:$0x2]
      %v587 = vld [vmem:[%s115 + $0x80] sm:$0x2]
      %v588 = vld [vmem:[%s115 + $0x88] sm:$0x2]
      %v589 = vld [vmem:[%s115 + $0x90] sm:$0x2]
      %v590 = vld [vmem:[%s115 + $0x98] sm:$0x2]
      %v591 = vld [vmem:[%s115 + $0xa0] sm:$0x2]
      %v592 = vld [vmem:[%s115 + $0xa8] sm:$0x2]
      %v593 = vld [vmem:[%s115 + $0xb0] sm:$0x2]
      %v594 = vld [vmem:[%s115 + $0xb8] sm:$0x2]
      %v595 = vld [vmem:[%s115 + $0xc0] sm:$0x2]
      %v596 = vld [vmem:[%s115 + $0xc8] sm:$0x2]
      %v597 = vld [vmem:[%s115 + $0xd0] sm:$0x2]
      %v598 = vld [vmem:[%s115 + $0xd8] sm:$0x2]
      %v599 = vld [vmem:[%s115 + $0xe0] sm:$0x2]
      %v600 = vld [vmem:[%s115 + $0xe8] sm:$0x2]
      %v601 = vld [vmem:[%s115 + $0xf0] sm:$0x2]
      %v602 = vld [vmem:[%s115 + $0xf8] sm:$0x2]
      %v603 = vld [vmem:[%s115 + $0x100] sm:$0x2]
      %v604 = vld [vmem:[%s115 + $0x108] sm:$0x2]
      %v605 = vld [vmem:[%s115 + $0x110] sm:$0x2]
      %v606 = vld [vmem:[%s115 + $0x118] sm:$0x2]
      %v607 = vld [vmem:[%s115 + $0x120] sm:$0x2]
      %v608 = vld [vmem:[%s115 + $0x128] sm:$0x2]
      %v609 = vld [vmem:[%s115 + $0x130] sm:$0x2]
      %v610 = vld [vmem:[%s115 + $0x138] sm:$0x2]
      %v611 = vld [vmem:[%s115 + $0x140] sm:$0x2]
      %v612 = vld [vmem:[%s115 + $0x148] sm:$0x2]
      %v613 = vld [vmem:[%s115 + $0x150] sm:$0x2]
      %v614 = vld [vmem:[%s115 + $0x158] sm:$0x2]
      %v615 = vld [vmem:[%s115 + $0x160] sm:$0x2]
      %v616 = vld [vmem:[%s115 + $0x168] sm:$0x2]
      %v617 = vld [vmem:[%s115 + $0x170] sm:$0x2]
      %v618 = vld [vmem:[%s115 + $0x178] sm:$0x2]
      %v619 = vld [vmem:[%s115 + $0x180] sm:$0x2]
      %v620 = vld [vmem:[%s115 + $0x188] sm:$0x2]
      %v621 = vld [vmem:[%s115 + $0x190] sm:$0x2]
      %v622 = vld [vmem:[%s115 + $0x198] sm:$0x2]
      %v623 = vld [vmem:[%s115 + $0x1a0] sm:$0x2]
      %v624 = vld [vmem:[%s115 + $0x1a8] sm:$0x2]
      %v625 = vld [vmem:[%s115 + $0x1b0] sm:$0x2]
      %v626 = vld [vmem:[%s115 + $0x1b8] sm:$0x2]
      %v627 = vld [vmem:[%s115 + $0x1c0] sm:$0x2]
      %v628 = vld [vmem:[%s115 + $0x1c8] sm:$0x2]
      %v629 = vld [vmem:[%s115 + $0x1d0] sm:$0x2]
      %v630 = vld [vmem:[%s115 + $0x1d8] sm:$0x2]
      %v631 = vld [vmem:[%s115 + $0x1e0] sm:$0x2]
      %v632 = vld [vmem:[%s115 + $0x1e8] sm:$0x2]
      %v633 = vld [vmem:[%s115 + $0x1f0] sm:$0x2]
      %v634 = vld [vmem:[%s115 + $0x1f8] sm:$0x2]
      %v635 = vunpack.c.l.bf16 %v507
      %v636 = vunpack.c.l.bf16 %v508
      %v637 = vunpack.c.l.bf16 %v509
      %v638 = vunpack.c.l.bf16 %v510
      %v639 = vunpack.c.l.bf16 %v511
      %v640 = vunpack.c.l.bf16 %v512
      %v641 = vunpack.c.l.bf16 %v513
      %v642 = vunpack.c.l.bf16 %v514
      %v643 = vunpack.c.l.bf16 %v515
      %v644 = vunpack.c.l.bf16 %v516
      %v645 = vunpack.c.l.bf16 %v517
      %v646 = vunpack.c.l.bf16 %v518
      %v647 = vunpack.c.l.bf16 %v519
      %v648 = vunpack.c.l.bf16 %v520
      %v649 = vunpack.c.l.bf16 %v521
      %v650 = vunpack.c.l.bf16 %v522
      %v651 = vunpack.c.l.bf16 %v523
      %v652 = vunpack.c.l.bf16 %v524
      %v653 = vunpack.c.l.bf16 %v525
      %v654 = vunpack.c.l.bf16 %v526
      %v655 = vunpack.c.l.bf16 %v527
      %v656 = vunpack.c.l.bf16 %v528
      %v657 = vunpack.c.l.bf16 %v529
      %v658 = vunpack.c.l.bf16 %v530
      %v659 = vunpack.c.l.bf16 %v531
      %v660 = vunpack.c.l.bf16 %v532
      %v661 = vunpack.c.l.bf16 %v533
      %v662 = vunpack.c.l.bf16 %v534
      %v663 = vunpack.c.l.bf16 %v535
      %v664 = vunpack.c.l.bf16 %v536
      %v665 = vunpack.c.l.bf16 %v537
      %v666 = vunpack.c.l.bf16 %v538
      %v667 = vunpack.c.l.bf16 %v539
      %v668 = vunpack.c.l.bf16 %v540
      %v669 = vunpack.c.l.bf16 %v541
      %v670 = vunpack.c.l.bf16 %v542
      %v671 = vunpack.c.l.bf16 %v543
      %v672 = vunpack.c.l.bf16 %v544
      %v673 = vunpack.c.l.bf16 %v545
      %v674 = vunpack.c.l.bf16 %v546
      %v675 = vunpack.c.l.bf16 %v547
      %v676 = vunpack.c.l.bf16 %v548
      %v677 = vunpack.c.l.bf16 %v549
      %v678 = vunpack.c.l.bf16 %v550
      %v679 = vunpack.c.l.bf16 %v551
      %v680 = vunpack.c.l.bf16 %v552
      %v681 = vunpack.c.l.bf16 %v553
      %v682 = vunpack.c.l.bf16 %v554
      %v683 = vunpack.c.l.bf16 %v555
      %v684 = vunpack.c.l.bf16 %v556
      %v685 = vunpack.c.l.bf16 %v557
      %v686 = vunpack.c.l.bf16 %v558
      %v687 = vunpack.c.l.bf16 %v559
      %v688 = vunpack.c.l.bf16 %v560
      %v689 = vunpack.c.l.bf16 %v561
      %v690 = vunpack.c.l.bf16 %v562
      %v691 = vunpack.c.l.bf16 %v563
      %v692 = vunpack.c.l.bf16 %v564
      %v693 = vunpack.c.l.bf16 %v565
      %v694 = vunpack.c.l.bf16 %v566
      %v695 = vunpack.c.l.bf16 %v567
      %v696 = vunpack.c.l.bf16 %v568
      %v697 = vunpack.c.l.bf16 %v569
      %v698 = vunpack.c.l.bf16 %v570
      %v699 = vunpack.c.l.bf16 %v571
      %v700 = vunpack.c.l.bf16 %v572
      %v701 = vunpack.c.l.bf16 %v573
      %v702 = vunpack.c.l.bf16 %v574
      %v703 = vunpack.c.l.bf16 %v575
      %v704 = vunpack.c.l.bf16 %v576
      %v705 = vunpack.c.l.bf16 %v577
      %v706 = vunpack.c.l.bf16 %v578
      %v707 = vunpack.c.l.bf16 %v579
      %v708 = vunpack.c.l.bf16 %v580
      %v709 = vunpack.c.l.bf16 %v581
      %v710 = vunpack.c.l.bf16 %v582
      %v711 = vunpack.c.l.bf16 %v583
      %v712 = vunpack.c.l.bf16 %v584
      %v713 = vunpack.c.l.bf16 %v585
      %v714 = vunpack.c.l.bf16 %v586
      %v715 = vunpack.c.l.bf16 %v587
      %v716 = vunpack.c.l.bf16 %v588
      %v717 = vunpack.c.l.bf16 %v589
      %v718 = vunpack.c.l.bf16 %v590
      %v719 = vunpack.c.l.bf16 %v591
      %v720 = vunpack.c.l.bf16 %v592
      %v721 = vunpack.c.l.bf16 %v593
      %v722 = vunpack.c.l.bf16 %v594
      %v723 = vunpack.c.l.bf16 %v595
      %v724 = vunpack.c.l.bf16 %v596
      %v725 = vunpack.c.l.bf16 %v597
      %v726 = vunpack.c.l.bf16 %v598
      %v727 = vunpack.c.l.bf16 %v599
      %v728 = vunpack.c.l.bf16 %v600
      %v729 = vunpack.c.l.bf16 %v601
      %v730 = vunpack.c.l.bf16 %v602
      %v731 = vunpack.c.l.bf16 %v603
      %v732 = vunpack.c.l.bf16 %v604
      %v733 = vunpack.c.l.bf16 %v605
      %v734 = vunpack.c.l.bf16 %v606
      %v735 = vunpack.c.l.bf16 %v607
      %v736 = vunpack.c.l.bf16 %v608
      %v737 = vunpack.c.l.bf16 %v609
      %v738 = vunpack.c.l.bf16 %v610
      %v739 = vunpack.c.l.bf16 %v611
      %v740 = vunpack.c.l.bf16 %v612
      %v741 = vunpack.c.l.bf16 %v613
      %v742 = vunpack.c.l.bf16 %v614
      %v743 = vunpack.c.l.bf16 %v615
      %v744 = vunpack.c.l.bf16 %v616
      %v745 = vunpack.c.l.bf16 %v617
      %v746 = vunpack.c.l.bf16 %v618
      %v747 = vunpack.c.l.bf16 %v619
      %v748 = vunpack.c.l.bf16 %v620
      %v749 = vunpack.c.l.bf16 %v621
      %v750 = vunpack.c.l.bf16 %v622
      %v751 = vunpack.c.l.bf16 %v623
      %v752 = vunpack.c.l.bf16 %v624
      %v753 = vunpack.c.l.bf16 %v625
      %v754 = vunpack.c.l.bf16 %v626
      %v755 = vunpack.c.l.bf16 %v627
      %v756 = vunpack.c.l.bf16 %v628
      %v757 = vunpack.c.l.bf16 %v629
      %v758 = vunpack.c.l.bf16 %v630
      %v759 = vunpack.c.l.bf16 %v631
      %v760 = vunpack.c.l.bf16 %v632
      %v761 = vunpack.c.l.bf16 %v633
      %v762 = vunpack.c.l.bf16 %v634
      %v827 = vrot.slane %v699, 2
      %v828 = vrot.slane %v700, 2
      %v829 = vrot.slane %v701, 2
      %v830 = vrot.slane %v702, 2
      %v831 = vrot.slane %v703, 2
      %v832 = vrot.slane %v704, 2
      %v833 = vrot.slane %v705, 2
      %v834 = vrot.slane %v706, 2
      %v835 = vrot.slane %v707, 2
      %v836 = vrot.slane %v708, 2
      %v837 = vrot.slane %v709, 2
      %v838 = vrot.slane %v710, 2
      %v839 = vrot.slane %v711, 2
      %v840 = vrot.slane %v712, 2
      %v841 = vrot.slane %v713, 2
      %v842 = vrot.slane %v714, 2
      %v843 = vrot.slane %v715, 2
      %v844 = vrot.slane %v716, 2
      %v845 = vrot.slane %v717, 2
      %v846 = vrot.slane %v718, 2
      %v847 = vrot.slane %v719, 2
      %v848 = vrot.slane %v720, 2
      %v849 = vrot.slane %v721, 2
      %v850 = vrot.slane %v722, 2
      %v851 = vrot.slane %v723, 2
      %v852 = vrot.slane %v724, 2
      %v853 = vrot.slane %v725, 2
      %v854 = vrot.slane %v726, 2
      %v855 = vrot.slane %v727, 2
      %v856 = vrot.slane %v728, 2
      %v857 = vrot.slane %v729, 2
      %v858 = vrot.slane %v730, 2
      %v859 = vrot.slane %v731, 2
      %v860 = vrot.slane %v732, 2
      %v861 = vrot.slane %v733, 2
      %v862 = vrot.slane %v734, 2
      %v863 = vrot.slane %v735, 2
      %v864 = vrot.slane %v736, 2
      %v865 = vrot.slane %v737, 2
      %v866 = vrot.slane %v738, 2
      %v867 = vrot.slane %v739, 2
      %v868 = vrot.slane %v740, 2
      %v869 = vrot.slane %v741, 2
      %v870 = vrot.slane %v742, 2
      %v871 = vrot.slane %v743, 2
      %v872 = vrot.slane %v744, 2
      %v873 = vrot.slane %v745, 2
      %v874 = vrot.slane %v746, 2
      %v875 = vrot.slane %v747, 2
      %v876 = vrot.slane %v748, 2
      %v877 = vrot.slane %v749, 2
      %v878 = vrot.slane %v750, 2
      %v879 = vrot.slane %v751, 2
      %v880 = vrot.slane %v752, 2
      %v881 = vrot.slane %v753, 2
      %v882 = vrot.slane %v754, 2
      %v883 = vrot.slane %v755, 2
      %v884 = vrot.slane %v756, 2
      %v885 = vrot.slane %v757, 2
      %v886 = vrot.slane %v758, 2
      %v887 = vrot.slane %v759, 2
      %v888 = vrot.slane %v760, 2
      %v889 = vrot.slane %v761, 2
      %v890 = vrot.slane %v762, 2
      %v955 = vmax.f32 %v635, %v827
      %v956 = vmax.f32 %v636, %v828
      %v957 = vmax.f32 %v637, %v829
      %v958 = vmax.f32 %v638, %v830
      %v959 = vmax.f32 %v639, %v831
      %v960 = vmax.f32 %v640, %v832
      %v961 = vmax.f32 %v641, %v833
      %v962 = vmax.f32 %v642, %v834
      %v963 = vmax.f32 %v643, %v835
      %v964 = vmax.f32 %v644, %v836
      %v965 = vmax.f32 %v645, %v837
      %v966 = vmax.f32 %v646, %v838
      %v967 = vmax.f32 %v647, %v839
      %v968 = vmax.f32 %v648, %v840
      %v969 = vmax.f32 %v649, %v841
      %v970 = vmax.f32 %v650, %v842
      %v971 = vmax.f32 %v651, %v843
      %v972 = vmax.f32 %v652, %v844
      %v973 = vmax.f32 %v653, %v845
      %v974 = vmax.f32 %v654, %v846
      %v975 = vmax.f32 %v655, %v847
      %v976 = vmax.f32 %v656, %v848
      %v977 = vmax.f32 %v657, %v849
      %v978 = vmax.f32 %v658, %v850
      %v979 = vmax.f32 %v659, %v851
      %v980 = vmax.f32 %v660, %v852
      %v981 = vmax.f32 %v661, %v853
      %v982 = vmax.f32 %v662, %v854
      %v983 = vmax.f32 %v663, %v855
      %v984 = vmax.f32 %v664, %v856
      %v985 = vmax.f32 %v665, %v857
      %v986 = vmax.f32 %v666, %v858
      %v987 = vmax.f32 %v667, %v859
      %v988 = vmax.f32 %v668, %v860
      %v989 = vmax.f32 %v669, %v861
      %v990 = vmax.f32 %v670, %v862
      %v991 = vmax.f32 %v671, %v863
      %v992 = vmax.f32 %v672, %v864
      %v993 = vmax.f32 %v673, %v865
      %v994 = vmax.f32 %v674, %v866
      %v995 = vmax.f32 %v675, %v867
      %v996 = vmax.f32 %v676, %v868
      %v997 = vmax.f32 %v677, %v869
      %v998 = vmax.f32 %v678, %v870
      %v999 = vmax.f32 %v679, %v871
      %v1000 = vmax.f32 %v680, %v872
      %v1001 = vmax.f32 %v681, %v873
      %v1002 = vmax.f32 %v682, %v874
      %v1003 = vmax.f32 %v683, %v875
      %v1004 = vmax.f32 %v684, %v876
      %v1005 = vmax.f32 %v685, %v877
      %v1006 = vmax.f32 %v686, %v878
      %v1007 = vmax.f32 %v687, %v879
      %v1008 = vmax.f32 %v688, %v880
      %v1009 = vmax.f32 %v689, %v881
      %v1010 = vmax.f32 %v690, %v882
      %v1011 = vmax.f32 %v691, %v883
      %v1012 = vmax.f32 %v692, %v884
      %v1013 = vmax.f32 %v693, %v885
      %v1014 = vmax.f32 %v694, %v886
      %v1015 = vmax.f32 %v695, %v887
      %v1016 = vmax.f32 %v696, %v888
      %v1017 = vmax.f32 %v697, %v889
      %v1018 = vmax.f32 %v698, %v890
      %v1019 = vpack.c.bf16 %v955, %v955
      %v1020 = vpack.c.bf16 %v956, %v956
      %v1021 = vpack.c.bf16 %v957, %v957
      %v1022 = vpack.c.bf16 %v958, %v958
      %v1023 = vpack.c.bf16 %v959, %v959
      %v1024 = vpack.c.bf16 %v960, %v960
      %v1025 = vpack.c.bf16 %v961, %v961
      %v1026 = vpack.c.bf16 %v962, %v962
      %v1027 = vpack.c.bf16 %v963, %v963
      %v1028 = vpack.c.bf16 %v964, %v964
      %v1029 = vpack.c.bf16 %v965, %v965
      %v1030 = vpack.c.bf16 %v966, %v966
      %v1031 = vpack.c.bf16 %v967, %v967
      %v1032 = vpack.c.bf16 %v968, %v968
      %v1033 = vpack.c.bf16 %v969, %v969
      %v1034 = vpack.c.bf16 %v970, %v970
      %v1035 = vpack.c.bf16 %v971, %v971
      %v1036 = vpack.c.bf16 %v972, %v972
      %v1037 = vpack.c.bf16 %v973, %v973
      %v1038 = vpack.c.bf16 %v974, %v974
      %v1039 = vpack.c.bf16 %v975, %v975
      %v1040 = vpack.c.bf16 %v976, %v976
      %v1041 = vpack.c.bf16 %v977, %v977
      %v1042 = vpack.c.bf16 %v978, %v978
      %v1043 = vpack.c.bf16 %v979, %v979
      %v1044 = vpack.c.bf16 %v980, %v980
      %v1045 = vpack.c.bf16 %v981, %v981
      %v1046 = vpack.c.bf16 %v982, %v982
      %v1047 = vpack.c.bf16 %v983, %v983
      %v1048 = vpack.c.bf16 %v984, %v984
      %v1049 = vpack.c.bf16 %v985, %v985
      %v1050 = vpack.c.bf16 %v986, %v986
      %v1051 = vpack.c.bf16 %v987, %v987
      %v1052 = vpack.c.bf16 %v988, %v988
      %v1053 = vpack.c.bf16 %v989, %v989
      %v1054 = vpack.c.bf16 %v990, %v990
      %v1055 = vpack.c.bf16 %v991, %v991
      %v1056 = vpack.c.bf16 %v992, %v992
      %v1057 = vpack.c.bf16 %v993, %v993
      %v1058 = vpack.c.bf16 %v994, %v994
      %v1059 = vpack.c.bf16 %v995, %v995
      %v1060 = vpack.c.bf16 %v996, %v996
      %v1061 = vpack.c.bf16 %v997, %v997
      %v1062 = vpack.c.bf16 %v998, %v998
      %v1063 = vpack.c.bf16 %v999, %v999
      %v1064 = vpack.c.bf16 %v1000, %v1000
      %v1065 = vpack.c.bf16 %v1001, %v1001
      %v1066 = vpack.c.bf16 %v1002, %v1002
      %v1067 = vpack.c.bf16 %v1003, %v1003
      %v1068 = vpack.c.bf16 %v1004, %v1004
      %v1069 = vpack.c.bf16 %v1005, %v1005
      %v1070 = vpack.c.bf16 %v1006, %v1006
      %v1071 = vpack.c.bf16 %v1007, %v1007
      %v1072 = vpack.c.bf16 %v1008, %v1008
      %v1073 = vpack.c.bf16 %v1009, %v1009
      %v1074 = vpack.c.bf16 %v1010, %v1010
      %v1075 = vpack.c.bf16 %v1011, %v1011
      %v1076 = vpack.c.bf16 %v1012, %v1012
      %v1077 = vpack.c.bf16 %v1013, %v1013
      %v1078 = vpack.c.bf16 %v1014, %v1014
      %v1079 = vpack.c.bf16 %v1015, %v1015
      %v1080 = vpack.c.bf16 %v1016, %v1016
      %v1081 = vpack.c.bf16 %v1017, %v1017
      %v1082 = vpack.c.bf16 %v1018, %v1018
      %v1083 = vunpack.c.l.bf16 %v1019
      %v1084 = vunpack.c.l.bf16 %v1020
      %v1085 = vunpack.c.l.bf16 %v1021
      %v1086 = vunpack.c.l.bf16 %v1022
      %v1087 = vunpack.c.l.bf16 %v1023
      %v1088 = vunpack.c.l.bf16 %v1024
      %v1089 = vunpack.c.l.bf16 %v1025
      %v1090 = vunpack.c.l.bf16 %v1026
      %v1091 = vunpack.c.l.bf16 %v1027
      %v1092 = vunpack.c.l.bf16 %v1028
      %v1093 = vunpack.c.l.bf16 %v1029
      %v1094 = vunpack.c.l.bf16 %v1030
      %v1095 = vunpack.c.l.bf16 %v1031
      %v1096 = vunpack.c.l.bf16 %v1032
      %v1097 = vunpack.c.l.bf16 %v1033
      %v1098 = vunpack.c.l.bf16 %v1034
      %v1099 = vunpack.c.l.bf16 %v1035
      %v1100 = vunpack.c.l.bf16 %v1036
      %v1101 = vunpack.c.l.bf16 %v1037
      %v1102 = vunpack.c.l.bf16 %v1038
      %v1103 = vunpack.c.l.bf16 %v1039
      %v1104 = vunpack.c.l.bf16 %v1040
      %v1105 = vunpack.c.l.bf16 %v1041
      %v1106 = vunpack.c.l.bf16 %v1042
      %v1107 = vunpack.c.l.bf16 %v1043
      %v1108 = vunpack.c.l.bf16 %v1044
      %v1109 = vunpack.c.l.bf16 %v1045
      %v1110 = vunpack.c.l.bf16 %v1046
      %v1111 = vunpack.c.l.bf16 %v1047
      %v1112 = vunpack.c.l.bf16 %v1048
      %v1113 = vunpack.c.l.bf16 %v1049
      %v1114 = vunpack.c.l.bf16 %v1050
      %v1115 = vunpack.c.l.bf16 %v1051
      %v1116 = vunpack.c.l.bf16 %v1052
      %v1117 = vunpack.c.l.bf16 %v1053
      %v1118 = vunpack.c.l.bf16 %v1054
      %v1119 = vunpack.c.l.bf16 %v1055
      %v1120 = vunpack.c.l.bf16 %v1056
      %v1121 = vunpack.c.l.bf16 %v1057
      %v1122 = vunpack.c.l.bf16 %v1058
      %v1123 = vunpack.c.l.bf16 %v1059
      %v1124 = vunpack.c.l.bf16 %v1060
      %v1125 = vunpack.c.l.bf16 %v1061
      %v1126 = vunpack.c.l.bf16 %v1062
      %v1127 = vunpack.c.l.bf16 %v1063
      %v1128 = vunpack.c.l.bf16 %v1064
      %v1129 = vunpack.c.l.bf16 %v1065
      %v1130 = vunpack.c.l.bf16 %v1066
      %v1131 = vunpack.c.l.bf16 %v1067
      %v1132 = vunpack.c.l.bf16 %v1068
      %v1133 = vunpack.c.l.bf16 %v1069
      %v1134 = vunpack.c.l.bf16 %v1070
      %v1135 = vunpack.c.l.bf16 %v1071
      %v1136 = vunpack.c.l.bf16 %v1072
      %v1137 = vunpack.c.l.bf16 %v1073
      %v1138 = vunpack.c.l.bf16 %v1074
      %v1139 = vunpack.c.l.bf16 %v1075
      %v1140 = vunpack.c.l.bf16 %v1076
      %v1141 = vunpack.c.l.bf16 %v1077
      %v1142 = vunpack.c.l.bf16 %v1078
      %v1143 = vunpack.c.l.bf16 %v1079
      %v1144 = vunpack.c.l.bf16 %v1080
      %v1145 = vunpack.c.l.bf16 %v1081
      %v1146 = vunpack.c.l.bf16 %v1082
      %v1147 = vrot.slane %v699, 3
      %v1148 = vrot.slane %v700, 3
      %v1149 = vrot.slane %v701, 3
      %v1150 = vrot.slane %v702, 3
      %v1151 = vrot.slane %v703, 3
      %v1152 = vrot.slane %v704, 3
      %v1153 = vrot.slane %v705, 3
      %v1154 = vrot.slane %v706, 3
      %v1155 = vrot.slane %v707, 3
      %v1156 = vrot.slane %v708, 3
      %v1157 = vrot.slane %v709, 3
      %v1158 = vrot.slane %v710, 3
      %v1159 = vrot.slane %v711, 3
      %v1160 = vrot.slane %v712, 3
      %v1161 = vrot.slane %v713, 3
      %v1162 = vrot.slane %v714, 3
      %v1163 = vrot.slane %v715, 3
      %v1164 = vrot.slane %v716, 3
      %v1165 = vrot.slane %v717, 3
      %v1166 = vrot.slane %v718, 3
      %v1167 = vrot.slane %v719, 3
      %v1168 = vrot.slane %v720, 3
      %v1169 = vrot.slane %v721, 3
      %v1170 = vrot.slane %v722, 3
      %v1171 = vrot.slane %v723, 3
      %v1172 = vrot.slane %v724, 3
      %v1173 = vrot.slane %v725, 3
      %v1174 = vrot.slane %v726, 3
      %v1175 = vrot.slane %v727, 3
      %v1176 = vrot.slane %v728, 3
      %v1177 = vrot.slane %v729, 3
      %v1178 = vrot.slane %v730, 3
      %v1179 = vrot.slane %v731, 3
      %v1180 = vrot.slane %v732, 3
      %v1181 = vrot.slane %v733, 3
      %v1182 = vrot.slane %v734, 3
      %v1183 = vrot.slane %v735, 3
      %v1184 = vrot.slane %v736, 3
      %v1185 = vrot.slane %v737, 3
      %v1186 = vrot.slane %v738, 3
      %v1187 = vrot.slane %v739, 3
      %v1188 = vrot.slane %v740, 3
      %v1189 = vrot.slane %v741, 3
      %v1190 = vrot.slane %v742, 3
      %v1191 = vrot.slane %v743, 3
      %v1192 = vrot.slane %v744, 3
      %v1193 = vrot.slane %v745, 3
      %v1194 = vrot.slane %v746, 3
      %v1195 = vrot.slane %v747, 3
      %v1196 = vrot.slane %v748, 3
      %v1197 = vrot.slane %v749, 3
      %v1198 = vrot.slane %v750, 3
      %v1199 = vrot.slane %v751, 3
      %v1200 = vrot.slane %v752, 3
      %v1201 = vrot.slane %v753, 3
      %v1202 = vrot.slane %v754, 3
      %v1203 = vrot.slane %v755, 3
      %v1204 = vrot.slane %v756, 3
      %v1205 = vrot.slane %v757, 3
      %v1206 = vrot.slane %v758, 3
      %v1207 = vrot.slane %v759, 3
      %v1208 = vrot.slane %v760, 3
      %v1209 = vrot.slane %v761, 3
      %v1210 = vrot.slane %v762, 3
      %v1275 = vmax.f32 %v1083, %v1147
      %v1276 = vmax.f32 %v1084, %v1148
      %v1277 = vmax.f32 %v1085, %v1149
      %v1278 = vmax.f32 %v1086, %v1150
      %v1279 = vmax.f32 %v1087, %v1151
      %v1280 = vmax.f32 %v1088, %v1152
      %v1281 = vmax.f32 %v1089, %v1153
      %v1282 = vmax.f32 %v1090, %v1154
      %v1283 = vmax.f32 %v1091, %v1155
      %v1284 = vmax.f32 %v1092, %v1156
      %v1285 = vmax.f32 %v1093, %v1157
      %v1286 = vmax.f32 %v1094, %v1158
      %v1287 = vmax.f32 %v1095, %v1159
      %v1288 = vmax.f32 %v1096, %v1160
      %v1289 = vmax.f32 %v1097, %v1161
      %v1290 = vmax.f32 %v1098, %v1162
      %v1291 = vmax.f32 %v1099, %v1163
      %v1292 = vmax.f32 %v1100, %v1164
      %v1293 = vmax.f32 %v1101, %v1165
      %v1294 = vmax.f32 %v1102, %v1166
      %v1295 = vmax.f32 %v1103, %v1167
      %v1296 = vmax.f32 %v1104, %v1168
      %v1297 = vmax.f32 %v1105, %v1169
      %v1298 = vmax.f32 %v1106, %v1170
      %v1299 = vmax.f32 %v1107, %v1171
      %v1300 = vmax.f32 %v1108, %v1172
      %v1301 = vmax.f32 %v1109, %v1173
      %v1302 = vmax.f32 %v1110, %v1174
      %v1303 = vmax.f32 %v1111, %v1175
      %v1304 = vmax.f32 %v1112, %v1176
      %v1305 = vmax.f32 %v1113, %v1177
      %v1306 = vmax.f32 %v1114, %v1178
      %v1307 = vmax.f32 %v1115, %v1179
      %v1308 = vmax.f32 %v1116, %v1180
      %v1309 = vmax.f32 %v1117, %v1181
      %v1310 = vmax.f32 %v1118, %v1182
      %v1311 = vmax.f32 %v1119, %v1183
      %v1312 = vmax.f32 %v1120, %v1184
      %v1313 = vmax.f32 %v1121, %v1185
      %v1314 = vmax.f32 %v1122, %v1186
      %v1315 = vmax.f32 %v1123, %v1187
      %v1316 = vmax.f32 %v1124, %v1188
      %v1317 = vmax.f32 %v1125, %v1189
      %v1318 = vmax.f32 %v1126, %v1190
      %v1319 = vmax.f32 %v1127, %v1191
      %v1320 = vmax.f32 %v1128, %v1192
      %v1321 = vmax.f32 %v1129, %v1193
      %v1322 = vmax.f32 %v1130, %v1194
      %v1323 = vmax.f32 %v1131, %v1195
      %v1324 = vmax.f32 %v1132, %v1196
      %v1325 = vmax.f32 %v1133, %v1197
      %v1326 = vmax.f32 %v1134, %v1198
      %v1327 = vmax.f32 %v1135, %v1199
      %v1328 = vmax.f32 %v1136, %v1200
      %v1329 = vmax.f32 %v1137, %v1201
      %v1330 = vmax.f32 %v1138, %v1202
      %v1331 = vmax.f32 %v1139, %v1203
      %v1332 = vmax.f32 %v1140, %v1204
      %v1333 = vmax.f32 %v1141, %v1205
      %v1334 = vmax.f32 %v1142, %v1206
      %v1335 = vmax.f32 %v1143, %v1207
      %v1336 = vmax.f32 %v1144, %v1208
      %v1337 = vmax.f32 %v1145, %v1209
      %v1338 = vmax.f32 %v1146, %v1210
      %v1339 = vpack.c.bf16 %v1275, %v1275
      %v1340 = vpack.c.bf16 %v1276, %v1276
      %v1341 = vpack.c.bf16 %v1277, %v1277
      %v1342 = vpack.c.bf16 %v1278, %v1278
      %v1343 = vpack.c.bf16 %v1279, %v1279
      %v1344 = vpack.c.bf16 %v1280, %v1280
      %v1345 = vpack.c.bf16 %v1281, %v1281
      %v1346 = vpack.c.bf16 %v1282, %v1282
      %v1347 = vpack.c.bf16 %v1283, %v1283
      %v1348 = vpack.c.bf16 %v1284, %v1284
      %v1349 = vpack.c.bf16 %v1285, %v1285
      %v1350 = vpack.c.bf16 %v1286, %v1286
      %v1351 = vpack.c.bf16 %v1287, %v1287
      %v1352 = vpack.c.bf16 %v1288, %v1288
      %v1353 = vpack.c.bf16 %v1289, %v1289
      %v1354 = vpack.c.bf16 %v1290, %v1290
      %v1355 = vpack.c.bf16 %v1291, %v1291
      %v1356 = vpack.c.bf16 %v1292, %v1292
      %v1357 = vpack.c.bf16 %v1293, %v1293
      %v1358 = vpack.c.bf16 %v1294, %v1294
      %v1359 = vpack.c.bf16 %v1295, %v1295
      %v1360 = vpack.c.bf16 %v1296, %v1296
      %v1361 = vpack.c.bf16 %v1297, %v1297
      %v1362 = vpack.c.bf16 %v1298, %v1298
      %v1363 = vpack.c.bf16 %v1299, %v1299
      %v1364 = vpack.c.bf16 %v1300, %v1300
      %v1365 = vpack.c.bf16 %v1301, %v1301
      %v1366 = vpack.c.bf16 %v1302, %v1302
      %v1367 = vpack.c.bf16 %v1303, %v1303
      %v1368 = vpack.c.bf16 %v1304, %v1304
      %v1369 = vpack.c.bf16 %v1305, %v1305
      %v1370 = vpack.c.bf16 %v1306, %v1306
      %v1371 = vpack.c.bf16 %v1307, %v1307
      %v1372 = vpack.c.bf16 %v1308, %v1308
      %v1373 = vpack.c.bf16 %v1309, %v1309
      %v1374 = vpack.c.bf16 %v1310, %v1310
      %v1375 = vpack.c.bf16 %v1311, %v1311
      %v1376 = vpack.c.bf16 %v1312, %v1312
      %v1377 = vpack.c.bf16 %v1313, %v1313
      %v1378 = vpack.c.bf16 %v1314, %v1314
      %v1379 = vpack.c.bf16 %v1315, %v1315
      %v1380 = vpack.c.bf16 %v1316, %v1316
      %v1381 = vpack.c.bf16 %v1317, %v1317
      %v1382 = vpack.c.bf16 %v1318, %v1318
      %v1383 = vpack.c.bf16 %v1319, %v1319
      %v1384 = vpack.c.bf16 %v1320, %v1320
      %v1385 = vpack.c.bf16 %v1321, %v1321
      %v1386 = vpack.c.bf16 %v1322, %v1322
      %v1387 = vpack.c.bf16 %v1323, %v1323
      %v1388 = vpack.c.bf16 %v1324, %v1324
      %v1389 = vpack.c.bf16 %v1325, %v1325
      %v1390 = vpack.c.bf16 %v1326, %v1326
      %v1391 = vpack.c.bf16 %v1327, %v1327
      %v1392 = vpack.c.bf16 %v1328, %v1328
      %v1393 = vpack.c.bf16 %v1329, %v1329
      %v1394 = vpack.c.bf16 %v1330, %v1330
      %v1395 = vpack.c.bf16 %v1331, %v1331
      %v1396 = vpack.c.bf16 %v1332, %v1332
      %v1397 = vpack.c.bf16 %v1333, %v1333
      %v1398 = vpack.c.bf16 %v1334, %v1334
      %v1399 = vpack.c.bf16 %v1335, %v1335
      %v1400 = vpack.c.bf16 %v1336, %v1336
      %v1401 = vpack.c.bf16 %v1337, %v1337
      %v1402 = vpack.c.bf16 %v1338, %v1338
      %v1403 = vld [vmem:[%s115] sm:$0x4]
      %v1404 = vld [vmem:[%s115 + $0x8] sm:$0x4]
      %v1405 = vld [vmem:[%s115 + $0x10] sm:$0x4]
      %v1406 = vld [vmem:[%s115 + $0x18] sm:$0x4]
      %v1407 = vld [vmem:[%s115 + $0x20] sm:$0x4]
      %v1408 = vld [vmem:[%s115 + $0x28] sm:$0x4]
      %v1409 = vld [vmem:[%s115 + $0x30] sm:$0x4]
      %v1410 = vld [vmem:[%s115 + $0x38] sm:$0x4]
      %v1411 = vld [vmem:[%s115 + $0x40] sm:$0x4]
      %v1412 = vld [vmem:[%s115 + $0x48] sm:$0x4]
      %v1413 = vld [vmem:[%s115 + $0x50] sm:$0x4]
      %v1414 = vld [vmem:[%s115 + $0x58] sm:$0x4]
      %v1415 = vld [vmem:[%s115 + $0x60] sm:$0x4]
      %v1416 = vld [vmem:[%s115 + $0x68] sm:$0x4]
      %v1417 = vld [vmem:[%s115 + $0x70] sm:$0x4]
      %v1418 = vld [vmem:[%s115 + $0x78] sm:$0x4]
      %v1419 = vld [vmem:[%s115 + $0x80] sm:$0x4]
      %v1420 = vld [vmem:[%s115 + $0x88] sm:$0x4]
      %v1421 = vld [vmem:[%s115 + $0x90] sm:$0x4]
      %v1422 = vld [vmem:[%s115 + $0x98] sm:$0x4]
      %v1423 = vld [vmem:[%s115 + $0xa0] sm:$0x4]
      %v1424 = vld [vmem:[%s115 + $0xa8] sm:$0x4]
      %v1425 = vld [vmem:[%s115 + $0xb0] sm:$0x4]
      %v1426 = vld [vmem:[%s115 + $0xb8] sm:$0x4]
      %v1427 = vld [vmem:[%s115 + $0xc0] sm:$0x4]
      %v1428 = vld [vmem:[%s115 + $0xc8] sm:$0x4]
      %v1429 = vld [vmem:[%s115 + $0xd0] sm:$0x4]
      %v1430 = vld [vmem:[%s115 + $0xd8] sm:$0x4]
      %v1431 = vld [vmem:[%s115 + $0xe0] sm:$0x4]
      %v1432 = vld [vmem:[%s115 + $0xe8] sm:$0x4]
      %v1433 = vld [vmem:[%s115 + $0xf0] sm:$0x4]
      %v1434 = vld [vmem:[%s115 + $0xf8] sm:$0x4]
      %v1435 = vld [vmem:[%s115 + $0x100] sm:$0x4]
      %v1436 = vld [vmem:[%s115 + $0x108] sm:$0x4]
      %v1437 = vld [vmem:[%s115 + $0x110] sm:$0x4]
      %v1438 = vld [vmem:[%s115 + $0x118] sm:$0x4]
      %v1439 = vld [vmem:[%s115 + $0x120] sm:$0x4]
      %v1440 = vld [vmem:[%s115 + $0x128] sm:$0x4]
      %v1441 = vld [vmem:[%s115 + $0x130] sm:$0x4]
      %v1442 = vld [vmem:[%s115 + $0x138] sm:$0x4]
      %v1443 = vld [vmem:[%s115 + $0x140] sm:$0x4]
      %v1444 = vld [vmem:[%s115 + $0x148] sm:$0x4]
      %v1445 = vld [vmem:[%s115 + $0x150] sm:$0x4]
      %v1446 = vld [vmem:[%s115 + $0x158] sm:$0x4]
      %v1447 = vld [vmem:[%s115 + $0x160] sm:$0x4]
      %v1448 = vld [vmem:[%s115 + $0x168] sm:$0x4]
      %v1449 = vld [vmem:[%s115 + $0x170] sm:$0x4]
      %v1450 = vld [vmem:[%s115 + $0x178] sm:$0x4]
      %v1451 = vld [vmem:[%s115 + $0x180] sm:$0x4]
      %v1452 = vld [vmem:[%s115 + $0x188] sm:$0x4]
      %v1453 = vld [vmem:[%s115 + $0x190] sm:$0x4]
      %v1454 = vld [vmem:[%s115 + $0x198] sm:$0x4]
      %v1455 = vld [vmem:[%s115 + $0x1a0] sm:$0x4]
      %v1456 = vld [vmem:[%s115 + $0x1a8] sm:$0x4]
      %v1457 = vld [vmem:[%s115 + $0x1b0] sm:$0x4]
      %v1458 = vld [vmem:[%s115 + $0x1b8] sm:$0x4]
      %v1459 = vld [vmem:[%s115 + $0x1c0] sm:$0x4]
      %v1460 = vld [vmem:[%s115 + $0x1c8] sm:$0x4]
      %v1461 = vld [vmem:[%s115 + $0x1d0] sm:$0x4]
      %v1462 = vld [vmem:[%s115 + $0x1d8] sm:$0x4]
      %v1463 = vld [vmem:[%s115 + $0x1e0] sm:$0x4]
      %v1464 = vld [vmem:[%s115 + $0x1e8] sm:$0x4]
      %v1465 = vld [vmem:[%s115 + $0x1f0] sm:$0x4]
      %v1466 = vld [vmem:[%s115 + $0x1f8] sm:$0x4]
      %v1467 = vunpack.c.l.bf16 %v1339
      %v1468 = vunpack.c.l.bf16 %v1340
      %v1469 = vunpack.c.l.bf16 %v1341
      %v1470 = vunpack.c.l.bf16 %v1342
      %v1471 = vunpack.c.l.bf16 %v1343
      %v1472 = vunpack.c.l.bf16 %v1344
      %v1473 = vunpack.c.l.bf16 %v1345
      %v1474 = vunpack.c.l.bf16 %v1346
      %v1475 = vunpack.c.l.bf16 %v1347
      %v1476 = vunpack.c.l.bf16 %v1348
      %v1477 = vunpack.c.l.bf16 %v1349
      %v1478 = vunpack.c.l.bf16 %v1350
      %v1479 = vunpack.c.l.bf16 %v1351
      %v1480 = vunpack.c.l.bf16 %v1352
      %v1481 = vunpack.c.l.bf16 %v1353
      %v1482 = vunpack.c.l.bf16 %v1354
      %v1483 = vunpack.c.l.bf16 %v1355
      %v1484 = vunpack.c.l.bf16 %v1356
      %v1485 = vunpack.c.l.bf16 %v1357
      %v1486 = vunpack.c.l.bf16 %v1358
      %v1487 = vunpack.c.l.bf16 %v1359
      %v1488 = vunpack.c.l.bf16 %v1360
      %v1489 = vunpack.c.l.bf16 %v1361
      %v1490 = vunpack.c.l.bf16 %v1362
      %v1491 = vunpack.c.l.bf16 %v1363
      %v1492 = vunpack.c.l.bf16 %v1364
      %v1493 = vunpack.c.l.bf16 %v1365
      %v1494 = vunpack.c.l.bf16 %v1366
      %v1495 = vunpack.c.l.bf16 %v1367
      %v1496 = vunpack.c.l.bf16 %v1368
      %v1497 = vunpack.c.l.bf16 %v1369
      %v1498 = vunpack.c.l.bf16 %v1370
      %v1499 = vunpack.c.l.bf16 %v1371
      %v1500 = vunpack.c.l.bf16 %v1372
      %v1501 = vunpack.c.l.bf16 %v1373
      %v1502 = vunpack.c.l.bf16 %v1374
      %v1503 = vunpack.c.l.bf16 %v1375
      %v1504 = vunpack.c.l.bf16 %v1376
      %v1505 = vunpack.c.l.bf16 %v1377
      %v1506 = vunpack.c.l.bf16 %v1378
      %v1507 = vunpack.c.l.bf16 %v1379
      %v1508 = vunpack.c.l.bf16 %v1380
      %v1509 = vunpack.c.l.bf16 %v1381
      %v1510 = vunpack.c.l.bf16 %v1382
      %v1511 = vunpack.c.l.bf16 %v1383
      %v1512 = vunpack.c.l.bf16 %v1384
      %v1513 = vunpack.c.l.bf16 %v1385
      %v1514 = vunpack.c.l.bf16 %v1386
      %v1515 = vunpack.c.l.bf16 %v1387
      %v1516 = vunpack.c.l.bf16 %v1388
      %v1517 = vunpack.c.l.bf16 %v1389
      %v1518 = vunpack.c.l.bf16 %v1390
      %v1519 = vunpack.c.l.bf16 %v1391
      %v1520 = vunpack.c.l.bf16 %v1392
      %v1521 = vunpack.c.l.bf16 %v1393
      %v1522 = vunpack.c.l.bf16 %v1394
      %v1523 = vunpack.c.l.bf16 %v1395
      %v1524 = vunpack.c.l.bf16 %v1396
      %v1525 = vunpack.c.l.bf16 %v1397
      %v1526 = vunpack.c.l.bf16 %v1398
      %v1527 = vunpack.c.l.bf16 %v1399
      %v1528 = vunpack.c.l.bf16 %v1400
      %v1529 = vunpack.c.l.bf16 %v1401
      %v1530 = vunpack.c.l.bf16 %v1402
      %v1531 = vunpack.c.l.bf16 %v1403
      %v1532 = vunpack.c.l.bf16 %v1404
      %v1533 = vunpack.c.l.bf16 %v1405
      %v1534 = vunpack.c.l.bf16 %v1406
      %v1535 = vunpack.c.l.bf16 %v1407
      %v1536 = vunpack.c.l.bf16 %v1408
      %v1537 = vunpack.c.l.bf16 %v1409
      %v1538 = vunpack.c.l.bf16 %v1410
      %v1539 = vunpack.c.l.bf16 %v1411
      %v1540 = vunpack.c.l.bf16 %v1412
      %v1541 = vunpack.c.l.bf16 %v1413
      %v1542 = vunpack.c.l.bf16 %v1414
      %v1543 = vunpack.c.l.bf16 %v1415
      %v1544 = vunpack.c.l.bf16 %v1416
      %v1545 = vunpack.c.l.bf16 %v1417
      %v1546 = vunpack.c.l.bf16 %v1418
      %v1547 = vunpack.c.l.bf16 %v1419
      %v1548 = vunpack.c.l.bf16 %v1420
      %v1549 = vunpack.c.l.bf16 %v1421
      %v1550 = vunpack.c.l.bf16 %v1422
      %v1551 = vunpack.c.l.bf16 %v1423
      %v1552 = vunpack.c.l.bf16 %v1424
      %v1553 = vunpack.c.l.bf16 %v1425
      %v1554 = vunpack.c.l.bf16 %v1426
      %v1555 = vunpack.c.l.bf16 %v1427
      %v1556 = vunpack.c.l.bf16 %v1428
      %v1557 = vunpack.c.l.bf16 %v1429
      %v1558 = vunpack.c.l.bf16 %v1430
      %v1559 = vunpack.c.l.bf16 %v1431
      %v1560 = vunpack.c.l.bf16 %v1432
      %v1561 = vunpack.c.l.bf16 %v1433
      %v1562 = vunpack.c.l.bf16 %v1434
      %v1563 = vunpack.c.l.bf16 %v1435
      %v1564 = vunpack.c.l.bf16 %v1436
      %v1565 = vunpack.c.l.bf16 %v1437
      %v1566 = vunpack.c.l.bf16 %v1438
      %v1567 = vunpack.c.l.bf16 %v1439
      %v1568 = vunpack.c.l.bf16 %v1440
      %v1569 = vunpack.c.l.bf16 %v1441
      %v1570 = vunpack.c.l.bf16 %v1442
      %v1571 = vunpack.c.l.bf16 %v1443
      %v1572 = vunpack.c.l.bf16 %v1444
      %v1573 = vunpack.c.l.bf16 %v1445
      %v1574 = vunpack.c.l.bf16 %v1446
      %v1575 = vunpack.c.l.bf16 %v1447
      %v1576 = vunpack.c.l.bf16 %v1448
      %v1577 = vunpack.c.l.bf16 %v1449
      %v1578 = vunpack.c.l.bf16 %v1450
      %v1579 = vunpack.c.l.bf16 %v1451
      %v1580 = vunpack.c.l.bf16 %v1452
      %v1581 = vunpack.c.l.bf16 %v1453
      %v1582 = vunpack.c.l.bf16 %v1454
      %v1583 = vunpack.c.l.bf16 %v1455
      %v1584 = vunpack.c.l.bf16 %v1456
      %v1585 = vunpack.c.l.bf16 %v1457
      %v1586 = vunpack.c.l.bf16 %v1458
      %v1587 = vunpack.c.l.bf16 %v1459
      %v1588 = vunpack.c.l.bf16 %v1460
      %v1589 = vunpack.c.l.bf16 %v1461
      %v1590 = vunpack.c.l.bf16 %v1462
      %v1591 = vunpack.c.l.bf16 %v1463
      %v1592 = vunpack.c.l.bf16 %v1464
      %v1593 = vunpack.c.l.bf16 %v1465
      %v1594 = vunpack.c.l.bf16 %v1466
      %v1659 = vrot.slane %v1531, 4
      %v1660 = vrot.slane %v1532, 4
      %v1661 = vrot.slane %v1533, 4
      %v1662 = vrot.slane %v1534, 4
      %v1663 = vrot.slane %v1535, 4
      %v1664 = vrot.slane %v1536, 4
      %v1665 = vrot.slane %v1537, 4
      %v1666 = vrot.slane %v1538, 4
      %v1667 = vrot.slane %v1539, 4
      %v1668 = vrot.slane %v1540, 4
      %v1669 = vrot.slane %v1541, 4
      %v1670 = vrot.slane %v1542, 4
      %v1671 = vrot.slane %v1543, 4
      %v1672 = vrot.slane %v1544, 4
      %v1673 = vrot.slane %v1545, 4
      %v1674 = vrot.slane %v1546, 4
      %v1675 = vrot.slane %v1547, 4
      %v1676 = vrot.slane %v1548, 4
      %v1677 = vrot.slane %v1549, 4
      %v1678 = vrot.slane %v1550, 4
      %v1679 = vrot.slane %v1551, 4
      %v1680 = vrot.slane %v1552, 4
      %v1681 = vrot.slane %v1553, 4
      %v1682 = vrot.slane %v1554, 4
      %v1683 = vrot.slane %v1555, 4
      %v1684 = vrot.slane %v1556, 4
      %v1685 = vrot.slane %v1557, 4
      %v1686 = vrot.slane %v1558, 4
      %v1687 = vrot.slane %v1559, 4
      %v1688 = vrot.slane %v1560, 4
      %v1689 = vrot.slane %v1561, 4
      %v1690 = vrot.slane %v1562, 4
      %v1691 = vrot.slane %v1563, 4
      %v1692 = vrot.slane %v1564, 4
      %v1693 = vrot.slane %v1565, 4
      %v1694 = vrot.slane %v1566, 4
      %v1695 = vrot.slane %v1567, 4
      %v1696 = vrot.slane %v1568, 4
      %v1697 = vrot.slane %v1569, 4
      %v1698 = vrot.slane %v1570, 4
      %v1699 = vrot.slane %v1571, 4
      %v1700 = vrot.slane %v1572, 4
      %v1701 = vrot.slane %v1573, 4
      %v1702 = vrot.slane %v1574, 4
      %v1703 = vrot.slane %v1575, 4
      %v1704 = vrot.slane %v1576, 4
      %v1705 = vrot.slane %v1577, 4
      %v1706 = vrot.slane %v1578, 4
      %v1707 = vrot.slane %v1579, 4
      %v1708 = vrot.slane %v1580, 4
      %v1709 = vrot.slane %v1581, 4
      %v1710 = vrot.slane %v1582, 4
      %v1711 = vrot.slane %v1583, 4
      %v1712 = vrot.slane %v1584, 4
      %v1713 = vrot.slane %v1585, 4
      %v1714 = vrot.slane %v1586, 4
      %v1715 = vrot.slane %v1587, 4
      %v1716 = vrot.slane %v1588, 4
      %v1717 = vrot.slane %v1589, 4
      %v1718 = vrot.slane %v1590, 4
      %v1719 = vrot.slane %v1591, 4
      %v1720 = vrot.slane %v1592, 4
      %v1721 = vrot.slane %v1593, 4
      %v1722 = vrot.slane %v1594, 4
      %v1787 = vmax.f32 %v1467, %v1659
      %v1788 = vmax.f32 %v1468, %v1660
      %v1789 = vmax.f32 %v1469, %v1661
      %v1790 = vmax.f32 %v1470, %v1662
      %v1791 = vmax.f32 %v1471, %v1663
      %v1792 = vmax.f32 %v1472, %v1664
      %v1793 = vmax.f32 %v1473, %v1665
      %v1794 = vmax.f32 %v1474, %v1666
      %v1795 = vmax.f32 %v1475, %v1667
      %v1796 = vmax.f32 %v1476, %v1668
      %v1797 = vmax.f32 %v1477, %v1669
      %v1798 = vmax.f32 %v1478, %v1670
      %v1799 = vmax.f32 %v1479, %v1671
      %v1800 = vmax.f32 %v1480, %v1672
      %v1801 = vmax.f32 %v1481, %v1673
      %v1802 = vmax.f32 %v1482, %v1674
      %v1803 = vmax.f32 %v1483, %v1675
      %v1804 = vmax.f32 %v1484, %v1676
      %v1805 = vmax.f32 %v1485, %v1677
      %v1806 = vmax.f32 %v1486, %v1678
      %v1807 = vmax.f32 %v1487, %v1679
      %v1808 = vmax.f32 %v1488, %v1680
      %v1809 = vmax.f32 %v1489, %v1681
      %v1810 = vmax.f32 %v1490, %v1682
      %v1811 = vmax.f32 %v1491, %v1683
      %v1812 = vmax.f32 %v1492, %v1684
      %v1813 = vmax.f32 %v1493, %v1685
      %v1814 = vmax.f32 %v1494, %v1686
      %v1815 = vmax.f32 %v1495, %v1687
      %v1816 = vmax.f32 %v1496, %v1688
      %v1817 = vmax.f32 %v1497, %v1689
      %v1818 = vmax.f32 %v1498, %v1690
      %v1819 = vmax.f32 %v1499, %v1691
      %v1820 = vmax.f32 %v1500, %v1692
      %v1821 = vmax.f32 %v1501, %v1693
      %v1822 = vmax.f32 %v1502, %v1694
      %v1823 = vmax.f32 %v1503, %v1695
      %v1824 = vmax.f32 %v1504, %v1696
      %v1825 = vmax.f32 %v1505, %v1697
      %v1826 = vmax.f32 %v1506, %v1698
      %v1827 = vmax.f32 %v1507, %v1699
      %v1828 = vmax.f32 %v1508, %v1700
      %v1829 = vmax.f32 %v1509, %v1701
      %v1830 = vmax.f32 %v1510, %v1702
      %v1831 = vmax.f32 %v1511, %v1703
      %v1832 = vmax.f32 %v1512, %v1704
      %v1833 = vmax.f32 %v1513, %v1705
      %v1834 = vmax.f32 %v1514, %v1706
      %v1835 = vmax.f32 %v1515, %v1707
      %v1836 = vmax.f32 %v1516, %v1708
      %v1837 = vmax.f32 %v1517, %v1709
      %v1838 = vmax.f32 %v1518, %v1710
      %v1839 = vmax.f32 %v1519, %v1711
      %v1840 = vmax.f32 %v1520, %v1712
      %v1841 = vmax.f32 %v1521, %v1713
      %v1842 = vmax.f32 %v1522, %v1714
      %v1843 = vmax.f32 %v1523, %v1715
      %v1844 = vmax.f32 %v1524, %v1716
      %v1845 = vmax.f32 %v1525, %v1717
      %v1846 = vmax.f32 %v1526, %v1718
      %v1847 = vmax.f32 %v1527, %v1719
      %v1848 = vmax.f32 %v1528, %v1720
      %v1849 = vmax.f32 %v1529, %v1721
      %v1850 = vmax.f32 %v1530, %v1722
      %v1851 = vpack.c.bf16 %v1787, %v1787
      %v1852 = vpack.c.bf16 %v1788, %v1788
      %v1853 = vpack.c.bf16 %v1789, %v1789
      %v1854 = vpack.c.bf16 %v1790, %v1790
      %v1855 = vpack.c.bf16 %v1791, %v1791
      %v1856 = vpack.c.bf16 %v1792, %v1792
      %v1857 = vpack.c.bf16 %v1793, %v1793
      %v1858 = vpack.c.bf16 %v1794, %v1794
      %v1859 = vpack.c.bf16 %v1795, %v1795
      %v1860 = vpack.c.bf16 %v1796, %v1796
      %v1861 = vpack.c.bf16 %v1797, %v1797
      %v1862 = vpack.c.bf16 %v1798, %v1798
      %v1863 = vpack.c.bf16 %v1799, %v1799
      %v1864 = vpack.c.bf16 %v1800, %v1800
      %v1865 = vpack.c.bf16 %v1801, %v1801
      %v1866 = vpack.c.bf16 %v1802, %v1802
      %v1867 = vpack.c.bf16 %v1803, %v1803
      %v1868 = vpack.c.bf16 %v1804, %v1804
      %v1869 = vpack.c.bf16 %v1805, %v1805
      %v1870 = vpack.c.bf16 %v1806, %v1806
      %v1871 = vpack.c.bf16 %v1807, %v1807
      %v1872 = vpack.c.bf16 %v1808, %v1808
      %v1873 = vpack.c.bf16 %v1809, %v1809
      %v1874 = vpack.c.bf16 %v1810, %v1810
      %v1875 = vpack.c.bf16 %v1811, %v1811
      %v1876 = vpack.c.bf16 %v1812, %v1812
      %v1877 = vpack.c.bf16 %v1813, %v1813
      %v1878 = vpack.c.bf16 %v1814, %v1814
      %v1879 = vpack.c.bf16 %v1815, %v1815
      %v1880 = vpack.c.bf16 %v1816, %v1816
      %v1881 = vpack.c.bf16 %v1817, %v1817
      %v1882 = vpack.c.bf16 %v1818, %v1818
      %v1883 = vpack.c.bf16 %v1819, %v1819
      %v1884 = vpack.c.bf16 %v1820, %v1820
      %v1885 = vpack.c.bf16 %v1821, %v1821
      %v1886 = vpack.c.bf16 %v1822, %v1822
      %v1887 = vpack.c.bf16 %v1823, %v1823
      %v1888 = vpack.c.bf16 %v1824, %v1824
      %v1889 = vpack.c.bf16 %v1825, %v1825
      %v1890 = vpack.c.bf16 %v1826, %v1826
      %v1891 = vpack.c.bf16 %v1827, %v1827
      %v1892 = vpack.c.bf16 %v1828, %v1828
      %v1893 = vpack.c.bf16 %v1829, %v1829
      %v1894 = vpack.c.bf16 %v1830, %v1830
      %v1895 = vpack.c.bf16 %v1831, %v1831
      %v1896 = vpack.c.bf16 %v1832, %v1832
      %v1897 = vpack.c.bf16 %v1833, %v1833
      %v1898 = vpack.c.bf16 %v1834, %v1834
      %v1899 = vpack.c.bf16 %v1835, %v1835
      %v1900 = vpack.c.bf16 %v1836, %v1836
      %v1901 = vpack.c.bf16 %v1837, %v1837
      %v1902 = vpack.c.bf16 %v1838, %v1838
      %v1903 = vpack.c.bf16 %v1839, %v1839
      %v1904 = vpack.c.bf16 %v1840, %v1840
      %v1905 = vpack.c.bf16 %v1841, %v1841
      %v1906 = vpack.c.bf16 %v1842, %v1842
      %v1907 = vpack.c.bf16 %v1843, %v1843
      %v1908 = vpack.c.bf16 %v1844, %v1844
      %v1909 = vpack.c.bf16 %v1845, %v1845
      %v1910 = vpack.c.bf16 %v1846, %v1846
      %v1911 = vpack.c.bf16 %v1847, %v1847
      %v1912 = vpack.c.bf16 %v1848, %v1848
      %v1913 = vpack.c.bf16 %v1849, %v1849
      %v1914 = vpack.c.bf16 %v1850, %v1850
      %v1915 = vunpack.c.l.bf16 %v1851
      %v1916 = vunpack.c.l.bf16 %v1852
      %v1917 = vunpack.c.l.bf16 %v1853
      %v1918 = vunpack.c.l.bf16 %v1854
      %v1919 = vunpack.c.l.bf16 %v1855
      %v1920 = vunpack.c.l.bf16 %v1856
      %v1921 = vunpack.c.l.bf16 %v1857
      %v1922 = vunpack.c.l.bf16 %v1858
      %v1923 = vunpack.c.l.bf16 %v1859
      %v1924 = vunpack.c.l.bf16 %v1860
      %v1925 = vunpack.c.l.bf16 %v1861
      %v1926 = vunpack.c.l.bf16 %v1862
      %v1927 = vunpack.c.l.bf16 %v1863
      %v1928 = vunpack.c.l.bf16 %v1864
      %v1929 = vunpack.c.l.bf16 %v1865
      %v1930 = vunpack.c.l.bf16 %v1866
      %v1931 = vunpack.c.l.bf16 %v1867
      %v1932 = vunpack.c.l.bf16 %v1868
      %v1933 = vunpack.c.l.bf16 %v1869
      %v1934 = vunpack.c.l.bf16 %v1870
      %v1935 = vunpack.c.l.bf16 %v1871
      %v1936 = vunpack.c.l.bf16 %v1872
      %v1937 = vunpack.c.l.bf16 %v1873
      %v1938 = vunpack.c.l.bf16 %v1874
      %v1939 = vunpack.c.l.bf16 %v1875
      %v1940 = vunpack.c.l.bf16 %v1876
      %v1941 = vunpack.c.l.bf16 %v1877
      %v1942 = vunpack.c.l.bf16 %v1878
      %v1943 = vunpack.c.l.bf16 %v1879
      %v1944 = vunpack.c.l.bf16 %v1880
      %v1945 = vunpack.c.l.bf16 %v1881
      %v1946 = vunpack.c.l.bf16 %v1882
      %v1947 = vunpack.c.l.bf16 %v1883
      %v1948 = vunpack.c.l.bf16 %v1884
      %v1949 = vunpack.c.l.bf16 %v1885
      %v1950 = vunpack.c.l.bf16 %v1886
      %v1951 = vunpack.c.l.bf16 %v1887
      %v1952 = vunpack.c.l.bf16 %v1888
      %v1953 = vunpack.c.l.bf16 %v1889
      %v1954 = vunpack.c.l.bf16 %v1890
      %v1955 = vunpack.c.l.bf16 %v1891
      %v1956 = vunpack.c.l.bf16 %v1892
      %v1957 = vunpack.c.l.bf16 %v1893
      %v1958 = vunpack.c.l.bf16 %v1894
      %v1959 = vunpack.c.l.bf16 %v1895
      %v1960 = vunpack.c.l.bf16 %v1896
      %v1961 = vunpack.c.l.bf16 %v1897
      %v1962 = vunpack.c.l.bf16 %v1898
      %v1963 = vunpack.c.l.bf16 %v1899
      %v1964 = vunpack.c.l.bf16 %v1900
      %v1965 = vunpack.c.l.bf16 %v1901
      %v1966 = vunpack.c.l.bf16 %v1902
      %v1967 = vunpack.c.l.bf16 %v1903
      %v1968 = vunpack.c.l.bf16 %v1904
      %v1969 = vunpack.c.l.bf16 %v1905
      %v1970 = vunpack.c.l.bf16 %v1906
      %v1971 = vunpack.c.l.bf16 %v1907
      %v1972 = vunpack.c.l.bf16 %v1908
      %v1973 = vunpack.c.l.bf16 %v1909
      %v1974 = vunpack.c.l.bf16 %v1910
      %v1975 = vunpack.c.l.bf16 %v1911
      %v1976 = vunpack.c.l.bf16 %v1912
      %v1977 = vunpack.c.l.bf16 %v1913
      %v1978 = vunpack.c.l.bf16 %v1914
      %v1979 = vrot.slane %v1531, 5
      %v1980 = vrot.slane %v1532, 5
      %v1981 = vrot.slane %v1533, 5
      %v1982 = vrot.slane %v1534, 5
      %v1983 = vrot.slane %v1535, 5
      %v1984 = vrot.slane %v1536, 5
      %v1985 = vrot.slane %v1537, 5
      %v1986 = vrot.slane %v1538, 5
      %v1987 = vrot.slane %v1539, 5
      %v1988 = vrot.slane %v1540, 5
      %v1989 = vrot.slane %v1541, 5
      %v1990 = vrot.slane %v1542, 5
      %v1991 = vrot.slane %v1543, 5
      %v1992 = vrot.slane %v1544, 5
      %v1993 = vrot.slane %v1545, 5
      %v1994 = vrot.slane %v1546, 5
      %v1995 = vrot.slane %v1547, 5
      %v1996 = vrot.slane %v1548, 5
      %v1997 = vrot.slane %v1549, 5
      %v1998 = vrot.slane %v1550, 5
      %v1999 = vrot.slane %v1551, 5
      %v2000 = vrot.slane %v1552, 5
      %v2001 = vrot.slane %v1553, 5
      %v2002 = vrot.slane %v1554, 5
      %v2003 = vrot.slane %v1555, 5
      %v2004 = vrot.slane %v1556, 5
      %v2005 = vrot.slane %v1557, 5
      %v2006 = vrot.slane %v1558, 5
      %v2007 = vrot.slane %v1559, 5
      %v2008 = vrot.slane %v1560, 5
      %v2009 = vrot.slane %v1561, 5
      %v2010 = vrot.slane %v1562, 5
      %v2011 = vrot.slane %v1563, 5
      %v2012 = vrot.slane %v1564, 5
      %v2013 = vrot.slane %v1565, 5
      %v2014 = vrot.slane %v1566, 5
      %v2015 = vrot.slane %v1567, 5
      %v2016 = vrot.slane %v1568, 5
      %v2017 = vrot.slane %v1569, 5
      %v2018 = vrot.slane %v1570, 5
      %v2019 = vrot.slane %v1571, 5
      %v2020 = vrot.slane %v1572, 5
      %v2021 = vrot.slane %v1573, 5
      %v2022 = vrot.slane %v1574, 5
      %v2023 = vrot.slane %v1575, 5
      %v2024 = vrot.slane %v1576, 5
      %v2025 = vrot.slane %v1577, 5
      %v2026 = vrot.slane %v1578, 5
      %v2027 = vrot.slane %v1579, 5
      %v2028 = vrot.slane %v1580, 5
      %v2029 = vrot.slane %v1581, 5
      %v2030 = vrot.slane %v1582, 5
      %v2031 = vrot.slane %v1583, 5
      %v2032 = vrot.slane %v1584, 5
      %v2033 = vrot.slane %v1585, 5
      %v2034 = vrot.slane %v1586, 5
      %v2035 = vrot.slane %v1587, 5
      %v2036 = vrot.slane %v1588, 5
      %v2037 = vrot.slane %v1589, 5
      %v2038 = vrot.slane %v1590, 5
      %v2039 = vrot.slane %v1591, 5
      %v2040 = vrot.slane %v1592, 5
      %v2041 = vrot.slane %v1593, 5
      %v2042 = vrot.slane %v1594, 5
      %v2107 = vmax.f32 %v1915, %v1979
      %v2108 = vmax.f32 %v1916, %v1980
      %v2109 = vmax.f32 %v1917, %v1981
      %v2110 = vmax.f32 %v1918, %v1982
      %v2111 = vmax.f32 %v1919, %v1983
      %v2112 = vmax.f32 %v1920, %v1984
      %v2113 = vmax.f32 %v1921, %v1985
      %v2114 = vmax.f32 %v1922, %v1986
      %v2115 = vmax.f32 %v1923, %v1987
      %v2116 = vmax.f32 %v1924, %v1988
      %v2117 = vmax.f32 %v1925, %v1989
      %v2118 = vmax.f32 %v1926, %v1990
      %v2119 = vmax.f32 %v1927, %v1991
      %v2120 = vmax.f32 %v1928, %v1992
      %v2121 = vmax.f32 %v1929, %v1993
      %v2122 = vmax.f32 %v1930, %v1994
      %v2123 = vmax.f32 %v1931, %v1995
      %v2124 = vmax.f32 %v1932, %v1996
      %v2125 = vmax.f32 %v1933, %v1997
      %v2126 = vmax.f32 %v1934, %v1998
      %v2127 = vmax.f32 %v1935, %v1999
      %v2128 = vmax.f32 %v1936, %v2000
      %v2129 = vmax.f32 %v1937, %v2001
      %v2130 = vmax.f32 %v1938, %v2002
      %v2131 = vmax.f32 %v1939, %v2003
      %v2132 = vmax.f32 %v1940, %v2004
      %v2133 = vmax.f32 %v1941, %v2005
      %v2134 = vmax.f32 %v1942, %v2006
      %v2135 = vmax.f32 %v1943, %v2007
      %v2136 = vmax.f32 %v1944, %v2008
      %v2137 = vmax.f32 %v1945, %v2009
      %v2138 = vmax.f32 %v1946, %v2010
      %v2139 = vmax.f32 %v1947, %v2011
      %v2140 = vmax.f32 %v1948, %v2012
      %v2141 = vmax.f32 %v1949, %v2013
      %v2142 = vmax.f32 %v1950, %v2014
      %v2143 = vmax.f32 %v1951, %v2015
      %v2144 = vmax.f32 %v1952, %v2016
      %v2145 = vmax.f32 %v1953, %v2017
      %v2146 = vmax.f32 %v1954, %v2018
      %v2147 = vmax.f32 %v1955, %v2019
      %v2148 = vmax.f32 %v1956, %v2020
      %v2149 = vmax.f32 %v1957, %v2021
      %v2150 = vmax.f32 %v1958, %v2022
      %v2151 = vmax.f32 %v1959, %v2023
      %v2152 = vmax.f32 %v1960, %v2024
      %v2153 = vmax.f32 %v1961, %v2025
      %v2154 = vmax.f32 %v1962, %v2026
      %v2155 = vmax.f32 %v1963, %v2027
      %v2156 = vmax.f32 %v1964, %v2028
      %v2157 = vmax.f32 %v1965, %v2029
      %v2158 = vmax.f32 %v1966, %v2030
      %v2159 = vmax.f32 %v1967, %v2031
      %v2160 = vmax.f32 %v1968, %v2032
      %v2161 = vmax.f32 %v1969, %v2033
      %v2162 = vmax.f32 %v1970, %v2034
      %v2163 = vmax.f32 %v1971, %v2035
      %v2164 = vmax.f32 %v1972, %v2036
      %v2165 = vmax.f32 %v1973, %v2037
      %v2166 = vmax.f32 %v1974, %v2038
      %v2167 = vmax.f32 %v1975, %v2039
      %v2168 = vmax.f32 %v1976, %v2040
      %v2169 = vmax.f32 %v1977, %v2041
      %v2170 = vmax.f32 %v1978, %v2042
      %v2171 = vpack.c.bf16 %v2107, %v2107
      %v2172 = vpack.c.bf16 %v2108, %v2108
      %v2173 = vpack.c.bf16 %v2109, %v2109
      %v2174 = vpack.c.bf16 %v2110, %v2110
      %v2175 = vpack.c.bf16 %v2111, %v2111
      %v2176 = vpack.c.bf16 %v2112, %v2112
      %v2177 = vpack.c.bf16 %v2113, %v2113
      %v2178 = vpack.c.bf16 %v2114, %v2114
      %v2179 = vpack.c.bf16 %v2115, %v2115
      %v2180 = vpack.c.bf16 %v2116, %v2116
      %v2181 = vpack.c.bf16 %v2117, %v2117
      %v2182 = vpack.c.bf16 %v2118, %v2118
      %v2183 = vpack.c.bf16 %v2119, %v2119
      %v2184 = vpack.c.bf16 %v2120, %v2120
      %v2185 = vpack.c.bf16 %v2121, %v2121
      %v2186 = vpack.c.bf16 %v2122, %v2122
      %v2187 = vpack.c.bf16 %v2123, %v2123
      %v2188 = vpack.c.bf16 %v2124, %v2124
      %v2189 = vpack.c.bf16 %v2125, %v2125
      %v2190 = vpack.c.bf16 %v2126, %v2126
      %v2191 = vpack.c.bf16 %v2127, %v2127
      %v2192 = vpack.c.bf16 %v2128, %v2128
      %v2193 = vpack.c.bf16 %v2129, %v2129
      %v2194 = vpack.c.bf16 %v2130, %v2130
      %v2195 = vpack.c.bf16 %v2131, %v2131
      %v2196 = vpack.c.bf16 %v2132, %v2132
      %v2197 = vpack.c.bf16 %v2133, %v2133
      %v2198 = vpack.c.bf16 %v2134, %v2134
      %v2199 = vpack.c.bf16 %v2135, %v2135
      %v2200 = vpack.c.bf16 %v2136, %v2136
      %v2201 = vpack.c.bf16 %v2137, %v2137
      %v2202 = vpack.c.bf16 %v2138, %v2138
      %v2203 = vpack.c.bf16 %v2139, %v2139
      %v2204 = vpack.c.bf16 %v2140, %v2140
      %v2205 = vpack.c.bf16 %v2141, %v2141
      %v2206 = vpack.c.bf16 %v2142, %v2142
      %v2207 = vpack.c.bf16 %v2143, %v2143
      %v2208 = vpack.c.bf16 %v2144, %v2144
      %v2209 = vpack.c.bf16 %v2145, %v2145
      %v2210 = vpack.c.bf16 %v2146, %v2146
      %v2211 = vpack.c.bf16 %v2147, %v2147
      %v2212 = vpack.c.bf16 %v2148, %v2148
      %v2213 = vpack.c.bf16 %v2149, %v2149
      %v2214 = vpack.c.bf16 %v2150, %v2150
      %v2215 = vpack.c.bf16 %v2151, %v2151
      %v2216 = vpack.c.bf16 %v2152, %v2152
      %v2217 = vpack.c.bf16 %v2153, %v2153
      %v2218 = vpack.c.bf16 %v2154, %v2154
      %v2219 = vpack.c.bf16 %v2155, %v2155
      %v2220 = vpack.c.bf16 %v2156, %v2156
      %v2221 = vpack.c.bf16 %v2157, %v2157
      %v2222 = vpack.c.bf16 %v2158, %v2158
      %v2223 = vpack.c.bf16 %v2159, %v2159
      %v2224 = vpack.c.bf16 %v2160, %v2160
      %v2225 = vpack.c.bf16 %v2161, %v2161
      %v2226 = vpack.c.bf16 %v2162, %v2162
      %v2227 = vpack.c.bf16 %v2163, %v2163
      %v2228 = vpack.c.bf16 %v2164, %v2164
      %v2229 = vpack.c.bf16 %v2165, %v2165
      %v2230 = vpack.c.bf16 %v2166, %v2166
      %v2231 = vpack.c.bf16 %v2167, %v2167
      %v2232 = vpack.c.bf16 %v2168, %v2168
      %v2233 = vpack.c.bf16 %v2169, %v2169
      %v2234 = vpack.c.bf16 %v2170, %v2170
      %v2235 = vld [vmem:[%s115] sm:$0x8]
      %v2236 = vld [vmem:[%s115 + $0x8] sm:$0x8]
      %v2237 = vld [vmem:[%s115 + $0x10] sm:$0x8]
      %v2238 = vld [vmem:[%s115 + $0x18] sm:$0x8]
      %v2239 = vld [vmem:[%s115 + $0x20] sm:$0x8]
      %v2240 = vld [vmem:[%s115 + $0x28] sm:$0x8]
      %v2241 = vld [vmem:[%s115 + $0x30] sm:$0x8]
      %v2242 = vld [vmem:[%s115 + $0x38] sm:$0x8]
      %v2243 = vld [vmem:[%s115 + $0x40] sm:$0x8]
      %v2244 = vld [vmem:[%s115 + $0x48] sm:$0x8]
      %v2245 = vld [vmem:[%s115 + $0x50] sm:$0x8]
      %v2246 = vld [vmem:[%s115 + $0x58] sm:$0x8]
      %v2247 = vld [vmem:[%s115 + $0x60] sm:$0x8]
      %v2248 = vld [vmem:[%s115 + $0x68] sm:$0x8]
      %v2249 = vld [vmem:[%s115 + $0x70] sm:$0x8]
      %v2250 = vld [vmem:[%s115 + $0x78] sm:$0x8]
      %v2251 = vld [vmem:[%s115 + $0x80] sm:$0x8]
      %v2252 = vld [vmem:[%s115 + $0x88] sm:$0x8]
      %v2253 = vld [vmem:[%s115 + $0x90] sm:$0x8]
      %v2254 = vld [vmem:[%s115 + $0x98] sm:$0x8]
      %v2255 = vld [vmem:[%s115 + $0xa0] sm:$0x8]
      %v2256 = vld [vmem:[%s115 + $0xa8] sm:$0x8]
      %v2257 = vld [vmem:[%s115 + $0xb0] sm:$0x8]
      %v2258 = vld [vmem:[%s115 + $0xb8] sm:$0x8]
      %v2259 = vld [vmem:[%s115 + $0xc0] sm:$0x8]
      %v2260 = vld [vmem:[%s115 + $0xc8] sm:$0x8]
      %v2261 = vld [vmem:[%s115 + $0xd0] sm:$0x8]
      %v2262 = vld [vmem:[%s115 + $0xd8] sm:$0x8]
      %v2263 = vld [vmem:[%s115 + $0xe0] sm:$0x8]
      %v2264 = vld [vmem:[%s115 + $0xe8] sm:$0x8]
      %v2265 = vld [vmem:[%s115 + $0xf0] sm:$0x8]
      %v2266 = vld [vmem:[%s115 + $0xf8] sm:$0x8]
      %v2267 = vld [vmem:[%s115 + $0x100] sm:$0x8]
      %v2268 = vld [vmem:[%s115 + $0x108] sm:$0x8]
      %v2269 = vld [vmem:[%s115 + $0x110] sm:$0x8]
      %v2270 = vld [vmem:[%s115 + $0x118] sm:$0x8]
      %v2271 = vld [vmem:[%s115 + $0x120] sm:$0x8]
      %v2272 = vld [vmem:[%s115 + $0x128] sm:$0x8]
      %v2273 = vld [vmem:[%s115 + $0x130] sm:$0x8]
      %v2274 = vld [vmem:[%s115 + $0x138] sm:$0x8]
      %v2275 = vld [vmem:[%s115 + $0x140] sm:$0x8]
      %v2276 = vld [vmem:[%s115 + $0x148] sm:$0x8]
      %v2277 = vld [vmem:[%s115 + $0x150] sm:$0x8]
      %v2278 = vld [vmem:[%s115 + $0x158] sm:$0x8]
      %v2279 = vld [vmem:[%s115 + $0x160] sm:$0x8]
      %v2280 = vld [vmem:[%s115 + $0x168] sm:$0x8]
      %v2281 = vld [vmem:[%s115 + $0x170] sm:$0x8]
      %v2282 = vld [vmem:[%s115 + $0x178] sm:$0x8]
      %v2283 = vld [vmem:[%s115 + $0x180] sm:$0x8]
      %v2284 = vld [vmem:[%s115 + $0x188] sm:$0x8]
      %v2285 = vld [vmem:[%s115 + $0x190] sm:$0x8]
      %v2286 = vld [vmem:[%s115 + $0x198] sm:$0x8]
      %v2287 = vld [vmem:[%s115 + $0x1a0] sm:$0x8]
      %v2288 = vld [vmem:[%s115 + $0x1a8] sm:$0x8]
      %v2289 = vld [vmem:[%s115 + $0x1b0] sm:$0x8]
      %v2290 = vld [vmem:[%s115 + $0x1b8] sm:$0x8]
      %v2291 = vld [vmem:[%s115 + $0x1c0] sm:$0x8]
      %v2292 = vld [vmem:[%s115 + $0x1c8] sm:$0x8]
      %v2293 = vld [vmem:[%s115 + $0x1d0] sm:$0x8]
      %v2294 = vld [vmem:[%s115 + $0x1d8] sm:$0x8]
      %v2295 = vld [vmem:[%s115 + $0x1e0] sm:$0x8]
      %v2296 = vld [vmem:[%s115 + $0x1e8] sm:$0x8]
      %v2297 = vld [vmem:[%s115 + $0x1f0] sm:$0x8]
      %v2298 = vld [vmem:[%s115 + $0x1f8] sm:$0x8]
      %v2299 = vunpack.c.l.bf16 %v2171
      %v2300 = vunpack.c.l.bf16 %v2172
      %v2301 = vunpack.c.l.bf16 %v2173
      %v2302 = vunpack.c.l.bf16 %v2174
      %v2303 = vunpack.c.l.bf16 %v2175
      %v2304 = vunpack.c.l.bf16 %v2176
      %v2305 = vunpack.c.l.bf16 %v2177
      %v2306 = vunpack.c.l.bf16 %v2178
      %v2307 = vunpack.c.l.bf16 %v2179
      %v2308 = vunpack.c.l.bf16 %v2180
      %v2309 = vunpack.c.l.bf16 %v2181
      %v2310 = vunpack.c.l.bf16 %v2182
      %v2311 = vunpack.c.l.bf16 %v2183
      %v2312 = vunpack.c.l.bf16 %v2184
      %v2313 = vunpack.c.l.bf16 %v2185
      %v2314 = vunpack.c.l.bf16 %v2186
      %v2315 = vunpack.c.l.bf16 %v2187
      %v2316 = vunpack.c.l.bf16 %v2188
      %v2317 = vunpack.c.l.bf16 %v2189
      %v2318 = vunpack.c.l.bf16 %v2190
      %v2319 = vunpack.c.l.bf16 %v2191
      %v2320 = vunpack.c.l.bf16 %v2192
      %v2321 = vunpack.c.l.bf16 %v2193
      %v2322 = vunpack.c.l.bf16 %v2194
      %v2323 = vunpack.c.l.bf16 %v2195
      %v2324 = vunpack.c.l.bf16 %v2196
      %v2325 = vunpack.c.l.bf16 %v2197
      %v2326 = vunpack.c.l.bf16 %v2198
      %v2327 = vunpack.c.l.bf16 %v2199
      %v2328 = vunpack.c.l.bf16 %v2200
      %v2329 = vunpack.c.l.bf16 %v2201
      %v2330 = vunpack.c.l.bf16 %v2202
      %v2331 = vunpack.c.l.bf16 %v2203
      %v2332 = vunpack.c.l.bf16 %v2204
      %v2333 = vunpack.c.l.bf16 %v2205
      %v2334 = vunpack.c.l.bf16 %v2206
      %v2335 = vunpack.c.l.bf16 %v2207
      %v2336 = vunpack.c.l.bf16 %v2208
      %v2337 = vunpack.c.l.bf16 %v2209
      %v2338 = vunpack.c.l.bf16 %v2210
      %v2339 = vunpack.c.l.bf16 %v2211
      %v2340 = vunpack.c.l.bf16 %v2212
      %v2341 = vunpack.c.l.bf16 %v2213
      %v2342 = vunpack.c.l.bf16 %v2214
      %v2343 = vunpack.c.l.bf16 %v2215
      %v2344 = vunpack.c.l.bf16 %v2216
      %v2345 = vunpack.c.l.bf16 %v2217
      %v2346 = vunpack.c.l.bf16 %v2218
      %v2347 = vunpack.c.l.bf16 %v2219
      %v2348 = vunpack.c.l.bf16 %v2220
      %v2349 = vunpack.c.l.bf16 %v2221
      %v2350 = vunpack.c.l.bf16 %v2222
      %v2351 = vunpack.c.l.bf16 %v2223
      %v2352 = vunpack.c.l.bf16 %v2224
      %v2353 = vunpack.c.l.bf16 %v2225
      %v2354 = vunpack.c.l.bf16 %v2226
      %v2355 = vunpack.c.l.bf16 %v2227
      %v2356 = vunpack.c.l.bf16 %v2228
      %v2357 = vunpack.c.l.bf16 %v2229
      %v2358 = vunpack.c.l.bf16 %v2230
      %v2359 = vunpack.c.l.bf16 %v2231
      %v2360 = vunpack.c.l.bf16 %v2232
      %v2361 = vunpack.c.l.bf16 %v2233
      %v2362 = vunpack.c.l.bf16 %v2234
      %v2363 = vunpack.c.l.bf16 %v2235
      %v2364 = vunpack.c.l.bf16 %v2236
      %v2365 = vunpack.c.l.bf16 %v2237
      %v2366 = vunpack.c.l.bf16 %v2238
      %v2367 = vunpack.c.l.bf16 %v2239
      %v2368 = vunpack.c.l.bf16 %v2240
      %v2369 = vunpack.c.l.bf16 %v2241
      %v2370 = vunpack.c.l.bf16 %v2242
      %v2371 = vunpack.c.l.bf16 %v2243
      %v2372 = vunpack.c.l.bf16 %v2244
      %v2373 = vunpack.c.l.bf16 %v2245
      %v2374 = vunpack.c.l.bf16 %v2246
      %v2375 = vunpack.c.l.bf16 %v2247
      %v2376 = vunpack.c.l.bf16 %v2248
      %v2377 = vunpack.c.l.bf16 %v2249
      %v2378 = vunpack.c.l.bf16 %v2250
      %v2379 = vunpack.c.l.bf16 %v2251
      %v2380 = vunpack.c.l.bf16 %v2252
      %v2381 = vunpack.c.l.bf16 %v2253
      %v2382 = vunpack.c.l.bf16 %v2254
      %v2383 = vunpack.c.l.bf16 %v2255
      %v2384 = vunpack.c.l.bf16 %v2256
      %v2385 = vunpack.c.l.bf16 %v2257
      %v2386 = vunpack.c.l.bf16 %v2258
      %v2387 = vunpack.c.l.bf16 %v2259
      %v2388 = vunpack.c.l.bf16 %v2260
      %v2389 = vunpack.c.l.bf16 %v2261
      %v2390 = vunpack.c.l.bf16 %v2262
      %v2391 = vunpack.c.l.bf16 %v2263
      %v2392 = vunpack.c.l.bf16 %v2264
      %v2393 = vunpack.c.l.bf16 %v2265
      %v2394 = vunpack.c.l.bf16 %v2266
      %v2395 = vunpack.c.l.bf16 %v2267
      %v2396 = vunpack.c.l.bf16 %v2268
      %v2397 = vunpack.c.l.bf16 %v2269
      %v2398 = vunpack.c.l.bf16 %v2270
      %v2399 = vunpack.c.l.bf16 %v2271
      %v2400 = vunpack.c.l.bf16 %v2272
      %v2401 = vunpack.c.l.bf16 %v2273
      %v2402 = vunpack.c.l.bf16 %v2274
      %v2403 = vunpack.c.l.bf16 %v2275
      %v2404 = vunpack.c.l.bf16 %v2276
      %v2405 = vunpack.c.l.bf16 %v2277
      %v2406 = vunpack.c.l.bf16 %v2278
      %v2407 = vunpack.c.l.bf16 %v2279
      %v2408 = vunpack.c.l.bf16 %v2280
      %v2409 = vunpack.c.l.bf16 %v2281
      %v2410 = vunpack.c.l.bf16 %v2282
      %v2411 = vunpack.c.l.bf16 %v2283
      %v2412 = vunpack.c.l.bf16 %v2284
      %v2413 = vunpack.c.l.bf16 %v2285
      %v2414 = vunpack.c.l.bf16 %v2286
      %v2415 = vunpack.c.l.bf16 %v2287
      %v2416 = vunpack.c.l.bf16 %v2288
      %v2417 = vunpack.c.l.bf16 %v2289
      %v2418 = vunpack.c.l.bf16 %v2290
      %v2419 = vunpack.c.l.bf16 %v2291
      %v2420 = vunpack.c.l.bf16 %v2292
      %v2421 = vunpack.c.l.bf16 %v2293
      %v2422 = vunpack.c.l.bf16 %v2294
      %v2423 = vunpack.c.l.bf16 %v2295
      %v2424 = vunpack.c.l.bf16 %v2296
      %v2425 = vunpack.c.l.bf16 %v2297
      %v2426 = vunpack.c.l.bf16 %v2298
      %v2491 = vrot.slane %v2363, 6
      %v2492 = vrot.slane %v2364, 6
      %v2493 = vrot.slane %v2365, 6
      %v2494 = vrot.slane %v2366, 6
      %v2495 = vrot.slane %v2367, 6
      %v2496 = vrot.slane %v2368, 6
      %v2497 = vrot.slane %v2369, 6
      %v2498 = vrot.slane %v2370, 6
      %v2499 = vrot.slane %v2371, 6
      %v2500 = vrot.slane %v2372, 6
      %v2501 = vrot.slane %v2373, 6
      %v2502 = vrot.slane %v2374, 6
      %v2503 = vrot.slane %v2375, 6
      %v2504 = vrot.slane %v2376, 6
      %v2505 = vrot.slane %v2377, 6
      %v2506 = vrot.slane %v2378, 6
      %v2507 = vrot.slane %v2379, 6
      %v2508 = vrot.slane %v2380, 6
      %v2509 = vrot.slane %v2381, 6
      %v2510 = vrot.slane %v2382, 6
      %v2511 = vrot.slane %v2383, 6
      %v2512 = vrot.slane %v2384, 6
      %v2513 = vrot.slane %v2385, 6
      %v2514 = vrot.slane %v2386, 6
      %v2515 = vrot.slane %v2387, 6
      %v2516 = vrot.slane %v2388, 6
      %v2517 = vrot.slane %v2389, 6
      %v2518 = vrot.slane %v2390, 6
      %v2519 = vrot.slane %v2391, 6
      %v2520 = vrot.slane %v2392, 6
      %v2521 = vrot.slane %v2393, 6
      %v2522 = vrot.slane %v2394, 6
      %v2523 = vrot.slane %v2395, 6
      %v2524 = vrot.slane %v2396, 6
      %v2525 = vrot.slane %v2397, 6
      %v2526 = vrot.slane %v2398, 6
      %v2527 = vrot.slane %v2399, 6
      %v2528 = vrot.slane %v2400, 6
      %v2529 = vrot.slane %v2401, 6
      %v2530 = vrot.slane %v2402, 6
      %v2531 = vrot.slane %v2403, 6
      %v2532 = vrot.slane %v2404, 6
      %v2533 = vrot.slane %v2405, 6
      %v2534 = vrot.slane %v2406, 6
      %v2535 = vrot.slane %v2407, 6
      %v2536 = vrot.slane %v2408, 6
      %v2537 = vrot.slane %v2409, 6
      %v2538 = vrot.slane %v2410, 6
      %v2539 = vrot.slane %v2411, 6
      %v2540 = vrot.slane %v2412, 6
      %v2541 = vrot.slane %v2413, 6
      %v2542 = vrot.slane %v2414, 6
      %v2543 = vrot.slane %v2415, 6
      %v2544 = vrot.slane %v2416, 6
      %v2545 = vrot.slane %v2417, 6
      %v2546 = vrot.slane %v2418, 6
      %v2547 = vrot.slane %v2419, 6
      %v2548 = vrot.slane %v2420, 6
      %v2549 = vrot.slane %v2421, 6
      %v2550 = vrot.slane %v2422, 6
      %v2551 = vrot.slane %v2423, 6
      %v2552 = vrot.slane %v2424, 6
      %v2553 = vrot.slane %v2425, 6
      %v2554 = vrot.slane %v2426, 6
      %v2619 = vmax.f32 %v2299, %v2491
      %v2620 = vmax.f32 %v2300, %v2492
      %v2621 = vmax.f32 %v2301, %v2493
      %v2622 = vmax.f32 %v2302, %v2494
      %v2623 = vmax.f32 %v2303, %v2495
      %v2624 = vmax.f32 %v2304, %v2496
      %v2625 = vmax.f32 %v2305, %v2497
      %v2626 = vmax.f32 %v2306, %v2498
      %v2627 = vmax.f32 %v2307, %v2499
      %v2628 = vmax.f32 %v2308, %v2500
      %v2629 = vmax.f32 %v2309, %v2501
      %v2630 = vmax.f32 %v2310, %v2502
      %v2631 = vmax.f32 %v2311, %v2503
      %v2632 = vmax.f32 %v2312, %v2504
      %v2633 = vmax.f32 %v2313, %v2505
      %v2634 = vmax.f32 %v2314, %v2506
      %v2635 = vmax.f32 %v2315, %v2507
      %v2636 = vmax.f32 %v2316, %v2508
      %v2637 = vmax.f32 %v2317, %v2509
      %v2638 = vmax.f32 %v2318, %v2510
      %v2639 = vmax.f32 %v2319, %v2511
      %v2640 = vmax.f32 %v2320, %v2512
      %v2641 = vmax.f32 %v2321, %v2513
      %v2642 = vmax.f32 %v2322, %v2514
      %v2643 = vmax.f32 %v2323, %v2515
      %v2644 = vmax.f32 %v2324, %v2516
      %v2645 = vmax.f32 %v2325, %v2517
      %v2646 = vmax.f32 %v2326, %v2518
      %v2647 = vmax.f32 %v2327, %v2519
      %v2648 = vmax.f32 %v2328, %v2520
      %v2649 = vmax.f32 %v2329, %v2521
      %v2650 = vmax.f32 %v2330, %v2522
      %v2651 = vmax.f32 %v2331, %v2523
      %v2652 = vmax.f32 %v2332, %v2524
      %v2653 = vmax.f32 %v2333, %v2525
      %v2654 = vmax.f32 %v2334, %v2526
      %v2655 = vmax.f32 %v2335, %v2527
      %v2656 = vmax.f32 %v2336, %v2528
      %v2657 = vmax.f32 %v2337, %v2529
      %v2658 = vmax.f32 %v2338, %v2530
      %v2659 = vmax.f32 %v2339, %v2531
      %v2660 = vmax.f32 %v2340, %v2532
      %v2661 = vmax.f32 %v2341, %v2533
      %v2662 = vmax.f32 %v2342, %v2534
      %v2663 = vmax.f32 %v2343, %v2535
      %v2664 = vmax.f32 %v2344, %v2536
      %v2665 = vmax.f32 %v2345, %v2537
      %v2666 = vmax.f32 %v2346, %v2538
      %v2667 = vmax.f32 %v2347, %v2539
      %v2668 = vmax.f32 %v2348, %v2540
      %v2669 = vmax.f32 %v2349, %v2541
      %v2670 = vmax.f32 %v2350, %v2542
      %v2671 = vmax.f32 %v2351, %v2543
      %v2672 = vmax.f32 %v2352, %v2544
      %v2673 = vmax.f32 %v2353, %v2545
      %v2674 = vmax.f32 %v2354, %v2546
      %v2675 = vmax.f32 %v2355, %v2547
      %v2676 = vmax.f32 %v2356, %v2548
      %v2677 = vmax.f32 %v2357, %v2549
      %v2678 = vmax.f32 %v2358, %v2550
      %v2679 = vmax.f32 %v2359, %v2551
      %v2680 = vmax.f32 %v2360, %v2552
      %v2681 = vmax.f32 %v2361, %v2553
      %v2682 = vmax.f32 %v2362, %v2554
      %v2683 = vpack.c.bf16 %v2619, %v2619
      %v2684 = vpack.c.bf16 %v2620, %v2620
      %v2685 = vpack.c.bf16 %v2621, %v2621
      %v2686 = vpack.c.bf16 %v2622, %v2622
      %v2687 = vpack.c.bf16 %v2623, %v2623
      %v2688 = vpack.c.bf16 %v2624, %v2624
      %v2689 = vpack.c.bf16 %v2625, %v2625
      %v2690 = vpack.c.bf16 %v2626, %v2626
      %v2691 = vpack.c.bf16 %v2627, %v2627
      %v2692 = vpack.c.bf16 %v2628, %v2628
      %v2693 = vpack.c.bf16 %v2629, %v2629
      %v2694 = vpack.c.bf16 %v2630, %v2630
      %v2695 = vpack.c.bf16 %v2631, %v2631
      %v2696 = vpack.c.bf16 %v2632, %v2632
      %v2697 = vpack.c.bf16 %v2633, %v2633
      %v2698 = vpack.c.bf16 %v2634, %v2634
      %v2699 = vpack.c.bf16 %v2635, %v2635
      %v2700 = vpack.c.bf16 %v2636, %v2636
      %v2701 = vpack.c.bf16 %v2637, %v2637
      %v2702 = vpack.c.bf16 %v2638, %v2638
      %v2703 = vpack.c.bf16 %v2639, %v2639
      %v2704 = vpack.c.bf16 %v2640, %v2640
      %v2705 = vpack.c.bf16 %v2641, %v2641
      %v2706 = vpack.c.bf16 %v2642, %v2642
      %v2707 = vpack.c.bf16 %v2643, %v2643
      %v2708 = vpack.c.bf16 %v2644, %v2644
      %v2709 = vpack.c.bf16 %v2645, %v2645
      %v2710 = vpack.c.bf16 %v2646, %v2646
      %v2711 = vpack.c.bf16 %v2647, %v2647
      %v2712 = vpack.c.bf16 %v2648, %v2648
      %v2713 = vpack.c.bf16 %v2649, %v2649
      %v2714 = vpack.c.bf16 %v2650, %v2650
      %v2715 = vpack.c.bf16 %v2651, %v2651
      %v2716 = vpack.c.bf16 %v2652, %v2652
      %v2717 = vpack.c.bf16 %v2653, %v2653
      %v2718 = vpack.c.bf16 %v2654, %v2654
      %v2719 = vpack.c.bf16 %v2655, %v2655
      %v2720 = vpack.c.bf16 %v2656, %v2656
      %v2721 = vpack.c.bf16 %v2657, %v2657
      %v2722 = vpack.c.bf16 %v2658, %v2658
      %v2723 = vpack.c.bf16 %v2659, %v2659
      %v2724 = vpack.c.bf16 %v2660, %v2660
      %v2725 = vpack.c.bf16 %v2661, %v2661
      %v2726 = vpack.c.bf16 %v2662, %v2662
      %v2727 = vpack.c.bf16 %v2663, %v2663
      %v2728 = vpack.c.bf16 %v2664, %v2664
      %v2729 = vpack.c.bf16 %v2665, %v2665
      %v2730 = vpack.c.bf16 %v2666, %v2666
      %v2731 = vpack.c.bf16 %v2667, %v2667
      %v2732 = vpack.c.bf16 %v2668, %v2668
      %v2733 = vpack.c.bf16 %v2669, %v2669
      %v2734 = vpack.c.bf16 %v2670, %v2670
      %v2735 = vpack.c.bf16 %v2671, %v2671
      %v2736 = vpack.c.bf16 %v2672, %v2672
      %v2737 = vpack.c.bf16 %v2673, %v2673
      %v2738 = vpack.c.bf16 %v2674, %v2674
      %v2739 = vpack.c.bf16 %v2675, %v2675
      %v2740 = vpack.c.bf16 %v2676, %v2676
      %v2741 = vpack.c.bf16 %v2677, %v2677
      %v2742 = vpack.c.bf16 %v2678, %v2678
      %v2743 = vpack.c.bf16 %v2679, %v2679
      %v2744 = vpack.c.bf16 %v2680, %v2680
      %v2745 = vpack.c.bf16 %v2681, %v2681
      %v2746 = vpack.c.bf16 %v2682, %v2682
      %v2747 = vunpack.c.l.bf16 %v2683
      %v2748 = vunpack.c.l.bf16 %v2684
      %v2749 = vunpack.c.l.bf16 %v2685
      %v2750 = vunpack.c.l.bf16 %v2686
      %v2751 = vunpack.c.l.bf16 %v2687
      %v2752 = vunpack.c.l.bf16 %v2688
      %v2753 = vunpack.c.l.bf16 %v2689
      %v2754 = vunpack.c.l.bf16 %v2690
      %v2755 = vunpack.c.l.bf16 %v2691
      %v2756 = vunpack.c.l.bf16 %v2692
      %v2757 = vunpack.c.l.bf16 %v2693
      %v2758 = vunpack.c.l.bf16 %v2694
      %v2759 = vunpack.c.l.bf16 %v2695
      %v2760 = vunpack.c.l.bf16 %v2696
      %v2761 = vunpack.c.l.bf16 %v2697
      %v2762 = vunpack.c.l.bf16 %v2698
      %v2763 = vunpack.c.l.bf16 %v2699
      %v2764 = vunpack.c.l.bf16 %v2700
      %v2765 = vunpack.c.l.bf16 %v2701
      %v2766 = vunpack.c.l.bf16 %v2702
      %v2767 = vunpack.c.l.bf16 %v2703
      %v2768 = vunpack.c.l.bf16 %v2704
      %v2769 = vunpack.c.l.bf16 %v2705
      %v2770 = vunpack.c.l.bf16 %v2706
      %v2771 = vunpack.c.l.bf16 %v2707
      %v2772 = vunpack.c.l.bf16 %v2708
      %v2773 = vunpack.c.l.bf16 %v2709
      %v2774 = vunpack.c.l.bf16 %v2710
      %v2775 = vunpack.c.l.bf16 %v2711
      %v2776 = vunpack.c.l.bf16 %v2712
      %v2777 = vunpack.c.l.bf16 %v2713
      %v2778 = vunpack.c.l.bf16 %v2714
      %v2779 = vunpack.c.l.bf16 %v2715
      %v2780 = vunpack.c.l.bf16 %v2716
      %v2781 = vunpack.c.l.bf16 %v2717
      %v2782 = vunpack.c.l.bf16 %v2718
      %v2783 = vunpack.c.l.bf16 %v2719
      %v2784 = vunpack.c.l.bf16 %v2720
      %v2785 = vunpack.c.l.bf16 %v2721
      %v2786 = vunpack.c.l.bf16 %v2722
      %v2787 = vunpack.c.l.bf16 %v2723
      %v2788 = vunpack.c.l.bf16 %v2724
      %v2789 = vunpack.c.l.bf16 %v2725
      %v2790 = vunpack.c.l.bf16 %v2726
      %v2791 = vunpack.c.l.bf16 %v2727
      %v2792 = vunpack.c.l.bf16 %v2728
      %v2793 = vunpack.c.l.bf16 %v2729
      %v2794 = vunpack.c.l.bf16 %v2730
      %v2795 = vunpack.c.l.bf16 %v2731
      %v2796 = vunpack.c.l.bf16 %v2732
      %v2797 = vunpack.c.l.bf16 %v2733
      %v2798 = vunpack.c.l.bf16 %v2734
      %v2799 = vunpack.c.l.bf16 %v2735
      %v2800 = vunpack.c.l.bf16 %v2736
      %v2801 = vunpack.c.l.bf16 %v2737
      %v2802 = vunpack.c.l.bf16 %v2738
      %v2803 = vunpack.c.l.bf16 %v2739
      %v2804 = vunpack.c.l.bf16 %v2740
      %v2805 = vunpack.c.l.bf16 %v2741
      %v2806 = vunpack.c.l.bf16 %v2742
      %v2807 = vunpack.c.l.bf16 %v2743
      %v2808 = vunpack.c.l.bf16 %v2744
      %v2809 = vunpack.c.l.bf16 %v2745
      %v2810 = vunpack.c.l.bf16 %v2746
      %v2811 = vrot.slane %v2363, 7
      %v2812 = vrot.slane %v2364, 7
      %v2813 = vrot.slane %v2365, 7
      %v2814 = vrot.slane %v2366, 7
      %v2815 = vrot.slane %v2367, 7
      %v2816 = vrot.slane %v2368, 7
      %v2817 = vrot.slane %v2369, 7
      %v2818 = vrot.slane %v2370, 7
      %v2819 = vrot.slane %v2371, 7
      %v2820 = vrot.slane %v2372, 7
      %v2821 = vrot.slane %v2373, 7
      %v2822 = vrot.slane %v2374, 7
      %v2823 = vrot.slane %v2375, 7
      %v2824 = vrot.slane %v2376, 7
      %v2825 = vrot.slane %v2377, 7
      %v2826 = vrot.slane %v2378, 7
      %v2827 = vrot.slane %v2379, 7
      %v2828 = vrot.slane %v2380, 7
      %v2829 = vrot.slane %v2381, 7
      %v2830 = vrot.slane %v2382, 7
      %v2831 = vrot.slane %v2383, 7
      %v2832 = vrot.slane %v2384, 7
      %v2833 = vrot.slane %v2385, 7
      %v2834 = vrot.slane %v2386, 7
      %v2835 = vrot.slane %v2387, 7
      %v2836 = vrot.slane %v2388, 7
      %v2837 = vrot.slane %v2389, 7
      %v2838 = vrot.slane %v2390, 7
      %v2839 = vrot.slane %v2391, 7
      %v2840 = vrot.slane %v2392, 7
      %v2841 = vrot.slane %v2393, 7
      %v2842 = vrot.slane %v2394, 7
      %v2843 = vrot.slane %v2395, 7
      %v2844 = vrot.slane %v2396, 7
      %v2845 = vrot.slane %v2397, 7
      %v2846 = vrot.slane %v2398, 7
      %v2847 = vrot.slane %v2399, 7
      %v2848 = vrot.slane %v2400, 7
      %v2849 = vrot.slane %v2401, 7
      %v2850 = vrot.slane %v2402, 7
      %v2851 = vrot.slane %v2403, 7
      %v2852 = vrot.slane %v2404, 7
      %v2853 = vrot.slane %v2405, 7
      %v2854 = vrot.slane %v2406, 7
      %v2855 = vrot.slane %v2407, 7
      %v2856 = vrot.slane %v2408, 7
      %v2857 = vrot.slane %v2409, 7
      %v2858 = vrot.slane %v2410, 7
      %v2859 = vrot.slane %v2411, 7
      %v2860 = vrot.slane %v2412, 7
      %v2861 = vrot.slane %v2413, 7
      %v2862 = vrot.slane %v2414, 7
      %v2863 = vrot.slane %v2415, 7
      %v2864 = vrot.slane %v2416, 7
      %v2865 = vrot.slane %v2417, 7
      %v2866 = vrot.slane %v2418, 7
      %v2867 = vrot.slane %v2419, 7
      %v2868 = vrot.slane %v2420, 7
      %v2869 = vrot.slane %v2421, 7
      %v2870 = vrot.slane %v2422, 7
      %v2871 = vrot.slane %v2423, 7
      %v2872 = vrot.slane %v2424, 7
      %v2873 = vrot.slane %v2425, 7
      %v2874 = vrot.slane %v2426, 7
      %v2939 = vmax.f32 %v2747, %v2811
      %v2940 = vmax.f32 %v2748, %v2812
      %v2941 = vmax.f32 %v2749, %v2813
      %v2942 = vmax.f32 %v2750, %v2814
      %v2943 = vmax.f32 %v2751, %v2815
      %v2944 = vmax.f32 %v2752, %v2816
      %v2945 = vmax.f32 %v2753, %v2817
      %v2946 = vmax.f32 %v2754, %v2818
      %v2947 = vmax.f32 %v2755, %v2819
      %v2948 = vmax.f32 %v2756, %v2820
      %v2949 = vmax.f32 %v2757, %v2821
      %v2950 = vmax.f32 %v2758, %v2822
      %v2951 = vmax.f32 %v2759, %v2823
      %v2952 = vmax.f32 %v2760, %v2824
      %v2953 = vmax.f32 %v2761, %v2825
      %v2954 = vmax.f32 %v2762, %v2826
      %v2955 = vmax.f32 %v2763, %v2827
      %v2956 = vmax.f32 %v2764, %v2828
      %v2957 = vmax.f32 %v2765, %v2829
      %v2958 = vmax.f32 %v2766, %v2830
      %v2959 = vmax.f32 %v2767, %v2831
      %v2960 = vmax.f32 %v2768, %v2832
      %v2961 = vmax.f32 %v2769, %v2833
      %v2962 = vmax.f32 %v2770, %v2834
      %v2963 = vmax.f32 %v2771, %v2835
      %v2964 = vmax.f32 %v2772, %v2836
      %v2965 = vmax.f32 %v2773, %v2837
      %v2966 = vmax.f32 %v2774, %v2838
      %v2967 = vmax.f32 %v2775, %v2839
      %v2968 = vmax.f32 %v2776, %v2840
      %v2969 = vmax.f32 %v2777, %v2841
      %v2970 = vmax.f32 %v2778, %v2842
      %v2971 = vmax.f32 %v2779, %v2843
      %v2972 = vmax.f32 %v2780, %v2844
      %v2973 = vmax.f32 %v2781, %v2845
      %v2974 = vmax.f32 %v2782, %v2846
      %v2975 = vmax.f32 %v2783, %v2847
      %v2976 = vmax.f32 %v2784, %v2848
      %v2977 = vmax.f32 %v2785, %v2849
      %v2978 = vmax.f32 %v2786, %v2850
      %v2979 = vmax.f32 %v2787, %v2851
      %v2980 = vmax.f32 %v2788, %v2852
      %v2981 = vmax.f32 %v2789, %v2853
      %v2982 = vmax.f32 %v2790, %v2854
      %v2983 = vmax.f32 %v2791, %v2855
      %v2984 = vmax.f32 %v2792, %v2856
      %v2985 = vmax.f32 %v2793, %v2857
      %v2986 = vmax.f32 %v2794, %v2858
      %v2987 = vmax.f32 %v2795, %v2859
      %v2988 = vmax.f32 %v2796, %v2860
      %v2989 = vmax.f32 %v2797, %v2861
      %v2990 = vmax.f32 %v2798, %v2862
      %v2991 = vmax.f32 %v2799, %v2863
      %v2992 = vmax.f32 %v2800, %v2864
      %v2993 = vmax.f32 %v2801, %v2865
      %v2994 = vmax.f32 %v2802, %v2866
      %v2995 = vmax.f32 %v2803, %v2867
      %v2996 = vmax.f32 %v2804, %v2868
      %v2997 = vmax.f32 %v2805, %v2869
      %v2998 = vmax.f32 %v2806, %v2870
      %v2999 = vmax.f32 %v2807, %v2871
      %v3000 = vmax.f32 %v2808, %v2872
      %v3001 = vmax.f32 %v2809, %v2873
      %v3002 = vmax.f32 %v2810, %v2874
      %v3003 = vpack.c.bf16 %v2939, %v2939
      %v3004 = vpack.c.bf16 %v2940, %v2940
      %v3005 = vpack.c.bf16 %v2941, %v2941
      %v3006 = vpack.c.bf16 %v2942, %v2942
      %v3007 = vpack.c.bf16 %v2943, %v2943
      %v3008 = vpack.c.bf16 %v2944, %v2944
      %v3009 = vpack.c.bf16 %v2945, %v2945
      %v3010 = vpack.c.bf16 %v2946, %v2946
      %v3011 = vpack.c.bf16 %v2947, %v2947
      %v3012 = vpack.c.bf16 %v2948, %v2948
      %v3013 = vpack.c.bf16 %v2949, %v2949
      %v3014 = vpack.c.bf16 %v2950, %v2950
      %v3015 = vpack.c.bf16 %v2951, %v2951
      %v3016 = vpack.c.bf16 %v2952, %v2952
      %v3017 = vpack.c.bf16 %v2953, %v2953
      %v3018 = vpack.c.bf16 %v2954, %v2954
      %v3019 = vpack.c.bf16 %v2955, %v2955
      %v3020 = vpack.c.bf16 %v2956, %v2956
      %v3021 = vpack.c.bf16 %v2957, %v2957
      %v3022 = vpack.c.bf16 %v2958, %v2958
      %v3023 = vpack.c.bf16 %v2959, %v2959
      %v3024 = vpack.c.bf16 %v2960, %v2960
      %v3025 = vpack.c.bf16 %v2961, %v2961
      %v3026 = vpack.c.bf16 %v2962, %v2962
      %v3027 = vpack.c.bf16 %v2963, %v2963
      %v3028 = vpack.c.bf16 %v2964, %v2964
      %v3029 = vpack.c.bf16 %v2965, %v2965
      %v3030 = vpack.c.bf16 %v2966, %v2966
      %v3031 = vpack.c.bf16 %v2967, %v2967
      %v3032 = vpack.c.bf16 %v2968, %v2968
      %v3033 = vpack.c.bf16 %v2969, %v2969
      %v3034 = vpack.c.bf16 %v2970, %v2970
      %v3035 = vpack.c.bf16 %v2971, %v2971
      %v3036 = vpack.c.bf16 %v2972, %v2972
      %v3037 = vpack.c.bf16 %v2973, %v2973
      %v3038 = vpack.c.bf16 %v2974, %v2974
      %v3039 = vpack.c.bf16 %v2975, %v2975
      %v3040 = vpack.c.bf16 %v2976, %v2976
      %v3041 = vpack.c.bf16 %v2977, %v2977
      %v3042 = vpack.c.bf16 %v2978, %v2978
      %v3043 = vpack.c.bf16 %v2979, %v2979
      %v3044 = vpack.c.bf16 %v2980, %v2980
      %v3045 = vpack.c.bf16 %v2981, %v2981
      %v3046 = vpack.c.bf16 %v2982, %v2982
      %v3047 = vpack.c.bf16 %v2983, %v2983
      %v3048 = vpack.c.bf16 %v2984, %v2984
      %v3049 = vpack.c.bf16 %v2985, %v2985
      %v3050 = vpack.c.bf16 %v2986, %v2986
      %v3051 = vpack.c.bf16 %v2987, %v2987
      %v3052 = vpack.c.bf16 %v2988, %v2988
      %v3053 = vpack.c.bf16 %v2989, %v2989
      %v3054 = vpack.c.bf16 %v2990, %v2990
      %v3055 = vpack.c.bf16 %v2991, %v2991
      %v3056 = vpack.c.bf16 %v2992, %v2992
      %v3057 = vpack.c.bf16 %v2993, %v2993
      %v3058 = vpack.c.bf16 %v2994, %v2994
      %v3059 = vpack.c.bf16 %v2995, %v2995
      %v3060 = vpack.c.bf16 %v2996, %v2996
      %v3061 = vpack.c.bf16 %v2997, %v2997
      %v3062 = vpack.c.bf16 %v2998, %v2998
      %v3063 = vpack.c.bf16 %v2999, %v2999
      %v3064 = vpack.c.bf16 %v3000, %v3000
      %v3065 = vpack.c.bf16 %v3001, %v3001
      %v3066 = vpack.c.bf16 %v3002, %v3002
      %v3067 = vld [vmem:[%s115 + $0x4] sm:$0x1]
      %v3068 = vld [vmem:[%s115 + $0xc] sm:$0x1]
      %v3069 = vld [vmem:[%s115 + $0x14] sm:$0x1]
      %v3070 = vld [vmem:[%s115 + $0x1c] sm:$0x1]
      %v3071 = vld [vmem:[%s115 + $0x24] sm:$0x1]
      %v3072 = vld [vmem:[%s115 + $0x2c] sm:$0x1]
      %v3073 = vld [vmem:[%s115 + $0x34] sm:$0x1]
      %v3074 = vld [vmem:[%s115 + $0x3c] sm:$0x1]
      %v3075 = vld [vmem:[%s115 + $0x44] sm:$0x1]
      %v3076 = vld [vmem:[%s115 + $0x4c] sm:$0x1]
      %v3077 = vld [vmem:[%s115 + $0x54] sm:$0x1]
      %v3078 = vld [vmem:[%s115 + $0x5c] sm:$0x1]
      %v3079 = vld [vmem:[%s115 + $0x64] sm:$0x1]
      %v3080 = vld [vmem:[%s115 + $0x6c] sm:$0x1]
      %v3081 = vld [vmem:[%s115 + $0x74] sm:$0x1]
      %v3082 = vld [vmem:[%s115 + $0x7c] sm:$0x1]
      %v3083 = vld [vmem:[%s115 + $0x84] sm:$0x1]
      %v3084 = vld [vmem:[%s115 + $0x8c] sm:$0x1]
      %v3085 = vld [vmem:[%s115 + $0x94] sm:$0x1]
      %v3086 = vld [vmem:[%s115 + $0x9c] sm:$0x1]
      %v3087 = vld [vmem:[%s115 + $0xa4] sm:$0x1]
      %v3088 = vld [vmem:[%s115 + $0xac] sm:$0x1]
      %v3089 = vld [vmem:[%s115 + $0xb4] sm:$0x1]
      %v3090 = vld [vmem:[%s115 + $0xbc] sm:$0x1]
      %v3091 = vld [vmem:[%s115 + $0xc4] sm:$0x1]
      %v3092 = vld [vmem:[%s115 + $0xcc] sm:$0x1]
      %v3093 = vld [vmem:[%s115 + $0xd4] sm:$0x1]
      %v3094 = vld [vmem:[%s115 + $0xdc] sm:$0x1]
      %v3095 = vld [vmem:[%s115 + $0xe4] sm:$0x1]
      %v3096 = vld [vmem:[%s115 + $0xec] sm:$0x1]
      %v3097 = vld [vmem:[%s115 + $0xf4] sm:$0x1]
      %v3098 = vld [vmem:[%s115 + $0xfc] sm:$0x1]
      %v3099 = vld [vmem:[%s115 + $0x104] sm:$0x1]
      %v3100 = vld [vmem:[%s115 + $0x10c] sm:$0x1]
      %v3101 = vld [vmem:[%s115 + $0x114] sm:$0x1]
      %v3102 = vld [vmem:[%s115 + $0x11c] sm:$0x1]
      %v3103 = vld [vmem:[%s115 + $0x124] sm:$0x1]
      %v3104 = vld [vmem:[%s115 + $0x12c] sm:$0x1]
      %v3105 = vld [vmem:[%s115 + $0x134] sm:$0x1]
      %v3106 = vld [vmem:[%s115 + $0x13c] sm:$0x1]
      %v3107 = vld [vmem:[%s115 + $0x144] sm:$0x1]
      %v3108 = vld [vmem:[%s115 + $0x14c] sm:$0x1]
      %v3109 = vld [vmem:[%s115 + $0x154] sm:$0x1]
      %v3110 = vld [vmem:[%s115 + $0x15c] sm:$0x1]
      %v3111 = vld [vmem:[%s115 + $0x164] sm:$0x1]
      %v3112 = vld [vmem:[%s115 + $0x16c] sm:$0x1]
      %v3113 = vld [vmem:[%s115 + $0x174] sm:$0x1]
      %v3114 = vld [vmem:[%s115 + $0x17c] sm:$0x1]
      %v3115 = vld [vmem:[%s115 + $0x184] sm:$0x1]
      %v3116 = vld [vmem:[%s115 + $0x18c] sm:$0x1]
      %v3117 = vld [vmem:[%s115 + $0x194] sm:$0x1]
      %v3118 = vld [vmem:[%s115 + $0x19c] sm:$0x1]
      %v3119 = vld [vmem:[%s115 + $0x1a4] sm:$0x1]
      %v3120 = vld [vmem:[%s115 + $0x1ac] sm:$0x1]
      %v3121 = vld [vmem:[%s115 + $0x1b4] sm:$0x1]
      %v3122 = vld [vmem:[%s115 + $0x1bc] sm:$0x1]
      %v3123 = vld [vmem:[%s115 + $0x1c4] sm:$0x1]
      %v3124 = vld [vmem:[%s115 + $0x1cc] sm:$0x1]
      %v3125 = vld [vmem:[%s115 + $0x1d4] sm:$0x1]
      %v3126 = vld [vmem:[%s115 + $0x1dc] sm:$0x1]
      %v3127 = vld [vmem:[%s115 + $0x1e4] sm:$0x1]
      %v3128 = vld [vmem:[%s115 + $0x1ec] sm:$0x1]
      %v3129 = vld [vmem:[%s115 + $0x1f4] sm:$0x1]
      %v3130 = vld [vmem:[%s115 + $0x1fc] sm:$0x1]
      %v3131 = vunpack.c.l.bf16 %v3003
      %v3132 = vunpack.c.l.bf16 %v3004
      %v3133 = vunpack.c.l.bf16 %v3005
      %v3134 = vunpack.c.l.bf16 %v3006
      %v3135 = vunpack.c.l.bf16 %v3007
      %v3136 = vunpack.c.l.bf16 %v3008
      %v3137 = vunpack.c.l.bf16 %v3009
      %v3138 = vunpack.c.l.bf16 %v3010
      %v3139 = vunpack.c.l.bf16 %v3011
      %v3140 = vunpack.c.l.bf16 %v3012
      %v3141 = vunpack.c.l.bf16 %v3013
      %v3142 = vunpack.c.l.bf16 %v3014
      %v3143 = vunpack.c.l.bf16 %v3015
      %v3144 = vunpack.c.l.bf16 %v3016
      %v3145 = vunpack.c.l.bf16 %v3017
      %v3146 = vunpack.c.l.bf16 %v3018
      %v3147 = vunpack.c.l.bf16 %v3019
      %v3148 = vunpack.c.l.bf16 %v3020
      %v3149 = vunpack.c.l.bf16 %v3021
      %v3150 = vunpack.c.l.bf16 %v3022
      %v3151 = vunpack.c.l.bf16 %v3023
      %v3152 = vunpack.c.l.bf16 %v3024
      %v3153 = vunpack.c.l.bf16 %v3025
      %v3154 = vunpack.c.l.bf16 %v3026
      %v3155 = vunpack.c.l.bf16 %v3027
      %v3156 = vunpack.c.l.bf16 %v3028
      %v3157 = vunpack.c.l.bf16 %v3029
      %v3158 = vunpack.c.l.bf16 %v3030
      %v3159 = vunpack.c.l.bf16 %v3031
      %v3160 = vunpack.c.l.bf16 %v3032
      %v3161 = vunpack.c.l.bf16 %v3033
      %v3162 = vunpack.c.l.bf16 %v3034
      %v3163 = vunpack.c.l.bf16 %v3035
      %v3164 = vunpack.c.l.bf16 %v3036
      %v3165 = vunpack.c.l.bf16 %v3037
      %v3166 = vunpack.c.l.bf16 %v3038
      %v3167 = vunpack.c.l.bf16 %v3039
      %v3168 = vunpack.c.l.bf16 %v3040
      %v3169 = vunpack.c.l.bf16 %v3041
      %v3170 = vunpack.c.l.bf16 %v3042
      %v3171 = vunpack.c.l.bf16 %v3043
      %v3172 = vunpack.c.l.bf16 %v3044
      %v3173 = vunpack.c.l.bf16 %v3045
      %v3174 = vunpack.c.l.bf16 %v3046
      %v3175 = vunpack.c.l.bf16 %v3047
      %v3176 = vunpack.c.l.bf16 %v3048
      %v3177 = vunpack.c.l.bf16 %v3049
      %v3178 = vunpack.c.l.bf16 %v3050
      %v3179 = vunpack.c.l.bf16 %v3051
      %v3180 = vunpack.c.l.bf16 %v3052
      %v3181 = vunpack.c.l.bf16 %v3053
      %v3182 = vunpack.c.l.bf16 %v3054
      %v3183 = vunpack.c.l.bf16 %v3055
      %v3184 = vunpack.c.l.bf16 %v3056
      %v3185 = vunpack.c.l.bf16 %v3057
      %v3186 = vunpack.c.l.bf16 %v3058
      %v3187 = vunpack.c.l.bf16 %v3059
      %v3188 = vunpack.c.l.bf16 %v3060
      %v3189 = vunpack.c.l.bf16 %v3061
      %v3190 = vunpack.c.l.bf16 %v3062
      %v3191 = vunpack.c.l.bf16 %v3063
      %v3192 = vunpack.c.l.bf16 %v3064
      %v3193 = vunpack.c.l.bf16 %v3065
      %v3194 = vunpack.c.l.bf16 %v3066
      %v3195 = vunpack.c.l.bf16 %v3067
      %v3196 = vunpack.c.l.bf16 %v3068
      %v3197 = vunpack.c.l.bf16 %v3069
      %v3198 = vunpack.c.l.bf16 %v3070
      %v3199 = vunpack.c.l.bf16 %v3071
      %v3200 = vunpack.c.l.bf16 %v3072
      %v3201 = vunpack.c.l.bf16 %v3073
      %v3202 = vunpack.c.l.bf16 %v3074
      %v3203 = vunpack.c.l.bf16 %v3075
      %v3204 = vunpack.c.l.bf16 %v3076
      %v3205 = vunpack.c.l.bf16 %v3077
      %v3206 = vunpack.c.l.bf16 %v3078
      %v3207 = vunpack.c.l.bf16 %v3079
      %v3208 = vunpack.c.l.bf16 %v3080
      %v3209 = vunpack.c.l.bf16 %v3081
      %v3210 = vunpack.c.l.bf16 %v3082
      %v3211 = vunpack.c.l.bf16 %v3083
      %v3212 = vunpack.c.l.bf16 %v3084
      %v3213 = vunpack.c.l.bf16 %v3085
      %v3214 = vunpack.c.l.bf16 %v3086
      %v3215 = vunpack.c.l.bf16 %v3087
      %v3216 = vunpack.c.l.bf16 %v3088
      %v3217 = vunpack.c.l.bf16 %v3089
      %v3218 = vunpack.c.l.bf16 %v3090
      %v3219 = vunpack.c.l.bf16 %v3091
      %v3220 = vunpack.c.l.bf16 %v3092
      %v3221 = vunpack.c.l.bf16 %v3093
      %v3222 = vunpack.c.l.bf16 %v3094
      %v3223 = vunpack.c.l.bf16 %v3095
      %v3224 = vunpack.c.l.bf16 %v3096
      %v3225 = vunpack.c.l.bf16 %v3097
      %v3226 = vunpack.c.l.bf16 %v3098
      %v3227 = vunpack.c.l.bf16 %v3099
      %v3228 = vunpack.c.l.bf16 %v3100
      %v3229 = vunpack.c.l.bf16 %v3101
      %v3230 = vunpack.c.l.bf16 %v3102
      %v3231 = vunpack.c.l.bf16 %v3103
      %v3232 = vunpack.c.l.bf16 %v3104
      %v3233 = vunpack.c.l.bf16 %v3105
      %v3234 = vunpack.c.l.bf16 %v3106
      %v3235 = vunpack.c.l.bf16 %v3107
      %v3236 = vunpack.c.l.bf16 %v3108
      %v3237 = vunpack.c.l.bf16 %v3109
      %v3238 = vunpack.c.l.bf16 %v3110
      %v3239 = vunpack.c.l.bf16 %v3111
      %v3240 = vunpack.c.l.bf16 %v3112
      %v3241 = vunpack.c.l.bf16 %v3113
      %v3242 = vunpack.c.l.bf16 %v3114
      %v3243 = vunpack.c.l.bf16 %v3115
      %v3244 = vunpack.c.l.bf16 %v3116
      %v3245 = vunpack.c.l.bf16 %v3117
      %v3246 = vunpack.c.l.bf16 %v3118
      %v3247 = vunpack.c.l.bf16 %v3119
      %v3248 = vunpack.c.l.bf16 %v3120
      %v3249 = vunpack.c.l.bf16 %v3121
      %v3250 = vunpack.c.l.bf16 %v3122
      %v3251 = vunpack.c.l.bf16 %v3123
      %v3252 = vunpack.c.l.bf16 %v3124
      %v3253 = vunpack.c.l.bf16 %v3125
      %v3254 = vunpack.c.l.bf16 %v3126
      %v3255 = vunpack.c.l.bf16 %v3127
      %v3256 = vunpack.c.l.bf16 %v3128
      %v3257 = vunpack.c.l.bf16 %v3129
      %v3258 = vunpack.c.l.bf16 %v3130
      %v3259 = vmax.f32 %v3131, %v3195
      %v3260 = vmax.f32 %v3132, %v3196
      %v3261 = vmax.f32 %v3133, %v3197
      %v3262 = vmax.f32 %v3134, %v3198
      %v3263 = vmax.f32 %v3135, %v3199
      %v3264 = vmax.f32 %v3136, %v3200
      %v3265 = vmax.f32 %v3137, %v3201
      %v3266 = vmax.f32 %v3138, %v3202
      %v3267 = vmax.f32 %v3139, %v3203
      %v3268 = vmax.f32 %v3140, %v3204
      %v3269 = vmax.f32 %v3141, %v3205
      %v3270 = vmax.f32 %v3142, %v3206
      %v3271 = vmax.f32 %v3143, %v3207
      %v3272 = vmax.f32 %v3144, %v3208
      %v3273 = vmax.f32 %v3145, %v3209
      %v3274 = vmax.f32 %v3146, %v3210
      %v3275 = vmax.f32 %v3147, %v3211
      %v3276 = vmax.f32 %v3148, %v3212
      %v3277 = vmax.f32 %v3149, %v3213
      %v3278 = vmax.f32 %v3150, %v3214
      %v3279 = vmax.f32 %v3151, %v3215
      %v3280 = vmax.f32 %v3152, %v3216
      %v3281 = vmax.f32 %v3153, %v3217
      %v3282 = vmax.f32 %v3154, %v3218
      %v3283 = vmax.f32 %v3155, %v3219
      %v3284 = vmax.f32 %v3156, %v3220
      %v3285 = vmax.f32 %v3157, %v3221
      %v3286 = vmax.f32 %v3158, %v3222
      %v3287 = vmax.f32 %v3159, %v3223
      %v3288 = vmax.f32 %v3160, %v3224
      %v3289 = vmax.f32 %v3161, %v3225
      %v3290 = vmax.f32 %v3162, %v3226
      %v3291 = vmax.f32 %v3163, %v3227
      %v3292 = vmax.f32 %v3164, %v3228
      %v3293 = vmax.f32 %v3165, %v3229
      %v3294 = vmax.f32 %v3166, %v3230
      %v3295 = vmax.f32 %v3167, %v3231
      %v3296 = vmax.f32 %v3168, %v3232
      %v3297 = vmax.f32 %v3169, %v3233
      %v3298 = vmax.f32 %v3170, %v3234
      %v3299 = vmax.f32 %v3171, %v3235
      %v3300 = vmax.f32 %v3172, %v3236
      %v3301 = vmax.f32 %v3173, %v3237
      %v3302 = vmax.f32 %v3174, %v3238
      %v3303 = vmax.f32 %v3175, %v3239
      %v3304 = vmax.f32 %v3176, %v3240
      %v3305 = vmax.f32 %v3177, %v3241
      %v3306 = vmax.f32 %v3178, %v3242
      %v3307 = vmax.f32 %v3179, %v3243
      %v3308 = vmax.f32 %v3180, %v3244
      %v3309 = vmax.f32 %v3181, %v3245
      %v3310 = vmax.f32 %v3182, %v3246
      %v3311 = vmax.f32 %v3183, %v3247
      %v3312 = vmax.f32 %v3184, %v3248
      %v3313 = vmax.f32 %v3185, %v3249
      %v3314 = vmax.f32 %v3186, %v3250
      %v3315 = vmax.f32 %v3187, %v3251
      %v3316 = vmax.f32 %v3188, %v3252
      %v3317 = vmax.f32 %v3189, %v3253
      %v3318 = vmax.f32 %v3190, %v3254
      %v3319 = vmax.f32 %v3191, %v3255
      %v3320 = vmax.f32 %v3192, %v3256
      %v3321 = vmax.f32 %v3193, %v3257
      %v3322 = vmax.f32 %v3194, %v3258
      %v3323 = vpack.c.bf16 %v3259, %v3259
      %v3324 = vpack.c.bf16 %v3260, %v3260
      %v3325 = vpack.c.bf16 %v3261, %v3261
      %v3326 = vpack.c.bf16 %v3262, %v3262
      %v3327 = vpack.c.bf16 %v3263, %v3263
      %v3328 = vpack.c.bf16 %v3264, %v3264
      %v3329 = vpack.c.bf16 %v3265, %v3265
      %v3330 = vpack.c.bf16 %v3266, %v3266
      %v3331 = vpack.c.bf16 %v3267, %v3267
      %v3332 = vpack.c.bf16 %v3268, %v3268
      %v3333 = vpack.c.bf16 %v3269, %v3269
      %v3334 = vpack.c.bf16 %v3270, %v3270
      %v3335 = vpack.c.bf16 %v3271, %v3271
      %v3336 = vpack.c.bf16 %v3272, %v3272
      %v3337 = vpack.c.bf16 %v3273, %v3273
      %v3338 = vpack.c.bf16 %v3274, %v3274
      %v3339 = vpack.c.bf16 %v3275, %v3275
      %v3340 = vpack.c.bf16 %v3276, %v3276
      %v3341 = vpack.c.bf16 %v3277, %v3277
      %v3342 = vpack.c.bf16 %v3278, %v3278
      %v3343 = vpack.c.bf16 %v3279, %v3279
      %v3344 = vpack.c.bf16 %v3280, %v3280
      %v3345 = vpack.c.bf16 %v3281, %v3281
      %v3346 = vpack.c.bf16 %v3282, %v3282
      %v3347 = vpack.c.bf16 %v3283, %v3283
      %v3348 = vpack.c.bf16 %v3284, %v3284
      %v3349 = vpack.c.bf16 %v3285, %v3285
      %v3350 = vpack.c.bf16 %v3286, %v3286
      %v3351 = vpack.c.bf16 %v3287, %v3287
      %v3352 = vpack.c.bf16 %v3288, %v3288
      %v3353 = vpack.c.bf16 %v3289, %v3289
      %v3354 = vpack.c.bf16 %v3290, %v3290
      %v3355 = vpack.c.bf16 %v3291, %v3291
      %v3356 = vpack.c.bf16 %v3292, %v3292
      %v3357 = vpack.c.bf16 %v3293, %v3293
      %v3358 = vpack.c.bf16 %v3294, %v3294
      %v3359 = vpack.c.bf16 %v3295, %v3295
      %v3360 = vpack.c.bf16 %v3296, %v3296
      %v3361 = vpack.c.bf16 %v3297, %v3297
      %v3362 = vpack.c.bf16 %v3298, %v3298
      %v3363 = vpack.c.bf16 %v3299, %v3299
      %v3364 = vpack.c.bf16 %v3300, %v3300
      %v3365 = vpack.c.bf16 %v3301, %v3301
      %v3366 = vpack.c.bf16 %v3302, %v3302
      %v3367 = vpack.c.bf16 %v3303, %v3303
      %v3368 = vpack.c.bf16 %v3304, %v3304
      %v3369 = vpack.c.bf16 %v3305, %v3305
      %v3370 = vpack.c.bf16 %v3306, %v3306
      %v3371 = vpack.c.bf16 %v3307, %v3307
      %v3372 = vpack.c.bf16 %v3308, %v3308
      %v3373 = vpack.c.bf16 %v3309, %v3309
      %v3374 = vpack.c.bf16 %v3310, %v3310
      %v3375 = vpack.c.bf16 %v3311, %v3311
      %v3376 = vpack.c.bf16 %v3312, %v3312
      %v3377 = vpack.c.bf16 %v3313, %v3313
      %v3378 = vpack.c.bf16 %v3314, %v3314
      %v3379 = vpack.c.bf16 %v3315, %v3315
      %v3380 = vpack.c.bf16 %v3316, %v3316
      %v3381 = vpack.c.bf16 %v3317, %v3317
      %v3382 = vpack.c.bf16 %v3318, %v3318
      %v3383 = vpack.c.bf16 %v3319, %v3319
      %v3384 = vpack.c.bf16 %v3320, %v3320
      %v3385 = vpack.c.bf16 %v3321, %v3321
      %v3386 = vpack.c.bf16 %v3322, %v3322
      %v3451 = vunpack.c.l.b16 %v3323
      %v3452 = vunpack.c.l.b16 %v3324
      %v3453 = vunpack.c.l.b16 %v3325
      %v3454 = vunpack.c.l.b16 %v3326
      %v3455 = vunpack.c.l.b16 %v3327
      %v3456 = vunpack.c.l.b16 %v3328
      %v3457 = vunpack.c.l.b16 %v3329
      %v3458 = vunpack.c.l.b16 %v3330
      %v3459 = vunpack.c.l.b16 %v3331
      %v3460 = vunpack.c.l.b16 %v3332
      %v3461 = vunpack.c.l.b16 %v3333
      %v3462 = vunpack.c.l.b16 %v3334
      %v3463 = vunpack.c.l.b16 %v3335
      %v3464 = vunpack.c.l.b16 %v3336
      %v3465 = vunpack.c.l.b16 %v3337
      %v3466 = vunpack.c.l.b16 %v3338
      %v3467 = vunpack.c.l.b16 %v3339
      %v3468 = vunpack.c.l.b16 %v3340
      %v3469 = vunpack.c.l.b16 %v3341
      %v3470 = vunpack.c.l.b16 %v3342
      %v3471 = vunpack.c.l.b16 %v3343
      %v3472 = vunpack.c.l.b16 %v3344
      %v3473 = vunpack.c.l.b16 %v3345
      %v3474 = vunpack.c.l.b16 %v3346
      %v3475 = vunpack.c.l.b16 %v3347
      %v3476 = vunpack.c.l.b16 %v3348
      %v3477 = vunpack.c.l.b16 %v3349
      %v3478 = vunpack.c.l.b16 %v3350
      %v3479 = vunpack.c.l.b16 %v3351
      %v3480 = vunpack.c.l.b16 %v3352
      %v3481 = vunpack.c.l.b16 %v3353
      %v3482 = vunpack.c.l.b16 %v3354
      %v3483 = vunpack.c.l.b16 %v3355
      %v3484 = vunpack.c.l.b16 %v3356
      %v3485 = vunpack.c.l.b16 %v3357
      %v3486 = vunpack.c.l.b16 %v3358
      %v3487 = vunpack.c.l.b16 %v3359
      %v3488 = vunpack.c.l.b16 %v3360
      %v3489 = vunpack.c.l.b16 %v3361
      %v3490 = vunpack.c.l.b16 %v3362
      %v3491 = vunpack.c.l.b16 %v3363
      %v3492 = vunpack.c.l.b16 %v3364
      %v3493 = vunpack.c.l.b16 %v3365
      %v3494 = vunpack.c.l.b16 %v3366
      %v3495 = vunpack.c.l.b16 %v3367
      %v3496 = vunpack.c.l.b16 %v3368
      %v3497 = vunpack.c.l.b16 %v3369
      %v3498 = vunpack.c.l.b16 %v3370
      %v3499 = vunpack.c.l.b16 %v3371
      %v3500 = vunpack.c.l.b16 %v3372
      %v3501 = vunpack.c.l.b16 %v3373
      %v3502 = vunpack.c.l.b16 %v3374
      %v3503 = vunpack.c.l.b16 %v3375
      %v3504 = vunpack.c.l.b16 %v3376
      %v3505 = vunpack.c.l.b16 %v3377
      %v3506 = vunpack.c.l.b16 %v3378
      %v3507 = vunpack.c.l.b16 %v3379
      %v3508 = vunpack.c.l.b16 %v3380
      %v3509 = vunpack.c.l.b16 %v3381
      %v3510 = vunpack.c.l.b16 %v3382
      %v3511 = vunpack.c.l.b16 %v3383
      %v3512 = vunpack.c.l.b16 %v3384
      %v3513 = vunpack.c.l.b16 %v3385
      %v3514 = vunpack.c.l.b16 %v3386
      %v3515 = vrot.slane %v3452, 7
      %vm3516 = vcmask 1041409
      %v3517 = vsel %vm3516, %v3515, %v3451
      %v3518 = vrot.slane %v3453, 6
      %vm3519 = vcmask 1042434
      %v3520 = vsel %vm3519, %v3518, %v3517
      %v3521 = vrot.slane %v3454, 5
      %vm3522 = vcmask 1043459
      %v3523 = vsel %vm3522, %v3521, %v3520
      %v3524 = vrot.slane %v3455, 4
      %vm3525 = vcmask 1044484
      %v3526 = vsel %vm3525, %v3524, %v3523
      %v3527 = vrot.slane %v3456, 3
      %vm3528 = vcmask 1045509
      %v3529 = vsel %vm3528, %v3527, %v3526
      %v3530 = vrot.slane %v3457, 2
      %vm3531 = vcmask 1046534
      %v3532 = vsel %vm3531, %v3530, %v3529
      %v3533 = vrot.slane %v3458, 1
      %vm3534 = vcmask 1047559
      %v3535 = vsel %vm3534, %v3533, %v3532
      %v3536 = vrot.slane %v3460, 7
      %v3537 = vsel %vm3516, %v3536, %v3459
      %v3538 = vrot.slane %v3461, 6
      %v3539 = vsel %vm3519, %v3538, %v3537
      %v3540 = vrot.slane %v3462, 5
      %v3541 = vsel %vm3522, %v3540, %v3539
      %v3542 = vrot.slane %v3463, 4
      %v3543 = vsel %vm3525, %v3542, %v3541
      %v3544 = vrot.slane %v3464, 3
      %v3545 = vsel %vm3528, %v3544, %v3543
      %v3546 = vrot.slane %v3465, 2
      %v3547 = vsel %vm3531, %v3546, %v3545
      %v3548 = vrot.slane %v3466, 1
      %v3549 = vsel %vm3534, %v3548, %v3547
      %v3550 = vrot.slane %v3468, 7
      %v3551 = vsel %vm3516, %v3550, %v3467
      %v3552 = vrot.slane %v3469, 6
      %v3553 = vsel %vm3519, %v3552, %v3551
      %v3554 = vrot.slane %v3470, 5
      %v3555 = vsel %vm3522, %v3554, %v3553
      %v3556 = vrot.slane %v3471, 4
      %v3557 = vsel %vm3525, %v3556, %v3555
      %v3558 = vrot.slane %v3472, 3
      %v3559 = vsel %vm3528, %v3558, %v3557
      %v3560 = vrot.slane %v3473, 2
      %v3561 = vsel %vm3531, %v3560, %v3559
      %v3562 = vrot.slane %v3474, 1
      %v3563 = vsel %vm3534, %v3562, %v3561
      %v3564 = vrot.slane %v3476, 7
      %v3565 = vsel %vm3516, %v3564, %v3475
      %v3566 = vrot.slane %v3477, 6
      %v3567 = vsel %vm3519, %v3566, %v3565
      %v3568 = vrot.slane %v3478, 5
      %v3569 = vsel %vm3522, %v3568, %v3567
      %v3570 = vrot.slane %v3479, 4
      %v3571 = vsel %vm3525, %v3570, %v3569
      %v3572 = vrot.slane %v3480, 3
      %v3573 = vsel %vm3528, %v3572, %v3571
      %v3574 = vrot.slane %v3481, 2
      %v3575 = vsel %vm3531, %v3574, %v3573
      %v3576 = vrot.slane %v3482, 1
      %v3577 = vsel %vm3534, %v3576, %v3575
      %v3578 = vrot.slane %v3484, 7
      %v3579 = vsel %vm3516, %v3578, %v3483
      %v3580 = vrot.slane %v3485, 6
      %v3581 = vsel %vm3519, %v3580, %v3579
      %v3582 = vrot.slane %v3486, 5
      %v3583 = vsel %vm3522, %v3582, %v3581
      %v3584 = vrot.slane %v3487, 4
      %v3585 = vsel %vm3525, %v3584, %v3583
      %v3586 = vrot.slane %v3488, 3
      %v3587 = vsel %vm3528, %v3586, %v3585
      %v3588 = vrot.slane %v3489, 2
      %v3589 = vsel %vm3531, %v3588, %v3587
      %v3590 = vrot.slane %v3490, 1
      %v3591 = vsel %vm3534, %v3590, %v3589
      %v3592 = vrot.slane %v3492, 7
      %v3593 = vsel %vm3516, %v3592, %v3491
      %v3594 = vrot.slane %v3493, 6
      %v3595 = vsel %vm3519, %v3594, %v3593
      %v3596 = vrot.slane %v3494, 5
      %v3597 = vsel %vm3522, %v3596, %v3595
      %v3598 = vrot.slane %v3495, 4
      %v3599 = vsel %vm3525, %v3598, %v3597
      %v3600 = vrot.slane %v3496, 3
      %v3601 = vsel %vm3528, %v3600, %v3599
      %v3602 = vrot.slane %v3497, 2
      %v3603 = vsel %vm3531, %v3602, %v3601
      %v3604 = vrot.slane %v3498, 1
      %v3605 = vsel %vm3534, %v3604, %v3603
      %v3606 = vrot.slane %v3500, 7
      %v3607 = vsel %vm3516, %v3606, %v3499
      %v3608 = vrot.slane %v3501, 6
      %v3609 = vsel %vm3519, %v3608, %v3607
      %v3610 = vrot.slane %v3502, 5
      %v3611 = vsel %vm3522, %v3610, %v3609
      %v3612 = vrot.slane %v3503, 4
      %v3613 = vsel %vm3525, %v3612, %v3611
      %v3614 = vrot.slane %v3504, 3
      %v3615 = vsel %vm3528, %v3614, %v3613
      %v3616 = vrot.slane %v3505, 2
      %v3617 = vsel %vm3531, %v3616, %v3615
      %v3618 = vrot.slane %v3506, 1
      %v3619 = vsel %vm3534, %v3618, %v3617
      %v3620 = vrot.slane %v3508, 7
      %v3621 = vsel %vm3516, %v3620, %v3507
      %v3622 = vrot.slane %v3509, 6
      %v3623 = vsel %vm3519, %v3622, %v3621
      %v3624 = vrot.slane %v3510, 5
      %v3625 = vsel %vm3522, %v3624, %v3623
      %v3626 = vrot.slane %v3511, 4
      %v3627 = vsel %vm3525, %v3626, %v3625
      %v3628 = vrot.slane %v3512, 3
      %v3629 = vsel %vm3528, %v3628, %v3627
      %v3630 = vrot.slane %v3513, 2
      %v3631 = vsel %vm3531, %v3630, %v3629
      %v3632 = vrot.slane %v3514, 1
      %v3633 = vsel %vm3534, %v3632, %v3631
      %v3634 = vpack.c.b16 %v3535, %v3535
      %v3635 = vpack.c.b16 %v3549, %v3549
      %v3636 = vpack.c.b16 %v3563, %v3563
      %v3637 = vpack.c.b16 %v3577, %v3577
      %v3638 = vpack.c.b16 %v3591, %v3591
      %v3639 = vpack.c.b16 %v3605, %v3605
      %v3640 = vpack.c.b16 %v3619, %v3619
      %v3641 = vpack.c.b16 %v3633, %v3633
      %3650 = vst [vmem:[%s121] sm:$0xf] %v3634
      %3651 = vst [vmem:[%s121 + $0x4] sm:$0xf] %v3635
      %3652 = vst [vmem:[%s121 + $0x8] sm:$0xf] %v3636
      %3653 = vst [vmem:[%s121 + $0xc] sm:$0xf] %v3637
      %3654 = vst [vmem:[%s121 + $0x10] sm:$0xf] %v3638
      %3655 = vst [vmem:[%s121 + $0x14] sm:$0xf] %v3639
      %3656 = vst [vmem:[%s121 + $0x18] sm:$0xf] %v3640
      %3657 = vst [vmem:[%s121 + $0x1c] sm:$0xf] %v3641
      %s3658 = smul.u32 8, %s12
      %p3659 = scmp.lt.s32.totalorder %s3658, 15
      %s3660 = scalar_select %p3659, %s3658, 15
      %s3661 = smul.addr %s3660, 4
      %s3662 = scalar_lea.vmem %s1, %s3661
      // Predicated region
      $region25: #{my_resnet_forward.23} parent=23 // pred_check
        %p3663 = pneg %p56
      $region26: #{my_resnet_forward.23} parent=23 // pred_check_branch
        %3665 = sbr.rel (%p3663) target = $region28
      $region27: #{my_resnet_forward.23} parent=23 // pred_region
        %s3666 = smul.u32 8, %s12
      $region28: #{my_resnet_forward.23} parent=23 // pred_fallthru
        _
    $region24: #{my_resnet_forward.23} parent=5 // pred_fallthru
      _
    %p3667 = scmp.le.s32.totalorder 2, %s7
    // Predicated region
    $region29: #{my_resnet_forward.23} parent=5 // pred_check
      %p3668 = pneg %p3667
    $region30: #{my_resnet_forward.23} parent=5 // pred_check_branch
      %3670 = sbr.rel (%p3668) target = $region32
    $region31: #{my_resnet_forward.23} parent=5 // pred_region
      %s3671 = ssub.s32 %s7, 2
      // Predicated region
      $region33: #{my_resnet_forward.23} parent=31 // pred_check
        %p3672 = pneg %p62
      $region34: #{my_resnet_forward.23} parent=31 // pred_check_branch
        %3674 = sbr.rel (%p3672) target = $region36
      $region35: #{my_resnet_forward.23} parent=31 // pred_region
        %s3675 = smul.u32 8, %s13
        %p3676 = scmp.lt.s32.totalorder %s3675, 15
        %s3677 = scalar_select %p3676, %s3675, 15
        %s3678 = smul.addr %s3677, 4
        %s3679 = scalar_lea.vmem %s1, %s3678
      $region36: #{my_resnet_forward.23} parent=31 // pred_fallthru
        _
    $region32: #{my_resnet_forward.23} parent=5 // pred_fallthru
      _
  $region6: #{my_resnet_forward.23} parent=0 // loop_footer
    %s11 = sadd.s32 1, %s7
  $region7: #{my_resnet_forward.23} parent=0 // loop_footer_branch
    %6 = sbr.rel target = $region3
  $region8: #{my_resnet_forward.23} parent=0 // loop_exit
    _

// kernel: my_resnet_forward.25
$region0: #{my_resnet_forward.25}
  #allocation0 [shape = 'u32[]', space=smem, size = 0x4, offset = 0x4, fixed_abs, tag = 'smem constant byte address 0x4 - core index']
  #allocation1 [shape = 'u32[72,128]{1,0:T(1,128)}', space=vmem, size = 0x9000, scoped, tag = 'internal scratch']
  %s0 = inlined_call_operand.vmem [shape: bf16[128,1152], index: 0, kind: input, shape index: {}]
  %s1 = inlined_call_operand.vmem [shape: bf16[1152,128], index: 1, kind: input, shape index: {}]
  %s2 = inlined_call_operand.vmem [shape: f32[1,128], index: 2, kind: input, shape index: {}]
  %s3 = inlined_call_operand.vmem [shape: bf16[128,128], index: 3, kind: input, shape index: {}]
  %s4 = inlined_call_operand.vmem [shape: bf16[128,128], index: 4, kind: output, shape index: {}]
  %s5 = sld [smem:[#allocation0]]
  $region49: #{my_resnet_forward.25} parent=0
    _
  %s7 = ssub.s32 1, %s5
  %s8 = scalar_select 0, %s7, %s5
  loop: start=0, step=1, limit=4
  $region2: #{my_resnet_forward.25} parent=0 // loop_pre_header
    _
  $region3: #{my_resnet_forward.25} parent=0 // loop_header
    %s10 = sphi 0, %s14
    %p11 = scmp.ge.s32.totalorder %s10, 4
    %s20 = sphi 0, %s22
    %s23 = sphi 0, %s20
    %s24 = sphi 0, %s23
    %s40 = sphi 0, %s24
    %s44 = sphi 0, %s44
    %s46 = sphi 0, %s44
    %s47 = sphi 0, %s46
    %s61 = sphi 0, %s47
    %s65 = sphi 0, %s65
    %s67 = sphi 0, %s65
    %s68 = sphi 0, %s67
    %s82 = sphi 0, %s68
    %s88 = sphi 0, %s90
    %s91 = sphi 0, %s88
    %s92 = sphi 0, %s91
    %s108 = sphi 0, %s92
    %s114 = sphi 0, %s116
    %s117 = sphi 0, %s114
    %s118 = sphi 0, %s117
    %s134 = sphi 0, %s118
  $region4: #{my_resnet_forward.25} parent=0 // loop_header_branch
    %13 = sbr.rel (%p11) target = $region8
  $region5: #{my_resnet_forward.25} parent=0 // loop_body
    %s15 = ssub.s32 %s10, 1
    %s16 = ssub.s32 %s10, 2
    %s17 = sadd.s32 %s10, 1
    %s18 = ssub.s32 %s10, %s17
    %p19 = scmp.eq.s32.totalorder %s18, 0
    %s21 = sadd.s32 %s20, 1
    %s22 = scalar_select %p19, %s20, %s21
    %p25 = pneg %p19
    %p26 = scmp.eq.s32.totalorder %s10, 1
    %p27 = por %p25, %p26
    %p28 = scmp.ne.s32.totalorder %s20, %s23
    %p29 = scmp.eq.s32.totalorder %s10, 0
    %p30 = por %p28, %p29
    %p31 = scmp.ne.s32.totalorder %s20, %s23
    %p32 = scmp.eq.s32.totalorder %s15, 1
    %p33 = por %p31, %p32
    %p34 = scmp.ne.s32.totalorder %s23, %s24
    %p35 = scmp.eq.s32.totalorder %s15, 0
    %p36 = por %p34, %p35
    %p37 = scmp.ne.s32.totalorder %s23, %s24
    %p38 = scmp.eq.s32.totalorder %s16, 1
    %p39 = por %p37, %p38
    %p41 = scmp.ne.s32.totalorder %s24, %s40
    %p42 = scmp.eq.s32.totalorder %s16, 0
    %p43 = por %p41, %p42
    %s45 = sadd.s32 %s44, 1
    %p48 = scmp.eq.s32.totalorder %s10, 1
    %p49 = scmp.ne.s32.totalorder %s44, %s46
    %p50 = scmp.eq.s32.totalorder %s10, 0
    %p51 = por %p49, %p50
    %p52 = scmp.ne.s32.totalorder %s44, %s46
    %p53 = scmp.eq.s32.totalorder %s15, 1
    %p54 = por %p52, %p53
    %p55 = scmp.ne.s32.totalorder %s46, %s47
    %p56 = scmp.eq.s32.totalorder %s15, 0
    %p57 = por %p55, %p56
    %p58 = scmp.ne.s32.totalorder %s46, %s47
    %p59 = scmp.eq.s32.totalorder %s16, 1
    %p60 = por %p58, %p59
    %p62 = scmp.ne.s32.totalorder %s47, %s61
    %p63 = scmp.eq.s32.totalorder %s16, 0
    %p64 = por %p62, %p63
    %s66 = sadd.s32 %s65, 1
    %p69 = scmp.eq.s32.totalorder %s10, 1
    %p70 = scmp.ne.s32.totalorder %s65, %s67
    %p71 = scmp.eq.s32.totalorder %s10, 0
    %p72 = por %p70, %p71
    %p73 = scmp.ne.s32.totalorder %s65, %s67
    %p74 = scmp.eq.s32.totalorder %s15, 1
    %p75 = por %p73, %p74
    %p76 = scmp.ne.s32.totalorder %s67, %s68
    %p77 = scmp.eq.s32.totalorder %s15, 0
    %p78 = por %p76, %p77
    %p79 = scmp.ne.s32.totalorder %s67, %s68
    %p80 = scmp.eq.s32.totalorder %s16, 1
    %p81 = por %p79, %p80
    %p83 = scmp.ne.s32.totalorder %s68, %s82
    %p84 = scmp.eq.s32.totalorder %s16, 0
    %p85 = por %p83, %p84
    %s86 = ssub.s32 %s10, %s17
    %p87 = scmp.eq.s32.totalorder %s86, 0
    %s89 = sadd.s32 %s88, 1
    %s90 = scalar_select %p87, %s88, %s89
    %p93 = pneg %p87
    %p94 = scmp.eq.s32.totalorder %s10, 1
    %p95 = por %p93, %p94
    %p96 = scmp.ne.s32.totalorder %s88, %s91
    %p97 = scmp.eq.s32.totalorder %s10, 0
    %p98 = por %p96, %p97
    %p99 = scmp.ne.s32.totalorder %s88, %s91
    %p100 = scmp.eq.s32.totalorder %s15, 1
    %p101 = por %p99, %p100
    %p102 = scmp.ne.s32.totalorder %s91, %s92
    %p103 = scmp.eq.s32.totalorder %s15, 0
    %p104 = por %p102, %p103
    %p105 = scmp.ne.s32.totalorder %s91, %s92
    %p106 = scmp.eq.s32.totalorder %s16, 1
    %p107 = por %p105, %p106
    %p109 = scmp.ne.s32.totalorder %s92, %s108
    %p110 = scmp.eq.s32.totalorder %s16, 0
    %p111 = por %p109, %p110
    %s112 = ssub.s32 %s10, %s17
    %p113 = scmp.eq.s32.totalorder %s112, 0
    %s115 = sadd.s32 %s114, 1
    %s116 = scalar_select %p113, %s114, %s115
    %p119 = pneg %p113
    %p120 = scmp.eq.s32.totalorder %s10, 1
    %p121 = por %p119, %p120
    %p122 = scmp.ne.s32.totalorder %s114, %s117
    %p123 = scmp.eq.s32.totalorder %s10, 0
    %p124 = por %p122, %p123
    %p125 = scmp.ne.s32.totalorder %s114, %s117
    %p126 = scmp.eq.s32.totalorder %s15, 1
    %p127 = por %p125, %p126
    %p128 = scmp.ne.s32.totalorder %s117, %s118
    %p129 = scmp.eq.s32.totalorder %s15, 0
    %p130 = por %p128, %p129
    %p131 = scmp.ne.s32.totalorder %s117, %s118
    %p132 = scmp.eq.s32.totalorder %s16, 1
    %p133 = por %p131, %p132
    %p135 = scmp.ne.s32.totalorder %s118, %s134
    %p136 = scmp.eq.s32.totalorder %s16, 0
    %p137 = por %p135, %p136
    %p138 = scmp.le.s32.totalorder 1, %s10
    %p139 = scmp.lt.s32.totalorder %s10, 3
    %p140 = pnand %p138, %p139
    %p141 = pneg %p140
    // Predicated region
    $region9: #{my_resnet_forward.25} parent=5 // pred_check
      _
    $region10: #{my_resnet_forward.25} parent=5 // pred_check_branch
      %143 = sbr.rel (%p140) target = $region12
    $region11: #{my_resnet_forward.25} parent=5 // pred_region
      %s144 = ssub.s32 %s10, 1
      // Predicated region
      $region13: #{my_resnet_forward.25} parent=11 // pred_check
        %p145 = pneg %p57
      $region14: #{my_resnet_forward.25} parent=11 // pred_check_branch
        %147 = sbr.rel (%p145) target = $region16
      $region15: #{my_resnet_forward.25} parent=11 // pred_region
        _
      $region16: #{my_resnet_forward.25} parent=11 // pred_fallthru
        _
      // Predicated region
      $region17: #{my_resnet_forward.25} parent=11 // pred_check
        %p148 = pneg %p78
      $region18: #{my_resnet_forward.25} parent=11 // pred_check_branch
        %150 = sbr.rel (%p148) target = $region20
      $region19: #{my_resnet_forward.25} parent=11 // pred_region
        _
      $region20: #{my_resnet_forward.25} parent=11 // pred_fallthru
        _
    $region12: #{my_resnet_forward.25} parent=5 // pred_fallthru
      _
    %p151 = scmp.lt.s32.totalorder %s10, 2
    // Predicated region
    $region21: #{my_resnet_forward.25} parent=5 // pred_check
      %p152 = pneg %p151
    $region22: #{my_resnet_forward.25} parent=5 // pred_check_branch
      %154 = sbr.rel (%p152) target = $region24
    $region23: #{my_resnet_forward.25} parent=5 // pred_region
      // Predicated region
      $region25: #{my_resnet_forward.25} parent=23 // pred_check
        %p155 = pneg %p30
      $region26: #{my_resnet_forward.25} parent=23 // pred_check_branch
        %157 = sbr.rel (%p155) target = $region28
      $region27: #{my_resnet_forward.25} parent=23 // pred_region
        %s158 = smul.u32 8, %s10
        %p159 = scmp.lt.s32.totalorder %s158, 15
        %s160 = scalar_select %p159, %s158, 15
        %s161 = smul.addr %s160, 9
        %s162 = smul.addr %s161, 4
        %s163 = scalar_lea.vmem %s0, %s162
        %s164 = smul.u32 8, %s10
      $region28: #{my_resnet_forward.25} parent=23 // pred_fallthru
        _
      // Predicated region
      $region29: #{my_resnet_forward.25} parent=23 // pred_check
        %p165 = pneg %p98
      $region30: #{my_resnet_forward.25} parent=23 // pred_check_branch
        %167 = sbr.rel (%p165) target = $region32
      $region31: #{my_resnet_forward.25} parent=23 // pred_region
        %s168 = smul.u32 8, %s10
        %p169 = scmp.lt.s32.totalorder %s168, 15
        %s170 = scalar_select %p169, %s168, 15
        %s171 = smul.addr %s170, 4
        %s172 = scalar_lea.vmem %s3, %s171
        %s173 = smul.u32 8, %s10
      $region32: #{my_resnet_forward.25} parent=23 // pred_fallthru
        _
    $region24: #{my_resnet_forward.25} parent=5 // pred_fallthru
      _
    %p174 = scmp.le.s32.totalorder 1, %s10
    %p175 = scmp.lt.s32.totalorder %s10, 3
    %p176 = pnand %p174, %p175
    %p177 = pneg %p176
    // Predicated region
    $region33: #{my_resnet_forward.25} parent=5 // pred_check
      _
    $region34: #{my_resnet_forward.25} parent=5 // pred_check_branch
      %179 = sbr.rel (%p176) target = $region36
    $region35: #{my_resnet_forward.25} parent=5 // pred_region
      %s180 = ssub.s32 %s10, 1
      %s181 = smul.u32 8, %s15
      %p182 = scmp.lt.s32.totalorder %s181, 15
      %s183 = scalar_select %p182, %s181, 15
      %s184 = smul.addr %s183, 9
      %s185 = smul.addr %s184, 4
      %s186 = scalar_lea.vmem %s0, %s185
      %p187 = pneg %p36
      %p188 = pneg %p33
      %p189 = pneg %p57
      %p190 = pneg %p54
      %p191 = pneg %p78
      %p192 = pneg %p75
      %s193 = smul.u32 8, %s15
      %p194 = scmp.lt.s32.totalorder %s193, 15
      %s195 = scalar_select %p194, %s193, 15
      %s196 = smul.addr %s195, 4
      %s197 = scalar_lea.vmem %s3, %s196
      %p198 = pneg %p104
      %p199 = pneg %p101
      %p200 = pneg %p130
      %p201 = pneg %p127
      %s202 = smul.u32 8, %s15
      %p203 = scmp.lt.s32.totalorder %s202, 15
      %s204 = scalar_select %p203, %s202, 15
      %s205 = smul.addr %s204, 4
      %s206 = scalar_lea.vmem %s4, %s205
      %s207 = smul.u32 8, %s15
      %p208 = scmp.lt.s32.totalorder %s207, 15
      %s209 = scalar_select %p208, %s207, 15
      %s210 = smul.addr %s209, 9
      %s211 = smul.addr %s210, 4
      %s212 = scalar_lea.vmem %s0, %s211
      %s213 = smul.u32 8, %s15
      %s214 = smul.u32 8, %s15
      %p215 = scmp.lt.s32.totalorder %s214, 15
      %s216 = scalar_select %p215, %s214, 15
      %s217 = smul.addr %s216, 4
      %s218 = scalar_lea.vmem %s3, %s217
      %s219 = smul.u32 8, %s15
      %s220 = smul.u32 8, %s15
      %p221 = scmp.lt.s32.totalorder %s220, 15
      %s222 = scalar_select %p221, %s220, 15
      %s223 = smul.addr %s222, 4
      %s224 = scalar_lea.vmem %s4, %s223
      %s225 = smul.u32 8, %s15
      %v226 = vld [vmem:[%s212] sm:$0xff]
      %v227 = vld [vmem:[%s212 + $0x8] sm:$0xff]
      %v228 = vld [vmem:[%s212 + $0x10] sm:$0xff]
      %v229 = vld [vmem:[%s212 + $0x18] sm:$0xff]
      %v230 = vld [vmem:[%s212 + $0x20] sm:$0xf]
      %v231 = vld [vmem:[%s212 + $0x24] sm:$0xff]
      %v232 = vld [vmem:[%s212 + $0x2c] sm:$0xff]
      %v233 = vld [vmem:[%s212 + $0x34] sm:$0xff]
      %v234 = vld [vmem:[%s212 + $0x3c] sm:$0xff]
      %v235 = vld [vmem:[%s212 + $0x44] sm:$0xf]
      %v236 = vld [vmem:[%s212 + $0x48] sm:$0xff]
      %v237 = vld [vmem:[%s212 + $0x50] sm:$0xff]
      %v238 = vld [vmem:[%s212 + $0x58] sm:$0xff]
      %v239 = vld [vmem:[%s212 + $0x60] sm:$0xff]
      %v240 = vld [vmem:[%s212 + $0x68] sm:$0xf]
      %v241 = vld [vmem:[%s212 + $0x6c] sm:$0xff]
      %v242 = vld [vmem:[%s212 + $0x74] sm:$0xff]
      %v243 = vld [vmem:[%s212 + $0x7c] sm:$0xff]
      %v244 = vld [vmem:[%s212 + $0x84] sm:$0xff]
      %v245 = vld [vmem:[%s212 + $0x8c] sm:$0xf]
      %v246 = vld [vmem:[%s212 + $0x90] sm:$0xff]
      %v247 = vld [vmem:[%s212 + $0x98] sm:$0xff]
      %v248 = vld [vmem:[%s212 + $0xa0] sm:$0xff]
      %v249 = vld [vmem:[%s212 + $0xa8] sm:$0xff]
      %v250 = vld [vmem:[%s212 + $0xb0] sm:$0xf]
      %v251 = vld [vmem:[%s212 + $0xb4] sm:$0xff]
      %v252 = vld [vmem:[%s212 + $0xbc] sm:$0xff]
      %v253 = vld [vmem:[%s212 + $0xc4] sm:$0xff]
      %v254 = vld [vmem:[%s212 + $0xcc] sm:$0xff]
      %v255 = vld [vmem:[%s212 + $0xd4] sm:$0xf]
      %v256 = vld [vmem:[%s212 + $0xd8] sm:$0xff]
      %v257 = vld [vmem:[%s212 + $0xe0] sm:$0xff]
      %v258 = vld [vmem:[%s212 + $0xe8] sm:$0xff]
      %v259 = vld [vmem:[%s212 + $0xf0] sm:$0xff]
      %v260 = vld [vmem:[%s212 + $0xf8] sm:$0xf]
      %v261 = vld [vmem:[%s212 + $0xfc] sm:$0xff]
      %v262 = vld [vmem:[%s212 + $0x104] sm:$0xff]
      %v263 = vld [vmem:[%s212 + $0x10c] sm:$0xff]
      %v264 = vld [vmem:[%s212 + $0x114] sm:$0xff]
      %v265 = vld [vmem:[%s212 + $0x11c] sm:$0xf]
      %v266 = vld [vmem:[%s1] sm:$0xf]
      %v267 = vld [vmem:[%s1 + $0x4] sm:$0xf]
      %v268 = vld [vmem:[%s1 + $0x8] sm:$0xf]
      %v269 = vld [vmem:[%s1 + $0xc] sm:$0xf]
      %v270 = vld [vmem:[%s1 + $0x10] sm:$0xf]
      %v271 = vld [vmem:[%s1 + $0x14] sm:$0xf]
      %v272 = vld [vmem:[%s1 + $0x18] sm:$0xf]
      %v273 = vld [vmem:[%s1 + $0x1c] sm:$0xf]
      %v274 = vld [vmem:[%s1 + $0x20] sm:$0xf]
      %v275 = vld [vmem:[%s1 + $0x24] sm:$0xf]
      %v276 = vld [vmem:[%s1 + $0x28] sm:$0xf]
      %v277 = vld [vmem:[%s1 + $0x2c] sm:$0xf]
      %v278 = vld [vmem:[%s1 + $0x30] sm:$0xf]
      %v279 = vld [vmem:[%s1 + $0x34] sm:$0xf]
      %v280 = vld [vmem:[%s1 + $0x38] sm:$0xf]
      %v281 = vld [vmem:[%s1 + $0x3c] sm:$0xf]
      %v282 = vld [vmem:[%s1 + $0x40] sm:$0xf]
      %v283 = vld [vmem:[%s1 + $0x44] sm:$0xf]
      %v284 = vld [vmem:[%s1 + $0x48] sm:$0xf]
      %v285 = vld [vmem:[%s1 + $0x4c] sm:$0xf]
      %v286 = vld [vmem:[%s1 + $0x50] sm:$0xf]
      %v287 = vld [vmem:[%s1 + $0x54] sm:$0xf]
      %v288 = vld [vmem:[%s1 + $0x58] sm:$0xf]
      %v289 = vld [vmem:[%s1 + $0x5c] sm:$0xf]
      %v290 = vld [vmem:[%s1 + $0x60] sm:$0xf]
      %v291 = vld [vmem:[%s1 + $0x64] sm:$0xf]
      %v292 = vld [vmem:[%s1 + $0x68] sm:$0xf]
      %v293 = vld [vmem:[%s1 + $0x6c] sm:$0xf]
      %v294 = vld [vmem:[%s1 + $0x70] sm:$0xf]
      %v295 = vld [vmem:[%s1 + $0x74] sm:$0xf]
      %v296 = vld [vmem:[%s1 + $0x78] sm:$0xf]
      %v297 = vld [vmem:[%s1 + $0x7c] sm:$0xf]
      %v298 = vld [vmem:[%s1 + $0x80] sm:$0xf]
      %v299 = vld [vmem:[%s1 + $0x84] sm:$0xf]
      %v300 = vld [vmem:[%s1 + $0x88] sm:$0xf]
      %v301 = vld [vmem:[%s1 + $0x8c] sm:$0xf]
      %v302 = vld [vmem:[%s1 + $0x90] sm:$0xf]
      %v303 = vld [vmem:[%s1 + $0x94] sm:$0xf]
      %v304 = vld [vmem:[%s1 + $0x98] sm:$0xf]
      %v305 = vld [vmem:[%s1 + $0x9c] sm:$0xf]
      %v306 = vld [vmem:[%s1 + $0xa0] sm:$0xf]
      %v307 = vld [vmem:[%s1 + $0xa4] sm:$0xf]
      %v308 = vld [vmem:[%s1 + $0xa8] sm:$0xf]
      %v309 = vld [vmem:[%s1 + $0xac] sm:$0xf]
      %v310 = vld [vmem:[%s1 + $0xb0] sm:$0xf]
      %v311 = vld [vmem:[%s1 + $0xb4] sm:$0xf]
      %v312 = vld [vmem:[%s1 + $0xb8] sm:$0xf]
      %v313 = vld [vmem:[%s1 + $0xbc] sm:$0xf]
      %v314 = vld [vmem:[%s1 + $0xc0] sm:$0xf]
      %v315 = vld [vmem:[%s1 + $0xc4] sm:$0xf]
      %v316 = vld [vmem:[%s1 + $0xc8] sm:$0xf]
      %v317 = vld [vmem:[%s1 + $0xcc] sm:$0xf]
      %v318 = vld [vmem:[%s1 + $0xd0] sm:$0xf]
      %v319 = vld [vmem:[%s1 + $0xd4] sm:$0xf]
      %v320 = vld [vmem:[%s1 + $0xd8] sm:$0xf]
      %v321 = vld [vmem:[%s1 + $0xdc] sm:$0xf]
      %v322 = vld [vmem:[%s1 + $0xe0] sm:$0xf]
      %v323 = vld [vmem:[%s1 + $0xe4] sm:$0xf]
      %v324 = vld [vmem:[%s1 + $0xe8] sm:$0xf]
      %v325 = vld [vmem:[%s1 + $0xec] sm:$0xf]
      %v326 = vld [vmem:[%s1 + $0xf0] sm:$0xf]
      %v327 = vld [vmem:[%s1 + $0xf4] sm:$0xf]
      %v328 = vld [vmem:[%s1 + $0xf8] sm:$0xf]
      %v329 = vld [vmem:[%s1 + $0xfc] sm:$0xf]
      %v330 = vld [vmem:[%s1 + $0x100] sm:$0xf]
      %v331 = vld [vmem:[%s1 + $0x104] sm:$0xf]
      %v332 = vld [vmem:[%s1 + $0x108] sm:$0xf]
      %v333 = vld [vmem:[%s1 + $0x10c] sm:$0xf]
      %v334 = vld [vmem:[%s1 + $0x110] sm:$0xf]
      %v335 = vld [vmem:[%s1 + $0x114] sm:$0xf]
      %v336 = vld [vmem:[%s1 + $0x118] sm:$0xf]
      %v337 = vld [vmem:[%s1 + $0x11c] sm:$0xf]
      %v338 = vld [vmem:[%s1 + $0x120] sm:$0xf]
      %v339 = vld [vmem:[%s1 + $0x124] sm:$0xf]
      %v340 = vld [vmem:[%s1 + $0x128] sm:$0xf]
      %v341 = vld [vmem:[%s1 + $0x12c] sm:$0xf]
      %v342 = vld [vmem:[%s1 + $0x130] sm:$0xf]
      %v343 = vld [vmem:[%s1 + $0x134] sm:$0xf]
      %v344 = vld [vmem:[%s1 + $0x138] sm:$0xf]
      %v345 = vld [vmem:[%s1 + $0x13c] sm:$0xf]
      %v346 = vld [vmem:[%s1 + $0x140] sm:$0xf]
      %v347 = vld [vmem:[%s1 + $0x144] sm:$0xf]
      %v348 = vld [vmem:[%s1 + $0x148] sm:$0xf]
      %v349 = vld [vmem:[%s1 + $0x14c] sm:$0xf]
      %v350 = vld [vmem:[%s1 + $0x150] sm:$0xf]
      %v351 = vld [vmem:[%s1 + $0x154] sm:$0xf]
      %v352 = vld [vmem:[%s1 + $0x158] sm:$0xf]
      %v353 = vld [vmem:[%s1 + $0x15c] sm:$0xf]
      %v354 = vld [vmem:[%s1 + $0x160] sm:$0xf]
      %v355 = vld [vmem:[%s1 + $0x164] sm:$0xf]
      %v356 = vld [vmem:[%s1 + $0x168] sm:$0xf]
      %v357 = vld [vmem:[%s1 + $0x16c] sm:$0xf]
      %v358 = vld [vmem:[%s1 + $0x170] sm:$0xf]
      %v359 = vld [vmem:[%s1 + $0x174] sm:$0xf]
      %v360 = vld [vmem:[%s1 + $0x178] sm:$0xf]
      %v361 = vld [vmem:[%s1 + $0x17c] sm:$0xf]
      %v362 = vld [vmem:[%s1 + $0x180] sm:$0xf]
      %v363 = vld [vmem:[%s1 + $0x184] sm:$0xf]
      %v364 = vld [vmem:[%s1 + $0x188] sm:$0xf]
      %v365 = vld [vmem:[%s1 + $0x18c] sm:$0xf]
      %v366 = vld [vmem:[%s1 + $0x190] sm:$0xf]
      %v367 = vld [vmem:[%s1 + $0x194] sm:$0xf]
      %v368 = vld [vmem:[%s1 + $0x198] sm:$0xf]
      %v369 = vld [vmem:[%s1 + $0x19c] sm:$0xf]
      %v370 = vld [vmem:[%s1 + $0x1a0] sm:$0xf]
      %v371 = vld [vmem:[%s1 + $0x1a4] sm:$0xf]
      %v372 = vld [vmem:[%s1 + $0x1a8] sm:$0xf]
      %v373 = vld [vmem:[%s1 + $0x1ac] sm:$0xf]
      %v374 = vld [vmem:[%s1 + $0x1b0] sm:$0xf]
      %v375 = vld [vmem:[%s1 + $0x1b4] sm:$0xf]
      %v376 = vld [vmem:[%s1 + $0x1b8] sm:$0xf]
      %v377 = vld [vmem:[%s1 + $0x1bc] sm:$0xf]
      %v378 = vld [vmem:[%s1 + $0x1c0] sm:$0xf]
      %v379 = vld [vmem:[%s1 + $0x1c4] sm:$0xf]
      %v380 = vld [vmem:[%s1 + $0x1c8] sm:$0xf]
      %v381 = vld [vmem:[%s1 + $0x1cc] sm:$0xf]
      %v382 = vld [vmem:[%s1 + $0x1d0] sm:$0xf]
      %v383 = vld [vmem:[%s1 + $0x1d4] sm:$0xf]
      %v384 = vld [vmem:[%s1 + $0x1d8] sm:$0xf]
      %v385 = vld [vmem:[%s1 + $0x1dc] sm:$0xf]
      %v386 = vld [vmem:[%s1 + $0x1e0] sm:$0xf]
      %v387 = vld [vmem:[%s1 + $0x1e4] sm:$0xf]
      %v388 = vld [vmem:[%s1 + $0x1e8] sm:$0xf]
      %v389 = vld [vmem:[%s1 + $0x1ec] sm:$0xf]
      %v390 = vld [vmem:[%s1 + $0x1f0] sm:$0xf]
      %v391 = vld [vmem:[%s1 + $0x1f4] sm:$0xf]
      %v392 = vld [vmem:[%s1 + $0x1f8] sm:$0xf]
      %v393 = vld [vmem:[%s1 + $0x1fc] sm:$0xf]
      %v394 = vld [vmem:[%s1 + $0x200] sm:$0xf]
      %v395 = vld [vmem:[%s1 + $0x204] sm:$0xf]
      %v396 = vld [vmem:[%s1 + $0x208] sm:$0xf]
      %v397 = vld [vmem:[%s1 + $0x20c] sm:$0xf]
      %v398 = vld [vmem:[%s1 + $0x210] sm:$0xf]
      %v399 = vld [vmem:[%s1 + $0x214] sm:$0xf]
      %v400 = vld [vmem:[%s1 + $0x218] sm:$0xf]
      %v401 = vld [vmem:[%s1 + $0x21c] sm:$0xf]
      %v402 = vld [vmem:[%s1 + $0x220] sm:$0xf]
      %v403 = vld [vmem:[%s1 + $0x224] sm:$0xf]
      %v404 = vld [vmem:[%s1 + $0x228] sm:$0xf]
      %v405 = vld [vmem:[%s1 + $0x22c] sm:$0xf]
      %v406 = vld [vmem:[%s1 + $0x230] sm:$0xf]
      %v407 = vld [vmem:[%s1 + $0x234] sm:$0xf]
      %v408 = vld [vmem:[%s1 + $0x238] sm:$0xf]
      %v409 = vld [vmem:[%s1 + $0x23c] sm:$0xf]
      %v410 = vld [vmem:[%s2] sm:$0x1]
      %v412 = vperm.slane %v410, 0
      %v454 = vunpack.c.l.b16 %v226
      %v455 = vunpack.c.h.b16 %v226
      %v456 = vunpack.c.l.b16 %v227
      %v457 = vunpack.c.h.b16 %v227
      %v458 = vunpack.c.l.b16 %v228
      %v459 = vunpack.c.h.b16 %v228
      %v460 = vunpack.c.l.b16 %v229
      %v461 = vunpack.c.h.b16 %v229
      %v462 = vunpack.c.l.b16 %v230
      %v463 = vunpack.c.l.b16 %v231
      %v464 = vunpack.c.h.b16 %v231
      %v465 = vunpack.c.l.b16 %v232
      %v466 = vunpack.c.h.b16 %v232
      %v467 = vunpack.c.l.b16 %v233
      %v468 = vunpack.c.h.b16 %v233
      %v469 = vunpack.c.l.b16 %v234
      %v470 = vunpack.c.h.b16 %v234
      %v471 = vunpack.c.l.b16 %v235
      %v472 = vunpack.c.l.b16 %v236
      %v473 = vunpack.c.h.b16 %v236
      %v474 = vunpack.c.l.b16 %v237
      %v475 = vunpack.c.h.b16 %v237
      %v476 = vunpack.c.l.b16 %v238
      %v477 = vunpack.c.h.b16 %v238
      %v478 = vunpack.c.l.b16 %v239
      %v479 = vunpack.c.h.b16 %v239
      %v480 = vunpack.c.l.b16 %v240
      %v481 = vunpack.c.l.b16 %v241
      %v482 = vunpack.c.h.b16 %v241
      %v483 = vunpack.c.l.b16 %v242
      %v484 = vunpack.c.h.b16 %v242
      %v485 = vunpack.c.l.b16 %v243
      %v486 = vunpack.c.h.b16 %v243
      %v487 = vunpack.c.l.b16 %v244
      %v488 = vunpack.c.h.b16 %v244
      %v489 = vunpack.c.l.b16 %v245
      %v490 = vunpack.c.l.b16 %v246
      %v491 = vunpack.c.h.b16 %v246
      %v492 = vunpack.c.l.b16 %v247
      %v493 = vunpack.c.h.b16 %v247
      %v494 = vunpack.c.l.b16 %v248
      %v495 = vunpack.c.h.b16 %v248
      %v496 = vunpack.c.l.b16 %v249
      %v497 = vunpack.c.h.b16 %v249
      %v498 = vunpack.c.l.b16 %v250
      %v499 = vunpack.c.l.b16 %v251
      %v500 = vunpack.c.h.b16 %v251
      %v501 = vunpack.c.l.b16 %v252
      %v502 = vunpack.c.h.b16 %v252
      %v503 = vunpack.c.l.b16 %v253
      %v504 = vunpack.c.h.b16 %v253
      %v505 = vunpack.c.l.b16 %v254
      %v506 = vunpack.c.h.b16 %v254
      %v507 = vunpack.c.l.b16 %v255
      %v508 = vunpack.c.l.b16 %v256
      %v509 = vunpack.c.h.b16 %v256
      %v510 = vunpack.c.l.b16 %v257
      %v511 = vunpack.c.h.b16 %v257
      %v512 = vunpack.c.l.b16 %v258
      %v513 = vunpack.c.h.b16 %v258
      %v514 = vunpack.c.l.b16 %v259
      %v515 = vunpack.c.h.b16 %v259
      %v516 = vunpack.c.l.b16 %v260
      %v517 = vunpack.c.l.b16 %v261
      %v518 = vunpack.c.h.b16 %v261
      %v519 = vunpack.c.l.b16 %v262
      %v520 = vunpack.c.h.b16 %v262
      %v521 = vunpack.c.l.b16 %v263
      %v522 = vunpack.c.h.b16 %v263
      %v523 = vunpack.c.l.b16 %v264
      %v524 = vunpack.c.h.b16 %v264
      %v525 = vunpack.c.l.b16 %v265
      %v526 = vpack.c.b16 %v463, %v454
      %v527 = vpack.c.b16 %v464, %v455
      %v528 = vpack.c.b16 %v465, %v456
      %v529 = vpack.c.b16 %v466, %v457
      %v530 = vpack.c.b16 %v467, %v458
      %v531 = vpack.c.b16 %v468, %v459
      %v532 = vpack.c.b16 %v469, %v460
      %v533 = vpack.c.b16 %v470, %v461
      %v534 = vpack.c.b16 %v471, %v462
      %v535 = vpack.c.b16 %v481, %v472
      %v536 = vpack.c.b16 %v482, %v473
      %v537 = vpack.c.b16 %v483, %v474
      %v538 = vpack.c.b16 %v484, %v475
      %v539 = vpack.c.b16 %v485, %v476
      %v540 = vpack.c.b16 %v486, %v477
      %v541 = vpack.c.b16 %v487, %v478
      %v542 = vpack.c.b16 %v488, %v479
      %v543 = vpack.c.b16 %v489, %v480
      %v544 = vpack.c.b16 %v499, %v490
      %v545 = vpack.c.b16 %v500, %v491
      %v546 = vpack.c.b16 %v501, %v492
      %v547 = vpack.c.b16 %v502, %v493
      %v548 = vpack.c.b16 %v503, %v494
      %v549 = vpack.c.b16 %v504, %v495
      %v550 = vpack.c.b16 %v505, %v496
      %v551 = vpack.c.b16 %v506, %v497
      %v552 = vpack.c.b16 %v507, %v498
      %v553 = vpack.c.b16 %v517, %v508
      %v554 = vpack.c.b16 %v518, %v509
      %v555 = vpack.c.b16 %v519, %v510
      %v556 = vpack.c.b16 %v520, %v511
      %v557 = vpack.c.b16 %v521, %v512
      %v558 = vpack.c.b16 %v522, %v513
      %v559 = vpack.c.b16 %v523, %v514
      %v560 = vpack.c.b16 %v524, %v515
      %v561 = vpack.c.b16 %v525, %v516
      %v742 = vunpack.c.l.b16 %v266
      %v743 = vunpack.c.l.b16 %v267
      %v744 = vunpack.c.l.b16 %v268
      %v745 = vunpack.c.l.b16 %v269
      %v746 = vunpack.c.l.b16 %v270
      %v747 = vunpack.c.l.b16 %v271
      %v748 = vunpack.c.l.b16 %v272
      %v749 = vunpack.c.l.b16 %v273
      %v750 = vunpack.c.l.b16 %v274
      %v751 = vunpack.c.l.b16 %v275
      %v752 = vunpack.c.l.b16 %v276
      %v753 = vunpack.c.l.b16 %v277
      %v754 = vunpack.c.l.b16 %v278
      %v755 = vunpack.c.l.b16 %v279
      %v756 = vunpack.c.l.b16 %v280
      %v757 = vunpack.c.l.b16 %v281
      %v758 = vunpack.c.l.b16 %v282
      %v759 = vunpack.c.l.b16 %v283
      %v760 = vunpack.c.l.b16 %v284
      %v761 = vunpack.c.l.b16 %v285
      %v762 = vunpack.c.l.b16 %v286
      %v763 = vunpack.c.l.b16 %v287
      %v764 = vunpack.c.l.b16 %v288
      %v765 = vunpack.c.l.b16 %v289
      %v766 = vunpack.c.l.b16 %v290
      %v767 = vunpack.c.l.b16 %v291
      %v768 = vunpack.c.l.b16 %v292
      %v769 = vunpack.c.l.b16 %v293
      %v770 = vunpack.c.l.b16 %v294
      %v771 = vunpack.c.l.b16 %v295
      %v772 = vunpack.c.l.b16 %v296
      %v773 = vunpack.c.l.b16 %v297
      %v774 = vunpack.c.l.b16 %v298
      %v775 = vunpack.c.l.b16 %v299
      %v776 = vunpack.c.l.b16 %v300
      %v777 = vunpack.c.l.b16 %v301
      %v778 = vunpack.c.l.b16 %v302
      %v779 = vunpack.c.l.b16 %v303
      %v780 = vunpack.c.l.b16 %v304
      %v781 = vunpack.c.l.b16 %v305
      %v782 = vunpack.c.l.b16 %v306
      %v783 = vunpack.c.l.b16 %v307
      %v784 = vunpack.c.l.b16 %v308
      %v785 = vunpack.c.l.b16 %v309
      %v786 = vunpack.c.l.b16 %v310
      %v787 = vunpack.c.l.b16 %v311
      %v788 = vunpack.c.l.b16 %v312
      %v789 = vunpack.c.l.b16 %v313
      %v790 = vunpack.c.l.b16 %v314
      %v791 = vunpack.c.l.b16 %v315
      %v792 = vunpack.c.l.b16 %v316
      %v793 = vunpack.c.l.b16 %v317
      %v794 = vunpack.c.l.b16 %v318
      %v795 = vunpack.c.l.b16 %v319
      %v796 = vunpack.c.l.b16 %v320
      %v797 = vunpack.c.l.b16 %v321
      %v798 = vunpack.c.l.b16 %v322
      %v799 = vunpack.c.l.b16 %v323
      %v800 = vunpack.c.l.b16 %v324
      %v801 = vunpack.c.l.b16 %v325
      %v802 = vunpack.c.l.b16 %v326
      %v803 = vunpack.c.l.b16 %v327
      %v804 = vunpack.c.l.b16 %v328
      %v805 = vunpack.c.l.b16 %v329
      %v806 = vunpack.c.l.b16 %v330
      %v807 = vunpack.c.l.b16 %v331
      %v808 = vunpack.c.l.b16 %v332
      %v809 = vunpack.c.l.b16 %v333
      %v810 = vunpack.c.l.b16 %v334
      %v811 = vunpack.c.l.b16 %v335
      %v812 = vunpack.c.l.b16 %v336
      %v813 = vunpack.c.l.b16 %v337
      %v814 = vunpack.c.l.b16 %v338
      %v815 = vunpack.c.l.b16 %v339
      %v816 = vunpack.c.l.b16 %v340
      %v817 = vunpack.c.l.b16 %v341
      %v818 = vunpack.c.l.b16 %v342
      %v819 = vunpack.c.l.b16 %v343
      %v820 = vunpack.c.l.b16 %v344
      %v821 = vunpack.c.l.b16 %v345
      %v822 = vunpack.c.l.b16 %v346
      %v823 = vunpack.c.l.b16 %v347
      %v824 = vunpack.c.l.b16 %v348
      %v825 = vunpack.c.l.b16 %v349
      %v826 = vunpack.c.l.b16 %v350
      %v827 = vunpack.c.l.b16 %v351
      %v828 = vunpack.c.l.b16 %v352
      %v829 = vunpack.c.l.b16 %v353
      %v830 = vunpack.c.l.b16 %v354
      %v831 = vunpack.c.l.b16 %v355
      %v832 = vunpack.c.l.b16 %v356
      %v833 = vunpack.c.l.b16 %v357
      %v834 = vunpack.c.l.b16 %v358
      %v835 = vunpack.c.l.b16 %v359
      %v836 = vunpack.c.l.b16 %v360
      %v837 = vunpack.c.l.b16 %v361
      %v838 = vunpack.c.l.b16 %v362
      %v839 = vunpack.c.l.b16 %v363
      %v840 = vunpack.c.l.b16 %v364
      %v841 = vunpack.c.l.b16 %v365
      %v842 = vunpack.c.l.b16 %v366
      %v843 = vunpack.c.l.b16 %v367
      %v844 = vunpack.c.l.b16 %v368
      %v845 = vunpack.c.l.b16 %v369
      %v846 = vunpack.c.l.b16 %v370
      %v847 = vunpack.c.l.b16 %v371
      %v848 = vunpack.c.l.b16 %v372
      %v849 = vunpack.c.l.b16 %v373
      %v850 = vunpack.c.l.b16 %v374
      %v851 = vunpack.c.l.b16 %v375
      %v852 = vunpack.c.l.b16 %v376
      %v853 = vunpack.c.l.b16 %v377
      %v854 = vunpack.c.l.b16 %v378
      %v855 = vunpack.c.l.b16 %v379
      %v856 = vunpack.c.l.b16 %v380
      %v857 = vunpack.c.l.b16 %v381
      %v858 = vunpack.c.l.b16 %v382
      %v859 = vunpack.c.l.b16 %v383
      %v860 = vunpack.c.l.b16 %v384
      %v861 = vunpack.c.l.b16 %v385
      %v862 = vunpack.c.l.b16 %v386
      %v863 = vunpack.c.l.b16 %v387
      %v864 = vunpack.c.l.b16 %v388
      %v865 = vunpack.c.l.b16 %v389
      %v866 = vunpack.c.l.b16 %v390
      %v867 = vunpack.c.l.b16 %v391
      %v868 = vunpack.c.l.b16 %v392
      %v869 = vunpack.c.l.b16 %v393
      %v870 = vunpack.c.l.b16 %v394
      %v871 = vunpack.c.l.b16 %v395
      %v872 = vunpack.c.l.b16 %v396
      %v873 = vunpack.c.l.b16 %v397
      %v874 = vunpack.c.l.b16 %v398
      %v875 = vunpack.c.l.b16 %v399
      %v876 = vunpack.c.l.b16 %v400
      %v877 = vunpack.c.l.b16 %v401
      %v878 = vunpack.c.l.b16 %v402
      %v879 = vunpack.c.l.b16 %v403
      %v880 = vunpack.c.l.b16 %v404
      %v881 = vunpack.c.l.b16 %v405
      %v882 = vunpack.c.l.b16 %v406
      %v883 = vunpack.c.l.b16 %v407
      %v884 = vunpack.c.l.b16 %v408
      %v885 = vunpack.c.l.b16 %v409
      %v886 = vpack.c.b16 %v743, %v742
      %v887 = vpack.c.b16 %v745, %v744
      %v888 = vpack.c.b16 %v747, %v746
      %v889 = vpack.c.b16 %v749, %v748
      %v890 = vpack.c.b16 %v751, %v750
      %v891 = vpack.c.b16 %v753, %v752
      %v892 = vpack.c.b16 %v755, %v754
      %v893 = vpack.c.b16 %v757, %v756
      %v894 = vpack.c.b16 %v759, %v758
      %v895 = vpack.c.b16 %v761, %v760
      %v896 = vpack.c.b16 %v763, %v762
      %v897 = vpack.c.b16 %v765, %v764
      %v898 = vpack.c.b16 %v767, %v766
      %v899 = vpack.c.b16 %v769, %v768
      %v900 = vpack.c.b16 %v771, %v770
      %v901 = vpack.c.b16 %v773, %v772
      %v902 = vpack.c.b16 %v775, %v774
      %v903 = vpack.c.b16 %v777, %v776
      %v904 = vpack.c.b16 %v779, %v778
      %v905 = vpack.c.b16 %v781, %v780
      %v906 = vpack.c.b16 %v783, %v782
      %v907 = vpack.c.b16 %v785, %v784
      %v908 = vpack.c.b16 %v787, %v786
      %v909 = vpack.c.b16 %v789, %v788
      %v910 = vpack.c.b16 %v791, %v790
      %v911 = vpack.c.b16 %v793, %v792
      %v912 = vpack.c.b16 %v795, %v794
      %v913 = vpack.c.b16 %v797, %v796
      %v914 = vpack.c.b16 %v799, %v798
      %v915 = vpack.c.b16 %v801, %v800
      %v916 = vpack.c.b16 %v803, %v802
      %v917 = vpack.c.b16 %v805, %v804
      %v918 = vpack.c.b16 %v807, %v806
      %v919 = vpack.c.b16 %v809, %v808
      %v920 = vpack.c.b16 %v811, %v810
      %v921 = vpack.c.b16 %v813, %v812
      %v922 = vpack.c.b16 %v815, %v814
      %v923 = vpack.c.b16 %v817, %v816
      %v924 = vpack.c.b16 %v819, %v818
      %v925 = vpack.c.b16 %v821, %v820
      %v926 = vpack.c.b16 %v823, %v822
      %v927 = vpack.c.b16 %v825, %v824
      %v928 = vpack.c.b16 %v827, %v826
      %v929 = vpack.c.b16 %v829, %v828
      %v930 = vpack.c.b16 %v831, %v830
      %v931 = vpack.c.b16 %v833, %v832
      %v932 = vpack.c.b16 %v835, %v834
      %v933 = vpack.c.b16 %v837, %v836
      %v934 = vpack.c.b16 %v839, %v838
      %v935 = vpack.c.b16 %v841, %v840
      %v936 = vpack.c.b16 %v843, %v842
      %v937 = vpack.c.b16 %v845, %v844
      %v938 = vpack.c.b16 %v847, %v846
      %v939 = vpack.c.b16 %v849, %v848
      %v940 = vpack.c.b16 %v851, %v850
      %v941 = vpack.c.b16 %v853, %v852
      %v942 = vpack.c.b16 %v855, %v854
      %v943 = vpack.c.b16 %v857, %v856
      %v944 = vpack.c.b16 %v859, %v858
      %v945 = vpack.c.b16 %v861, %v860
      %v946 = vpack.c.b16 %v863, %v862
      %v947 = vpack.c.b16 %v865, %v864
      %v948 = vpack.c.b16 %v867, %v866
      %v949 = vpack.c.b16 %v869, %v868
      %v950 = vpack.c.b16 %v871, %v870
      %v951 = vpack.c.b16 %v873, %v872
      %v952 = vpack.c.b16 %v875, %v874
      %v953 = vpack.c.b16 %v877, %v876
      %v954 = vpack.c.b16 %v879, %v878
      %v955 = vpack.c.b16 %v881, %v880
      %v956 = vpack.c.b16 %v883, %v882
      %v957 = vpack.c.b16 %v885, %v884
      %1030 = vmatpush.bf16.msra.mxu0 %v893
      %1031 = vmatpush.bf16.msra.mxu0 %v892
      %1032 = vmatpush.bf16.msra.mxu0 %v891
      %1033 = vmatpush.bf16.msra.mxu0 %v890
      %1034 = vmatpush.bf16.msra.mxu0 %v889
      %1035 = vmatpush.bf16.msra.mxu0 %v888
      %1036 = vmatpush.bf16.msra.mxu0 %v887
      %1037 = vmatpush.bf16.msra.mxu0 %v886
      %1038 = vmatmul.bf16.gmra.mxu0 %v526
      %v1039 = vpop.f32.mrf.mxu0
      %v1040 = vadd.f32 %v412, %v1039
      %v1041 = vpop.f32.mrf.mxu0
      %v1042 = vadd.f32 %v412, %v1041
      %1043 = vmatmul.bf16.gmra.mxu0 %v535
      %v1044 = vpop.f32.mrf.mxu0
      %v1045 = vadd.f32 %v412, %v1044
      %v1046 = vpop.f32.mrf.mxu0
      %v1047 = vadd.f32 %v412, %v1046
      %1048 = vmatmul.bf16.gmra.mxu0 %v544
      %v1049 = vpop.f32.mrf.mxu0
      %v1050 = vadd.f32 %v412, %v1049
      %v1051 = vpop.f32.mrf.mxu0
      %v1052 = vadd.f32 %v412, %v1051
      %1053 = vmatmul.bf16.gmra.mxu0 %v553
      %v1054 = vpop.f32.mrf.mxu0
      %v1055 = vadd.f32 %v412, %v1054
      %v1056 = vpop.f32.mrf.mxu0
      %v1057 = vadd.f32 %v412, %v1056
      %1058 = vdwg.mxu0
      %1059 = vmatpush.bf16.msra.mxu0 %v901
      %1060 = vmatpush.bf16.msra.mxu0 %v900
      %1061 = vmatpush.bf16.msra.mxu0 %v899
      %1062 = vmatpush.bf16.msra.mxu0 %v898
      %1063 = vmatpush.bf16.msra.mxu0 %v897
      %1064 = vmatpush.bf16.msra.mxu0 %v896
      %1065 = vmatpush.bf16.msra.mxu0 %v895
      %1066 = vmatpush.bf16.msra.mxu0 %v894
      %1067 = vmatmul.bf16.gmra.mxu0 %v527
      %v1068 = vpop.f32.mrf.mxu0
      %v1069 = vadd.f32 %v1040, %v1068
      %v1070 = vpop.f32.mrf.mxu0
      %v1071 = vadd.f32 %v1042, %v1070
      %1072 = vmatmul.bf16.gmra.mxu0 %v536
      %v1073 = vpop.f32.mrf.mxu0
      %v1074 = vadd.f32 %v1045, %v1073
      %v1075 = vpop.f32.mrf.mxu0
      %v1076 = vadd.f32 %v1047, %v1075
      %1077 = vmatmul.bf16.gmra.mxu0 %v545
      %v1078 = vpop.f32.mrf.mxu0
      %v1079 = vadd.f32 %v1050, %v1078
      %v1080 = vpop.f32.mrf.mxu0
      %v1081 = vadd.f32 %v1052, %v1080
      %1082 = vmatmul.bf16.gmra.mxu0 %v554
      %v1083 = vpop.f32.mrf.mxu0
      %v1084 = vadd.f32 %v1055, %v1083
      %v1085 = vpop.f32.mrf.mxu0
      %v1086 = vadd.f32 %v1057, %v1085
      %1087 = vdwg.mxu0
      %1088 = vmatpush.bf16.msra.mxu0 %v909
      %1089 = vmatpush.bf16.msra.mxu0 %v908
      %1090 = vmatpush.bf16.msra.mxu0 %v907
      %1091 = vmatpush.bf16.msra.mxu0 %v906
      %1092 = vmatpush.bf16.msra.mxu0 %v905
      %1093 = vmatpush.bf16.msra.mxu0 %v904
      %1094 = vmatpush.bf16.msra.mxu0 %v903
      %1095 = vmatpush.bf16.msra.mxu0 %v902
      %1096 = vmatmul.bf16.gmra.mxu0 %v528
      %v1097 = vpop.f32.mrf.mxu0
      %v1098 = vadd.f32 %v1069, %v1097
      %v1099 = vpop.f32.mrf.mxu0
      %v1100 = vadd.f32 %v1071, %v1099
      %1101 = vmatmul.bf16.gmra.mxu0 %v537
      %v1102 = vpop.f32.mrf.mxu0
      %v1103 = vadd.f32 %v1074, %v1102
      %v1104 = vpop.f32.mrf.mxu0
      %v1105 = vadd.f32 %v1076, %v1104
      %1106 = vmatmul.bf16.gmra.mxu0 %v546
      %v1107 = vpop.f32.mrf.mxu0
      %v1108 = vadd.f32 %v1079, %v1107
      %v1109 = vpop.f32.mrf.mxu0
      %v1110 = vadd.f32 %v1081, %v1109
      %1111 = vmatmul.bf16.gmra.mxu0 %v555
      %v1112 = vpop.f32.mrf.mxu0
      %v1113 = vadd.f32 %v1084, %v1112
      %v1114 = vpop.f32.mrf.mxu0
      %v1115 = vadd.f32 %v1086, %v1114
      %1116 = vdwg.mxu0
      %1117 = vmatpush.bf16.msra.mxu0 %v917
      %1118 = vmatpush.bf16.msra.mxu0 %v916
      %1119 = vmatpush.bf16.msra.mxu0 %v915
      %1120 = vmatpush.bf16.msra.mxu0 %v914
      %1121 = vmatpush.bf16.msra.mxu0 %v913
      %1122 = vmatpush.bf16.msra.mxu0 %v912
      %1123 = vmatpush.bf16.msra.mxu0 %v911
      %1124 = vmatpush.bf16.msra.mxu0 %v910
      %1125 = vmatmul.bf16.gmra.mxu0 %v529
      %v1126 = vpop.f32.mrf.mxu0
      %v1127 = vadd.f32 %v1098, %v1126
      %v1128 = vpop.f32.mrf.mxu0
      %v1129 = vadd.f32 %v1100, %v1128
      %1130 = vmatmul.bf16.gmra.mxu0 %v538
      %v1131 = vpop.f32.mrf.mxu0
      %v1132 = vadd.f32 %v1103, %v1131
      %v1133 = vpop.f32.mrf.mxu0
      %v1134 = vadd.f32 %v1105, %v1133
      %1135 = vmatmul.bf16.gmra.mxu0 %v547
      %v1136 = vpop.f32.mrf.mxu0
      %v1137 = vadd.f32 %v1108, %v1136
      %v1138 = vpop.f32.mrf.mxu0
      %v1139 = vadd.f32 %v1110, %v1138
      %1140 = vmatmul.bf16.gmra.mxu0 %v556
      %v1141 = vpop.f32.mrf.mxu0
      %v1142 = vadd.f32 %v1113, %v1141
      %v1143 = vpop.f32.mrf.mxu0
      %v1144 = vadd.f32 %v1115, %v1143
      %1145 = vdwg.mxu0
      %1146 = vmatpush.bf16.msra.mxu0 %v925
      %1147 = vmatpush.bf16.msra.mxu0 %v924
      %1148 = vmatpush.bf16.msra.mxu0 %v923
      %1149 = vmatpush.bf16.msra.mxu0 %v922
      %1150 = vmatpush.bf16.msra.mxu0 %v921
      %1151 = vmatpush.bf16.msra.mxu0 %v920
      %1152 = vmatpush.bf16.msra.mxu0 %v919
      %1153 = vmatpush.bf16.msra.mxu0 %v918
      %1154 = vmatmul.bf16.gmra.mxu0 %v530
      %v1155 = vpop.f32.mrf.mxu0
      %v1156 = vadd.f32 %v1127, %v1155
      %v1157 = vpop.f32.mrf.mxu0
      %v1158 = vadd.f32 %v1129, %v1157
      %1159 = vmatmul.bf16.gmra.mxu0 %v539
      %v1160 = vpop.f32.mrf.mxu0
      %v1161 = vadd.f32 %v1132, %v1160
      %v1162 = vpop.f32.mrf.mxu0
      %v1163 = vadd.f32 %v1134, %v1162
      %1164 = vmatmul.bf16.gmra.mxu0 %v548
      %v1165 = vpop.f32.mrf.mxu0
      %v1166 = vadd.f32 %v1137, %v1165
      %v1167 = vpop.f32.mrf.mxu0
      %v1168 = vadd.f32 %v1139, %v1167
      %1169 = vmatmul.bf16.gmra.mxu0 %v557
      %v1170 = vpop.f32.mrf.mxu0
      %v1171 = vadd.f32 %v1142, %v1170
      %v1172 = vpop.f32.mrf.mxu0
      %v1173 = vadd.f32 %v1144, %v1172
      %1174 = vdwg.mxu0
      %1175 = vmatpush.bf16.msra.mxu0 %v933
      %1176 = vmatpush.bf16.msra.mxu0 %v932
      %1177 = vmatpush.bf16.msra.mxu0 %v931
      %1178 = vmatpush.bf16.msra.mxu0 %v930
      %1179 = vmatpush.bf16.msra.mxu0 %v929
      %1180 = vmatpush.bf16.msra.mxu0 %v928
      %1181 = vmatpush.bf16.msra.mxu0 %v927
      %1182 = vmatpush.bf16.msra.mxu0 %v926
      %1183 = vmatmul.bf16.gmra.mxu0 %v531
      %v1184 = vpop.f32.mrf.mxu0
      %v1185 = vadd.f32 %v1156, %v1184
      %v1186 = vpop.f32.mrf.mxu0
      %v1187 = vadd.f32 %v1158, %v1186
      %1188 = vmatmul.bf16.gmra.mxu0 %v540
      %v1189 = vpop.f32.mrf.mxu0
      %v1190 = vadd.f32 %v1161, %v1189
      %v1191 = vpop.f32.mrf.mxu0
      %v1192 = vadd.f32 %v1163, %v1191
      %1193 = vmatmul.bf16.gmra.mxu0 %v549
      %v1194 = vpop.f32.mrf.mxu0
      %v1195 = vadd.f32 %v1166, %v1194
      %v1196 = vpop.f32.mrf.mxu0
      %v1197 = vadd.f32 %v1168, %v1196
      %1198 = vmatmul.bf16.gmra.mxu0 %v558
      %v1199 = vpop.f32.mrf.mxu0
      %v1200 = vadd.f32 %v1171, %v1199
      %v1201 = vpop.f32.mrf.mxu0
      %v1202 = vadd.f32 %v1173, %v1201
      %1203 = vdwg.mxu0
      %1204 = vmatpush.bf16.msra.mxu0 %v941
      %1205 = vmatpush.bf16.msra.mxu0 %v940
      %1206 = vmatpush.bf16.msra.mxu0 %v939
      %1207 = vmatpush.bf16.msra.mxu0 %v938
      %1208 = vmatpush.bf16.msra.mxu0 %v937
      %1209 = vmatpush.bf16.msra.mxu0 %v936
      %1210 = vmatpush.bf16.msra.mxu0 %v935
      %1211 = vmatpush.bf16.msra.mxu0 %v934
      %1212 = vmatmul.bf16.gmra.mxu0 %v532
      %v1213 = vpop.f32.mrf.mxu0
      %v1214 = vadd.f32 %v1185, %v1213
      %v1215 = vpop.f32.mrf.mxu0
      %v1216 = vadd.f32 %v1187, %v1215
      %1217 = vmatmul.bf16.gmra.mxu0 %v541
      %v1218 = vpop.f32.mrf.mxu0
      %v1219 = vadd.f32 %v1190, %v1218
      %v1220 = vpop.f32.mrf.mxu0
      %v1221 = vadd.f32 %v1192, %v1220
      %1222 = vmatmul.bf16.gmra.mxu0 %v550
      %v1223 = vpop.f32.mrf.mxu0
      %v1224 = vadd.f32 %v1195, %v1223
      %v1225 = vpop.f32.mrf.mxu0
      %v1226 = vadd.f32 %v1197, %v1225
      %1227 = vmatmul.bf16.gmra.mxu0 %v559
      %v1228 = vpop.f32.mrf.mxu0
      %v1229 = vadd.f32 %v1200, %v1228
      %v1230 = vpop.f32.mrf.mxu0
      %v1231 = vadd.f32 %v1202, %v1230
      %1232 = vdwg.mxu0
      %1233 = vmatpush.bf16.msra.mxu0 %v949
      %1234 = vmatpush.bf16.msra.mxu0 %v948
      %1235 = vmatpush.bf16.msra.mxu0 %v947
      %1236 = vmatpush.bf16.msra.mxu0 %v946
      %1237 = vmatpush.bf16.msra.mxu0 %v945
      %1238 = vmatpush.bf16.msra.mxu0 %v944
      %1239 = vmatpush.bf16.msra.mxu0 %v943
      %1240 = vmatpush.bf16.msra.mxu0 %v942
      %1241 = vmatmul.bf16.gmra.mxu0 %v533
      %v1242 = vpop.f32.mrf.mxu0
      %v1243 = vadd.f32 %v1214, %v1242
      %v1244 = vpop.f32.mrf.mxu0
      %v1245 = vadd.f32 %v1216, %v1244
      %1246 = vmatmul.bf16.gmra.mxu0 %v542
      %v1247 = vpop.f32.mrf.mxu0
      %v1248 = vadd.f32 %v1219, %v1247
      %v1249 = vpop.f32.mrf.mxu0
      %v1250 = vadd.f32 %v1221, %v1249
      %1251 = vmatmul.bf16.gmra.mxu0 %v551
      %v1252 = vpop.f32.mrf.mxu0
      %v1253 = vadd.f32 %v1224, %v1252
      %v1254 = vpop.f32.mrf.mxu0
      %v1255 = vadd.f32 %v1226, %v1254
      %1256 = vmatmul.bf16.gmra.mxu0 %v560
      %v1257 = vpop.f32.mrf.mxu0
      %v1258 = vadd.f32 %v1229, %v1257
      %v1259 = vpop.f32.mrf.mxu0
      %v1260 = vadd.f32 %v1231, %v1259
      %1261 = vdwg.mxu0
      %1262 = vmatpush.bf16.msra.mxu0 %v957
      %1263 = vmatpush.bf16.msra.mxu0 %v956
      %1264 = vmatpush.bf16.msra.mxu0 %v955
      %1265 = vmatpush.bf16.msra.mxu0 %v954
      %1266 = vmatpush.bf16.msra.mxu0 %v953
      %1267 = vmatpush.bf16.msra.mxu0 %v952
      %1268 = vmatpush.bf16.msra.mxu0 %v951
      %1269 = vmatpush.bf16.msra.mxu0 %v950
      %1270 = vmatmul.bf16.gmra.mxu0 %v534
      %v1271 = vpop.f32.mrf.mxu0
      %v1272 = vadd.f32 %v1243, %v1271
      %v1273 = vpop.f32.mrf.mxu0
      %v1274 = vadd.f32 %v1245, %v1273
      %1275 = vmatmul.bf16.gmra.mxu0 %v543
      %v1276 = vpop.f32.mrf.mxu0
      %v1277 = vadd.f32 %v1248, %v1276
      %v1278 = vpop.f32.mrf.mxu0
      %v1279 = vadd.f32 %v1250, %v1278
      %1280 = vmatmul.bf16.gmra.mxu0 %v552
      %v1281 = vpop.f32.mrf.mxu0
      %v1282 = vadd.f32 %v1253, %v1281
      %v1283 = vpop.f32.mrf.mxu0
      %v1284 = vadd.f32 %v1255, %v1283
      %1285 = vmatmul.bf16.gmra.mxu0 %v561
      %v1286 = vpop.f32.mrf.mxu0
      %v1287 = vadd.f32 %v1258, %v1286
      %v1288 = vpop.f32.mrf.mxu0
      %v1289 = vadd.f32 %v1260, %v1288
      %1290 = vdwg.mxu0
      %v1291 = vld [vmem:[%s218] sm:$0xf]
      %v1292 = vld [vmem:[%s218 + $0x4] sm:$0xf]
      %v1293 = vld [vmem:[%s218 + $0x8] sm:$0xf]
      %v1294 = vld [vmem:[%s218 + $0xc] sm:$0xf]
      %v1295 = vld [vmem:[%s218 + $0x10] sm:$0xf]
      %v1296 = vld [vmem:[%s218 + $0x14] sm:$0xf]
      %v1297 = vld [vmem:[%s218 + $0x18] sm:$0xf]
      %v1298 = vld [vmem:[%s218 + $0x1c] sm:$0xf]
      %v1299 = vunpack.c.l.bf16 %v1291
      %v1300 = vunpack.c.l.bf16 %v1292
      %v1301 = vunpack.c.l.bf16 %v1293
      %v1302 = vunpack.c.l.bf16 %v1294
      %v1303 = vunpack.c.l.bf16 %v1295
      %v1304 = vunpack.c.l.bf16 %v1296
      %v1305 = vunpack.c.l.bf16 %v1297
      %v1306 = vunpack.c.l.bf16 %v1298
      %v1307 = vadd.f32 %v1272, %v1299
      %v1308 = vadd.f32 %v1274, %v1300
      %v1309 = vadd.f32 %v1277, %v1301
      %v1310 = vadd.f32 %v1279, %v1302
      %v1311 = vadd.f32 %v1282, %v1303
      %v1312 = vadd.f32 %v1284, %v1304
      %v1313 = vadd.f32 %v1287, %v1305
      %v1314 = vadd.f32 %v1289, %v1306
      %v1315 = vmax.f32 %v1307, 0.0
      %v1316 = vmax.f32 %v1308, 0.0
      %v1317 = vmax.f32 %v1309, 0.0
      %v1318 = vmax.f32 %v1310, 0.0
      %v1319 = vmax.f32 %v1311, 0.0
      %v1320 = vmax.f32 %v1312, 0.0
      %v1321 = vmax.f32 %v1313, 0.0
      %v1322 = vmax.f32 %v1314, 0.0
      %v1323 = vpack.c.bf16 %v1315, %v1315
      %v1324 = vpack.c.bf16 %v1316, %v1316
      %v1325 = vpack.c.bf16 %v1317, %v1317
      %v1326 = vpack.c.bf16 %v1318, %v1318
      %v1327 = vpack.c.bf16 %v1319, %v1319
      %v1328 = vpack.c.bf16 %v1320, %v1320
      %v1329 = vpack.c.bf16 %v1321, %v1321
      %v1330 = vpack.c.bf16 %v1322, %v1322
      %1331 = vst [vmem:[%s224] sm:$0xf] %v1323
      %1332 = vst [vmem:[%s224 + $0x4] sm:$0xf] %v1324
      %1333 = vst [vmem:[%s224 + $0x8] sm:$0xf] %v1325
      %1334 = vst [vmem:[%s224 + $0xc] sm:$0xf] %v1326
      %1335 = vst [vmem:[%s224 + $0x10] sm:$0xf] %v1327
      %1336 = vst [vmem:[%s224 + $0x14] sm:$0xf] %v1328
      %1337 = vst [vmem:[%s224 + $0x18] sm:$0xf] %v1329
      %1338 = vst [vmem:[%s224 + $0x1c] sm:$0xf] %v1330
      %s1339 = smul.u32 8, %s15
      %p1340 = scmp.lt.s32.totalorder %s1339, 15
      %s1341 = scalar_select %p1340, %s1339, 15
      %s1342 = smul.addr %s1341, 4
      %s1343 = scalar_lea.vmem %s4, %s1342
      // Predicated region
      $region37: #{my_resnet_forward.25} parent=35 // pred_check
        %p1344 = pneg %p127
      $region38: #{my_resnet_forward.25} parent=35 // pred_check_branch
        %1346 = sbr.rel (%p1344) target = $region40
      $region39: #{my_resnet_forward.25} parent=35 // pred_region
        %s1347 = smul.u32 8, %s15
      $region40: #{my_resnet_forward.25} parent=35 // pred_fallthru
        _
    $region36: #{my_resnet_forward.25} parent=5 // pred_fallthru
      _
    %p1348 = scmp.le.s32.totalorder 2, %s10
    // Predicated region
    $region41: #{my_resnet_forward.25} parent=5 // pred_check
      %p1349 = pneg %p1348
    $region42: #{my_resnet_forward.25} parent=5 // pred_check_branch
      %1351 = sbr.rel (%p1349) target = $region44
    $region43: #{my_resnet_forward.25} parent=5 // pred_region
      %s1352 = ssub.s32 %s10, 2
      // Predicated region
      $region45: #{my_resnet_forward.25} parent=43 // pred_check
        %p1353 = pneg %p133
      $region46: #{my_resnet_forward.25} parent=43 // pred_check_branch
        %1355 = sbr.rel (%p1353) target = $region48
      $region47: #{my_resnet_forward.25} parent=43 // pred_region
        %s1356 = smul.u32 8, %s16
        %p1357 = scmp.lt.s32.totalorder %s1356, 15
        %s1358 = scalar_select %p1357, %s1356, 15
        %s1359 = smul.addr %s1358, 4
        %s1360 = scalar_lea.vmem %s4, %s1359
      $region48: #{my_resnet_forward.25} parent=43 // pred_fallthru
        _
    $region44: #{my_resnet_forward.25} parent=5 // pred_fallthru
      _
  $region6: #{my_resnet_forward.25} parent=0 // loop_footer
    %s14 = sadd.s32 1, %s10
  $region7: #{my_resnet_forward.25} parent=0 // loop_footer_branch
    %9 = sbr.rel target = $region3
  $region8: #{my_resnet_forward.25} parent=0 // loop_exit
    _

// kernel: my_resnet_forward.28
$region0: #{my_resnet_forward.28}
  #allocation0 [shape = 'u32[]', space=smem, size = 0x4, offset = 0x4, fixed_abs, tag = 'smem constant byte address 0x4 - core index']
  #allocation1 [shape = 'u32[72,128]{1,0:T(1,128)}', space=vmem, size = 0x9000, scoped, tag = 'internal scratch']
  %s0 = inlined_call_operand.vmem [shape: bf16[32,1152], index: 0, kind: input, shape index: {}]
  %s1 = inlined_call_operand.vmem [shape: bf16[1152,128], index: 1, kind: input, shape index: {}]
  %s2 = inlined_call_operand.vmem [shape: f32[1,128], index: 2, kind: input, shape index: {}]
  %s3 = inlined_call_operand.vmem [shape: bf16[32,128], index: 3, kind: output, shape index: {}]
  %s4 = sld [smem:[#allocation0]]
  $region22: #{my_resnet_forward.28} parent=0
    _
  %s6 = ssub.s32 1, %s4
  %s7 = scalar_select 0, %s6, %s4
  // Predicated region
  $region2: #{my_resnet_forward.28} parent=0 // pred_check
    _
  $region3: #{my_resnet_forward.28} parent=0 // pred_check_branch
    %9 = sbr.rel (0) target = $region5
  $region4: #{my_resnet_forward.28} parent=0 // pred_region
    _
  $region5: #{my_resnet_forward.28} parent=0 // pred_fallthru
    _
  // Predicated region
  $region6: #{my_resnet_forward.28} parent=0 // pred_check
    _
  $region7: #{my_resnet_forward.28} parent=0 // pred_check_branch
    %11 = sbr.rel (0) target = $region9
  $region8: #{my_resnet_forward.28} parent=0 // pred_region
    _
  $region9: #{my_resnet_forward.28} parent=0 // pred_fallthru
    _
  // Predicated region
  $region10: #{my_resnet_forward.28} parent=0 // pred_check
    _
  $region11: #{my_resnet_forward.28} parent=0 // pred_check_branch
    %13 = sbr.rel (0) target = $region13
  $region12: #{my_resnet_forward.28} parent=0 // pred_region
    _
  $region13: #{my_resnet_forward.28} parent=0 // pred_fallthru
    _
  %v14 = vld [vmem:[%s0] sm:$0xff]
  %v15 = vld [vmem:[%s0 + $0x8] sm:$0xff]
  %v16 = vld [vmem:[%s0 + $0x10] sm:$0xff]
  %v17 = vld [vmem:[%s0 + $0x18] sm:$0xff]
  %v18 = vld [vmem:[%s0 + $0x20] sm:$0xf]
  %v19 = vld [vmem:[%s0 + $0x24] sm:$0xff]
  %v20 = vld [vmem:[%s0 + $0x2c] sm:$0xff]
  %v21 = vld [vmem:[%s0 + $0x34] sm:$0xff]
  %v22 = vld [vmem:[%s0 + $0x3c] sm:$0xff]
  %v23 = vld [vmem:[%s0 + $0x44] sm:$0xf]
  %v24 = vld [vmem:[%s0 + $0x48] sm:$0xff]
  %v25 = vld [vmem:[%s0 + $0x50] sm:$0xff]
  %v26 = vld [vmem:[%s0 + $0x58] sm:$0xff]
  %v27 = vld [vmem:[%s0 + $0x60] sm:$0xff]
  %v28 = vld [vmem:[%s0 + $0x68] sm:$0xf]
  %v29 = vld [vmem:[%s0 + $0x6c] sm:$0xff]
  %v30 = vld [vmem:[%s0 + $0x74] sm:$0xff]
  %v31 = vld [vmem:[%s0 + $0x7c] sm:$0xff]
  %v32 = vld [vmem:[%s0 + $0x84] sm:$0xff]
  %v33 = vld [vmem:[%s0 + $0x8c] sm:$0xf]
  %v34 = vld [vmem:[%s1] sm:$0xf]
  %v35 = vld [vmem:[%s1 + $0x4] sm:$0xf]
  %v36 = vld [vmem:[%s1 + $0x8] sm:$0xf]
  %v37 = vld [vmem:[%s1 + $0xc] sm:$0xf]
  %v38 = vld [vmem:[%s1 + $0x10] sm:$0xf]
  %v39 = vld [vmem:[%s1 + $0x14] sm:$0xf]
  %v40 = vld [vmem:[%s1 + $0x18] sm:$0xf]
  %v41 = vld [vmem:[%s1 + $0x1c] sm:$0xf]
  %v42 = vld [vmem:[%s1 + $0x20] sm:$0xf]
  %v43 = vld [vmem:[%s1 + $0x24] sm:$0xf]
  %v44 = vld [vmem:[%s1 + $0x28] sm:$0xf]
  %v45 = vld [vmem:[%s1 + $0x2c] sm:$0xf]
  %v46 = vld [vmem:[%s1 + $0x30] sm:$0xf]
  %v47 = vld [vmem:[%s1 + $0x34] sm:$0xf]
  %v48 = vld [vmem:[%s1 + $0x38] sm:$0xf]
  %v49 = vld [vmem:[%s1 + $0x3c] sm:$0xf]
  %v50 = vld [vmem:[%s1 + $0x40] sm:$0xf]
  %v51 = vld [vmem:[%s1 + $0x44] sm:$0xf]
  %v52 = vld [vmem:[%s1 + $0x48] sm:$0xf]
  %v53 = vld [vmem:[%s1 + $0x4c] sm:$0xf]
  %v54 = vld [vmem:[%s1 + $0x50] sm:$0xf]
  %v55 = vld [vmem:[%s1 + $0x54] sm:$0xf]
  %v56 = vld [vmem:[%s1 + $0x58] sm:$0xf]
  %v57 = vld [vmem:[%s1 + $0x5c] sm:$0xf]
  %v58 = vld [vmem:[%s1 + $0x60] sm:$0xf]
  %v59 = vld [vmem:[%s1 + $0x64] sm:$0xf]
  %v60 = vld [vmem:[%s1 + $0x68] sm:$0xf]
  %v61 = vld [vmem:[%s1 + $0x6c] sm:$0xf]
  %v62 = vld [vmem:[%s1 + $0x70] sm:$0xf]
  %v63 = vld [vmem:[%s1 + $0x74] sm:$0xf]
  %v64 = vld [vmem:[%s1 + $0x78] sm:$0xf]
  %v65 = vld [vmem:[%s1 + $0x7c] sm:$0xf]
  %v66 = vld [vmem:[%s1 + $0x80] sm:$0xf]
  %v67 = vld [vmem:[%s1 + $0x84] sm:$0xf]
  %v68 = vld [vmem:[%s1 + $0x88] sm:$0xf]
  %v69 = vld [vmem:[%s1 + $0x8c] sm:$0xf]
  %v70 = vld [vmem:[%s1 + $0x90] sm:$0xf]
  %v71 = vld [vmem:[%s1 + $0x94] sm:$0xf]
  %v72 = vld [vmem:[%s1 + $0x98] sm:$0xf]
  %v73 = vld [vmem:[%s1 + $0x9c] sm:$0xf]
  %v74 = vld [vmem:[%s1 + $0xa0] sm:$0xf]
  %v75 = vld [vmem:[%s1 + $0xa4] sm:$0xf]
  %v76 = vld [vmem:[%s1 + $0xa8] sm:$0xf]
  %v77 = vld [vmem:[%s1 + $0xac] sm:$0xf]
  %v78 = vld [vmem:[%s1 + $0xb0] sm:$0xf]
  %v79 = vld [vmem:[%s1 + $0xb4] sm:$0xf]
  %v80 = vld [vmem:[%s1 + $0xb8] sm:$0xf]
  %v81 = vld [vmem:[%s1 + $0xbc] sm:$0xf]
  %v82 = vld [vmem:[%s1 + $0xc0] sm:$0xf]
  %v83 = vld [vmem:[%s1 + $0xc4] sm:$0xf]
  %v84 = vld [vmem:[%s1 + $0xc8] sm:$0xf]
  %v85 = vld [vmem:[%s1 + $0xcc] sm:$0xf]
  %v86 = vld [vmem:[%s1 + $0xd0] sm:$0xf]
  %v87 = vld [vmem:[%s1 + $0xd4] sm:$0xf]
  %v88 = vld [vmem:[%s1 + $0xd8] sm:$0xf]
  %v89 = vld [vmem:[%s1 + $0xdc] sm:$0xf]
  %v90 = vld [vmem:[%s1 + $0xe0] sm:$0xf]
  %v91 = vld [vmem:[%s1 + $0xe4] sm:$0xf]
  %v92 = vld [vmem:[%s1 + $0xe8] sm:$0xf]
  %v93 = vld [vmem:[%s1 + $0xec] sm:$0xf]
  %v94 = vld [vmem:[%s1 + $0xf0] sm:$0xf]
  %v95 = vld [vmem:[%s1 + $0xf4] sm:$0xf]
  %v96 = vld [vmem:[%s1 + $0xf8] sm:$0xf]
  %v97 = vld [vmem:[%s1 + $0xfc] sm:$0xf]
  %v98 = vld [vmem:[%s1 + $0x100] sm:$0xf]
  %v99 = vld [vmem:[%s1 + $0x104] sm:$0xf]
  %v100 = vld [vmem:[%s1 + $0x108] sm:$0xf]
  %v101 = vld [vmem:[%s1 + $0x10c] sm:$0xf]
  %v102 = vld [vmem:[%s1 + $0x110] sm:$0xf]
  %v103 = vld [vmem:[%s1 + $0x114] sm:$0xf]
  %v104 = vld [vmem:[%s1 + $0x118] sm:$0xf]
  %v105 = vld [vmem:[%s1 + $0x11c] sm:$0xf]
  %v106 = vld [vmem:[%s1 + $0x120] sm:$0xf]
  %v107 = vld [vmem:[%s1 + $0x124] sm:$0xf]
  %v108 = vld [vmem:[%s1 + $0x128] sm:$0xf]
  %v109 = vld [vmem:[%s1 + $0x12c] sm:$0xf]
  %v110 = vld [vmem:[%s1 + $0x130] sm:$0xf]
  %v111 = vld [vmem:[%s1 + $0x134] sm:$0xf]
  %v112 = vld [vmem:[%s1 + $0x138] sm:$0xf]
  %v113 = vld [vmem:[%s1 + $0x13c] sm:$0xf]
  %v114 = vld [vmem:[%s1 + $0x140] sm:$0xf]
  %v115 = vld [vmem:[%s1 + $0x144] sm:$0xf]
  %v116 = vld [vmem:[%s1 + $0x148] sm:$0xf]
  %v117 = vld [vmem:[%s1 + $0x14c] sm:$0xf]
  %v118 = vld [vmem:[%s1 + $0x150] sm:$0xf]
  %v119 = vld [vmem:[%s1 + $0x154] sm:$0xf]
  %v120 = vld [vmem:[%s1 + $0x158] sm:$0xf]
  %v121 = vld [vmem:[%s1 + $0x15c] sm:$0xf]
  %v122 = vld [vmem:[%s1 + $0x160] sm:$0xf]
  %v123 = vld [vmem:[%s1 + $0x164] sm:$0xf]
  %v124 = vld [vmem:[%s1 + $0x168] sm:$0xf]
  %v125 = vld [vmem:[%s1 + $0x16c] sm:$0xf]
  %v126 = vld [vmem:[%s1 + $0x170] sm:$0xf]
  %v127 = vld [vmem:[%s1 + $0x174] sm:$0xf]
  %v128 = vld [vmem:[%s1 + $0x178] sm:$0xf]
  %v129 = vld [vmem:[%s1 + $0x17c] sm:$0xf]
  %v130 = vld [vmem:[%s1 + $0x180] sm:$0xf]
  %v131 = vld [vmem:[%s1 + $0x184] sm:$0xf]
  %v132 = vld [vmem:[%s1 + $0x188] sm:$0xf]
  %v133 = vld [vmem:[%s1 + $0x18c] sm:$0xf]
  %v134 = vld [vmem:[%s1 + $0x190] sm:$0xf]
  %v135 = vld [vmem:[%s1 + $0x194] sm:$0xf]
  %v136 = vld [vmem:[%s1 + $0x198] sm:$0xf]
  %v137 = vld [vmem:[%s1 + $0x19c] sm:$0xf]
  %v138 = vld [vmem:[%s1 + $0x1a0] sm:$0xf]
  %v139 = vld [vmem:[%s1 + $0x1a4] sm:$0xf]
  %v140 = vld [vmem:[%s1 + $0x1a8] sm:$0xf]
  %v141 = vld [vmem:[%s1 + $0x1ac] sm:$0xf]
  %v142 = vld [vmem:[%s1 + $0x1b0] sm:$0xf]
  %v143 = vld [vmem:[%s1 + $0x1b4] sm:$0xf]
  %v144 = vld [vmem:[%s1 + $0x1b8] sm:$0xf]
  %v145 = vld [vmem:[%s1 + $0x1bc] sm:$0xf]
  %v146 = vld [vmem:[%s1 + $0x1c0] sm:$0xf]
  %v147 = vld [vmem:[%s1 + $0x1c4] sm:$0xf]
  %v148 = vld [vmem:[%s1 + $0x1c8] sm:$0xf]
  %v149 = vld [vmem:[%s1 + $0x1cc] sm:$0xf]
  %v150 = vld [vmem:[%s1 + $0x1d0] sm:$0xf]
  %v151 = vld [vmem:[%s1 + $0x1d4] sm:$0xf]
  %v152 = vld [vmem:[%s1 + $0x1d8] sm:$0xf]
  %v153 = vld [vmem:[%s1 + $0x1dc] sm:$0xf]
  %v154 = vld [vmem:[%s1 + $0x1e0] sm:$0xf]
  %v155 = vld [vmem:[%s1 + $0x1e4] sm:$0xf]
  %v156 = vld [vmem:[%s1 + $0x1e8] sm:$0xf]
  %v157 = vld [vmem:[%s1 + $0x1ec] sm:$0xf]
  %v158 = vld [vmem:[%s1 + $0x1f0] sm:$0xf]
  %v159 = vld [vmem:[%s1 + $0x1f4] sm:$0xf]
  %v160 = vld [vmem:[%s1 + $0x1f8] sm:$0xf]
  %v161 = vld [vmem:[%s1 + $0x1fc] sm:$0xf]
  %v162 = vld [vmem:[%s1 + $0x200] sm:$0xf]
  %v163 = vld [vmem:[%s1 + $0x204] sm:$0xf]
  %v164 = vld [vmem:[%s1 + $0x208] sm:$0xf]
  %v165 = vld [vmem:[%s1 + $0x20c] sm:$0xf]
  %v166 = vld [vmem:[%s1 + $0x210] sm:$0xf]
  %v167 = vld [vmem:[%s1 + $0x214] sm:$0xf]
  %v168 = vld [vmem:[%s1 + $0x218] sm:$0xf]
  %v169 = vld [vmem:[%s1 + $0x21c] sm:$0xf]
  %v170 = vld [vmem:[%s1 + $0x220] sm:$0xf]
  %v171 = vld [vmem:[%s1 + $0x224] sm:$0xf]
  %v172 = vld [vmem:[%s1 + $0x228] sm:$0xf]
  %v173 = vld [vmem:[%s1 + $0x22c] sm:$0xf]
  %v174 = vld [vmem:[%s1 + $0x230] sm:$0xf]
  %v175 = vld [vmem:[%s1 + $0x234] sm:$0xf]
  %v176 = vld [vmem:[%s1 + $0x238] sm:$0xf]
  %v177 = vld [vmem:[%s1 + $0x23c] sm:$0xf]
  %v178 = vld [vmem:[%s2] sm:$0x1]
  %v180 = vperm.slane %v178, 0
  %v202 = vunpack.c.l.b16 %v14
  %v203 = vunpack.c.h.b16 %v14
  %v204 = vunpack.c.l.b16 %v15
  %v205 = vunpack.c.h.b16 %v15
  %v206 = vunpack.c.l.b16 %v16
  %v207 = vunpack.c.h.b16 %v16
  %v208 = vunpack.c.l.b16 %v17
  %v209 = vunpack.c.h.b16 %v17
  %v210 = vunpack.c.l.b16 %v18
  %v211 = vunpack.c.l.b16 %v19
  %v212 = vunpack.c.h.b16 %v19
  %v213 = vunpack.c.l.b16 %v20
  %v214 = vunpack.c.h.b16 %v20
  %v215 = vunpack.c.l.b16 %v21
  %v216 = vunpack.c.h.b16 %v21
  %v217 = vunpack.c.l.b16 %v22
  %v218 = vunpack.c.h.b16 %v22
  %v219 = vunpack.c.l.b16 %v23
  %v220 = vunpack.c.l.b16 %v24
  %v221 = vunpack.c.h.b16 %v24
  %v222 = vunpack.c.l.b16 %v25
  %v223 = vunpack.c.h.b16 %v25
  %v224 = vunpack.c.l.b16 %v26
  %v225 = vunpack.c.h.b16 %v26
  %v226 = vunpack.c.l.b16 %v27
  %v227 = vunpack.c.h.b16 %v27
  %v228 = vunpack.c.l.b16 %v28
  %v229 = vunpack.c.l.b16 %v29
  %v230 = vunpack.c.h.b16 %v29
  %v231 = vunpack.c.l.b16 %v30
  %v232 = vunpack.c.h.b16 %v30
  %v233 = vunpack.c.l.b16 %v31
  %v234 = vunpack.c.h.b16 %v31
  %v235 = vunpack.c.l.b16 %v32
  %v236 = vunpack.c.h.b16 %v32
  %v237 = vunpack.c.l.b16 %v33
  %v238 = vpack.c.b16 %v211, %v202
  %v239 = vpack.c.b16 %v212, %v203
  %v240 = vpack.c.b16 %v213, %v204
  %v241 = vpack.c.b16 %v214, %v205
  %v242 = vpack.c.b16 %v215, %v206
  %v243 = vpack.c.b16 %v216, %v207
  %v244 = vpack.c.b16 %v217, %v208
  %v245 = vpack.c.b16 %v218, %v209
  %v246 = vpack.c.b16 %v219, %v210
  %v247 = vpack.c.b16 %v229, %v220
  %v248 = vpack.c.b16 %v230, %v221
  %v249 = vpack.c.b16 %v231, %v222
  %v250 = vpack.c.b16 %v232, %v223
  %v251 = vpack.c.b16 %v233, %v224
  %v252 = vpack.c.b16 %v234, %v225
  %v253 = vpack.c.b16 %v235, %v226
  %v254 = vpack.c.b16 %v236, %v227
  %v255 = vpack.c.b16 %v237, %v228
  %v418 = vunpack.c.l.b16 %v34
  %v419 = vunpack.c.l.b16 %v35
  %v420 = vunpack.c.l.b16 %v36
  %v421 = vunpack.c.l.b16 %v37
  %v422 = vunpack.c.l.b16 %v38
  %v423 = vunpack.c.l.b16 %v39
  %v424 = vunpack.c.l.b16 %v40
  %v425 = vunpack.c.l.b16 %v41
  %v426 = vunpack.c.l.b16 %v42
  %v427 = vunpack.c.l.b16 %v43
  %v428 = vunpack.c.l.b16 %v44
  %v429 = vunpack.c.l.b16 %v45
  %v430 = vunpack.c.l.b16 %v46
  %v431 = vunpack.c.l.b16 %v47
  %v432 = vunpack.c.l.b16 %v48
  %v433 = vunpack.c.l.b16 %v49
  %v434 = vunpack.c.l.b16 %v50
  %v435 = vunpack.c.l.b16 %v51
  %v436 = vunpack.c.l.b16 %v52
  %v437 = vunpack.c.l.b16 %v53
  %v438 = vunpack.c.l.b16 %v54
  %v439 = vunpack.c.l.b16 %v55
  %v440 = vunpack.c.l.b16 %v56
  %v441 = vunpack.c.l.b16 %v57
  %v442 = vunpack.c.l.b16 %v58
  %v443 = vunpack.c.l.b16 %v59
  %v444 = vunpack.c.l.b16 %v60
  %v445 = vunpack.c.l.b16 %v61
  %v446 = vunpack.c.l.b16 %v62
  %v447 = vunpack.c.l.b16 %v63
  %v448 = vunpack.c.l.b16 %v64
  %v449 = vunpack.c.l.b16 %v65
  %v450 = vunpack.c.l.b16 %v66
  %v451 = vunpack.c.l.b16 %v67
  %v452 = vunpack.c.l.b16 %v68
  %v453 = vunpack.c.l.b16 %v69
  %v454 = vunpack.c.l.b16 %v70
  %v455 = vunpack.c.l.b16 %v71
  %v456 = vunpack.c.l.b16 %v72
  %v457 = vunpack.c.l.b16 %v73
  %v458 = vunpack.c.l.b16 %v74
  %v459 = vunpack.c.l.b16 %v75
  %v460 = vunpack.c.l.b16 %v76
  %v461 = vunpack.c.l.b16 %v77
  %v462 = vunpack.c.l.b16 %v78
  %v463 = vunpack.c.l.b16 %v79
  %v464 = vunpack.c.l.b16 %v80
  %v465 = vunpack.c.l.b16 %v81
  %v466 = vunpack.c.l.b16 %v82
  %v467 = vunpack.c.l.b16 %v83
  %v468 = vunpack.c.l.b16 %v84
  %v469 = vunpack.c.l.b16 %v85
  %v470 = vunpack.c.l.b16 %v86
  %v471 = vunpack.c.l.b16 %v87
  %v472 = vunpack.c.l.b16 %v88
  %v473 = vunpack.c.l.b16 %v89
  %v474 = vunpack.c.l.b16 %v90
  %v475 = vunpack.c.l.b16 %v91
  %v476 = vunpack.c.l.b16 %v92
  %v477 = vunpack.c.l.b16 %v93
  %v478 = vunpack.c.l.b16 %v94
  %v479 = vunpack.c.l.b16 %v95
  %v480 = vunpack.c.l.b16 %v96
  %v481 = vunpack.c.l.b16 %v97
  %v482 = vunpack.c.l.b16 %v98
  %v483 = vunpack.c.l.b16 %v99
  %v484 = vunpack.c.l.b16 %v100
  %v485 = vunpack.c.l.b16 %v101
  %v486 = vunpack.c.l.b16 %v102
  %v487 = vunpack.c.l.b16 %v103
  %v488 = vunpack.c.l.b16 %v104
  %v489 = vunpack.c.l.b16 %v105
  %v490 = vunpack.c.l.b16 %v106
  %v491 = vunpack.c.l.b16 %v107
  %v492 = vunpack.c.l.b16 %v108
  %v493 = vunpack.c.l.b16 %v109
  %v494 = vunpack.c.l.b16 %v110
  %v495 = vunpack.c.l.b16 %v111
  %v496 = vunpack.c.l.b16 %v112
  %v497 = vunpack.c.l.b16 %v113
  %v498 = vunpack.c.l.b16 %v114
  %v499 = vunpack.c.l.b16 %v115
  %v500 = vunpack.c.l.b16 %v116
  %v501 = vunpack.c.l.b16 %v117
  %v502 = vunpack.c.l.b16 %v118
  %v503 = vunpack.c.l.b16 %v119
  %v504 = vunpack.c.l.b16 %v120
  %v505 = vunpack.c.l.b16 %v121
  %v506 = vunpack.c.l.b16 %v122
  %v507 = vunpack.c.l.b16 %v123
  %v508 = vunpack.c.l.b16 %v124
  %v509 = vunpack.c.l.b16 %v125
  %v510 = vunpack.c.l.b16 %v126
  %v511 = vunpack.c.l.b16 %v127
  %v512 = vunpack.c.l.b16 %v128
  %v513 = vunpack.c.l.b16 %v129
  %v514 = vunpack.c.l.b16 %v130
  %v515 = vunpack.c.l.b16 %v131
  %v516 = vunpack.c.l.b16 %v132
  %v517 = vunpack.c.l.b16 %v133
  %v518 = vunpack.c.l.b16 %v134
  %v519 = vunpack.c.l.b16 %v135
  %v520 = vunpack.c.l.b16 %v136
  %v521 = vunpack.c.l.b16 %v137
  %v522 = vunpack.c.l.b16 %v138
  %v523 = vunpack.c.l.b16 %v139
  %v524 = vunpack.c.l.b16 %v140
  %v525 = vunpack.c.l.b16 %v141
  %v526 = vunpack.c.l.b16 %v142
  %v527 = vunpack.c.l.b16 %v143
  %v528 = vunpack.c.l.b16 %v144
  %v529 = vunpack.c.l.b16 %v145
  %v530 = vunpack.c.l.b16 %v146
  %v531 = vunpack.c.l.b16 %v147
  %v532 = vunpack.c.l.b16 %v148
  %v533 = vunpack.c.l.b16 %v149
  %v534 = vunpack.c.l.b16 %v150
  %v535 = vunpack.c.l.b16 %v151
  %v536 = vunpack.c.l.b16 %v152
  %v537 = vunpack.c.l.b16 %v153
  %v538 = vunpack.c.l.b16 %v154
  %v539 = vunpack.c.l.b16 %v155
  %v540 = vunpack.c.l.b16 %v156
  %v541 = vunpack.c.l.b16 %v157
  %v542 = vunpack.c.l.b16 %v158
  %v543 = vunpack.c.l.b16 %v159
  %v544 = vunpack.c.l.b16 %v160
  %v545 = vunpack.c.l.b16 %v161
  %v546 = vunpack.c.l.b16 %v162
  %v547 = vunpack.c.l.b16 %v163
  %v548 = vunpack.c.l.b16 %v164
  %v549 = vunpack.c.l.b16 %v165
  %v550 = vunpack.c.l.b16 %v166
  %v551 = vunpack.c.l.b16 %v167
  %v552 = vunpack.c.l.b16 %v168
  %v553 = vunpack.c.l.b16 %v169
  %v554 = vunpack.c.l.b16 %v170
  %v555 = vunpack.c.l.b16 %v171
  %v556 = vunpack.c.l.b16 %v172
  %v557 = vunpack.c.l.b16 %v173
  %v558 = vunpack.c.l.b16 %v174
  %v559 = vunpack.c.l.b16 %v175
  %v560 = vunpack.c.l.b16 %v176
  %v561 = vunpack.c.l.b16 %v177
  %v562 = vpack.c.b16 %v419, %v418
  %v563 = vpack.c.b16 %v421, %v420
  %v564 = vpack.c.b16 %v423, %v422
  %v565 = vpack.c.b16 %v425, %v424
  %v566 = vpack.c.b16 %v427, %v426
  %v567 = vpack.c.b16 %v429, %v428
  %v568 = vpack.c.b16 %v431, %v430
  %v569 = vpack.c.b16 %v433, %v432
  %v570 = vpack.c.b16 %v435, %v434
  %v571 = vpack.c.b16 %v437, %v436
  %v572 = vpack.c.b16 %v439, %v438
  %v573 = vpack.c.b16 %v441, %v440
  %v574 = vpack.c.b16 %v443, %v442
  %v575 = vpack.c.b16 %v445, %v444
  %v576 = vpack.c.b16 %v447, %v446
  %v577 = vpack.c.b16 %v449, %v448
  %v578 = vpack.c.b16 %v451, %v450
  %v579 = vpack.c.b16 %v453, %v452
  %v580 = vpack.c.b16 %v455, %v454
  %v581 = vpack.c.b16 %v457, %v456
  %v582 = vpack.c.b16 %v459, %v458
  %v583 = vpack.c.b16 %v461, %v460
  %v584 = vpack.c.b16 %v463, %v462
  %v585 = vpack.c.b16 %v465, %v464
  %v586 = vpack.c.b16 %v467, %v466
  %v587 = vpack.c.b16 %v469, %v468
  %v588 = vpack.c.b16 %v471, %v470
  %v589 = vpack.c.b16 %v473, %v472
  %v590 = vpack.c.b16 %v475, %v474
  %v591 = vpack.c.b16 %v477, %v476
  %v592 = vpack.c.b16 %v479, %v478
  %v593 = vpack.c.b16 %v481, %v480
  %v594 = vpack.c.b16 %v483, %v482
  %v595 = vpack.c.b16 %v485, %v484
  %v596 = vpack.c.b16 %v487, %v486
  %v597 = vpack.c.b16 %v489, %v488
  %v598 = vpack.c.b16 %v491, %v490
  %v599 = vpack.c.b16 %v493, %v492
  %v600 = vpack.c.b16 %v495, %v494
  %v601 = vpack.c.b16 %v497, %v496
  %v602 = vpack.c.b16 %v499, %v498
  %v603 = vpack.c.b16 %v501, %v500
  %v604 = vpack.c.b16 %v503, %v502
  %v605 = vpack.c.b16 %v505, %v504
  %v606 = vpack.c.b16 %v507, %v506
  %v607 = vpack.c.b16 %v509, %v508
  %v608 = vpack.c.b16 %v511, %v510
  %v609 = vpack.c.b16 %v513, %v512
  %v610 = vpack.c.b16 %v515, %v514
  %v611 = vpack.c.b16 %v517, %v516
  %v612 = vpack.c.b16 %v519, %v518
  %v613 = vpack.c.b16 %v521, %v520
  %v614 = vpack.c.b16 %v523, %v522
  %v615 = vpack.c.b16 %v525, %v524
  %v616 = vpack.c.b16 %v527, %v526
  %v617 = vpack.c.b16 %v529, %v528
  %v618 = vpack.c.b16 %v531, %v530
  %v619 = vpack.c.b16 %v533, %v532
  %v620 = vpack.c.b16 %v535, %v534
  %v621 = vpack.c.b16 %v537, %v536
  %v622 = vpack.c.b16 %v539, %v538
  %v623 = vpack.c.b16 %v541, %v540
  %v624 = vpack.c.b16 %v543, %v542
  %v625 = vpack.c.b16 %v545, %v544
  %v626 = vpack.c.b16 %v547, %v546
  %v627 = vpack.c.b16 %v549, %v548
  %v628 = vpack.c.b16 %v551, %v550
  %v629 = vpack.c.b16 %v553, %v552
  %v630 = vpack.c.b16 %v555, %v554
  %v631 = vpack.c.b16 %v557, %v556
  %v632 = vpack.c.b16 %v559, %v558
  %v633 = vpack.c.b16 %v561, %v560
  %706 = vmatpush.bf16.msra.mxu0 %v569
  %707 = vmatpush.bf16.msra.mxu0 %v568
  %708 = vmatpush.bf16.msra.mxu0 %v567
  %709 = vmatpush.bf16.msra.mxu0 %v566
  %710 = vmatpush.bf16.msra.mxu0 %v565
  %711 = vmatpush.bf16.msra.mxu0 %v564
  %712 = vmatpush.bf16.msra.mxu0 %v563
  %713 = vmatpush.bf16.msra.mxu0 %v562
  %714 = vmatmul.bf16.gmra.mxu0 %v238
  %v715 = vpop.f32.mrf.mxu0
  %v716 = vadd.f32 %v180, %v715
  %v717 = vpop.f32.mrf.mxu0
  %v718 = vadd.f32 %v180, %v717
  %719 = vmatmul.bf16.gmra.mxu0 %v247
  %v720 = vpop.f32.mrf.mxu0
  %v721 = vadd.f32 %v180, %v720
  %v722 = vpop.f32.mrf.mxu0
  %v723 = vadd.f32 %v180, %v722
  %724 = vdwg.mxu0
  %725 = vmatpush.bf16.msra.mxu0 %v577
  %726 = vmatpush.bf16.msra.mxu0 %v576
  %727 = vmatpush.bf16.msra.mxu0 %v575
  %728 = vmatpush.bf16.msra.mxu0 %v574
  %729 = vmatpush.bf16.msra.mxu0 %v573
  %730 = vmatpush.bf16.msra.mxu0 %v572
  %731 = vmatpush.bf16.msra.mxu0 %v571
  %732 = vmatpush.bf16.msra.mxu0 %v570
  %733 = vmatmul.bf16.gmra.mxu0 %v239
  %v734 = vpop.f32.mrf.mxu0
  %v735 = vadd.f32 %v716, %v734
  %v736 = vpop.f32.mrf.mxu0
  %v737 = vadd.f32 %v718, %v736
  %738 = vmatmul.bf16.gmra.mxu0 %v248
  %v739 = vpop.f32.mrf.mxu0
  %v740 = vadd.f32 %v721, %v739
  %v741 = vpop.f32.mrf.mxu0
  %v742 = vadd.f32 %v723, %v741
  %743 = vdwg.mxu0
  %744 = vmatpush.bf16.msra.mxu0 %v585
  %745 = vmatpush.bf16.msra.mxu0 %v584
  %746 = vmatpush.bf16.msra.mxu0 %v583
  %747 = vmatpush.bf16.msra.mxu0 %v582
  %748 = vmatpush.bf16.msra.mxu0 %v581
  %749 = vmatpush.bf16.msra.mxu0 %v580
  %750 = vmatpush.bf16.msra.mxu0 %v579
  %751 = vmatpush.bf16.msra.mxu0 %v578
  %752 = vmatmul.bf16.gmra.mxu0 %v240
  %v753 = vpop.f32.mrf.mxu0
  %v754 = vadd.f32 %v735, %v753
  %v755 = vpop.f32.mrf.mxu0
  %v756 = vadd.f32 %v737, %v755
  %757 = vmatmul.bf16.gmra.mxu0 %v249
  %v758 = vpop.f32.mrf.mxu0
  %v759 = vadd.f32 %v740, %v758
  %v760 = vpop.f32.mrf.mxu0
  %v761 = vadd.f32 %v742, %v760
  %762 = vdwg.mxu0
  %763 = vmatpush.bf16.msra.mxu0 %v593
  %764 = vmatpush.bf16.msra.mxu0 %v592
  %765 = vmatpush.bf16.msra.mxu0 %v591
  %766 = vmatpush.bf16.msra.mxu0 %v590
  %767 = vmatpush.bf16.msra.mxu0 %v589
  %768 = vmatpush.bf16.msra.mxu0 %v588
  %769 = vmatpush.bf16.msra.mxu0 %v587
  %770 = vmatpush.bf16.msra.mxu0 %v586
  %771 = vmatmul.bf16.gmra.mxu0 %v241
  %v772 = vpop.f32.mrf.mxu0
  %v773 = vadd.f32 %v754, %v772
  %v774 = vpop.f32.mrf.mxu0
  %v775 = vadd.f32 %v756, %v774
  %776 = vmatmul.bf16.gmra.mxu0 %v250
  %v777 = vpop.f32.mrf.mxu0
  %v778 = vadd.f32 %v759, %v777
  %v779 = vpop.f32.mrf.mxu0
  %v780 = vadd.f32 %v761, %v779
  %781 = vdwg.mxu0
  %782 = vmatpush.bf16.msra.mxu0 %v601
  %783 = vmatpush.bf16.msra.mxu0 %v600
  %784 = vmatpush.bf16.msra.mxu0 %v599
  %785 = vmatpush.bf16.msra.mxu0 %v598
  %786 = vmatpush.bf16.msra.mxu0 %v597
  %787 = vmatpush.bf16.msra.mxu0 %v596
  %788 = vmatpush.bf16.msra.mxu0 %v595
  %789 = vmatpush.bf16.msra.mxu0 %v594
  %790 = vmatmul.bf16.gmra.mxu0 %v242
  %v791 = vpop.f32.mrf.mxu0
  %v792 = vadd.f32 %v773, %v791
  %v793 = vpop.f32.mrf.mxu0
  %v794 = vadd.f32 %v775, %v793
  %795 = vmatmul.bf16.gmra.mxu0 %v251
  %v796 = vpop.f32.mrf.mxu0
  %v797 = vadd.f32 %v778, %v796
  %v798 = vpop.f32.mrf.mxu0
  %v799 = vadd.f32 %v780, %v798
  %800 = vdwg.mxu0
  %801 = vmatpush.bf16.msra.mxu0 %v609
  %802 = vmatpush.bf16.msra.mxu0 %v608
  %803 = vmatpush.bf16.msra.mxu0 %v607
  %804 = vmatpush.bf16.msra.mxu0 %v606
  %805 = vmatpush.bf16.msra.mxu0 %v605
  %806 = vmatpush.bf16.msra.mxu0 %v604
  %807 = vmatpush.bf16.msra.mxu0 %v603
  %808 = vmatpush.bf16.msra.mxu0 %v602
  %809 = vmatmul.bf16.gmra.mxu0 %v243
  %v810 = vpop.f32.mrf.mxu0
  %v811 = vadd.f32 %v792, %v810
  %v812 = vpop.f32.mrf.mxu0
  %v813 = vadd.f32 %v794, %v812
  %814 = vmatmul.bf16.gmra.mxu0 %v252
  %v815 = vpop.f32.mrf.mxu0
  %v816 = vadd.f32 %v797, %v815
  %v817 = vpop.f32.mrf.mxu0
  %v818 = vadd.f32 %v799, %v817
  %819 = vdwg.mxu0
  %820 = vmatpush.bf16.msra.mxu0 %v617
  %821 = vmatpush.bf16.msra.mxu0 %v616
  %822 = vmatpush.bf16.msra.mxu0 %v615
  %823 = vmatpush.bf16.msra.mxu0 %v614
  %824 = vmatpush.bf16.msra.mxu0 %v613
  %825 = vmatpush.bf16.msra.mxu0 %v612
  %826 = vmatpush.bf16.msra.mxu0 %v611
  %827 = vmatpush.bf16.msra.mxu0 %v610
  %828 = vmatmul.bf16.gmra.mxu0 %v244
  %v829 = vpop.f32.mrf.mxu0
  %v830 = vadd.f32 %v811, %v829
  %v831 = vpop.f32.mrf.mxu0
  %v832 = vadd.f32 %v813, %v831
  %833 = vmatmul.bf16.gmra.mxu0 %v253
  %v834 = vpop.f32.mrf.mxu0
  %v835 = vadd.f32 %v816, %v834
  %v836 = vpop.f32.mrf.mxu0
  %v837 = vadd.f32 %v818, %v836
  %838 = vdwg.mxu0
  %839 = vmatpush.bf16.msra.mxu0 %v625
  %840 = vmatpush.bf16.msra.mxu0 %v624
  %841 = vmatpush.bf16.msra.mxu0 %v623
  %842 = vmatpush.bf16.msra.mxu0 %v622
  %843 = vmatpush.bf16.msra.mxu0 %v621
  %844 = vmatpush.bf16.msra.mxu0 %v620
  %845 = vmatpush.bf16.msra.mxu0 %v619
  %846 = vmatpush.bf16.msra.mxu0 %v618
  %847 = vmatmul.bf16.gmra.mxu0 %v245
  %v848 = vpop.f32.mrf.mxu0
  %v849 = vadd.f32 %v830, %v848
  %v850 = vpop.f32.mrf.mxu0
  %v851 = vadd.f32 %v832, %v850
  %852 = vmatmul.bf16.gmra.mxu0 %v254
  %v853 = vpop.f32.mrf.mxu0
  %v854 = vadd.f32 %v835, %v853
  %v855 = vpop.f32.mrf.mxu0
  %v856 = vadd.f32 %v837, %v855
  %857 = vdwg.mxu0
  %858 = vmatpush.bf16.msra.mxu0 %v633
  %859 = vmatpush.bf16.msra.mxu0 %v632
  %860 = vmatpush.bf16.msra.mxu0 %v631
  %861 = vmatpush.bf16.msra.mxu0 %v630
  %862 = vmatpush.bf16.msra.mxu0 %v629
  %863 = vmatpush.bf16.msra.mxu0 %v628
  %864 = vmatpush.bf16.msra.mxu0 %v627
  %865 = vmatpush.bf16.msra.mxu0 %v626
  %866 = vmatmul.bf16.gmra.mxu0 %v246
  %v867 = vpop.f32.mrf.mxu0
  %v868 = vadd.f32 %v849, %v867
  %v869 = vpop.f32.mrf.mxu0
  %v870 = vadd.f32 %v851, %v869
  %871 = vmatmul.bf16.gmra.mxu0 %v255
  %v872 = vpop.f32.mrf.mxu0
  %v873 = vadd.f32 %v854, %v872
  %v874 = vpop.f32.mrf.mxu0
  %v875 = vadd.f32 %v856, %v874
  %876 = vdwg.mxu0
  %v877 = vmax.f32 %v868, 0.0
  %v878 = vmax.f32 %v870, 0.0
  %v879 = vmax.f32 %v873, 0.0
  %v880 = vmax.f32 %v875, 0.0
  %v881 = vpack.c.bf16 %v877, %v877
  %v882 = vpack.c.bf16 %v878, %v878
  %v883 = vpack.c.bf16 %v879, %v879
  %v884 = vpack.c.bf16 %v880, %v880
  %885 = vst [vmem:[%s3] sm:$0xf] %v881
  %886 = vst [vmem:[%s3 + $0x4] sm:$0xf] %v882
  %887 = vst [vmem:[%s3 + $0x8] sm:$0xf] %v883
  %888 = vst [vmem:[%s3 + $0xc] sm:$0xf] %v884
  // Predicated region
  $region14: #{my_resnet_forward.28} parent=0 // pred_check
    _
  $region15: #{my_resnet_forward.28} parent=0 // pred_check_branch
    %890 = sbr.rel (0) target = $region17
  $region16: #{my_resnet_forward.28} parent=0 // pred_region
    _
  $region17: #{my_resnet_forward.28} parent=0 // pred_fallthru
    _
  // Predicated region
  $region18: #{my_resnet_forward.28} parent=0 // pred_check
    _
  $region19: #{my_resnet_forward.28} parent=0 // pred_check_branch
    %892 = sbr.rel (0) target = $region21
  $region20: #{my_resnet_forward.28} parent=0 // pred_region
    _
  $region21: #{my_resnet_forward.28} parent=0 // pred_fallthru
    _

// kernel: my_resnet_forward.29
$region0: #{my_resnet_forward.29}
  #allocation0 [shape = 'u32[]', space=smem, size = 0x4, offset = 0x4, fixed_abs, tag = 'smem constant byte address 0x4 - core index']
  #allocation1 [shape = 'u32[72,128]{1,0:T(1,128)}', space=vmem, size = 0x9000, scoped, tag = 'internal scratch']
  %s0 = inlined_call_operand.vmem [shape: bf16[32,128], index: 0, kind: input, shape index: {}]
  %s1 = inlined_call_operand.vmem [shape: bf16[128,128], index: 1, kind: input, shape index: {}]
  %s2 = inlined_call_operand.vmem [shape: f32[1,128], index: 2, kind: input, shape index: {}]
  %s3 = inlined_call_operand.vmem [shape: bf16[32,128], index: 3, kind: output, shape index: {}]
  %s4 = sld [smem:[#allocation0]]
  $region22: #{my_resnet_forward.29} parent=0
    _
  %s6 = ssub.s32 1, %s4
  %s7 = scalar_select 0, %s6, %s4
  // Predicated region
  $region2: #{my_resnet_forward.29} parent=0 // pred_check
    _
  $region3: #{my_resnet_forward.29} parent=0 // pred_check_branch
    %9 = sbr.rel (0) target = $region5
  $region4: #{my_resnet_forward.29} parent=0 // pred_region
    _
  $region5: #{my_resnet_forward.29} parent=0 // pred_fallthru
    _
  // Predicated region
  $region6: #{my_resnet_forward.29} parent=0 // pred_check
    _
  $region7: #{my_resnet_forward.29} parent=0 // pred_check_branch
    %11 = sbr.rel (0) target = $region9
  $region8: #{my_resnet_forward.29} parent=0 // pred_region
    _
  $region9: #{my_resnet_forward.29} parent=0 // pred_fallthru
    _
  // Predicated region
  $region10: #{my_resnet_forward.29} parent=0 // pred_check
    _
  $region11: #{my_resnet_forward.29} parent=0 // pred_check_branch
    %13 = sbr.rel (0) target = $region13
  $region12: #{my_resnet_forward.29} parent=0 // pred_region
    _
  $region13: #{my_resnet_forward.29} parent=0 // pred_fallthru
    _
  %v14 = vld [vmem:[%s0] sm:$0xf]
  %v15 = vld [vmem:[%s0 + $0x4] sm:$0xf]
  %v16 = vld [vmem:[%s0 + $0x8] sm:$0xf]
  %v17 = vld [vmem:[%s0 + $0xc] sm:$0xf]
  %v18 = vld [vmem:[%s1] sm:$0xf]
  %v19 = vld [vmem:[%s1 + $0x4] sm:$0xf]
  %v20 = vld [vmem:[%s1 + $0x8] sm:$0xf]
  %v21 = vld [vmem:[%s1 + $0xc] sm:$0xf]
  %v22 = vld [vmem:[%s1 + $0x10] sm:$0xf]
  %v23 = vld [vmem:[%s1 + $0x14] sm:$0xf]
  %v24 = vld [vmem:[%s1 + $0x18] sm:$0xf]
  %v25 = vld [vmem:[%s1 + $0x1c] sm:$0xf]
  %v26 = vld [vmem:[%s1 + $0x20] sm:$0xf]
  %v27 = vld [vmem:[%s1 + $0x24] sm:$0xf]
  %v28 = vld [vmem:[%s1 + $0x28] sm:$0xf]
  %v29 = vld [vmem:[%s1 + $0x2c] sm:$0xf]
  %v30 = vld [vmem:[%s1 + $0x30] sm:$0xf]
  %v31 = vld [vmem:[%s1 + $0x34] sm:$0xf]
  %v32 = vld [vmem:[%s1 + $0x38] sm:$0xf]
  %v33 = vld [vmem:[%s1 + $0x3c] sm:$0xf]
  %v34 = vld [vmem:[%s2] sm:$0x1]
  %v36 = vperm.slane %v34, 0
  %v42 = vunpack.c.l.b16 %v14
  %v43 = vunpack.c.l.b16 %v15
  %v44 = vunpack.c.l.b16 %v16
  %v45 = vunpack.c.l.b16 %v17
  %v46 = vpack.c.b16 %v43, %v42
  %v47 = vpack.c.b16 %v45, %v44
  %v66 = vunpack.c.l.b16 %v18
  %v67 = vunpack.c.l.b16 %v19
  %v68 = vunpack.c.l.b16 %v20
  %v69 = vunpack.c.l.b16 %v21
  %v70 = vunpack.c.l.b16 %v22
  %v71 = vunpack.c.l.b16 %v23
  %v72 = vunpack.c.l.b16 %v24
  %v73 = vunpack.c.l.b16 %v25
  %v74 = vunpack.c.l.b16 %v26
  %v75 = vunpack.c.l.b16 %v27
  %v76 = vunpack.c.l.b16 %v28
  %v77 = vunpack.c.l.b16 %v29
  %v78 = vunpack.c.l.b16 %v30
  %v79 = vunpack.c.l.b16 %v31
  %v80 = vunpack.c.l.b16 %v32
  %v81 = vunpack.c.l.b16 %v33
  %v82 = vpack.c.b16 %v67, %v66
  %v83 = vpack.c.b16 %v69, %v68
  %v84 = vpack.c.b16 %v71, %v70
  %v85 = vpack.c.b16 %v73, %v72
  %v86 = vpack.c.b16 %v75, %v74
  %v87 = vpack.c.b16 %v77, %v76
  %v88 = vpack.c.b16 %v79, %v78
  %v89 = vpack.c.b16 %v81, %v80
  %98 = vmatpush.bf16.msra.mxu0 %v89
  %99 = vmatpush.bf16.msra.mxu0 %v88
  %100 = vmatpush.bf16.msra.mxu0 %v87
  %101 = vmatpush.bf16.msra.mxu0 %v86
  %102 = vmatpush.bf16.msra.mxu0 %v85
  %103 = vmatpush.bf16.msra.mxu0 %v84
  %104 = vmatpush.bf16.msra.mxu0 %v83
  %105 = vmatpush.bf16.msra.mxu0 %v82
  %106 = vmatmul.bf16.gmra.mxu0 %v46
  %v107 = vpop.f32.mrf.mxu0
  %v108 = vadd.f32 %v36, %v107
  %v109 = vpop.f32.mrf.mxu0
  %v110 = vadd.f32 %v36, %v109
  %111 = vmatmul.bf16.gmra.mxu0 %v47
  %v112 = vpop.f32.mrf.mxu0
  %v113 = vadd.f32 %v36, %v112
  %v114 = vpop.f32.mrf.mxu0
  %v115 = vadd.f32 %v36, %v114
  %116 = vdwg.mxu0
  %v117 = vpack.c.bf16 %v108, %v108
  %v118 = vpack.c.bf16 %v110, %v110
  %v119 = vpack.c.bf16 %v113, %v113
  %v120 = vpack.c.bf16 %v115, %v115
  %121 = vst [vmem:[%s3] sm:$0xf] %v117
  %122 = vst [vmem:[%s3 + $0x4] sm:$0xf] %v118
  %123 = vst [vmem:[%s3 + $0x8] sm:$0xf] %v119
  %124 = vst [vmem:[%s3 + $0xc] sm:$0xf] %v120
  // Predicated region
  $region14: #{my_resnet_forward.29} parent=0 // pred_check
    _
  $region15: #{my_resnet_forward.29} parent=0 // pred_check_branch
    %126 = sbr.rel (0) target = $region17
  $region16: #{my_resnet_forward.29} parent=0 // pred_region
    _
  $region17: #{my_resnet_forward.29} parent=0 // pred_fallthru
    _
  // Predicated region
  $region18: #{my_resnet_forward.29} parent=0 // pred_check
    _
  $region19: #{my_resnet_forward.29} parent=0 // pred_check_branch
    %128 = sbr.rel (0) target = $region21
  $region20: #{my_resnet_forward.29} parent=0 // pred_region
    _
  $region21: #{my_resnet_forward.29} parent=0 // pred_fallthru
    _

// kernel: my_resnet_forward.30
$region0: #{my_resnet_forward.30}
  #allocation0 [shape = 'u32[]', space=smem, size = 0x4, offset = 0x4, fixed_abs, tag = 'smem constant byte address 0x4 - core index']
  #allocation1 [shape = 'u32[72,128]{1,0:T(1,128)}', space=vmem, size = 0x9000, scoped, tag = 'internal scratch']
  %s0 = inlined_call_operand.vmem [shape: bf16[32,1152], index: 0, kind: input, shape index: {}]
  %s1 = inlined_call_operand.vmem [shape: bf16[1152,128], index: 1, kind: input, shape index: {}]
  %s2 = inlined_call_operand.vmem [shape: f32[1,128], index: 2, kind: input, shape index: {}]
  %s3 = inlined_call_operand.vmem [shape: bf16[32,128], index: 3, kind: input, shape index: {}]
  %s4 = inlined_call_operand.vmem [shape: bf16[32,128], index: 4, kind: output, shape index: {}]
  %s5 = sld [smem:[#allocation0]]
  $region26: #{my_resnet_forward.30} parent=0
    _
  %s7 = ssub.s32 1, %s5
  %s8 = scalar_select 0, %s7, %s5
  // Predicated region
  $region2: #{my_resnet_forward.30} parent=0 // pred_check
    _
  $region3: #{my_resnet_forward.30} parent=0 // pred_check_branch
    %10 = sbr.rel (0) target = $region5
  $region4: #{my_resnet_forward.30} parent=0 // pred_region
    _
  $region5: #{my_resnet_forward.30} parent=0 // pred_fallthru
    _
  // Predicated region
  $region6: #{my_resnet_forward.30} parent=0 // pred_check
    _
  $region7: #{my_resnet_forward.30} parent=0 // pred_check_branch
    %12 = sbr.rel (0) target = $region9
  $region8: #{my_resnet_forward.30} parent=0 // pred_region
    _
  $region9: #{my_resnet_forward.30} parent=0 // pred_fallthru
    _
  // Predicated region
  $region10: #{my_resnet_forward.30} parent=0 // pred_check
    _
  $region11: #{my_resnet_forward.30} parent=0 // pred_check_branch
    %14 = sbr.rel (0) target = $region13
  $region12: #{my_resnet_forward.30} parent=0 // pred_region
    _
  $region13: #{my_resnet_forward.30} parent=0 // pred_fallthru
    _
  // Predicated region
  $region14: #{my_resnet_forward.30} parent=0 // pred_check
    _
  $region15: #{my_resnet_forward.30} parent=0 // pred_check_branch
    %16 = sbr.rel (0) target = $region17
  $region16: #{my_resnet_forward.30} parent=0 // pred_region
    _
  $region17: #{my_resnet_forward.30} parent=0 // pred_fallthru
    _
  %v17 = vld [vmem:[%s0] sm:$0xff]
  %v18 = vld [vmem:[%s0 + $0x8] sm:$0xff]
  %v19 = vld [vmem:[%s0 + $0x10] sm:$0xff]
  %v20 = vld [vmem:[%s0 + $0x18] sm:$0xff]
  %v21 = vld [vmem:[%s0 + $0x20] sm:$0xf]
  %v22 = vld [vmem:[%s0 + $0x24] sm:$0xff]
  %v23 = vld [vmem:[%s0 + $0x2c] sm:$0xff]
  %v24 = vld [vmem:[%s0 + $0x34] sm:$0xff]
  %v25 = vld [vmem:[%s0 + $0x3c] sm:$0xff]
  %v26 = vld [vmem:[%s0 + $0x44] sm:$0xf]
  %v27 = vld [vmem:[%s0 + $0x48] sm:$0xff]
  %v28 = vld [vmem:[%s0 + $0x50] sm:$0xff]
  %v29 = vld [vmem:[%s0 + $0x58] sm:$0xff]
  %v30 = vld [vmem:[%s0 + $0x60] sm:$0xff]
  %v31 = vld [vmem:[%s0 + $0x68] sm:$0xf]
  %v32 = vld [vmem:[%s0 + $0x6c] sm:$0xff]
  %v33 = vld [vmem:[%s0 + $0x74] sm:$0xff]
  %v34 = vld [vmem:[%s0 + $0x7c] sm:$0xff]
  %v35 = vld [vmem:[%s0 + $0x84] sm:$0xff]
  %v36 = vld [vmem:[%s0 + $0x8c] sm:$0xf]
  %v37 = vld [vmem:[%s1] sm:$0xf]
  %v38 = vld [vmem:[%s1 + $0x4] sm:$0xf]
  %v39 = vld [vmem:[%s1 + $0x8] sm:$0xf]
  %v40 = vld [vmem:[%s1 + $0xc] sm:$0xf]
  %v41 = vld [vmem:[%s1 + $0x10] sm:$0xf]
  %v42 = vld [vmem:[%s1 + $0x14] sm:$0xf]
  %v43 = vld [vmem:[%s1 + $0x18] sm:$0xf]
  %v44 = vld [vmem:[%s1 + $0x1c] sm:$0xf]
  %v45 = vld [vmem:[%s1 + $0x20] sm:$0xf]
  %v46 = vld [vmem:[%s1 + $0x24] sm:$0xf]
  %v47 = vld [vmem:[%s1 + $0x28] sm:$0xf]
  %v48 = vld [vmem:[%s1 + $0x2c] sm:$0xf]
  %v49 = vld [vmem:[%s1 + $0x30] sm:$0xf]
  %v50 = vld [vmem:[%s1 + $0x34] sm:$0xf]
  %v51 = vld [vmem:[%s1 + $0x38] sm:$0xf]
  %v52 = vld [vmem:[%s1 + $0x3c] sm:$0xf]
  %v53 = vld [vmem:[%s1 + $0x40] sm:$0xf]
  %v54 = vld [vmem:[%s1 + $0x44] sm:$0xf]
  %v55 = vld [vmem:[%s1 + $0x48] sm:$0xf]
  %v56 = vld [vmem:[%s1 + $0x4c] sm:$0xf]
  %v57 = vld [vmem:[%s1 + $0x50] sm:$0xf]
  %v58 = vld [vmem:[%s1 + $0x54] sm:$0xf]
  %v59 = vld [vmem:[%s1 + $0x58] sm:$0xf]
  %v60 = vld [vmem:[%s1 + $0x5c] sm:$0xf]
  %v61 = vld [vmem:[%s1 + $0x60] sm:$0xf]
  %v62 = vld [vmem:[%s1 + $0x64] sm:$0xf]
  %v63 = vld [vmem:[%s1 + $0x68] sm:$0xf]
  %v64 = vld [vmem:[%s1 + $0x6c] sm:$0xf]
  %v65 = vld [vmem:[%s1 + $0x70] sm:$0xf]
  %v66 = vld [vmem:[%s1 + $0x74] sm:$0xf]
  %v67 = vld [vmem:[%s1 + $0x78] sm:$0xf]
  %v68 = vld [vmem:[%s1 + $0x7c] sm:$0xf]
  %v69 = vld [vmem:[%s1 + $0x80] sm:$0xf]
  %v70 = vld [vmem:[%s1 + $0x84] sm:$0xf]
  %v71 = vld [vmem:[%s1 + $0x88] sm:$0xf]
  %v72 = vld [vmem:[%s1 + $0x8c] sm:$0xf]
  %v73 = vld [vmem:[%s1 + $0x90] sm:$0xf]
  %v74 = vld [vmem:[%s1 + $0x94] sm:$0xf]
  %v75 = vld [vmem:[%s1 + $0x98] sm:$0xf]
  %v76 = vld [vmem:[%s1 + $0x9c] sm:$0xf]
  %v77 = vld [vmem:[%s1 + $0xa0] sm:$0xf]
  %v78 = vld [vmem:[%s1 + $0xa4] sm:$0xf]
  %v79 = vld [vmem:[%s1 + $0xa8] sm:$0xf]
  %v80 = vld [vmem:[%s1 + $0xac] sm:$0xf]
  %v81 = vld [vmem:[%s1 + $0xb0] sm:$0xf]
  %v82 = vld [vmem:[%s1 + $0xb4] sm:$0xf]
  %v83 = vld [vmem:[%s1 + $0xb8] sm:$0xf]
  %v84 = vld [vmem:[%s1 + $0xbc] sm:$0xf]
  %v85 = vld [vmem:[%s1 + $0xc0] sm:$0xf]
  %v86 = vld [vmem:[%s1 + $0xc4] sm:$0xf]
  %v87 = vld [vmem:[%s1 + $0xc8] sm:$0xf]
  %v88 = vld [vmem:[%s1 + $0xcc] sm:$0xf]
  %v89 = vld [vmem:[%s1 + $0xd0] sm:$0xf]
  %v90 = vld [vmem:[%s1 + $0xd4] sm:$0xf]
  %v91 = vld [vmem:[%s1 + $0xd8] sm:$0xf]
  %v92 = vld [vmem:[%s1 + $0xdc] sm:$0xf]
  %v93 = vld [vmem:[%s1 + $0xe0] sm:$0xf]
  %v94 = vld [vmem:[%s1 + $0xe4] sm:$0xf]
  %v95 = vld [vmem:[%s1 + $0xe8] sm:$0xf]
  %v96 = vld [vmem:[%s1 + $0xec] sm:$0xf]
  %v97 = vld [vmem:[%s1 + $0xf0] sm:$0xf]
  %v98 = vld [vmem:[%s1 + $0xf4] sm:$0xf]
  %v99 = vld [vmem:[%s1 + $0xf8] sm:$0xf]
  %v100 = vld [vmem:[%s1 + $0xfc] sm:$0xf]
  %v101 = vld [vmem:[%s1 + $0x100] sm:$0xf]
  %v102 = vld [vmem:[%s1 + $0x104] sm:$0xf]
  %v103 = vld [vmem:[%s1 + $0x108] sm:$0xf]
  %v104 = vld [vmem:[%s1 + $0x10c] sm:$0xf]
  %v105 = vld [vmem:[%s1 + $0x110] sm:$0xf]
  %v106 = vld [vmem:[%s1 + $0x114] sm:$0xf]
  %v107 = vld [vmem:[%s1 + $0x118] sm:$0xf]
  %v108 = vld [vmem:[%s1 + $0x11c] sm:$0xf]
  %v109 = vld [vmem:[%s1 + $0x120] sm:$0xf]
  %v110 = vld [vmem:[%s1 + $0x124] sm:$0xf]
  %v111 = vld [vmem:[%s1 + $0x128] sm:$0xf]
  %v112 = vld [vmem:[%s1 + $0x12c] sm:$0xf]
  %v113 = vld [vmem:[%s1 + $0x130] sm:$0xf]
  %v114 = vld [vmem:[%s1 + $0x134] sm:$0xf]
  %v115 = vld [vmem:[%s1 + $0x138] sm:$0xf]
  %v116 = vld [vmem:[%s1 + $0x13c] sm:$0xf]
  %v117 = vld [vmem:[%s1 + $0x140] sm:$0xf]
  %v118 = vld [vmem:[%s1 + $0x144] sm:$0xf]
  %v119 = vld [vmem:[%s1 + $0x148] sm:$0xf]
  %v120 = vld [vmem:[%s1 + $0x14c] sm:$0xf]
  %v121 = vld [vmem:[%s1 + $0x150] sm:$0xf]
  %v122 = vld [vmem:[%s1 + $0x154] sm:$0xf]
  %v123 = vld [vmem:[%s1 + $0x158] sm:$0xf]
  %v124 = vld [vmem:[%s1 + $0x15c] sm:$0xf]
  %v125 = vld [vmem:[%s1 + $0x160] sm:$0xf]
  %v126 = vld [vmem:[%s1 + $0x164] sm:$0xf]
  %v127 = vld [vmem:[%s1 + $0x168] sm:$0xf]
  %v128 = vld [vmem:[%s1 + $0x16c] sm:$0xf]
  %v129 = vld [vmem:[%s1 + $0x170] sm:$0xf]
  %v130 = vld [vmem:[%s1 + $0x174] sm:$0xf]
  %v131 = vld [vmem:[%s1 + $0x178] sm:$0xf]
  %v132 = vld [vmem:[%s1 + $0x17c] sm:$0xf]
  %v133 = vld [vmem:[%s1 + $0x180] sm:$0xf]
  %v134 = vld [vmem:[%s1 + $0x184] sm:$0xf]
  %v135 = vld [vmem:[%s1 + $0x188] sm:$0xf]
  %v136 = vld [vmem:[%s1 + $0x18c] sm:$0xf]
  %v137 = vld [vmem:[%s1 + $0x190] sm:$0xf]
  %v138 = vld [vmem:[%s1 + $0x194] sm:$0xf]
  %v139 = vld [vmem:[%s1 + $0x198] sm:$0xf]
  %v140 = vld [vmem:[%s1 + $0x19c] sm:$0xf]
  %v141 = vld [vmem:[%s1 + $0x1a0] sm:$0xf]
  %v142 = vld [vmem:[%s1 + $0x1a4] sm:$0xf]
  %v143 = vld [vmem:[%s1 + $0x1a8] sm:$0xf]
  %v144 = vld [vmem:[%s1 + $0x1ac] sm:$0xf]
  %v145 = vld [vmem:[%s1 + $0x1b0] sm:$0xf]
  %v146 = vld [vmem:[%s1 + $0x1b4] sm:$0xf]
  %v147 = vld [vmem:[%s1 + $0x1b8] sm:$0xf]
  %v148 = vld [vmem:[%s1 + $0x1bc] sm:$0xf]
  %v149 = vld [vmem:[%s1 + $0x1c0] sm:$0xf]
  %v150 = vld [vmem:[%s1 + $0x1c4] sm:$0xf]
  %v151 = vld [vmem:[%s1 + $0x1c8] sm:$0xf]
  %v152 = vld [vmem:[%s1 + $0x1cc] sm:$0xf]
  %v153 = vld [vmem:[%s1 + $0x1d0] sm:$0xf]
  %v154 = vld [vmem:[%s1 + $0x1d4] sm:$0xf]
  %v155 = vld [vmem:[%s1 + $0x1d8] sm:$0xf]
  %v156 = vld [vmem:[%s1 + $0x1dc] sm:$0xf]
  %v157 = vld [vmem:[%s1 + $0x1e0] sm:$0xf]
  %v158 = vld [vmem:[%s1 + $0x1e4] sm:$0xf]
  %v159 = vld [vmem:[%s1 + $0x1e8] sm:$0xf]
  %v160 = vld [vmem:[%s1 + $0x1ec] sm:$0xf]
  %v161 = vld [vmem:[%s1 + $0x1f0] sm:$0xf]
  %v162 = vld [vmem:[%s1 + $0x1f4] sm:$0xf]
  %v163 = vld [vmem:[%s1 + $0x1f8] sm:$0xf]
  %v164 = vld [vmem:[%s1 + $0x1fc] sm:$0xf]
  %v165 = vld [vmem:[%s1 + $0x200] sm:$0xf]
  %v166 = vld [vmem:[%s1 + $0x204] sm:$0xf]
  %v167 = vld [vmem:[%s1 + $0x208] sm:$0xf]
  %v168 = vld [vmem:[%s1 + $0x20c] sm:$0xf]
  %v169 = vld [vmem:[%s1 + $0x210] sm:$0xf]
  %v170 = vld [vmem:[%s1 + $0x214] sm:$0xf]
  %v171 = vld [vmem:[%s1 + $0x218] sm:$0xf]
  %v172 = vld [vmem:[%s1 + $0x21c] sm:$0xf]
  %v173 = vld [vmem:[%s1 + $0x220] sm:$0xf]
  %v174 = vld [vmem:[%s1 + $0x224] sm:$0xf]
  %v175 = vld [vmem:[%s1 + $0x228] sm:$0xf]
  %v176 = vld [vmem:[%s1 + $0x22c] sm:$0xf]
  %v177 = vld [vmem:[%s1 + $0x230] sm:$0xf]
  %v178 = vld [vmem:[%s1 + $0x234] sm:$0xf]
  %v179 = vld [vmem:[%s1 + $0x238] sm:$0xf]
  %v180 = vld [vmem:[%s1 + $0x23c] sm:$0xf]
  %v181 = vld [vmem:[%s2] sm:$0x1]
  %v183 = vperm.slane %v181, 0
  %v205 = vunpack.c.l.b16 %v17
  %v206 = vunpack.c.h.b16 %v17
  %v207 = vunpack.c.l.b16 %v18
  %v208 = vunpack.c.h.b16 %v18
  %v209 = vunpack.c.l.b16 %v19
  %v210 = vunpack.c.h.b16 %v19
  %v211 = vunpack.c.l.b16 %v20
  %v212 = vunpack.c.h.b16 %v20
  %v213 = vunpack.c.l.b16 %v21
  %v214 = vunpack.c.l.b16 %v22
  %v215 = vunpack.c.h.b16 %v22
  %v216 = vunpack.c.l.b16 %v23
  %v217 = vunpack.c.h.b16 %v23
  %v218 = vunpack.c.l.b16 %v24
  %v219 = vunpack.c.h.b16 %v24
  %v220 = vunpack.c.l.b16 %v25
  %v221 = vunpack.c.h.b16 %v25
  %v222 = vunpack.c.l.b16 %v26
  %v223 = vunpack.c.l.b16 %v27
  %v224 = vunpack.c.h.b16 %v27
  %v225 = vunpack.c.l.b16 %v28
  %v226 = vunpack.c.h.b16 %v28
  %v227 = vunpack.c.l.b16 %v29
  %v228 = vunpack.c.h.b16 %v29
  %v229 = vunpack.c.l.b16 %v30
  %v230 = vunpack.c.h.b16 %v30
  %v231 = vunpack.c.l.b16 %v31
  %v232 = vunpack.c.l.b16 %v32
  %v233 = vunpack.c.h.b16 %v32
  %v234 = vunpack.c.l.b16 %v33
  %v235 = vunpack.c.h.b16 %v33
  %v236 = vunpack.c.l.b16 %v34
  %v237 = vunpack.c.h.b16 %v34
  %v238 = vunpack.c.l.b16 %v35
  %v239 = vunpack.c.h.b16 %v35
  %v240 = vunpack.c.l.b16 %v36
  %v241 = vpack.c.b16 %v214, %v205
  %v242 = vpack.c.b16 %v215, %v206
  %v243 = vpack.c.b16 %v216, %v207
  %v244 = vpack.c.b16 %v217, %v208
  %v245 = vpack.c.b16 %v218, %v209
  %v246 = vpack.c.b16 %v219, %v210
  %v247 = vpack.c.b16 %v220, %v211
  %v248 = vpack.c.b16 %v221, %v212
  %v249 = vpack.c.b16 %v222, %v213
  %v250 = vpack.c.b16 %v232, %v223
  %v251 = vpack.c.b16 %v233, %v224
  %v252 = vpack.c.b16 %v234, %v225
  %v253 = vpack.c.b16 %v235, %v226
  %v254 = vpack.c.b16 %v236, %v227
  %v255 = vpack.c.b16 %v237, %v228
  %v256 = vpack.c.b16 %v238, %v229
  %v257 = vpack.c.b16 %v239, %v230
  %v258 = vpack.c.b16 %v240, %v231
  %v421 = vunpack.c.l.b16 %v37
  %v422 = vunpack.c.l.b16 %v38
  %v423 = vunpack.c.l.b16 %v39
  %v424 = vunpack.c.l.b16 %v40
  %v425 = vunpack.c.l.b16 %v41
  %v426 = vunpack.c.l.b16 %v42
  %v427 = vunpack.c.l.b16 %v43
  %v428 = vunpack.c.l.b16 %v44
  %v429 = vunpack.c.l.b16 %v45
  %v430 = vunpack.c.l.b16 %v46
  %v431 = vunpack.c.l.b16 %v47
  %v432 = vunpack.c.l.b16 %v48
  %v433 = vunpack.c.l.b16 %v49
  %v434 = vunpack.c.l.b16 %v50
  %v435 = vunpack.c.l.b16 %v51
  %v436 = vunpack.c.l.b16 %v52
  %v437 = vunpack.c.l.b16 %v53
  %v438 = vunpack.c.l.b16 %v54
  %v439 = vunpack.c.l.b16 %v55
  %v440 = vunpack.c.l.b16 %v56
  %v441 = vunpack.c.l.b16 %v57
  %v442 = vunpack.c.l.b16 %v58
  %v443 = vunpack.c.l.b16 %v59
  %v444 = vunpack.c.l.b16 %v60
  %v445 = vunpack.c.l.b16 %v61
  %v446 = vunpack.c.l.b16 %v62
  %v447 = vunpack.c.l.b16 %v63
  %v448 = vunpack.c.l.b16 %v64
  %v449 = vunpack.c.l.b16 %v65
  %v450 = vunpack.c.l.b16 %v66
  %v451 = vunpack.c.l.b16 %v67
  %v452 = vunpack.c.l.b16 %v68
  %v453 = vunpack.c.l.b16 %v69
  %v454 = vunpack.c.l.b16 %v70
  %v455 = vunpack.c.l.b16 %v71
  %v456 = vunpack.c.l.b16 %v72
  %v457 = vunpack.c.l.b16 %v73
  %v458 = vunpack.c.l.b16 %v74
  %v459 = vunpack.c.l.b16 %v75
  %v460 = vunpack.c.l.b16 %v76
  %v461 = vunpack.c.l.b16 %v77
  %v462 = vunpack.c.l.b16 %v78
  %v463 = vunpack.c.l.b16 %v79
  %v464 = vunpack.c.l.b16 %v80
  %v465 = vunpack.c.l.b16 %v81
  %v466 = vunpack.c.l.b16 %v82
  %v467 = vunpack.c.l.b16 %v83
  %v468 = vunpack.c.l.b16 %v84
  %v469 = vunpack.c.l.b16 %v85
  %v470 = vunpack.c.l.b16 %v86
  %v471 = vunpack.c.l.b16 %v87
  %v472 = vunpack.c.l.b16 %v88
  %v473 = vunpack.c.l.b16 %v89
  %v474 = vunpack.c.l.b16 %v90
  %v475 = vunpack.c.l.b16 %v91
  %v476 = vunpack.c.l.b16 %v92
  %v477 = vunpack.c.l.b16 %v93
  %v478 = vunpack.c.l.b16 %v94
  %v479 = vunpack.c.l.b16 %v95
  %v480 = vunpack.c.l.b16 %v96
  %v481 = vunpack.c.l.b16 %v97
  %v482 = vunpack.c.l.b16 %v98
  %v483 = vunpack.c.l.b16 %v99
  %v484 = vunpack.c.l.b16 %v100
  %v485 = vunpack.c.l.b16 %v101
  %v486 = vunpack.c.l.b16 %v102
  %v487 = vunpack.c.l.b16 %v103
  %v488 = vunpack.c.l.b16 %v104
  %v489 = vunpack.c.l.b16 %v105
  %v490 = vunpack.c.l.b16 %v106
  %v491 = vunpack.c.l.b16 %v107
  %v492 = vunpack.c.l.b16 %v108
  %v493 = vunpack.c.l.b16 %v109
  %v494 = vunpack.c.l.b16 %v110
  %v495 = vunpack.c.l.b16 %v111
  %v496 = vunpack.c.l.b16 %v112
  %v497 = vunpack.c.l.b16 %v113
  %v498 = vunpack.c.l.b16 %v114
  %v499 = vunpack.c.l.b16 %v115
  %v500 = vunpack.c.l.b16 %v116
  %v501 = vunpack.c.l.b16 %v117
  %v502 = vunpack.c.l.b16 %v118
  %v503 = vunpack.c.l.b16 %v119
  %v504 = vunpack.c.l.b16 %v120
  %v505 = vunpack.c.l.b16 %v121
  %v506 = vunpack.c.l.b16 %v122
  %v507 = vunpack.c.l.b16 %v123
  %v508 = vunpack.c.l.b16 %v124
  %v509 = vunpack.c.l.b16 %v125
  %v510 = vunpack.c.l.b16 %v126
  %v511 = vunpack.c.l.b16 %v127
  %v512 = vunpack.c.l.b16 %v128
  %v513 = vunpack.c.l.b16 %v129
  %v514 = vunpack.c.l.b16 %v130
  %v515 = vunpack.c.l.b16 %v131
  %v516 = vunpack.c.l.b16 %v132
  %v517 = vunpack.c.l.b16 %v133
  %v518 = vunpack.c.l.b16 %v134
  %v519 = vunpack.c.l.b16 %v135
  %v520 = vunpack.c.l.b16 %v136
  %v521 = vunpack.c.l.b16 %v137
  %v522 = vunpack.c.l.b16 %v138
  %v523 = vunpack.c.l.b16 %v139
  %v524 = vunpack.c.l.b16 %v140
  %v525 = vunpack.c.l.b16 %v141
  %v526 = vunpack.c.l.b16 %v142
  %v527 = vunpack.c.l.b16 %v143
  %v528 = vunpack.c.l.b16 %v144
  %v529 = vunpack.c.l.b16 %v145
  %v530 = vunpack.c.l.b16 %v146
  %v531 = vunpack.c.l.b16 %v147
  %v532 = vunpack.c.l.b16 %v148
  %v533 = vunpack.c.l.b16 %v149
  %v534 = vunpack.c.l.b16 %v150
  %v535 = vunpack.c.l.b16 %v151
  %v536 = vunpack.c.l.b16 %v152
  %v537 = vunpack.c.l.b16 %v153
  %v538 = vunpack.c.l.b16 %v154
  %v539 = vunpack.c.l.b16 %v155
  %v540 = vunpack.c.l.b16 %v156
  %v541 = vunpack.c.l.b16 %v157
  %v542 = vunpack.c.l.b16 %v158
  %v543 = vunpack.c.l.b16 %v159
  %v544 = vunpack.c.l.b16 %v160
  %v545 = vunpack.c.l.b16 %v161
  %v546 = vunpack.c.l.b16 %v162
  %v547 = vunpack.c.l.b16 %v163
  %v548 = vunpack.c.l.b16 %v164
  %v549 = vunpack.c.l.b16 %v165
  %v550 = vunpack.c.l.b16 %v166
  %v551 = vunpack.c.l.b16 %v167
  %v552 = vunpack.c.l.b16 %v168
  %v553 = vunpack.c.l.b16 %v169
  %v554 = vunpack.c.l.b16 %v170
  %v555 = vunpack.c.l.b16 %v171
  %v556 = vunpack.c.l.b16 %v172
  %v557 = vunpack.c.l.b16 %v173
  %v558 = vunpack.c.l.b16 %v174
  %v559 = vunpack.c.l.b16 %v175
  %v560 = vunpack.c.l.b16 %v176
  %v561 = vunpack.c.l.b16 %v177
  %v562 = vunpack.c.l.b16 %v178
  %v563 = vunpack.c.l.b16 %v179
  %v564 = vunpack.c.l.b16 %v180
  %v565 = vpack.c.b16 %v422, %v421
  %v566 = vpack.c.b16 %v424, %v423
  %v567 = vpack.c.b16 %v426, %v425
  %v568 = vpack.c.b16 %v428, %v427
  %v569 = vpack.c.b16 %v430, %v429
  %v570 = vpack.c.b16 %v432, %v431
  %v571 = vpack.c.b16 %v434, %v433
  %v572 = vpack.c.b16 %v436, %v435
  %v573 = vpack.c.b16 %v438, %v437
  %v574 = vpack.c.b16 %v440, %v439
  %v575 = vpack.c.b16 %v442, %v441
  %v576 = vpack.c.b16 %v444, %v443
  %v577 = vpack.c.b16 %v446, %v445
  %v578 = vpack.c.b16 %v448, %v447
  %v579 = vpack.c.b16 %v450, %v449
  %v580 = vpack.c.b16 %v452, %v451
  %v581 = vpack.c.b16 %v454, %v453
  %v582 = vpack.c.b16 %v456, %v455
  %v583 = vpack.c.b16 %v458, %v457
  %v584 = vpack.c.b16 %v460, %v459
  %v585 = vpack.c.b16 %v462, %v461
  %v586 = vpack.c.b16 %v464, %v463
  %v587 = vpack.c.b16 %v466, %v465
  %v588 = vpack.c.b16 %v468, %v467
  %v589 = vpack.c.b16 %v470, %v469
  %v590 = vpack.c.b16 %v472, %v471
  %v591 = vpack.c.b16 %v474, %v473
  %v592 = vpack.c.b16 %v476, %v475
  %v593 = vpack.c.b16 %v478, %v477
  %v594 = vpack.c.b16 %v480, %v479
  %v595 = vpack.c.b16 %v482, %v481
  %v596 = vpack.c.b16 %v484, %v483
  %v597 = vpack.c.b16 %v486, %v485
  %v598 = vpack.c.b16 %v488, %v487
  %v599 = vpack.c.b16 %v490, %v489
  %v600 = vpack.c.b16 %v492, %v491
  %v601 = vpack.c.b16 %v494, %v493
  %v602 = vpack.c.b16 %v496, %v495
  %v603 = vpack.c.b16 %v498, %v497
  %v604 = vpack.c.b16 %v500, %v499
  %v605 = vpack.c.b16 %v502, %v501
  %v606 = vpack.c.b16 %v504, %v503
  %v607 = vpack.c.b16 %v506, %v505
  %v608 = vpack.c.b16 %v508, %v507
  %v609 = vpack.c.b16 %v510, %v509
  %v610 = vpack.c.b16 %v512, %v511
  %v611 = vpack.c.b16 %v514, %v513
  %v612 = vpack.c.b16 %v516, %v515
  %v613 = vpack.c.b16 %v518, %v517
  %v614 = vpack.c.b16 %v520, %v519
  %v615 = vpack.c.b16 %v522, %v521
  %v616 = vpack.c.b16 %v524, %v523
  %v617 = vpack.c.b16 %v526, %v525
  %v618 = vpack.c.b16 %v528, %v527
  %v619 = vpack.c.b16 %v530, %v529
  %v620 = vpack.c.b16 %v532, %v531
  %v621 = vpack.c.b16 %v534, %v533
  %v622 = vpack.c.b16 %v536, %v535
  %v623 = vpack.c.b16 %v538, %v537
  %v624 = vpack.c.b16 %v540, %v539
  %v625 = vpack.c.b16 %v542, %v541
  %v626 = vpack.c.b16 %v544, %v543
  %v627 = vpack.c.b16 %v546, %v545
  %v628 = vpack.c.b16 %v548, %v547
  %v629 = vpack.c.b16 %v550, %v549
  %v630 = vpack.c.b16 %v552, %v551
  %v631 = vpack.c.b16 %v554, %v553
  %v632 = vpack.c.b16 %v556, %v555
  %v633 = vpack.c.b16 %v558, %v557
  %v634 = vpack.c.b16 %v560, %v559
  %v635 = vpack.c.b16 %v562, %v561
  %v636 = vpack.c.b16 %v564, %v563
  %709 = vmatpush.bf16.msra.mxu0 %v572
  %710 = vmatpush.bf16.msra.mxu0 %v571
  %711 = vmatpush.bf16.msra.mxu0 %v570
  %712 = vmatpush.bf16.msra.mxu0 %v569
  %713 = vmatpush.bf16.msra.mxu0 %v568
  %714 = vmatpush.bf16.msra.mxu0 %v567
  %715 = vmatpush.bf16.msra.mxu0 %v566
  %716 = vmatpush.bf16.msra.mxu0 %v565
  %717 = vmatmul.bf16.gmra.mxu0 %v241
  %v718 = vpop.f32.mrf.mxu0
  %v719 = vadd.f32 %v183, %v718
  %v720 = vpop.f32.mrf.mxu0
  %v721 = vadd.f32 %v183, %v720
  %722 = vmatmul.bf16.gmra.mxu0 %v250
  %v723 = vpop.f32.mrf.mxu0
  %v724 = vadd.f32 %v183, %v723
  %v725 = vpop.f32.mrf.mxu0
  %v726 = vadd.f32 %v183, %v725
  %727 = vdwg.mxu0
  %728 = vmatpush.bf16.msra.mxu0 %v580
  %729 = vmatpush.bf16.msra.mxu0 %v579
  %730 = vmatpush.bf16.msra.mxu0 %v578
  %731 = vmatpush.bf16.msra.mxu0 %v577
  %732 = vmatpush.bf16.msra.mxu0 %v576
  %733 = vmatpush.bf16.msra.mxu0 %v575
  %734 = vmatpush.bf16.msra.mxu0 %v574
  %735 = vmatpush.bf16.msra.mxu0 %v573
  %736 = vmatmul.bf16.gmra.mxu0 %v242
  %v737 = vpop.f32.mrf.mxu0
  %v738 = vadd.f32 %v719, %v737
  %v739 = vpop.f32.mrf.mxu0
  %v740 = vadd.f32 %v721, %v739
  %741 = vmatmul.bf16.gmra.mxu0 %v251
  %v742 = vpop.f32.mrf.mxu0
  %v743 = vadd.f32 %v724, %v742
  %v744 = vpop.f32.mrf.mxu0
  %v745 = vadd.f32 %v726, %v744
  %746 = vdwg.mxu0
  %747 = vmatpush.bf16.msra.mxu0 %v588
  %748 = vmatpush.bf16.msra.mxu0 %v587
  %749 = vmatpush.bf16.msra.mxu0 %v586
  %750 = vmatpush.bf16.msra.mxu0 %v585
  %751 = vmatpush.bf16.msra.mxu0 %v584
  %752 = vmatpush.bf16.msra.mxu0 %v583
  %753 = vmatpush.bf16.msra.mxu0 %v582
  %754 = vmatpush.bf16.msra.mxu0 %v581
  %755 = vmatmul.bf16.gmra.mxu0 %v243
  %v756 = vpop.f32.mrf.mxu0
  %v757 = vadd.f32 %v738, %v756
  %v758 = vpop.f32.mrf.mxu0
  %v759 = vadd.f32 %v740, %v758
  %760 = vmatmul.bf16.gmra.mxu0 %v252
  %v761 = vpop.f32.mrf.mxu0
  %v762 = vadd.f32 %v743, %v761
  %v763 = vpop.f32.mrf.mxu0
  %v764 = vadd.f32 %v745, %v763
  %765 = vdwg.mxu0
  %766 = vmatpush.bf16.msra.mxu0 %v596
  %767 = vmatpush.bf16.msra.mxu0 %v595
  %768 = vmatpush.bf16.msra.mxu0 %v594
  %769 = vmatpush.bf16.msra.mxu0 %v593
  %770 = vmatpush.bf16.msra.mxu0 %v592
  %771 = vmatpush.bf16.msra.mxu0 %v591
  %772 = vmatpush.bf16.msra.mxu0 %v590
  %773 = vmatpush.bf16.msra.mxu0 %v589
  %774 = vmatmul.bf16.gmra.mxu0 %v244
  %v775 = vpop.f32.mrf.mxu0
  %v776 = vadd.f32 %v757, %v775
  %v777 = vpop.f32.mrf.mxu0
  %v778 = vadd.f32 %v759, %v777
  %779 = vmatmul.bf16.gmra.mxu0 %v253
  %v780 = vpop.f32.mrf.mxu0
  %v781 = vadd.f32 %v762, %v780
  %v782 = vpop.f32.mrf.mxu0
  %v783 = vadd.f32 %v764, %v782
  %784 = vdwg.mxu0
  %785 = vmatpush.bf16.msra.mxu0 %v604
  %786 = vmatpush.bf16.msra.mxu0 %v603
  %787 = vmatpush.bf16.msra.mxu0 %v602
  %788 = vmatpush.bf16.msra.mxu0 %v601
  %789 = vmatpush.bf16.msra.mxu0 %v600
  %790 = vmatpush.bf16.msra.mxu0 %v599
  %791 = vmatpush.bf16.msra.mxu0 %v598
  %792 = vmatpush.bf16.msra.mxu0 %v597
  %793 = vmatmul.bf16.gmra.mxu0 %v245
  %v794 = vpop.f32.mrf.mxu0
  %v795 = vadd.f32 %v776, %v794
  %v796 = vpop.f32.mrf.mxu0
  %v797 = vadd.f32 %v778, %v796
  %798 = vmatmul.bf16.gmra.mxu0 %v254
  %v799 = vpop.f32.mrf.mxu0
  %v800 = vadd.f32 %v781, %v799
  %v801 = vpop.f32.mrf.mxu0
  %v802 = vadd.f32 %v783, %v801
  %803 = vdwg.mxu0
  %804 = vmatpush.bf16.msra.mxu0 %v612
  %805 = vmatpush.bf16.msra.mxu0 %v611
  %806 = vmatpush.bf16.msra.mxu0 %v610
  %807 = vmatpush.bf16.msra.mxu0 %v609
  %808 = vmatpush.bf16.msra.mxu0 %v608
  %809 = vmatpush.bf16.msra.mxu0 %v607
  %810 = vmatpush.bf16.msra.mxu0 %v606
  %811 = vmatpush.bf16.msra.mxu0 %v605
  %812 = vmatmul.bf16.gmra.mxu0 %v246
  %v813 = vpop.f32.mrf.mxu0
  %v814 = vadd.f32 %v795, %v813
  %v815 = vpop.f32.mrf.mxu0
  %v816 = vadd.f32 %v797, %v815
  %817 = vmatmul.bf16.gmra.mxu0 %v255
  %v818 = vpop.f32.mrf.mxu0
  %v819 = vadd.f32 %v800, %v818
  %v820 = vpop.f32.mrf.mxu0
  %v821 = vadd.f32 %v802, %v820
  %822 = vdwg.mxu0
  %823 = vmatpush.bf16.msra.mxu0 %v620
  %824 = vmatpush.bf16.msra.mxu0 %v619
  %825 = vmatpush.bf16.msra.mxu0 %v618
  %826 = vmatpush.bf16.msra.mxu0 %v617
  %827 = vmatpush.bf16.msra.mxu0 %v616
  %828 = vmatpush.bf16.msra.mxu0 %v615
  %829 = vmatpush.bf16.msra.mxu0 %v614
  %830 = vmatpush.bf16.msra.mxu0 %v613
  %831 = vmatmul.bf16.gmra.mxu0 %v247
  %v832 = vpop.f32.mrf.mxu0
  %v833 = vadd.f32 %v814, %v832
  %v834 = vpop.f32.mrf.mxu0
  %v835 = vadd.f32 %v816, %v834
  %836 = vmatmul.bf16.gmra.mxu0 %v256
  %v837 = vpop.f32.mrf.mxu0
  %v838 = vadd.f32 %v819, %v837
  %v839 = vpop.f32.mrf.mxu0
  %v840 = vadd.f32 %v821, %v839
  %841 = vdwg.mxu0
  %842 = vmatpush.bf16.msra.mxu0 %v628
  %843 = vmatpush.bf16.msra.mxu0 %v627
  %844 = vmatpush.bf16.msra.mxu0 %v626
  %845 = vmatpush.bf16.msra.mxu0 %v625
  %846 = vmatpush.bf16.msra.mxu0 %v624
  %847 = vmatpush.bf16.msra.mxu0 %v623
  %848 = vmatpush.bf16.msra.mxu0 %v622
  %849 = vmatpush.bf16.msra.mxu0 %v621
  %850 = vmatmul.bf16.gmra.mxu0 %v248
  %v851 = vpop.f32.mrf.mxu0
  %v852 = vadd.f32 %v833, %v851
  %v853 = vpop.f32.mrf.mxu0
  %v854 = vadd.f32 %v835, %v853
  %855 = vmatmul.bf16.gmra.mxu0 %v257
  %v856 = vpop.f32.mrf.mxu0
  %v857 = vadd.f32 %v838, %v856
  %v858 = vpop.f32.mrf.mxu0
  %v859 = vadd.f32 %v840, %v858
  %860 = vdwg.mxu0
  %861 = vmatpush.bf16.msra.mxu0 %v636
  %862 = vmatpush.bf16.msra.mxu0 %v635
  %863 = vmatpush.bf16.msra.mxu0 %v634
  %864 = vmatpush.bf16.msra.mxu0 %v633
  %865 = vmatpush.bf16.msra.mxu0 %v632
  %866 = vmatpush.bf16.msra.mxu0 %v631
  %867 = vmatpush.bf16.msra.mxu0 %v630
  %868 = vmatpush.bf16.msra.mxu0 %v629
  %869 = vmatmul.bf16.gmra.mxu0 %v249
  %v870 = vpop.f32.mrf.mxu0
  %v871 = vadd.f32 %v852, %v870
  %v872 = vpop.f32.mrf.mxu0
  %v873 = vadd.f32 %v854, %v872
  %874 = vmatmul.bf16.gmra.mxu0 %v258
  %v875 = vpop.f32.mrf.mxu0
  %v876 = vadd.f32 %v857, %v875
  %v877 = vpop.f32.mrf.mxu0
  %v878 = vadd.f32 %v859, %v877
  %879 = vdwg.mxu0
  %v880 = vld [vmem:[%s3] sm:$0xf]
  %v881 = vld [vmem:[%s3 + $0x4] sm:$0xf]
  %v882 = vld [vmem:[%s3 + $0x8] sm:$0xf]
  %v883 = vld [vmem:[%s3 + $0xc] sm:$0xf]
  %v884 = vunpack.c.l.bf16 %v880
  %v885 = vunpack.c.l.bf16 %v881
  %v886 = vunpack.c.l.bf16 %v882
  %v887 = vunpack.c.l.bf16 %v883
  %v888 = vadd.f32 %v871, %v884
  %v889 = vadd.f32 %v873, %v885
  %v890 = vadd.f32 %v876, %v886
  %v891 = vadd.f32 %v878, %v887
  %v892 = vmax.f32 %v888, 0.0
  %v893 = vmax.f32 %v889, 0.0
  %v894 = vmax.f32 %v890, 0.0
  %v895 = vmax.f32 %v891, 0.0
  %v896 = vpack.c.bf16 %v892, %v892
  %v897 = vpack.c.bf16 %v893, %v893
  %v898 = vpack.c.bf16 %v894, %v894
  %v899 = vpack.c.bf16 %v895, %v895
  %900 = vst [vmem:[%s4] sm:$0xf] %v896
  %901 = vst [vmem:[%s4 + $0x4] sm:$0xf] %v897
  %902 = vst [vmem:[%s4 + $0x8] sm:$0xf] %v898
  %903 = vst [vmem:[%s4 + $0xc] sm:$0xf] %v899
  // Predicated region
  $region18: #{my_resnet_forward.30} parent=0 // pred_check
    _
  $region19: #{my_resnet_forward.30} parent=0 // pred_check_branch
    %905 = sbr.rel (0) target = $region21
  $region20: #{my_resnet_forward.30} parent=0 // pred_region
    _
  $region21: #{my_resnet_forward.30} parent=0 // pred_fallthru
    _
  // Predicated region
  $region22: #{my_resnet_forward.30} parent=0 // pred_check
    _
  $region23: #{my_resnet_forward.30} parent=0 // pred_check_branch
    %907 = sbr.rel (0) target = $region25
  $region24: #{my_resnet_forward.30} parent=0 // pred_region
    _
  $region25: #{my_resnet_forward.30} parent=0 // pred_fallthru
    _

// kernel: my_resnet_forward.43
$region0: #{my_resnet_forward.43}
  #allocation0 [shape = 'u32[]', space=smem, size = 0x4, offset = 0x4, fixed_abs, tag = 'smem constant byte address 0x4 - core index']
  #allocation1 [shape = 'u32[72,128]{1,0:T(1,128)}', space=vmem, size = 0x9000, scoped, tag = 'internal scratch']
  %s0 = inlined_call_operand.vmem [shape: bf16[2,1,128], index: 0, kind: input, shape index: {}]
  %s1 = inlined_call_operand.hbm [shape: f32[2,128], index: 1, kind: output, shape index: {}]
  %s2 = sld [smem:[#allocation0]]
  $region14: #{my_resnet_forward.43} parent=0
    _
  %s4 = ssub.s32 1, %s2
  %s5 = scalar_select 0, %s4, %s2
  $region1: #{my_resnet_forward.43} parent=0
    #allocation2 [shape = 'u8[1024]{0}', space=vmem, size = 0x400, scoped, tag = 'output window, operand 0, single buffered']
    #allocation3 [shape = 's32[1]{0}', space=sflag, size = 0x4, scoped, tag = 'scoped memory for my_resnet_forward.43']
    %6 = vsyncpa [#allocation3], 0
    // Predicated region
    $region2: #{my_resnet_forward.43} parent=1 // pred_check
      _
    $region3: #{my_resnet_forward.43} parent=1 // pred_check_branch
      %8 = sbr.rel (0) target = $region5
    $region4: #{my_resnet_forward.43} parent=1 // pred_region
      _
    $region5: #{my_resnet_forward.43} parent=1 // pred_fallthru
      _
    %v9 = vld [vmem:[%s0] sm:$0x1]
    %v10 = vld [vmem:[%s0 + $0x1] sm:$0x1]
    %v11 = vunpack.c.l.bf16 %v9
    %v12 = vunpack.c.l.bf16 %v10
    %v13 = vadd.f32 %v11, 0.0
    %v14 = vadd.f32 %v12, 0.0
    %v17 = vperm.slane %v13, 0
    %v18 = vperm.slane %v14, 0
    %vm19 = vcmask 1041409
    %v20 = vsel %vm19, %v18, %v17
    %22 = vst [vmem:[#allocation2] sm:$0x3] %v20
    // Predicated region
    $region6: #{my_resnet_forward.43} parent=1 // pred_check
      _
    $region7: #{my_resnet_forward.43} parent=1 // pred_check_branch
      %24 = sbr.rel (0) target = $region9
    $region8: #{my_resnet_forward.43} parent=1 // pred_region
      %26 = vsyncadd [#allocation3], 0
      %s28 = sshll.u32 [#allocation2], 4
      %s29 = int_to_ptr.vmem [resolvable:$true] %s28
      %s30 = sshll.u32 %s1, 4
      %s31 = int_to_ptr.hbm [resolvable:$true] %s30
      %33 = dma.vmem_to_hbm [thread:$0]  %s29, 32, %s31, [#allocation3]
    $region9: #{my_resnet_forward.43} parent=1 // pred_fallthru
      _
    // Predicated region
    $region10: #{my_resnet_forward.43} parent=1 // pred_check
      _
    $region11: #{my_resnet_forward.43} parent=1 // pred_check_branch
      %35 = sbr.rel (0) target = $region13
    $region12: #{my_resnet_forward.43} parent=1 // pred_region
      %37 = dma.done [#allocation3], 32
    $region13: #{my_resnet_forward.43} parent=1 // pred_fallthru
      _
    %38 = vsyncpa [#allocation3], 1

</llo_original>
